<compile_context>
chip_gen: v7x
topology: tpu7x:2x2x1
jax: 0.10.0
libtpu: 0.0.40
codegen_flags: <defaults>
</compile_context>

<pallas_src>
import math

import numpy as np
import jax
import jax.numpy as jnp
from jax.experimental import pallas as pl
from jax.experimental.pallas import tpu as pltpu


def _ceil_to(x, m):
    return ((x + m - 1) // m) * m


# ----------------------------------------------------------------------------
# Trace-time constant 0/1 matrices (numpy): spatial gathers become MXU matmuls.
# ----------------------------------------------------------------------------
def _upsample2x_matrix(H, W):
    """M (H*W, 4*H*W): nearest-x2 upsample of x laid out (C, H*W) is x @ M."""
    Ho, Wo = 2 * H, 2 * W
    ys, xs = np.meshgrid(np.arange(Ho), np.arange(Wo), indexing="ij")
    p_dst = (ys * Wo + xs).reshape(-1)
    p_src = ((ys // 2) * W + (xs // 2)).reshape(-1)
    M = np.zeros((H * W, Ho * Wo), np.float32)
    M[p_src, p_dst] = 1.0
    return M


def _shift_matrices(H, W, K):
    """S (K*K, H*W, H*W): tap t=ky*K+kx of x (C, H*W) is x @ S[t], equal to the
    zero-padded shifted window x_pad[y+ky, x+kx] of a 'same' KxK conv."""
    pad = K // 2
    ys, xs = np.meshgrid(np.arange(H), np.arange(W), indexing="ij")
    p_dst = (ys * W + xs).reshape(-1)
    S = np.zeros((K * K, H * W, H * W), np.float32)
    for ky in range(K):
        for kx in range(K):
            sy = ys + ky - pad
            sx = xs + kx - pad
            valid = ((sy >= 0) & (sy < H) & (sx >= 0) & (sx < W)).reshape(-1)
            p_src = (np.clip(sy, 0, H - 1) * W + np.clip(sx, 0, W - 1)).reshape(-1)
            S[ky * K + kx, p_src[valid], p_dst[valid]] = 1.0
    return S


def _build_weight_matrix(w_oihw, bn_scale, cin_parts, K):
    """-> (Cout, K*K*Cin_pad), columns ordered (ky, kx, cin_pad), with the
    BatchNorm scale folded in (exact: the conv has no bias).  `cin_parts` is a
    list of (real, padded) channel counts matching the kernel's concatenated,
    zero-padded input row layout."""
    Cout = w_oihw.shape[0]
    pieces, off = [], 0
    for real, padded in cin_parts:
        wp = w_oihw[:, off:off + real]
        if padded > real:
            wp = jnp.pad(wp, ((0, 0), (0, padded - real), (0, 0), (0, 0)))
        pieces.append(wp)
        off += real
    w_pad = jnp.concatenate(pieces, axis=1) if len(pieces) > 1 else pieces[0]
    cin_pad = w_pad.shape[1]
    wm = jnp.transpose(w_pad, (0, 2, 3, 1)).reshape(Cout, K * K * cin_pad)
    return (wm * bn_scale[:, None]).astype(jnp.float32)


# ----------------------------------------------------------------------------
# Fused decoder kernel (one invocation per batch element).
# ----------------------------------------------------------------------------
def _pad_rows(x, rows):
    if x.shape[0] == rows:
        return x
    return jnp.concatenate(
        [x, jnp.zeros((rows - x.shape[0], x.shape[1]), x.dtype)], axis=0)


def _make_decoder_kernel(blocks_meta, num_taps):
    def kernel(*refs):
        out_ref = refs[-1]
        it = iter(refs[:-1])
        x = next(it)[0]                              # head: (C_head_pad, HW)
        for bm in blocks_meta:
            m_ref = next(it)                         # (HW_pre, HW_out)
            ss_ref = next(it)                        # (K*K, HW_out, HW_out)
            # nearest-x2 upsample as an MXU matmul against a 0/1 matrix
            x = jnp.dot(x, m_ref[...], preferred_element_type=jnp.float32)
            x = _pad_rows(x, bm["cx_pad"])
            if bm["has_skip"]:
                # channel concat (never leaves VMEM); both parts 8-row aligned
                x = jnp.concatenate([x, next(it)[0]], axis=0)
            for _ in range(bm["num_convs"]):
                w_ref = next(it)                     # (Cout, K*K*Cin_pad)
                b_ref = next(it)                     # (Cout, 1)
                cin_pad = w_ref.shape[1] // num_taps
                x = _pad_rows(x, cin_pad)
                # im2col: taps via MXU selection matmuls (padding = zero rows
                # of S), then ONE big conv contraction over K*K*Cin.
                taps = [
                    jnp.dot(x, ss_ref[t], preferred_element_type=jnp.float32)
                    for t in range(num_taps)
                ]
                patches = jnp.concatenate(taps, axis=0)   # (K*K*Cin_pad, HW)
                y = jnp.dot(w_ref[...], patches,
                            preferred_element_type=jnp.float32)  # (Cout, HW)
                x = jnp.maximum(y + b_ref[...], 0.0)      # fused BN shift+ReLU
        # x is already channel-major (C_last, H*W): lane-dense NCHW store.
        out_ref[0] = x.astype(out_ref.dtype)
    return kernel


# ----------------------------------------------------------------------------
# Forward wrapper: builds constants / weight matrices and one pallas_call.
# ----------------------------------------------------------------------------
def unet_decoder_forward(params, *features_nchw, K=3):
    """params: output of init_unet_decoder_params; features NCHW,
    features[0] = highest resolution (PyTorch convention).  Returns NCHW."""
    num_taps = K * K
    feats = list(features_nchw)[::-1]            # deepest first
    head = feats[0]
    skips = feats[1:]
    N, c_head, Hc, Wc = head.shape

    inputs, in_specs = [], []

    def add_batched3(arr):                       # (N, C, HW) per-batch blocks
        inputs.append(arr)
        in_specs.append(pl.BlockSpec((1,) + arr.shape[1:], lambda n: (n, 0, 0)))

    def add_const(arr):                          # whole array, grid-invariant
        inputs.append(arr)
        if arr.ndim == 2:
            in_specs.append(pl.BlockSpec(arr.shape, lambda n: (0, 0)))
        else:
            in_specs.append(pl.BlockSpec(arr.shape, lambda n: (0, 0, 0)))

    # head feature: NCHW -> (N, C, H*W) is a free reshape; pad C to x8
    c_head_p = _ceil_to(c_head, 8)
    head_flat = head.reshape(N, c_head, Hc * Wc)
    if c_head_p > c_head:
        head_flat = jnp.pad(head_flat, ((0, 0), (0, c_head_p - c_head), (0, 0)))
    add_batched3(head_flat)

    blocks_meta = []
    cur_c = c_head                               # real channels of running x
    for bi, convs in enumerate(params):
        Ho, Wo = 2 * Hc, 2 * Wc
        add_const(jnp.asarray(_upsample2x_matrix(Hc, Wc)))
        add_const(jnp.asarray(_shift_matrices(Ho, Wo, K)))

        cx, cx_pad = cur_c, _ceil_to(cur_c, 8)
        has_skip = bi < len(skips)
        cs = skips[bi].shape[1] if has_skip else 0
        cs_pad = _ceil_to(cs, 8) if has_skip else 0
        if has_skip:
            skip = skips[bi]
            assert skip.shape[2:] == (Ho, Wo), "skip spatial size mismatch"
            skip_flat = skip.reshape(N, cs, Ho * Wo)
            if cs_pad > cs:
                skip_flat = jnp.pad(skip_flat,
                                    ((0, 0), (0, cs_pad - cs), (0, 0)))
            add_batched3(skip_flat)

        blocks_meta.append({"cx_pad": cx_pad, "has_skip": has_skip,
                            "num_convs": len(convs)})

        cin_real = cx + cs
        cin_parts = [(cx, cx_pad)] + ([(cs, cs_pad)] if has_skip else [])
        for (w_oihw, bn_scale, bn_shift) in convs:
            cout = w_oihw.shape[0]
            assert w_oihw.shape[1] == cin_real, "conv cin mismatch"
            add_const(_build_weight_matrix(w_oihw, bn_scale, cin_parts, K))
            add_const(bn_shift.reshape(cout, 1).astype(jnp.float32))
            cin_real = cout
            cin_parts = [(cout, _ceil_to(cout, 8))]
        cur_c = cin_real
        Hc, Wc = Ho, Wo

    c_last, hw_last = cur_c, Hc * Wc
    out = pl.pallas_call(
        _make_decoder_kernel(blocks_meta, num_taps),
        out_shape=jax.ShapeDtypeStruct((N, c_last, hw_last), jnp.float32),
        grid_spec=pltpu.PrefetchScalarGridSpec(
            num_scalar_prefetch=0,
            grid=(N,),
            in_specs=in_specs,
            out_specs=pl.BlockSpec((1, c_last, hw_last), lambda n: (n, 0, 0)),
        ),
        compiler_params=pltpu.CompilerParams(
            dimension_semantics=("parallel",),
            vmem_limit_bytes=32 * 1024 * 1024,
        ),
    )(*inputs)
    return out.reshape(N, c_last, Hc, Wc)        # already NCHW, free reshape


# ----------------------------------------------------------------------------
# Deterministic parameter init matching the module's __init__.
# ----------------------------------------------------------------------------
def _kaiming_uniform_fan_out_relu(key, out_ch, in_ch, k):
    fan_out = out_ch * k * k
    bound = math.sqrt(2.0) * math.sqrt(3.0 / fan_out)   # nonlinearity='relu'
    return jax.random.uniform(key, (out_ch, in_ch, k, k), jnp.float32,
                              minval=-bound, maxval=bound)


def init_unet_decoder_params(key, encoder_channels, decoder_channels,
                             decoder_layers, K=3):
    enc = tuple(encoder_channels)[::-1]
    head_channels = enc[0]
    in_channels = [head_channels] + list(decoder_channels[:-1])
    skip_channels = list(enc[1:])
    out_channels = list(decoder_channels)
    assert len(in_channels) == len(skip_channels) == len(out_channels)

    eps = 1e-5
    blocks = []
    for num_blocks, in_ch, skip_ch, out_ch in zip(
            decoder_layers, in_channels, skip_channels, out_channels):
        convs = []
        cin = in_ch + skip_ch
        for _ in range(num_blocks):
            key, sub = jax.random.split(key)
            w = _kaiming_uniform_fan_out_relu(sub, out_ch, cin, K)
            # BatchNorm2d init: gamma=1, beta=0, running_mean=0, running_var=1
            bn_scale = jnp.full((out_ch,), 1.0 / math.sqrt(1.0 + eps),
                                dtype=jnp.float32)
            bn_shift = jnp.zeros((out_ch,), dtype=jnp.float32)
            convs.append((w, bn_scale, bn_shift))
            cin = out_ch
        blocks.append(convs)
    return blocks


# ----------------------------------------------------------------------------
# Pure-JAX reference (for a numerical sanity check).
# ----------------------------------------------------------------------------
def _reference_forward(params, *features_nchw, K=3):
    feats = list(features_nchw)[::-1]
    x = feats[0]
    skips = feats[1:]
    for i, convs in enumerate(params):
        x = jnp.repeat(jnp.repeat(x, 2, axis=2), 2, axis=3)   # nearest x2
        if i < len(skips):
            x = jnp.concatenate([x, skips[i]], axis=1)
        for (w, scale, shift) in convs:
            y = jax.lax.conv_general_dilated(
                x, w, window_strides=(1, 1), padding="SAME",
                dimension_numbers=("NCHW", "OIHW", "NCHW"),
                precision=jax.lax.Precision.HIGHEST)
            y = y * scale[None, :, None, None] + shift[None, :, None, None]
            x = jnp.maximum(y, 0.0)
    return x


# ----------------------------------------------------------------------------
if __name__ == "__main__":
    key = jax.random.PRNGKey(0)

    # Config: encoder_channels=(4,8,16,32), decoder_channels=(24,16,8),
    # decoder_layers=(2,1,1), kernel_size=3.
    encoder_channels = (4, 8, 16, 32)
    decoder_channels = (24, 16, 8)
    decoder_layers = (2, 1, 1)

    k_params, k0, k1, k2, k3 = jax.random.split(key, 5)
    params = init_unet_decoder_params(k_params, encoder_channels,
                                      decoder_channels, decoder_layers, K=3)

    N = 2
    # Encoder features (NCHW), spatial halving per level.
    f0 = jax.random.normal(k0, (N, 4, 16, 16), dtype=jnp.float32)
    f1 = jax.random.normal(k1, (N, 8, 8, 8), dtype=jnp.float32)
    f2 = jax.random.normal(k2, (N, 16, 4, 4), dtype=jnp.float32)
    f3 = jax.random.normal(k3, (N, 32, 2, 2), dtype=jnp.float32)

    out = unet_decoder_forward(params, f0, f1, f2, f3, K=3)
    out = jax.block_until_ready(out)
    assert out.shape == (N, decoder_channels[-1], 16, 16), out.shape
    assert out.dtype == jnp.float32

    ref = jax.block_until_ready(_reference_forward(params, f0, f1, f2, f3, K=3))
    assert jnp.allclose(out, ref, atol=1e-2, rtol=1e-2), \
        float(jnp.max(jnp.abs(out - ref)))

    print("KERNEL_OK")
</pallas_src>

<mosaic_0001>
module attributes {stable_mosaic.version = 11 : i64} {
  func.func @kernel(%arg0: i32, %arg1: memref<1x32x4xf32, #tpu.memory_space<vmem>>, %arg2: memref<4x16xf32, #tpu.memory_space<vmem>>, %arg3: memref<9x16x16xf32, #tpu.memory_space<vmem>>, %arg4: memref<1x16x16xf32, #tpu.memory_space<vmem>>, %arg5: memref<24x432xf32, #tpu.memory_space<vmem>>, %arg6: memref<24x1xf32, #tpu.memory_space<vmem>>, %arg7: memref<24x216xf32, #tpu.memory_space<vmem>>, %arg8: memref<24x1xf32, #tpu.memory_space<vmem>>, %arg9: memref<16x64xf32, #tpu.memory_space<vmem>>, %arg10: memref<9x64x64xf32, #tpu.memory_space<vmem>>, %arg11: memref<1x8x64xf32, #tpu.memory_space<vmem>>, %arg12: memref<16x288xf32, #tpu.memory_space<vmem>>, %arg13: memref<16x1xf32, #tpu.memory_space<vmem>>, %arg14: memref<64x256xf32, #tpu.memory_space<vmem>>, %arg15: memref<9x256x256xf32, #tpu.memory_space<vmem>>, %arg16: memref<1x8x256xf32, #tpu.memory_space<vmem>>, %arg17: memref<8x216xf32, #tpu.memory_space<vmem>>, %arg18: memref<8x1xf32, #tpu.memory_space<vmem>>, %arg19: memref<1x8x256xf32, #tpu.memory_space<vmem>>) attributes {dimension_semantics = [#tpu.dimension_semantics<parallel>], iteration_bounds = array<i64: 2>, scalar_prefetch = 0 : i64, scratch_operands = 0 : i64, tpu.core_type = #tpu.core_type<tc>, window_params = [{transform_indices = @transform_0, window_bounds = array<i64: 1, 32, 4>}, {pipeline_mode = #tpu.pipeline_mode<synchronous>, transform_indices = @transform_1, window_bounds = array<i64: 4, 16>}, {pipeline_mode = #tpu.pipeline_mode<synchronous>, transform_indices = @transform_2, window_bounds = array<i64: 9, 16, 16>}, {transform_indices = @transform_3, window_bounds = array<i64: 1, 16, 16>}, {pipeline_mode = #tpu.pipeline_mode<synchronous>, transform_indices = @transform_4, window_bounds = array<i64: 24, 432>}, {pipeline_mode = #tpu.pipeline_mode<synchronous>, transform_indices = @transform_5, window_bounds = array<i64: 24, 1>}, {pipeline_mode = #tpu.pipeline_mode<synchronous>, transform_indices = @transform_6, window_bounds = array<i64: 24, 216>}, {pipeline_mode = #tpu.pipeline_mode<synchronous>, transform_indices = @transform_7, window_bounds = array<i64: 24, 1>}, {pipeline_mode = #tpu.pipeline_mode<synchronous>, transform_indices = @transform_8, window_bounds = array<i64: 16, 64>}, {pipeline_mode = #tpu.pipeline_mode<synchronous>, transform_indices = @transform_9, window_bounds = array<i64: 9, 64, 64>}, {transform_indices = @transform_10, window_bounds = array<i64: 1, 8, 64>}, {pipeline_mode = #tpu.pipeline_mode<synchronous>, transform_indices = @transform_11, window_bounds = array<i64: 16, 288>}, {pipeline_mode = #tpu.pipeline_mode<synchronous>, transform_indices = @transform_12, window_bounds = array<i64: 16, 1>}, {pipeline_mode = #tpu.pipeline_mode<synchronous>, transform_indices = @transform_13, window_bounds = array<i64: 64, 256>}, {pipeline_mode = #tpu.pipeline_mode<synchronous>, transform_indices = @transform_14, window_bounds = array<i64: 9, 256, 256>}, {transform_indices = @transform_15, window_bounds = array<i64: 1, 8, 256>}, {pipeline_mode = #tpu.pipeline_mode<synchronous>, transform_indices = @transform_16, window_bounds = array<i64: 8, 216>}, {pipeline_mode = #tpu.pipeline_mode<synchronous>, transform_indices = @transform_17, window_bounds = array<i64: 8, 1>}, {transform_indices = @transform_18, window_bounds = array<i64: 1, 8, 256>}]} {
    %c0 = arith.constant 0 : index
    %c0_0 = arith.constant 0 : index
    %c0_1 = arith.constant 0 : index
    %0 = vector.load %arg1[%c0, %c0_0, %c0_1] : memref<1x32x4xf32, #tpu.memory_space<vmem>>, vector<1x32x4xf32>
    %1 = vector.shape_cast %0 : vector<1x32x4xf32> to vector<32x4xf32>
    %c0_2 = arith.constant 0 : index
    %c0_3 = arith.constant 0 : index
    %2 = vector.load %arg2[%c0_2, %c0_3] : memref<4x16xf32, #tpu.memory_space<vmem>>, vector<4x16xf32>
    %cst = arith.constant dense<0.000000e+00> : vector<32x16xf32>
    %3 = tpu.matmul %1, %2, %cst {dimension_numbers = #tpu.dot_dimension_numbers<[1], [0], [0], [1], [0, 0, 1, 1], [], []>} : vector<32x4xf32>, vector<4x16xf32>, vector<32x16xf32> -> vector<32x16xf32>
    %c0_4 = arith.constant 0 : index
    %c0_5 = arith.constant 0 : index
    %c0_6 = arith.constant 0 : index
    %4 = vector.load %arg4[%c0_4, %c0_5, %c0_6] : memref<1x16x16xf32, #tpu.memory_space<vmem>>, vector<1x16x16xf32>
    %5 = vector.shape_cast %4 : vector<1x16x16xf32> to vector<16x16xf32>
    %6 = tpu.concatenate %3, %5 in 0 : vector<32x16xf32>, vector<16x16xf32> -> vector<48x16xf32>
    %c0_7 = arith.constant 0 : index
    %c0_8 = arith.constant 0 : index
    %c0_9 = arith.constant 0 : index
    %7 = vector.load %arg3[%c0_7, %c0_8, %c0_9] : memref<9x16x16xf32, #tpu.memory_space<vmem>>, vector<1x16x16xf32>
    %8 = vector.shape_cast %7 : vector<1x16x16xf32> to vector<16x16xf32>
    %cst_10 = arith.constant dense<0.000000e+00> : vector<48x16xf32>
    %9 = tpu.matmul %6, %8, %cst_10 {dimension_numbers = #tpu.dot_dimension_numbers<[1], [0], [0], [1], [0, 0, 1, 1], [], []>} : vector<48x16xf32>, vector<16x16xf32>, vector<48x16xf32> -> vector<48x16xf32>
    %c1 = arith.constant 1 : index
    %c0_11 = arith.constant 0 : index
    %c0_12 = arith.constant 0 : index
    %10 = vector.load %arg3[%c1, %c0_11, %c0_12] : memref<9x16x16xf32, #tpu.memory_space<vmem>>, vector<1x16x16xf32>
    %11 = vector.shape_cast %10 : vector<1x16x16xf32> to vector<16x16xf32>
    %cst_13 = arith.constant dense<0.000000e+00> : vector<48x16xf32>
    %12 = tpu.matmul %6, %11, %cst_13 {dimension_numbers = #tpu.dot_dimension_numbers<[1], [0], [0], [1], [0, 0, 1, 1], [], []>} : vector<48x16xf32>, vector<16x16xf32>, vector<48x16xf32> -> vector<48x16xf32>
    %c2 = arith.constant 2 : index
    %c0_14 = arith.constant 0 : index
    %c0_15 = arith.constant 0 : index
    %13 = vector.load %arg3[%c2, %c0_14, %c0_15] : memref<9x16x16xf32, #tpu.memory_space<vmem>>, vector<1x16x16xf32>
    %14 = vector.shape_cast %13 : vector<1x16x16xf32> to vector<16x16xf32>
    %cst_16 = arith.constant dense<0.000000e+00> : vector<48x16xf32>
    %15 = tpu.matmul %6, %14, %cst_16 {dimension_numbers = #tpu.dot_dimension_numbers<[1], [0], [0], [1], [0, 0, 1, 1], [], []>} : vector<48x16xf32>, vector<16x16xf32>, vector<48x16xf32> -> vector<48x16xf32>
    %c3 = arith.constant 3 : index
    %c0_17 = arith.constant 0 : index
    %c0_18 = arith.constant 0 : index
    %16 = vector.load %arg3[%c3, %c0_17, %c0_18] : memref<9x16x16xf32, #tpu.memory_space<vmem>>, vector<1x16x16xf32>
    %17 = vector.shape_cast %16 : vector<1x16x16xf32> to vector<16x16xf32>
    %cst_19 = arith.constant dense<0.000000e+00> : vector<48x16xf32>
    %18 = tpu.matmul %6, %17, %cst_19 {dimension_numbers = #tpu.dot_dimension_numbers<[1], [0], [0], [1], [0, 0, 1, 1], [], []>} : vector<48x16xf32>, vector<16x16xf32>, vector<48x16xf32> -> vector<48x16xf32>
    %c4 = arith.constant 4 : index
    %c0_20 = arith.constant 0 : index
    %c0_21 = arith.constant 0 : index
    %19 = vector.load %arg3[%c4, %c0_20, %c0_21] : memref<9x16x16xf32, #tpu.memory_space<vmem>>, vector<1x16x16xf32>
    %20 = vector.shape_cast %19 : vector<1x16x16xf32> to vector<16x16xf32>
    %cst_22 = arith.constant dense<0.000000e+00> : vector<48x16xf32>
    %21 = tpu.matmul %6, %20, %cst_22 {dimension_numbers = #tpu.dot_dimension_numbers<[1], [0], [0], [1], [0, 0, 1, 1], [], []>} : vector<48x16xf32>, vector<16x16xf32>, vector<48x16xf32> -> vector<48x16xf32>
    %c5 = arith.constant 5 : index
    %c0_23 = arith.constant 0 : index
    %c0_24 = arith.constant 0 : index
    %22 = vector.load %arg3[%c5, %c0_23, %c0_24] : memref<9x16x16xf32, #tpu.memory_space<vmem>>, vector<1x16x16xf32>
    %23 = vector.shape_cast %22 : vector<1x16x16xf32> to vector<16x16xf32>
    %cst_25 = arith.constant dense<0.000000e+00> : vector<48x16xf32>
    %24 = tpu.matmul %6, %23, %cst_25 {dimension_numbers = #tpu.dot_dimension_numbers<[1], [0], [0], [1], [0, 0, 1, 1], [], []>} : vector<48x16xf32>, vector<16x16xf32>, vector<48x16xf32> -> vector<48x16xf32>
    %c6 = arith.constant 6 : index
    %c0_26 = arith.constant 0 : index
    %c0_27 = arith.constant 0 : index
    %25 = vector.load %arg3[%c6, %c0_26, %c0_27] : memref<9x16x16xf32, #tpu.memory_space<vmem>>, vector<1x16x16xf32>
    %26 = vector.shape_cast %25 : vector<1x16x16xf32> to vector<16x16xf32>
    %cst_28 = arith.constant dense<0.000000e+00> : vector<48x16xf32>
    %27 = tpu.matmul %6, %26, %cst_28 {dimension_numbers = #tpu.dot_dimension_numbers<[1], [0], [0], [1], [0, 0, 1, 1], [], []>} : vector<48x16xf32>, vector<16x16xf32>, vector<48x16xf32> -> vector<48x16xf32>
    %c7 = arith.constant 7 : index
    %c0_29 = arith.constant 0 : index
    %c0_30 = arith.constant 0 : index
    %28 = vector.load %arg3[%c7, %c0_29, %c0_30] : memref<9x16x16xf32, #tpu.memory_space<vmem>>, vector<1x16x16xf32>
    %29 = vector.shape_cast %28 : vector<1x16x16xf32> to vector<16x16xf32>
    %cst_31 = arith.constant dense<0.000000e+00> : vector<48x16xf32>
    %30 = tpu.matmul %6, %29, %cst_31 {dimension_numbers = #tpu.dot_dimension_numbers<[1], [0], [0], [1], [0, 0, 1, 1], [], []>} : vector<48x16xf32>, vector<16x16xf32>, vector<48x16xf32> -> vector<48x16xf32>
    %c8 = arith.constant 8 : index
    %c0_32 = arith.constant 0 : index
    %c0_33 = arith.constant 0 : index
    %31 = vector.load %arg3[%c8, %c0_32, %c0_33] : memref<9x16x16xf32, #tpu.memory_space<vmem>>, vector<1x16x16xf32>
    %32 = vector.shape_cast %31 : vector<1x16x16xf32> to vector<16x16xf32>
    %cst_34 = arith.constant dense<0.000000e+00> : vector<48x16xf32>
    %33 = tpu.matmul %6, %32, %cst_34 {dimension_numbers = #tpu.dot_dimension_numbers<[1], [0], [0], [1], [0, 0, 1, 1], [], []>} : vector<48x16xf32>, vector<16x16xf32>, vector<48x16xf32> -> vector<48x16xf32>
    %34 = tpu.concatenate %9, %12, %15, %18, %21, %24, %27, %30, %33 in 0 : vector<48x16xf32>, vector<48x16xf32>, vector<48x16xf32>, vector<48x16xf32>, vector<48x16xf32>, vector<48x16xf32>, vector<48x16xf32>, vector<48x16xf32>, vector<48x16xf32> -> vector<432x16xf32>
    %c0_35 = arith.constant 0 : index
    %c0_36 = arith.constant 0 : index
    %35 = vector.load %arg5[%c0_35, %c0_36] : memref<24x432xf32, #tpu.memory_space<vmem>>, vector<24x432xf32>
    %cst_37 = arith.constant dense<0.000000e+00> : vector<24x16xf32>
    %36 = tpu.matmul %35, %34, %cst_37 {dimension_numbers = #tpu.dot_dimension_numbers<[1], [0], [0], [1], [0, 0, 1, 1], [], []>} : vector<24x432xf32>, vector<432x16xf32>, vector<24x16xf32> -> vector<24x16xf32>
    %c0_38 = arith.constant 0 : index
    %c0_39 = arith.constant 0 : index
    %37 = vector.load %arg6[%c0_38, %c0_39] : memref<24x1xf32, #tpu.memory_space<vmem>>, vector<24x1xf32>
    %38 = vector.broadcast %37 : vector<24x1xf32> to vector<24x16xf32>
    %39 = arith.addf %36, %38 : vector<24x16xf32>
    %cst_40 = arith.constant 0.000000e+00 : f32
    %40 = vector.broadcast %cst_40 : f32 to vector<24x16xf32>
    %41 = arith.maximumf %39, %40 : vector<24x16xf32>
    %c0_41 = arith.constant 0 : index
    %c0_42 = arith.constant 0 : index
    %c0_43 = arith.constant 0 : index
    %42 = vector.load %arg3[%c0_41, %c0_42, %c0_43] : memref<9x16x16xf32, #tpu.memory_space<vmem>>, vector<1x16x16xf32>
    %43 = vector.shape_cast %42 : vector<1x16x16xf32> to vector<16x16xf32>
    %cst_44 = arith.constant dense<0.000000e+00> : vector<24x16xf32>
    %44 = tpu.matmul %41, %43, %cst_44 {dimension_numbers = #tpu.dot_dimension_numbers<[1], [0], [0], [1], [0, 0, 1, 1], [], []>} : vector<24x16xf32>, vector<16x16xf32>, vector<24x16xf32> -> vector<24x16xf32>
    %c1_45 = arith.constant 1 : index
    %c0_46 = arith.constant 0 : index
    %c0_47 = arith.constant 0 : index
    %45 = vector.load %arg3[%c1_45, %c0_46, %c0_47] : memref<9x16x16xf32, #tpu.memory_space<vmem>>, vector<1x16x16xf32>
    %46 = vector.shape_cast %45 : vector<1x16x16xf32> to vector<16x16xf32>
    %cst_48 = arith.constant dense<0.000000e+00> : vector<24x16xf32>
    %47 = tpu.matmul %41, %46, %cst_48 {dimension_numbers = #tpu.dot_dimension_numbers<[1], [0], [0], [1], [0, 0, 1, 1], [], []>} : vector<24x16xf32>, vector<16x16xf32>, vector<24x16xf32> -> vector<24x16xf32>
    %c2_49 = arith.constant 2 : index
    %c0_50 = arith.constant 0 : index
    %c0_51 = arith.constant 0 : index
    %48 = vector.load %arg3[%c2_49, %c0_50, %c0_51] : memref<9x16x16xf32, #tpu.memory_space<vmem>>, vector<1x16x16xf32>
    %49 = vector.shape_cast %48 : vector<1x16x16xf32> to vector<16x16xf32>
    %cst_52 = arith.constant dense<0.000000e+00> : vector<24x16xf32>
    %50 = tpu.matmul %41, %49, %cst_52 {dimension_numbers = #tpu.dot_dimension_numbers<[1], [0], [0], [1], [0, 0, 1, 1], [], []>} : vector<24x16xf32>, vector<16x16xf32>, vector<24x16xf32> -> vector<24x16xf32>
    %c3_53 = arith.constant 3 : index
    %c0_54 = arith.constant 0 : index
    %c0_55 = arith.constant 0 : index
    %51 = vector.load %arg3[%c3_53, %c0_54, %c0_55] : memref<9x16x16xf32, #tpu.memory_space<vmem>>, vector<1x16x16xf32>
    %52 = vector.shape_cast %51 : vector<1x16x16xf32> to vector<16x16xf32>
    %cst_56 = arith.constant dense<0.000000e+00> : vector<24x16xf32>
    %53 = tpu.matmul %41, %52, %cst_56 {dimension_numbers = #tpu.dot_dimension_numbers<[1], [0], [0], [1], [0, 0, 1, 1], [], []>} : vector<24x16xf32>, vector<16x16xf32>, vector<24x16xf32> -> vector<24x16xf32>
    %c4_57 = arith.constant 4 : index
    %c0_58 = arith.constant 0 : index
    %c0_59 = arith.constant 0 : index
    %54 = vector.load %arg3[%c4_57, %c0_58, %c0_59] : memref<9x16x16xf32, #tpu.memory_space<vmem>>, vector<1x16x16xf32>
    %55 = vector.shape_cast %54 : vector<1x16x16xf32> to vector<16x16xf32>
    %cst_60 = arith.constant dense<0.000000e+00> : vector<24x16xf32>
    %56 = tpu.matmul %41, %55, %cst_60 {dimension_numbers = #tpu.dot_dimension_numbers<[1], [0], [0], [1], [0, 0, 1, 1], [], []>} : vector<24x16xf32>, vector<16x16xf32>, vector<24x16xf32> -> vector<24x16xf32>
    %c5_61 = arith.constant 5 : index
    %c0_62 = arith.constant 0 : index
    %c0_63 = arith.constant 0 : index
    %57 = vector.load %arg3[%c5_61, %c0_62, %c0_63] : memref<9x16x16xf32, #tpu.memory_space<vmem>>, vector<1x16x16xf32>
    %58 = vector.shape_cast %57 : vector<1x16x16xf32> to vector<16x16xf32>
    %cst_64 = arith.constant dense<0.000000e+00> : vector<24x16xf32>
    %59 = tpu.matmul %41, %58, %cst_64 {dimension_numbers = #tpu.dot_dimension_numbers<[1], [0], [0], [1], [0, 0, 1, 1], [], []>} : vector<24x16xf32>, vector<16x16xf32>, vector<24x16xf32> -> vector<24x16xf32>
    %c6_65 = arith.constant 6 : index
    %c0_66 = arith.constant 0 : index
    %c0_67 = arith.constant 0 : index
    %60 = vector.load %arg3[%c6_65, %c0_66, %c0_67] : memref<9x16x16xf32, #tpu.memory_space<vmem>>, vector<1x16x16xf32>
    %61 = vector.shape_cast %60 : vector<1x16x16xf32> to vector<16x16xf32>
    %cst_68 = arith.constant dense<0.000000e+00> : vector<24x16xf32>
    %62 = tpu.matmul %41, %61, %cst_68 {dimension_numbers = #tpu.dot_dimension_numbers<[1], [0], [0], [1], [0, 0, 1, 1], [], []>} : vector<24x16xf32>, vector<16x16xf32>, vector<24x16xf32> -> vector<24x16xf32>
    %c7_69 = arith.constant 7 : index
    %c0_70 = arith.constant 0 : index
    %c0_71 = arith.constant 0 : index
    %63 = vector.load %arg3[%c7_69, %c0_70, %c0_71] : memref<9x16x16xf32, #tpu.memory_space<vmem>>, vector<1x16x16xf32>
    %64 = vector.shape_cast %63 : vector<1x16x16xf32> to vector<16x16xf32>
    %cst_72 = arith.constant dense<0.000000e+00> : vector<24x16xf32>
    %65 = tpu.matmul %41, %64, %cst_72 {dimension_numbers = #tpu.dot_dimension_numbers<[1], [0], [0], [1], [0, 0, 1, 1], [], []>} : vector<24x16xf32>, vector<16x16xf32>, vector<24x16xf32> -> vector<24x16xf32>
    %c8_73 = arith.constant 8 : index
    %c0_74 = arith.constant 0 : index
    %c0_75 = arith.constant 0 : index
    %66 = vector.load %arg3[%c8_73, %c0_74, %c0_75] : memref<9x16x16xf32, #tpu.memory_space<vmem>>, vector<1x16x16xf32>
    %67 = vector.shape_cast %66 : vector<1x16x16xf32> to vector<16x16xf32>
    %cst_76 = arith.constant dense<0.000000e+00> : vector<24x16xf32>
    %68 = tpu.matmul %41, %67, %cst_76 {dimension_numbers = #tpu.dot_dimension_numbers<[1], [0], [0], [1], [0, 0, 1, 1], [], []>} : vector<24x16xf32>, vector<16x16xf32>, vector<24x16xf32> -> vector<24x16xf32>
    %69 = tpu.concatenate %44, %47, %50, %53, %56, %59, %62, %65, %68 in 0 : vector<24x16xf32>, vector<24x16xf32>, vector<24x16xf32>, vector<24x16xf32>, vector<24x16xf32>, vector<24x16xf32>, vector<24x16xf32>, vector<24x16xf32>, vector<24x16xf32> -> vector<216x16xf32>
    %c0_77 = arith.constant 0 : index
    %c0_78 = arith.constant 0 : index
    %70 = vector.load %arg7[%c0_77, %c0_78] : memref<24x216xf32, #tpu.memory_space<vmem>>, vector<24x216xf32>
    %cst_79 = arith.constant dense<0.000000e+00> : vector<24x16xf32>
    %71 = tpu.matmul %70, %69, %cst_79 {dimension_numbers = #tpu.dot_dimension_numbers<[1], [0], [0], [1], [0, 0, 1, 1], [], []>} : vector<24x216xf32>, vector<216x16xf32>, vector<24x16xf32> -> vector<24x16xf32>
    %c0_80 = arith.constant 0 : index
    %c0_81 = arith.constant 0 : index
    %72 = vector.load %arg8[%c0_80, %c0_81] : memref<24x1xf32, #tpu.memory_space<vmem>>, vector<24x1xf32>
    %73 = vector.broadcast %72 : vector<24x1xf32> to vector<24x16xf32>
    %74 = arith.addf %71, %73 : vector<24x16xf32>
    %cst_82 = arith.constant 0.000000e+00 : f32
    %75 = vector.broadcast %cst_82 : f32 to vector<24x16xf32>
    %76 = arith.maximumf %74, %75 : vector<24x16xf32>
    %c0_83 = arith.constant 0 : index
    %c0_84 = arith.constant 0 : index
    %77 = vector.load %arg9[%c0_83, %c0_84] : memref<16x64xf32, #tpu.memory_space<vmem>>, vector<16x64xf32>
    %cst_85 = arith.constant dense<0.000000e+00> : vector<24x64xf32>
    %78 = tpu.matmul %76, %77, %cst_85 {dimension_numbers = #tpu.dot_dimension_numbers<[1], [0], [0], [1], [0, 0, 1, 1], [], []>} : vector<24x16xf32>, vector<16x64xf32>, vector<24x64xf32> -> vector<24x64xf32>
    %c0_86 = arith.constant 0 : index
    %c0_87 = arith.constant 0 : index
    %c0_88 = arith.constant 0 : index
    %79 = vector.load %arg11[%c0_86, %c0_87, %c0_88] : memref<1x8x64xf32, #tpu.memory_space<vmem>>, vector<1x8x64xf32>
    %80 = vector.shape_cast %79 : vector<1x8x64xf32> to vector<8x64xf32>
    %81 = tpu.concatenate %78, %80 in 0 : vector<24x64xf32>, vector<8x64xf32> -> vector<32x64xf32>
    %c0_89 = arith.constant 0 : index
    %c0_90 = arith.constant 0 : index
    %c0_91 = arith.constant 0 : index
    %82 = vector.load %arg10[%c0_89, %c0_90, %c0_91] : memref<9x64x64xf32, #tpu.memory_space<vmem>>, vector<1x64x64xf32>
    %83 = vector.shape_cast %82 : vector<1x64x64xf32> to vector<64x64xf32>
    %cst_92 = arith.constant dense<0.000000e+00> : vector<32x64xf32>
    %84 = tpu.matmul %81, %83, %cst_92 {dimension_numbers = #tpu.dot_dimension_numbers<[1], [0], [0], [1], [0, 0, 1, 1], [], []>} : vector<32x64xf32>, vector<64x64xf32>, vector<32x64xf32> -> vector<32x64xf32>
    %c1_93 = arith.constant 1 : index
    %c0_94 = arith.constant 0 : index
    %c0_95 = arith.constant 0 : index
    %85 = vector.load %arg10[%c1_93, %c0_94, %c0_95] : memref<9x64x64xf32, #tpu.memory_space<vmem>>, vector<1x64x64xf32>
    %86 = vector.shape_cast %85 : vector<1x64x64xf32> to vector<64x64xf32>
    %cst_96 = arith.constant dense<0.000000e+00> : vector<32x64xf32>
    %87 = tpu.matmul %81, %86, %cst_96 {dimension_numbers = #tpu.dot_dimension_numbers<[1], [0], [0], [1], [0, 0, 1, 1], [], []>} : vector<32x64xf32>, vector<64x64xf32>, vector<32x64xf32> -> vector<32x64xf32>
    %c2_97 = arith.constant 2 : index
    %c0_98 = arith.constant 0 : index
    %c0_99 = arith.constant 0 : index
    %88 = vector.load %arg10[%c2_97, %c0_98, %c0_99] : memref<9x64x64xf32, #tpu.memory_space<vmem>>, vector<1x64x64xf32>
    %89 = vector.shape_cast %88 : vector<1x64x64xf32> to vector<64x64xf32>
    %cst_100 = arith.constant dense<0.000000e+00> : vector<32x64xf32>
    %90 = tpu.matmul %81, %89, %cst_100 {dimension_numbers = #tpu.dot_dimension_numbers<[1], [0], [0], [1], [0, 0, 1, 1], [], []>} : vector<32x64xf32>, vector<64x64xf32>, vector<32x64xf32> -> vector<32x64xf32>
    %c3_101 = arith.constant 3 : index
    %c0_102 = arith.constant 0 : index
    %c0_103 = arith.constant 0 : index
    %91 = vector.load %arg10[%c3_101, %c0_102, %c0_103] : memref<9x64x64xf32, #tpu.memory_space<vmem>>, vector<1x64x64xf32>
    %92 = vector.shape_cast %91 : vector<1x64x64xf32> to vector<64x64xf32>
    %cst_104 = arith.constant dense<0.000000e+00> : vector<32x64xf32>
    %93 = tpu.matmul %81, %92, %cst_104 {dimension_numbers = #tpu.dot_dimension_numbers<[1], [0], [0], [1], [0, 0, 1, 1], [], []>} : vector<32x64xf32>, vector<64x64xf32>, vector<32x64xf32> -> vector<32x64xf32>
    %c4_105 = arith.constant 4 : index
    %c0_106 = arith.constant 0 : index
    %c0_107 = arith.constant 0 : index
    %94 = vector.load %arg10[%c4_105, %c0_106, %c0_107] : memref<9x64x64xf32, #tpu.memory_space<vmem>>, vector<1x64x64xf32>
    %95 = vector.shape_cast %94 : vector<1x64x64xf32> to vector<64x64xf32>
    %cst_108 = arith.constant dense<0.000000e+00> : vector<32x64xf32>
    %96 = tpu.matmul %81, %95, %cst_108 {dimension_numbers = #tpu.dot_dimension_numbers<[1], [0], [0], [1], [0, 0, 1, 1], [], []>} : vector<32x64xf32>, vector<64x64xf32>, vector<32x64xf32> -> vector<32x64xf32>
    %c5_109 = arith.constant 5 : index
    %c0_110 = arith.constant 0 : index
    %c0_111 = arith.constant 0 : index
    %97 = vector.load %arg10[%c5_109, %c0_110, %c0_111] : memref<9x64x64xf32, #tpu.memory_space<vmem>>, vector<1x64x64xf32>
    %98 = vector.shape_cast %97 : vector<1x64x64xf32> to vector<64x64xf32>
    %cst_112 = arith.constant dense<0.000000e+00> : vector<32x64xf32>
    %99 = tpu.matmul %81, %98, %cst_112 {dimension_numbers = #tpu.dot_dimension_numbers<[1], [0], [0], [1], [0, 0, 1, 1], [], []>} : vector<32x64xf32>, vector<64x64xf32>, vector<32x64xf32> -> vector<32x64xf32>
    %c6_113 = arith.constant 6 : index
    %c0_114 = arith.constant 0 : index
    %c0_115 = arith.constant 0 : index
    %100 = vector.load %arg10[%c6_113, %c0_114, %c0_115] : memref<9x64x64xf32, #tpu.memory_space<vmem>>, vector<1x64x64xf32>
    %101 = vector.shape_cast %100 : vector<1x64x64xf32> to vector<64x64xf32>
    %cst_116 = arith.constant dense<0.000000e+00> : vector<32x64xf32>
    %102 = tpu.matmul %81, %101, %cst_116 {dimension_numbers = #tpu.dot_dimension_numbers<[1], [0], [0], [1], [0, 0, 1, 1], [], []>} : vector<32x64xf32>, vector<64x64xf32>, vector<32x64xf32> -> vector<32x64xf32>
    %c7_117 = arith.constant 7 : index
    %c0_118 = arith.constant 0 : index
    %c0_119 = arith.constant 0 : index
    %103 = vector.load %arg10[%c7_117, %c0_118, %c0_119] : memref<9x64x64xf32, #tpu.memory_space<vmem>>, vector<1x64x64xf32>
    %104 = vector.shape_cast %103 : vector<1x64x64xf32> to vector<64x64xf32>
    %cst_120 = arith.constant dense<0.000000e+00> : vector<32x64xf32>
    %105 = tpu.matmul %81, %104, %cst_120 {dimension_numbers = #tpu.dot_dimension_numbers<[1], [0], [0], [1], [0, 0, 1, 1], [], []>} : vector<32x64xf32>, vector<64x64xf32>, vector<32x64xf32> -> vector<32x64xf32>
    %c8_121 = arith.constant 8 : index
    %c0_122 = arith.constant 0 : index
    %c0_123 = arith.constant 0 : index
    %106 = vector.load %arg10[%c8_121, %c0_122, %c0_123] : memref<9x64x64xf32, #tpu.memory_space<vmem>>, vector<1x64x64xf32>
    %107 = vector.shape_cast %106 : vector<1x64x64xf32> to vector<64x64xf32>
    %cst_124 = arith.constant dense<0.000000e+00> : vector<32x64xf32>
    %108 = tpu.matmul %81, %107, %cst_124 {dimension_numbers = #tpu.dot_dimension_numbers<[1], [0], [0], [1], [0, 0, 1, 1], [], []>} : vector<32x64xf32>, vector<64x64xf32>, vector<32x64xf32> -> vector<32x64xf32>
    %109 = tpu.concatenate %84, %87, %90, %93, %96, %99, %102, %105, %108 in 0 : vector<32x64xf32>, vector<32x64xf32>, vector<32x64xf32>, vector<32x64xf32>, vector<32x64xf32>, vector<32x64xf32>, vector<32x64xf32>, vector<32x64xf32>, vector<32x64xf32> -> vector<288x64xf32>
    %c0_125 = arith.constant 0 : index
    %c0_126 = arith.constant 0 : index
    %110 = vector.load %arg12[%c0_125, %c0_126] : memref<16x288xf32, #tpu.memory_space<vmem>>, vector<16x288xf32>
    %cst_127 = arith.constant dense<0.000000e+00> : vector<16x64xf32>
    %111 = tpu.matmul %110, %109, %cst_127 {dimension_numbers = #tpu.dot_dimension_numbers<[1], [0], [0], [1], [0, 0, 1, 1], [], []>} : vector<16x288xf32>, vector<288x64xf32>, vector<16x64xf32> -> vector<16x64xf32>
    %c0_128 = arith.constant 0 : index
    %c0_129 = arith.constant 0 : index
    %112 = vector.load %arg13[%c0_128, %c0_129] : memref<16x1xf32, #tpu.memory_space<vmem>>, vector<16x1xf32>
    %113 = vector.broadcast %112 : vector<16x1xf32> to vector<16x64xf32>
    %114 = arith.addf %111, %113 : vector<16x64xf32>
    %cst_130 = arith.constant 0.000000e+00 : f32
    %115 = vector.broadcast %cst_130 : f32 to vector<16x64xf32>
    %116 = arith.maximumf %114, %115 : vector<16x64xf32>
    %c0_131 = arith.constant 0 : index
    %c0_132 = arith.constant 0 : index
    %117 = vector.load %arg14[%c0_131, %c0_132] : memref<64x256xf32, #tpu.memory_space<vmem>>, vector<64x256xf32>
    %cst_133 = arith.constant dense<0.000000e+00> : vector<16x256xf32>
    %118 = tpu.matmul %116, %117, %cst_133 {dimension_numbers = #tpu.dot_dimension_numbers<[1], [0], [0], [1], [0, 0, 1, 1], [], []>} : vector<16x64xf32>, vector<64x256xf32>, vector<16x256xf32> -> vector<16x256xf32>
    %c0_134 = arith.constant 0 : index
    %c0_135 = arith.constant 0 : index
    %c0_136 = arith.constant 0 : index
    %119 = vector.load %arg16[%c0_134, %c0_135, %c0_136] : memref<1x8x256xf32, #tpu.memory_space<vmem>>, vector<1x8x256xf32>
    %120 = vector.shape_cast %119 : vector<1x8x256xf32> to vector<8x256xf32>
    %121 = tpu.concatenate %118, %120 in 0 : vector<16x256xf32>, vector<8x256xf32> -> vector<24x256xf32>
    %c0_137 = arith.constant 0 : index
    %c0_138 = arith.constant 0 : index
    %c0_139 = arith.constant 0 : index
    %122 = vector.load %arg15[%c0_137, %c0_138, %c0_139] : memref<9x256x256xf32, #tpu.memory_space<vmem>>, vector<1x256x256xf32>
    %123 = vector.shape_cast %122 : vector<1x256x256xf32> to vector<256x256xf32>
    %cst_140 = arith.constant dense<0.000000e+00> : vector<24x256xf32>
    %124 = tpu.matmul %121, %123, %cst_140 {dimension_numbers = #tpu.dot_dimension_numbers<[1], [0], [0], [1], [0, 0, 1, 1], [], []>} : vector<24x256xf32>, vector<256x256xf32>, vector<24x256xf32> -> vector<24x256xf32>
    %c1_141 = arith.constant 1 : index
    %c0_142 = arith.constant 0 : index
    %c0_143 = arith.constant 0 : index
    %125 = vector.load %arg15[%c1_141, %c0_142, %c0_143] : memref<9x256x256xf32, #tpu.memory_space<vmem>>, vector<1x256x256xf32>
    %126 = vector.shape_cast %125 : vector<1x256x256xf32> to vector<256x256xf32>
    %cst_144 = arith.constant dense<0.000000e+00> : vector<24x256xf32>
    %127 = tpu.matmul %121, %126, %cst_144 {dimension_numbers = #tpu.dot_dimension_numbers<[1], [0], [0], [1], [0, 0, 1, 1], [], []>} : vector<24x256xf32>, vector<256x256xf32>, vector<24x256xf32> -> vector<24x256xf32>
    %c2_145 = arith.constant 2 : index
    %c0_146 = arith.constant 0 : index
    %c0_147 = arith.constant 0 : index
    %128 = vector.load %arg15[%c2_145, %c0_146, %c0_147] : memref<9x256x256xf32, #tpu.memory_space<vmem>>, vector<1x256x256xf32>
    %129 = vector.shape_cast %128 : vector<1x256x256xf32> to vector<256x256xf32>
    %cst_148 = arith.constant dense<0.000000e+00> : vector<24x256xf32>
    %130 = tpu.matmul %121, %129, %cst_148 {dimension_numbers = #tpu.dot_dimension_numbers<[1], [0], [0], [1], [0, 0, 1, 1], [], []>} : vector<24x256xf32>, vector<256x256xf32>, vector<24x256xf32> -> vector<24x256xf32>
    %c3_149 = arith.constant 3 : index
    %c0_150 = arith.constant 0 : index
    %c0_151 = arith.constant 0 : index
    %131 = vector.load %arg15[%c3_149, %c0_150, %c0_151] : memref<9x256x256xf32, #tpu.memory_space<vmem>>, vector<1x256x256xf32>
    %132 = vector.shape_cast %131 : vector<1x256x256xf32> to vector<256x256xf32>
    %cst_152 = arith.constant dense<0.000000e+00> : vector<24x256xf32>
    %133 = tpu.matmul %121, %132, %cst_152 {dimension_numbers = #tpu.dot_dimension_numbers<[1], [0], [0], [1], [0, 0, 1, 1], [], []>} : vector<24x256xf32>, vector<256x256xf32>, vector<24x256xf32> -> vector<24x256xf32>
    %c4_153 = arith.constant 4 : index
    %c0_154 = arith.constant 0 : index
    %c0_155 = arith.constant 0 : index
    %134 = vector.load %arg15[%c4_153, %c0_154, %c0_155] : memref<9x256x256xf32, #tpu.memory_space<vmem>>, vector<1x256x256xf32>
    %135 = vector.shape_cast %134 : vector<1x256x256xf32> to vector<256x256xf32>
    %cst_156 = arith.constant dense<0.000000e+00> : vector<24x256xf32>
    %136 = tpu.matmul %121, %135, %cst_156 {dimension_numbers = #tpu.dot_dimension_numbers<[1], [0], [0], [1], [0, 0, 1, 1], [], []>} : vector<24x256xf32>, vector<256x256xf32>, vector<24x256xf32> -> vector<24x256xf32>
    %c5_157 = arith.constant 5 : index
    %c0_158 = arith.constant 0 : index
    %c0_159 = arith.constant 0 : index
    %137 = vector.load %arg15[%c5_157, %c0_158, %c0_159] : memref<9x256x256xf32, #tpu.memory_space<vmem>>, vector<1x256x256xf32>
    %138 = vector.shape_cast %137 : vector<1x256x256xf32> to vector<256x256xf32>
    %cst_160 = arith.constant dense<0.000000e+00> : vector<24x256xf32>
    %139 = tpu.matmul %121, %138, %cst_160 {dimension_numbers = #tpu.dot_dimension_numbers<[1], [0], [0], [1], [0, 0, 1, 1], [], []>} : vector<24x256xf32>, vector<256x256xf32>, vector<24x256xf32> -> vector<24x256xf32>
    %c6_161 = arith.constant 6 : index
    %c0_162 = arith.constant 0 : index
    %c0_163 = arith.constant 0 : index
    %140 = vector.load %arg15[%c6_161, %c0_162, %c0_163] : memref<9x256x256xf32, #tpu.memory_space<vmem>>, vector<1x256x256xf32>
    %141 = vector.shape_cast %140 : vector<1x256x256xf32> to vector<256x256xf32>
    %cst_164 = arith.constant dense<0.000000e+00> : vector<24x256xf32>
    %142 = tpu.matmul %121, %141, %cst_164 {dimension_numbers = #tpu.dot_dimension_numbers<[1], [0], [0], [1], [0, 0, 1, 1], [], []>} : vector<24x256xf32>, vector<256x256xf32>, vector<24x256xf32> -> vector<24x256xf32>
    %c7_165 = arith.constant 7 : index
    %c0_166 = arith.constant 0 : index
    %c0_167 = arith.constant 0 : index
    %143 = vector.load %arg15[%c7_165, %c0_166, %c0_167] : memref<9x256x256xf32, #tpu.memory_space<vmem>>, vector<1x256x256xf32>
    %144 = vector.shape_cast %143 : vector<1x256x256xf32> to vector<256x256xf32>
    %cst_168 = arith.constant dense<0.000000e+00> : vector<24x256xf32>
    %145 = tpu.matmul %121, %144, %cst_168 {dimension_numbers = #tpu.dot_dimension_numbers<[1], [0], [0], [1], [0, 0, 1, 1], [], []>} : vector<24x256xf32>, vector<256x256xf32>, vector<24x256xf32> -> vector<24x256xf32>
    %c8_169 = arith.constant 8 : index
    %c0_170 = arith.constant 0 : index
    %c0_171 = arith.constant 0 : index
    %146 = vector.load %arg15[%c8_169, %c0_170, %c0_171] : memref<9x256x256xf32, #tpu.memory_space<vmem>>, vector<1x256x256xf32>
    %147 = vector.shape_cast %146 : vector<1x256x256xf32> to vector<256x256xf32>
    %cst_172 = arith.constant dense<0.000000e+00> : vector<24x256xf32>
    %148 = tpu.matmul %121, %147, %cst_172 {dimension_numbers = #tpu.dot_dimension_numbers<[1], [0], [0], [1], [0, 0, 1, 1], [], []>} : vector<24x256xf32>, vector<256x256xf32>, vector<24x256xf32> -> vector<24x256xf32>
    %149 = tpu.concatenate %124, %127, %130, %133, %136, %139, %142, %145, %148 in 0 : vector<24x256xf32>, vector<24x256xf32>, vector<24x256xf32>, vector<24x256xf32>, vector<24x256xf32>, vector<24x256xf32>, vector<24x256xf32>, vector<24x256xf32>, vector<24x256xf32> -> vector<216x256xf32>
    %c0_173 = arith.constant 0 : index
    %c0_174 = arith.constant 0 : index
    %150 = vector.load %arg17[%c0_173, %c0_174] : memref<8x216xf32, #tpu.memory_space<vmem>>, vector<8x216xf32>
    %cst_175 = arith.constant dense<0.000000e+00> : vector<8x256xf32>
    %151 = tpu.matmul %150, %149, %cst_175 {dimension_numbers = #tpu.dot_dimension_numbers<[1], [0], [0], [1], [0, 0, 1, 1], [], []>} : vector<8x216xf32>, vector<216x256xf32>, vector<8x256xf32> -> vector<8x256xf32>
    %c0_176 = arith.constant 0 : index
    %c0_177 = arith.constant 0 : index
    %152 = vector.load %arg18[%c0_176, %c0_177] : memref<8x1xf32, #tpu.memory_space<vmem>>, vector<8x1xf32>
    %153 = vector.broadcast %152 : vector<8x1xf32> to vector<8x256xf32>
    %154 = arith.addf %151, %153 : vector<8x256xf32>
    %cst_178 = arith.constant 0.000000e+00 : f32
    %155 = vector.broadcast %cst_178 : f32 to vector<8x256xf32>
    %156 = arith.maximumf %154, %155 : vector<8x256xf32>
    %c0_179 = arith.constant 0 : index
    %c0_180 = arith.constant 0 : index
    %c0_181 = arith.constant 0 : index
    %157 = vector.load %arg19[%c0_179, %c0_180, %c0_181] : memref<1x8x256xf32, #tpu.memory_space<vmem>>, vector<1x8x256xf32>
    %158 = vector.shape_cast %157 : vector<1x8x256xf32> to vector<8x256xf32>
    %159 = vector.shape_cast %156 : vector<8x256xf32> to vector<1x8x256xf32>
    tpu.vector_store %arg19[%c0_179, %c0_180, %c0_181], %159 {strides = array<i32>} : memref<1x8x256xf32, #tpu.memory_space<vmem>>, vector<1x8x256xf32>,
    return
  }
  func.func @transform_0(%arg0: i32) -> (i32, i32, i32) {
    %c0_i32 = arith.constant 0 : i32
    %c0_i32_0 = arith.constant 0 : i32
    %c0_i32_1 = arith.constant 0 : i32
    return %arg0, %c0_i32, %c0_i32_0 : i32, i32, i32
  }
  func.func @transform_1(%arg0: i32) -> (i32, i32) {
    %c0_i32 = arith.constant 0 : i32
    %c0_i32_0 = arith.constant 0 : i32
    %c0_i32_1 = arith.constant 0 : i32
    return %c0_i32, %c0_i32_0 : i32, i32
  }
  func.func @transform_2(%arg0: i32) -> (i32, i32, i32) {
    %c0_i32 = arith.constant 0 : i32
    %c0_i32_0 = arith.constant 0 : i32
    %c0_i32_1 = arith.constant 0 : i32
    %c0_i32_2 = arith.constant 0 : i32
    return %c0_i32, %c0_i32_0, %c0_i32_1 : i32, i32, i32
  }
  func.func @transform_3(%arg0: i32) -> (i32, i32, i32) {
    %c0_i32 = arith.constant 0 : i32
    %c0_i32_0 = arith.constant 0 : i32
    %c0_i32_1 = arith.constant 0 : i32
    return %arg0, %c0_i32, %c0_i32_0 : i32, i32, i32
  }
  func.func @transform_4(%arg0: i32) -> (i32, i32) {
    %c0_i32 = arith.constant 0 : i32
    %c0_i32_0 = arith.constant 0 : i32
    %c0_i32_1 = arith.constant 0 : i32
    return %c0_i32, %c0_i32_0 : i32, i32
  }
  func.func @transform_5(%arg0: i32) -> (i32, i32) {
    %c0_i32 = arith.constant 0 : i32
    %c0_i32_0 = arith.constant 0 : i32
    %c0_i32_1 = arith.constant 0 : i32
    return %c0_i32, %c0_i32_0 : i32, i32
  }
  func.func @transform_6(%arg0: i32) -> (i32, i32) {
    %c0_i32 = arith.constant 0 : i32
    %c0_i32_0 = arith.constant 0 : i32
    %c0_i32_1 = arith.constant 0 : i32
    return %c0_i32, %c0_i32_0 : i32, i32
  }
  func.func @transform_7(%arg0: i32) -> (i32, i32) {
    %c0_i32 = arith.constant 0 : i32
    %c0_i32_0 = arith.constant 0 : i32
    %c0_i32_1 = arith.constant 0 : i32
    return %c0_i32, %c0_i32_0 : i32, i32
  }
  func.func @transform_8(%arg0: i32) -> (i32, i32) {
    %c0_i32 = arith.constant 0 : i32
    %c0_i32_0 = arith.constant 0 : i32
    %c0_i32_1 = arith.constant 0 : i32
    return %c0_i32, %c0_i32_0 : i32, i32
  }
  func.func @transform_9(%arg0: i32) -> (i32, i32, i32) {
    %c0_i32 = arith.constant 0 : i32
    %c0_i32_0 = arith.constant 0 : i32
    %c0_i32_1 = arith.constant 0 : i32
    %c0_i32_2 = arith.constant 0 : i32
    return %c0_i32, %c0_i32_0, %c0_i32_1 : i32, i32, i32
  }
  func.func @transform_10(%arg0: i32) -> (i32, i32, i32) {
    %c0_i32 = arith.constant 0 : i32
    %c0_i32_0 = arith.constant 0 : i32
    %c0_i32_1 = arith.constant 0 : i32
    return %arg0, %c0_i32, %c0_i32_0 : i32, i32, i32
  }
  func.func @transform_11(%arg0: i32) -> (i32, i32) {
    %c0_i32 = arith.constant 0 : i32
    %c0_i32_0 = arith.constant 0 : i32
    %c0_i32_1 = arith.constant 0 : i32
    return %c0_i32, %c0_i32_0 : i32, i32
  }
  func.func @transform_12(%arg0: i32) -> (i32, i32) {
    %c0_i32 = arith.constant 0 : i32
    %c0_i32_0 = arith.constant 0 : i32
    %c0_i32_1 = arith.constant 0 : i32
    return %c0_i32, %c0_i32_0 : i32, i32
  }
  func.func @transform_13(%arg0: i32) -> (i32, i32) {
    %c0_i32 = arith.constant 0 : i32
    %c0_i32_0 = arith.constant 0 : i32
    %c0_i32_1 = arith.constant 0 : i32
    return %c0_i32, %c0_i32_0 : i32, i32
  }
  func.func @transform_14(%arg0: i32) -> (i32, i32, i32) {
    %c0_i32 = arith.constant 0 : i32
    %c0_i32_0 = arith.constant 0 : i32
    %c0_i32_1 = arith.constant 0 : i32
    %c0_i32_2 = arith.constant 0 : i32
    return %c0_i32, %c0_i32_0, %c0_i32_1 : i32, i32, i32
  }
  func.func @transform_15(%arg0: i32) -> (i32, i32, i32) {
    %c0_i32 = arith.constant 0 : i32
    %c0_i32_0 = arith.constant 0 : i32
    %c0_i32_1 = arith.constant 0 : i32
    return %arg0, %c0_i32, %c0_i32_0 : i32, i32, i32
  }
  func.func @transform_16(%arg0: i32) -> (i32, i32) {
    %c0_i32 = arith.constant 0 : i32
    %c0_i32_0 = arith.constant 0 : i32
    %c0_i32_1 = arith.constant 0 : i32
    return %c0_i32, %c0_i32_0 : i32, i32
  }
  func.func @transform_17(%arg0: i32) -> (i32, i32) {
    %c0_i32 = arith.constant 0 : i32
    %c0_i32_0 = arith.constant 0 : i32
    %c0_i32_1 = arith.constant 0 : i32
    return %c0_i32, %c0_i32_0 : i32, i32
  }
  func.func @transform_18(%arg0: i32) -> (i32, i32, i32) {
    %c0_i32 = arith.constant 0 : i32
    %c0_i32_0 = arith.constant 0 : i32
    %c0_i32_1 = arith.constant 0 : i32
    return %arg0, %c0_i32, %c0_i32_0 : i32, i32, i32
  }
}

</mosaic_0001>

<llo_original>
// kernel: tpu_custom_call.1
$region0: #{tpu_custom_call.1}
  #allocation0 [shape = 'u32[]', space=smem, size = 0x4, offset = 0x4, fixed_abs, tag = 'smem constant byte address 0x4 - core index']
  #allocation1 [shape = 'u32[144,128]{1,0:T(1,128)}', space=vmem, size = 0x12000, scoped, tag = 'internal scratch']
  %s0 = inlined_call_operand.vmem [shape: f32[2,32,4], index: 0, kind: input, shape index: {}]
  %s1 = inlined_call_operand.hbm [shape: f32[4,16], index: 1, kind: input, shape index: {}]
  %s2 = inlined_call_operand.hbm [shape: f32[9,16,16], index: 2, kind: input, shape index: {}]
  %s3 = inlined_call_operand.hbm [shape: f32[2,16,16], index: 3, kind: input, shape index: {}]
  %s4 = inlined_call_operand.hbm [shape: f32[24,432], index: 4, kind: input, shape index: {}]
  %s5 = inlined_call_operand.vmem [shape: f32[24,1], index: 5, kind: input, shape index: {}]
  %s6 = inlined_call_operand.hbm [shape: f32[24,216], index: 6, kind: input, shape index: {}]
  %s7 = inlined_call_operand.vmem [shape: f32[24,1], index: 7, kind: input, shape index: {}]
  %s8 = inlined_call_operand.hbm [shape: f32[16,64], index: 8, kind: input, shape index: {}]
  %s9 = inlined_call_operand.hbm [shape: f32[9,64,64], index: 9, kind: input, shape index: {}]
  %s10 = inlined_call_operand.hbm [shape: f32[2,8,64], index: 10, kind: input, shape index: {}]
  %s11 = inlined_call_operand.hbm [shape: f32[16,288], index: 11, kind: input, shape index: {}]
  %s12 = inlined_call_operand.vmem [shape: f32[16,1], index: 12, kind: input, shape index: {}]
  %s13 = inlined_call_operand.hbm [shape: f32[64,256], index: 13, kind: input, shape index: {}]
  %s14 = inlined_call_operand.hbm [shape: f32[9,256,256], index: 14, kind: input, shape index: {}]
  %s15 = inlined_call_operand.hbm [shape: f32[2,8,256], index: 15, kind: input, shape index: {}]
  %s16 = inlined_call_operand.hbm [shape: f32[8,216], index: 16, kind: input, shape index: {}]
  %s17 = inlined_call_operand.vmem [shape: f32[8,1], index: 17, kind: input, shape index: {}]
  %s18 = inlined_call_operand.hbm [shape: f32[2,8,256], index: 18, kind: output, shape index: {}]
  %s19 = sld [smem:[#allocation0]]
  $region157: #{tpu_custom_call.1} parent=0
    _
  %s21 = ssub.s32 1, %s19
  %s22 = scalar_select 0, %s21, %s19
  $region1: #{tpu_custom_call.1} parent=0
    #allocation2 [shape = 'u8[2048]{0}', space=vmem, size = 0x800, scoped, tag = 'input window, operand 1, single buffered']
    #allocation3 [shape = 's32[2]{0}', space=sflag, size = 0x8, scoped, tag = 'scoped memory for tpu_custom_call.1']
    #allocation4 [shape = 's32[2]{0}', space=sflag, size = 0x8, scoped, tag = 'scoped memory for tpu_custom_call.1']
    #allocation5 [shape = 'u8[73728]{0}', space=vmem, size = 0x12000, scoped, tag = 'input window, operand 2, single buffered']
    #allocation6 [shape = 's32[1]{0}', space=sflag, size = 0x4, scoped, tag = 'scoped memory for tpu_custom_call.1']
    #allocation7 [shape = 'u8[16384]{0}', space=vmem, size = 0x4000, scoped, tag = 'input window, operand 3']
    #allocation8 [shape = 'u8[49152]{0}', space=vmem, size = 0xc000, scoped, tag = 'input window, operand 4, single buffered']
    #allocation9 [shape = 'u8[24576]{0}', space=vmem, size = 0x6000, scoped, tag = 'input window, operand 6, single buffered']
    #allocation10 [shape = 's32[1]{0}', space=sflag, size = 0x4, scoped, tag = 'scoped memory for tpu_custom_call.1']
    #allocation11 [shape = 'u8[8192]{0}', space=vmem, size = 0x2000, scoped, tag = 'input window, operand 8, single buffered']
    #allocation12 [shape = 'u8[294912]{0}', space=vmem, size = 0x48000, scoped, tag = 'input window, operand 9, single buffered']
    #allocation13 [shape = 's32[1]{0}', space=sflag, size = 0x4, scoped, tag = 'scoped memory for tpu_custom_call.1']
    #allocation14 [shape = 'u8[8192]{0}', space=vmem, size = 0x2000, scoped, tag = 'input window, operand 10']
    #allocation15 [shape = 'u8[24576]{0}', space=vmem, size = 0x6000, scoped, tag = 'input window, operand 11, single buffered']
    #allocation16 [shape = 'u8[65536]{0}', space=vmem, size = 0x10000, scoped, tag = 'input window, operand 13, single buffered']
    #allocation17 [shape = 'u8[2359296]{0}', space=vmem, size = 0x240000, scoped, tag = 'input window, operand 14, single buffered']
    #allocation18 [shape = 'u8[16384]{0}', space=vmem, size = 0x4000, scoped, tag = 'input window, operand 15']
    #allocation19 [shape = 's32[2]{0}', space=sflag, size = 0x8, scoped, tag = 'scoped memory for tpu_custom_call.1']
    #allocation20 [shape = 'u8[8192]{0}', space=vmem, size = 0x2000, scoped, tag = 'input window, operand 16, single buffered']
    #allocation21 [shape = 'u8[16384]{0}', space=vmem, size = 0x4000, scoped, tag = 'output window, operand 0']
    %23 = vsyncpa [#allocation3], 0
    %24 = vsyncpa [#allocation6], 0
    %25 = vsyncpa [#allocation10], 0
    %26 = vsyncpa [#allocation13], 0
    %27 = vsyncpa [#allocation19], 0
    %s28 = scalar_lea.sflag [#allocation19], 1
    %29 = vsyncpa %s28, 0
    %30 = vsyncpa [#allocation4], 0
    %s31 = scalar_lea.sflag [#allocation4], 1
    %32 = vsyncpa %s31, 0
    loop: start=0, step=1, limit=4
    $region2: #{tpu_custom_call.1} parent=1 // loop_pre_header
      _
    $region3: #{tpu_custom_call.1} parent=1 // loop_header
      %s34 = sphi 0, %s38
      %p35 = scmp.ge.s32.totalorder %s34, 4
      %s44 = sphi 0, %s46
      %s47 = sphi 0, %s44
      %s48 = sphi 0, %s47
      %s64 = sphi 0, %s48
      %s68 = sphi 0, %s68
      %s70 = sphi 0, %s68
      %s71 = sphi 0, %s70
      %s85 = sphi 0, %s71
      %s89 = sphi 0, %s89
      %s91 = sphi 0, %s89
      %s92 = sphi 0, %s91
      %s106 = sphi 0, %s92
      %s112 = sphi 0, %s114
      %s115 = sphi 0, %s112
      %s116 = sphi 0, %s115
      %s132 = sphi 0, %s116
      %s136 = sphi 0, %s136
      %s138 = sphi 0, %s136
      %s139 = sphi 0, %s138
      %s153 = sphi 0, %s139
      %s157 = sphi 0, %s157
      %s159 = sphi 0, %s157
      %s160 = sphi 0, %s159
      %s174 = sphi 0, %s160
      %s178 = sphi 0, %s178
      %s180 = sphi 0, %s178
      %s181 = sphi 0, %s180
      %s195 = sphi 0, %s181
      %s199 = sphi 0, %s199
      %s201 = sphi 0, %s199
      %s202 = sphi 0, %s201
      %s216 = sphi 0, %s202
      %s220 = sphi 0, %s220
      %s222 = sphi 0, %s220
      %s223 = sphi 0, %s222
      %s237 = sphi 0, %s223
      %s241 = sphi 0, %s241
      %s243 = sphi 0, %s241
      %s244 = sphi 0, %s243
      %s258 = sphi 0, %s244
      %s264 = sphi 0, %s266
      %s267 = sphi 0, %s264
      %s268 = sphi 0, %s267
      %s284 = sphi 0, %s268
      %s288 = sphi 0, %s288
      %s290 = sphi 0, %s288
      %s291 = sphi 0, %s290
      %s305 = sphi 0, %s291
      %s309 = sphi 0, %s309
      %s311 = sphi 0, %s309
      %s312 = sphi 0, %s311
      %s326 = sphi 0, %s312
      %s330 = sphi 0, %s330
      %s332 = sphi 0, %s330
      %s333 = sphi 0, %s332
      %s347 = sphi 0, %s333
      %s351 = sphi 0, %s351
      %s353 = sphi 0, %s351
      %s354 = sphi 0, %s353
      %s368 = sphi 0, %s354
      %s374 = sphi 0, %s376
      %s377 = sphi 0, %s374
      %s378 = sphi 0, %s377
      %s394 = sphi 0, %s378
      %s398 = sphi 0, %s398
      %s400 = sphi 0, %s398
      %s401 = sphi 0, %s400
      %s415 = sphi 0, %s401
      %s419 = sphi 0, %s419
      %s421 = sphi 0, %s419
      %s422 = sphi 0, %s421
      %s436 = sphi 0, %s422
      %s442 = sphi 0, %s444
      %s445 = sphi 0, %s442
      %s446 = sphi 0, %s445
      %s462 = sphi 0, %s446
    $region4: #{tpu_custom_call.1} parent=1 // loop_header_branch
      %37 = sbr.rel (%p35) target = $region8
    $region5: #{tpu_custom_call.1} parent=1 // loop_body
      %s39 = ssub.s32 %s34, 1
      %s40 = ssub.s32 %s34, 2
      %s41 = sadd.s32 %s34, 1
      %s42 = ssub.s32 %s34, %s41
      %p43 = scmp.eq.s32.totalorder %s42, 0
      %s45 = sadd.s32 %s44, 1
      %s46 = scalar_select %p43, %s44, %s45
      %p49 = pneg %p43
      %p50 = scmp.eq.s32.totalorder %s34, 1
      %p51 = por %p49, %p50
      %p52 = scmp.ne.s32.totalorder %s44, %s47
      %p53 = scmp.eq.s32.totalorder %s34, 0
      %p54 = por %p52, %p53
      %p55 = scmp.ne.s32.totalorder %s44, %s47
      %p56 = scmp.eq.s32.totalorder %s39, 1
      %p57 = por %p55, %p56
      %p58 = scmp.ne.s32.totalorder %s47, %s48
      %p59 = scmp.eq.s32.totalorder %s39, 0
      %p60 = por %p58, %p59
      %p61 = scmp.ne.s32.totalorder %s47, %s48
      %p62 = scmp.eq.s32.totalorder %s40, 1
      %p63 = por %p61, %p62
      %p65 = scmp.ne.s32.totalorder %s48, %s64
      %p66 = scmp.eq.s32.totalorder %s40, 0
      %p67 = por %p65, %p66
      %s69 = sadd.s32 %s68, 1
      %p72 = scmp.eq.s32.totalorder %s34, 1
      %p73 = scmp.ne.s32.totalorder %s68, %s70
      %p74 = scmp.eq.s32.totalorder %s34, 0
      %p75 = por %p73, %p74
      %p76 = scmp.ne.s32.totalorder %s68, %s70
      %p77 = scmp.eq.s32.totalorder %s39, 1
      %p78 = por %p76, %p77
      %p79 = scmp.ne.s32.totalorder %s70, %s71
      %p80 = scmp.eq.s32.totalorder %s39, 0
      %p81 = por %p79, %p80
      %p82 = scmp.ne.s32.totalorder %s70, %s71
      %p83 = scmp.eq.s32.totalorder %s40, 1
      %p84 = por %p82, %p83
      %p86 = scmp.ne.s32.totalorder %s71, %s85
      %p87 = scmp.eq.s32.totalorder %s40, 0
      %p88 = por %p86, %p87
      %s90 = sadd.s32 %s89, 1
      %p93 = scmp.eq.s32.totalorder %s34, 1
      %p94 = scmp.ne.s32.totalorder %s89, %s91
      %p95 = scmp.eq.s32.totalorder %s34, 0
      %p96 = por %p94, %p95
      %p97 = scmp.ne.s32.totalorder %s89, %s91
      %p98 = scmp.eq.s32.totalorder %s39, 1
      %p99 = por %p97, %p98
      %p100 = scmp.ne.s32.totalorder %s91, %s92
      %p101 = scmp.eq.s32.totalorder %s39, 0
      %p102 = por %p100, %p101
      %p103 = scmp.ne.s32.totalorder %s91, %s92
      %p104 = scmp.eq.s32.totalorder %s40, 1
      %p105 = por %p103, %p104
      %p107 = scmp.ne.s32.totalorder %s92, %s106
      %p108 = scmp.eq.s32.totalorder %s40, 0
      %p109 = por %p107, %p108
      %s110 = ssub.s32 %s34, %s41
      %p111 = scmp.eq.s32.totalorder %s110, 0
      %s113 = sadd.s32 %s112, 1
      %s114 = scalar_select %p111, %s112, %s113
      %p117 = pneg %p111
      %p118 = scmp.eq.s32.totalorder %s34, 1
      %p119 = por %p117, %p118
      %p120 = scmp.ne.s32.totalorder %s112, %s115
      %p121 = scmp.eq.s32.totalorder %s34, 0
      %p122 = por %p120, %p121
      %p123 = scmp.ne.s32.totalorder %s112, %s115
      %p124 = scmp.eq.s32.totalorder %s39, 1
      %p125 = por %p123, %p124
      %p126 = scmp.ne.s32.totalorder %s115, %s116
      %p127 = scmp.eq.s32.totalorder %s39, 0
      %p128 = por %p126, %p127
      %p129 = scmp.ne.s32.totalorder %s115, %s116
      %p130 = scmp.eq.s32.totalorder %s40, 1
      %p131 = por %p129, %p130
      %p133 = scmp.ne.s32.totalorder %s116, %s132
      %p134 = scmp.eq.s32.totalorder %s40, 0
      %p135 = por %p133, %p134
      %s137 = sadd.s32 %s136, 1
      %p140 = scmp.eq.s32.totalorder %s34, 1
      %p141 = scmp.ne.s32.totalorder %s136, %s138
      %p142 = scmp.eq.s32.totalorder %s34, 0
      %p143 = por %p141, %p142
      %p144 = scmp.ne.s32.totalorder %s136, %s138
      %p145 = scmp.eq.s32.totalorder %s39, 1
      %p146 = por %p144, %p145
      %p147 = scmp.ne.s32.totalorder %s138, %s139
      %p148 = scmp.eq.s32.totalorder %s39, 0
      %p149 = por %p147, %p148
      %p150 = scmp.ne.s32.totalorder %s138, %s139
      %p151 = scmp.eq.s32.totalorder %s40, 1
      %p152 = por %p150, %p151
      %p154 = scmp.ne.s32.totalorder %s139, %s153
      %p155 = scmp.eq.s32.totalorder %s40, 0
      %p156 = por %p154, %p155
      %s158 = sadd.s32 %s157, 1
      %p161 = scmp.eq.s32.totalorder %s34, 1
      %p162 = scmp.ne.s32.totalorder %s157, %s159
      %p163 = scmp.eq.s32.totalorder %s34, 0
      %p164 = por %p162, %p163
      %p165 = scmp.ne.s32.totalorder %s157, %s159
      %p166 = scmp.eq.s32.totalorder %s39, 1
      %p167 = por %p165, %p166
      %p168 = scmp.ne.s32.totalorder %s159, %s160
      %p169 = scmp.eq.s32.totalorder %s39, 0
      %p170 = por %p168, %p169
      %p171 = scmp.ne.s32.totalorder %s159, %s160
      %p172 = scmp.eq.s32.totalorder %s40, 1
      %p173 = por %p171, %p172
      %p175 = scmp.ne.s32.totalorder %s160, %s174
      %p176 = scmp.eq.s32.totalorder %s40, 0
      %p177 = por %p175, %p176
      %s179 = sadd.s32 %s178, 1
      %p182 = scmp.eq.s32.totalorder %s34, 1
      %p183 = scmp.ne.s32.totalorder %s178, %s180
      %p184 = scmp.eq.s32.totalorder %s34, 0
      %p185 = por %p183, %p184
      %p186 = scmp.ne.s32.totalorder %s178, %s180
      %p187 = scmp.eq.s32.totalorder %s39, 1
      %p188 = por %p186, %p187
      %p189 = scmp.ne.s32.totalorder %s180, %s181
      %p190 = scmp.eq.s32.totalorder %s39, 0
      %p191 = por %p189, %p190
      %p192 = scmp.ne.s32.totalorder %s180, %s181
      %p193 = scmp.eq.s32.totalorder %s40, 1
      %p194 = por %p192, %p193
      %p196 = scmp.ne.s32.totalorder %s181, %s195
      %p197 = scmp.eq.s32.totalorder %s40, 0
      %p198 = por %p196, %p197
      %s200 = sadd.s32 %s199, 1
      %p203 = scmp.eq.s32.totalorder %s34, 1
      %p204 = scmp.ne.s32.totalorder %s199, %s201
      %p205 = scmp.eq.s32.totalorder %s34, 0
      %p206 = por %p204, %p205
      %p207 = scmp.ne.s32.totalorder %s199, %s201
      %p208 = scmp.eq.s32.totalorder %s39, 1
      %p209 = por %p207, %p208
      %p210 = scmp.ne.s32.totalorder %s201, %s202
      %p211 = scmp.eq.s32.totalorder %s39, 0
      %p212 = por %p210, %p211
      %p213 = scmp.ne.s32.totalorder %s201, %s202
      %p214 = scmp.eq.s32.totalorder %s40, 1
      %p215 = por %p213, %p214
      %p217 = scmp.ne.s32.totalorder %s202, %s216
      %p218 = scmp.eq.s32.totalorder %s40, 0
      %p219 = por %p217, %p218
      %s221 = sadd.s32 %s220, 1
      %p224 = scmp.eq.s32.totalorder %s34, 1
      %p225 = scmp.ne.s32.totalorder %s220, %s222
      %p226 = scmp.eq.s32.totalorder %s34, 0
      %p227 = por %p225, %p226
      %p228 = scmp.ne.s32.totalorder %s220, %s222
      %p229 = scmp.eq.s32.totalorder %s39, 1
      %p230 = por %p228, %p229
      %p231 = scmp.ne.s32.totalorder %s222, %s223
      %p232 = scmp.eq.s32.totalorder %s39, 0
      %p233 = por %p231, %p232
      %p234 = scmp.ne.s32.totalorder %s222, %s223
      %p235 = scmp.eq.s32.totalorder %s40, 1
      %p236 = por %p234, %p235
      %p238 = scmp.ne.s32.totalorder %s223, %s237
      %p239 = scmp.eq.s32.totalorder %s40, 0
      %p240 = por %p238, %p239
      %s242 = sadd.s32 %s241, 1
      %p245 = scmp.eq.s32.totalorder %s34, 1
      %p246 = scmp.ne.s32.totalorder %s241, %s243
      %p247 = scmp.eq.s32.totalorder %s34, 0
      %p248 = por %p246, %p247
      %p249 = scmp.ne.s32.totalorder %s241, %s243
      %p250 = scmp.eq.s32.totalorder %s39, 1
      %p251 = por %p249, %p250
      %p252 = scmp.ne.s32.totalorder %s243, %s244
      %p253 = scmp.eq.s32.totalorder %s39, 0
      %p254 = por %p252, %p253
      %p255 = scmp.ne.s32.totalorder %s243, %s244
      %p256 = scmp.eq.s32.totalorder %s40, 1
      %p257 = por %p255, %p256
      %p259 = scmp.ne.s32.totalorder %s244, %s258
      %p260 = scmp.eq.s32.totalorder %s40, 0
      %p261 = por %p259, %p260
      %s262 = ssub.s32 %s34, %s41
      %p263 = scmp.eq.s32.totalorder %s262, 0
      %s265 = sadd.s32 %s264, 1
      %s266 = scalar_select %p263, %s264, %s265
      %p269 = pneg %p263
      %p270 = scmp.eq.s32.totalorder %s34, 1
      %p271 = por %p269, %p270
      %p272 = scmp.ne.s32.totalorder %s264, %s267
      %p273 = scmp.eq.s32.totalorder %s34, 0
      %p274 = por %p272, %p273
      %p275 = scmp.ne.s32.totalorder %s264, %s267
      %p276 = scmp.eq.s32.totalorder %s39, 1
      %p277 = por %p275, %p276
      %p278 = scmp.ne.s32.totalorder %s267, %s268
      %p279 = scmp.eq.s32.totalorder %s39, 0
      %p280 = por %p278, %p279
      %p281 = scmp.ne.s32.totalorder %s267, %s268
      %p282 = scmp.eq.s32.totalorder %s40, 1
      %p283 = por %p281, %p282
      %p285 = scmp.ne.s32.totalorder %s268, %s284
      %p286 = scmp.eq.s32.totalorder %s40, 0
      %p287 = por %p285, %p286
      %s289 = sadd.s32 %s288, 1
      %p292 = scmp.eq.s32.totalorder %s34, 1
      %p293 = scmp.ne.s32.totalorder %s288, %s290
      %p294 = scmp.eq.s32.totalorder %s34, 0
      %p295 = por %p293, %p294
      %p296 = scmp.ne.s32.totalorder %s288, %s290
      %p297 = scmp.eq.s32.totalorder %s39, 1
      %p298 = por %p296, %p297
      %p299 = scmp.ne.s32.totalorder %s290, %s291
      %p300 = scmp.eq.s32.totalorder %s39, 0
      %p301 = por %p299, %p300
      %p302 = scmp.ne.s32.totalorder %s290, %s291
      %p303 = scmp.eq.s32.totalorder %s40, 1
      %p304 = por %p302, %p303
      %p306 = scmp.ne.s32.totalorder %s291, %s305
      %p307 = scmp.eq.s32.totalorder %s40, 0
      %p308 = por %p306, %p307
      %s310 = sadd.s32 %s309, 1
      %p313 = scmp.eq.s32.totalorder %s34, 1
      %p314 = scmp.ne.s32.totalorder %s309, %s311
      %p315 = scmp.eq.s32.totalorder %s34, 0
      %p316 = por %p314, %p315
      %p317 = scmp.ne.s32.totalorder %s309, %s311
      %p318 = scmp.eq.s32.totalorder %s39, 1
      %p319 = por %p317, %p318
      %p320 = scmp.ne.s32.totalorder %s311, %s312
      %p321 = scmp.eq.s32.totalorder %s39, 0
      %p322 = por %p320, %p321
      %p323 = scmp.ne.s32.totalorder %s311, %s312
      %p324 = scmp.eq.s32.totalorder %s40, 1
      %p325 = por %p323, %p324
      %p327 = scmp.ne.s32.totalorder %s312, %s326
      %p328 = scmp.eq.s32.totalorder %s40, 0
      %p329 = por %p327, %p328
      %s331 = sadd.s32 %s330, 1
      %p334 = scmp.eq.s32.totalorder %s34, 1
      %p335 = scmp.ne.s32.totalorder %s330, %s332
      %p336 = scmp.eq.s32.totalorder %s34, 0
      %p337 = por %p335, %p336
      %p338 = scmp.ne.s32.totalorder %s330, %s332
      %p339 = scmp.eq.s32.totalorder %s39, 1
      %p340 = por %p338, %p339
      %p341 = scmp.ne.s32.totalorder %s332, %s333
      %p342 = scmp.eq.s32.totalorder %s39, 0
      %p343 = por %p341, %p342
      %p344 = scmp.ne.s32.totalorder %s332, %s333
      %p345 = scmp.eq.s32.totalorder %s40, 1
      %p346 = por %p344, %p345
      %p348 = scmp.ne.s32.totalorder %s333, %s347
      %p349 = scmp.eq.s32.totalorder %s40, 0
      %p350 = por %p348, %p349
      %s352 = sadd.s32 %s351, 1
      %p355 = scmp.eq.s32.totalorder %s34, 1
      %p356 = scmp.ne.s32.totalorder %s351, %s353
      %p357 = scmp.eq.s32.totalorder %s34, 0
      %p358 = por %p356, %p357
      %p359 = scmp.ne.s32.totalorder %s351, %s353
      %p360 = scmp.eq.s32.totalorder %s39, 1
      %p361 = por %p359, %p360
      %p362 = scmp.ne.s32.totalorder %s353, %s354
      %p363 = scmp.eq.s32.totalorder %s39, 0
      %p364 = por %p362, %p363
      %p365 = scmp.ne.s32.totalorder %s353, %s354
      %p366 = scmp.eq.s32.totalorder %s40, 1
      %p367 = por %p365, %p366
      %p369 = scmp.ne.s32.totalorder %s354, %s368
      %p370 = scmp.eq.s32.totalorder %s40, 0
      %p371 = por %p369, %p370
      %s372 = ssub.s32 %s34, %s41
      %p373 = scmp.eq.s32.totalorder %s372, 0
      %s375 = sadd.s32 %s374, 1
      %s376 = scalar_select %p373, %s374, %s375
      %p379 = pneg %p373
      %p380 = scmp.eq.s32.totalorder %s34, 1
      %p381 = por %p379, %p380
      %p382 = scmp.ne.s32.totalorder %s374, %s377
      %p383 = scmp.eq.s32.totalorder %s34, 0
      %p384 = por %p382, %p383
      %p385 = scmp.ne.s32.totalorder %s374, %s377
      %p386 = scmp.eq.s32.totalorder %s39, 1
      %p387 = por %p385, %p386
      %p388 = scmp.ne.s32.totalorder %s377, %s378
      %p389 = scmp.eq.s32.totalorder %s39, 0
      %p390 = por %p388, %p389
      %p391 = scmp.ne.s32.totalorder %s377, %s378
      %p392 = scmp.eq.s32.totalorder %s40, 1
      %p393 = por %p391, %p392
      %p395 = scmp.ne.s32.totalorder %s378, %s394
      %p396 = scmp.eq.s32.totalorder %s40, 0
      %p397 = por %p395, %p396
      %s399 = sadd.s32 %s398, 1
      %p402 = scmp.eq.s32.totalorder %s34, 1
      %p403 = scmp.ne.s32.totalorder %s398, %s400
      %p404 = scmp.eq.s32.totalorder %s34, 0
      %p405 = por %p403, %p404
      %p406 = scmp.ne.s32.totalorder %s398, %s400
      %p407 = scmp.eq.s32.totalorder %s39, 1
      %p408 = por %p406, %p407
      %p409 = scmp.ne.s32.totalorder %s400, %s401
      %p410 = scmp.eq.s32.totalorder %s39, 0
      %p411 = por %p409, %p410
      %p412 = scmp.ne.s32.totalorder %s400, %s401
      %p413 = scmp.eq.s32.totalorder %s40, 1
      %p414 = por %p412, %p413
      %p416 = scmp.ne.s32.totalorder %s401, %s415
      %p417 = scmp.eq.s32.totalorder %s40, 0
      %p418 = por %p416, %p417
      %s420 = sadd.s32 %s419, 1
      %p423 = scmp.eq.s32.totalorder %s34, 1
      %p424 = scmp.ne.s32.totalorder %s419, %s421
      %p425 = scmp.eq.s32.totalorder %s34, 0
      %p426 = por %p424, %p425
      %p427 = scmp.ne.s32.totalorder %s419, %s421
      %p428 = scmp.eq.s32.totalorder %s39, 1
      %p429 = por %p427, %p428
      %p430 = scmp.ne.s32.totalorder %s421, %s422
      %p431 = scmp.eq.s32.totalorder %s39, 0
      %p432 = por %p430, %p431
      %p433 = scmp.ne.s32.totalorder %s421, %s422
      %p434 = scmp.eq.s32.totalorder %s40, 1
      %p435 = por %p433, %p434
      %p437 = scmp.ne.s32.totalorder %s422, %s436
      %p438 = scmp.eq.s32.totalorder %s40, 0
      %p439 = por %p437, %p438
      %s440 = ssub.s32 %s34, %s41
      %p441 = scmp.eq.s32.totalorder %s440, 0
      %s443 = sadd.s32 %s442, 1
      %s444 = scalar_select %p441, %s442, %s443
      %p447 = pneg %p441
      %p448 = scmp.eq.s32.totalorder %s34, 1
      %p449 = por %p447, %p448
      %p450 = scmp.ne.s32.totalorder %s442, %s445
      %p451 = scmp.eq.s32.totalorder %s34, 0
      %p452 = por %p450, %p451
      %p453 = scmp.ne.s32.totalorder %s442, %s445
      %p454 = scmp.eq.s32.totalorder %s39, 1
      %p455 = por %p453, %p454
      %p456 = scmp.ne.s32.totalorder %s445, %s446
      %p457 = scmp.eq.s32.totalorder %s39, 0
      %p458 = por %p456, %p457
      %p459 = scmp.ne.s32.totalorder %s445, %s446
      %p460 = scmp.eq.s32.totalorder %s40, 1
      %p461 = por %p459, %p460
      %p463 = scmp.ne.s32.totalorder %s446, %s462
      %p464 = scmp.eq.s32.totalorder %s40, 0
      %p465 = por %p463, %p464
      %p466 = scmp.le.s32.totalorder 1, %s34
      %p467 = scmp.lt.s32.totalorder %s34, 3
      %p468 = pnand %p466, %p467
      %p469 = pneg %p468
      // Predicated region
      $region9: #{tpu_custom_call.1} parent=5 // pred_check
        _
      $region10: #{tpu_custom_call.1} parent=5 // pred_check_branch
        %471 = sbr.rel (%p468) target = $region12
      $region11: #{tpu_custom_call.1} parent=5 // pred_region
        %s472 = ssub.s32 %s34, 1
        // Predicated region
        $region13: #{tpu_custom_call.1} parent=11 // pred_check
          %p473 = pneg %p81
        $region14: #{tpu_custom_call.1} parent=11 // pred_check_branch
          %475 = sbr.rel (%p473) target = $region16
        $region15: #{tpu_custom_call.1} parent=11 // pred_region
          %s477 = ssub.s32 64, 64
          %478 = vsyncadd [#allocation3], %s477
          %s480 = sshll.u32 [#allocation2], 4
          %s481 = int_to_ptr.vmem [resolvable:$true] %s480
          %483 = dma.hbm_to_vmem [thread:$0]  %s1, 64, %s481, [#allocation3]
        $region16: #{tpu_custom_call.1} parent=11 // pred_fallthru
          _
        // Predicated region
        $region17: #{tpu_custom_call.1} parent=11 // pred_check
          %p484 = pneg %p102
        $region18: #{tpu_custom_call.1} parent=11 // pred_check_branch
          %486 = sbr.rel (%p484) target = $region20
        $region19: #{tpu_custom_call.1} parent=11 // pred_region
          %s488 = ssub.s32 2304, 2304
          %489 = vsyncadd [#allocation6], %s488
          %s490 = sshll.u32 [#allocation5], 4
          %s491 = int_to_ptr.vmem [resolvable:$true] %s490
          %496 = dma.hbm_to_vmem [thread:$0]  %s2, 2304, %s491, [#allocation6], 128, 128, 8
        $region20: #{tpu_custom_call.1} parent=11 // pred_fallthru
          _
        // Predicated region
        $region21: #{tpu_custom_call.1} parent=11 // pred_check
          %p497 = pneg %p149
        $region22: #{tpu_custom_call.1} parent=11 // pred_check_branch
          %499 = sbr.rel (%p497) target = $region24
        $region23: #{tpu_custom_call.1} parent=11 // pred_region
          %s501 = ssub.s32 1536, 1536
          %502 = vsyncadd [#allocation6], %s501
          %s503 = sshll.u32 [#allocation8], 4
          %s504 = int_to_ptr.vmem [resolvable:$true] %s503
          %509 = dma.hbm_to_vmem [thread:$0]  %s4, 1536, %s504, [#allocation6], 512, 512, 32
        $region24: #{tpu_custom_call.1} parent=11 // pred_fallthru
          _
        // Predicated region
        $region25: #{tpu_custom_call.1} parent=11 // pred_check
          %p510 = pneg %p170
        $region26: #{tpu_custom_call.1} parent=11 // pred_check_branch
          %512 = sbr.rel (%p510) target = $region28
        $region27: #{tpu_custom_call.1} parent=11 // pred_region
          _
        $region28: #{tpu_custom_call.1} parent=11 // pred_fallthru
          _
        // Predicated region
        $region29: #{tpu_custom_call.1} parent=11 // pred_check
          %p513 = pneg %p191
        $region30: #{tpu_custom_call.1} parent=11 // pred_check_branch
          %515 = sbr.rel (%p513) target = $region32
        $region31: #{tpu_custom_call.1} parent=11 // pred_region
          %s517 = ssub.s32 768, 768
          %518 = vsyncadd [#allocation10], %s517
          %s519 = sshll.u32 [#allocation9], 4
          %s520 = int_to_ptr.vmem [resolvable:$true] %s519
          %525 = dma.hbm_to_vmem [thread:$0]  %s6, 768, %s520, [#allocation10], 256, 256, 16
        $region32: #{tpu_custom_call.1} parent=11 // pred_fallthru
          _
        // Predicated region
        $region33: #{tpu_custom_call.1} parent=11 // pred_check
          %p526 = pneg %p212
        $region34: #{tpu_custom_call.1} parent=11 // pred_check_branch
          %528 = sbr.rel (%p526) target = $region36
        $region35: #{tpu_custom_call.1} parent=11 // pred_region
          _
        $region36: #{tpu_custom_call.1} parent=11 // pred_fallthru
          _
        // Predicated region
        $region37: #{tpu_custom_call.1} parent=11 // pred_check
          %p529 = pneg %p233
        $region38: #{tpu_custom_call.1} parent=11 // pred_check_branch
          %531 = sbr.rel (%p529) target = $region40
        $region39: #{tpu_custom_call.1} parent=11 // pred_region
          %s533 = ssub.s32 256, 256
          %534 = vsyncadd [#allocation10], %s533
          %s535 = sshll.u32 [#allocation11], 4
          %s536 = int_to_ptr.vmem [resolvable:$true] %s535
          %541 = dma.hbm_to_vmem [thread:$0]  %s8, 256, %s536, [#allocation10], 128, 128, 8
        $region40: #{tpu_custom_call.1} parent=11 // pred_fallthru
          _
        // Predicated region
        $region41: #{tpu_custom_call.1} parent=11 // pred_check
          %p542 = pneg %p254
        $region42: #{tpu_custom_call.1} parent=11 // pred_check_branch
          %544 = sbr.rel (%p542) target = $region44
        $region43: #{tpu_custom_call.1} parent=11 // pred_region
          %s546 = ssub.s32 9216, 9216
          %547 = vsyncadd [#allocation13], %s546
          %s548 = sshll.u32 [#allocation12], 4
          %s549 = int_to_ptr.vmem [resolvable:$true] %s548
          %554 = dma.hbm_to_vmem [thread:$0]  %s9, 9216, %s549, [#allocation13], 128, 128, 8
        $region44: #{tpu_custom_call.1} parent=11 // pred_fallthru
          _
        // Predicated region
        $region45: #{tpu_custom_call.1} parent=11 // pred_check
          %p555 = pneg %p301
        $region46: #{tpu_custom_call.1} parent=11 // pred_check_branch
          %557 = sbr.rel (%p555) target = $region48
        $region47: #{tpu_custom_call.1} parent=11 // pred_region
          %s559 = ssub.s32 768, 768
          %560 = vsyncadd [#allocation6], %s559
          %s561 = sshll.u32 [#allocation15], 4
          %s562 = int_to_ptr.vmem [resolvable:$true] %s561
          %567 = dma.hbm_to_vmem [thread:$0]  %s11, 768, %s562, [#allocation6], 384, 384, 24
        $region48: #{tpu_custom_call.1} parent=11 // pred_fallthru
          _
        // Predicated region
        $region49: #{tpu_custom_call.1} parent=11 // pred_check
          %p568 = pneg %p322
        $region50: #{tpu_custom_call.1} parent=11 // pred_check_branch
          %570 = sbr.rel (%p568) target = $region52
        $region51: #{tpu_custom_call.1} parent=11 // pred_region
          _
        $region52: #{tpu_custom_call.1} parent=11 // pred_fallthru
          _
        // Predicated region
        $region53: #{tpu_custom_call.1} parent=11 // pred_check
          %p571 = pneg %p343
        $region54: #{tpu_custom_call.1} parent=11 // pred_check_branch
          %573 = sbr.rel (%p571) target = $region56
        $region55: #{tpu_custom_call.1} parent=11 // pred_region
          %s575 = ssub.s32 2048, 2048
          %576 = vsyncadd [#allocation10], %s575
          %s577 = sshll.u32 [#allocation16], 4
          %s578 = int_to_ptr.vmem [resolvable:$true] %s577
          %583 = dma.hbm_to_vmem [thread:$0]  %s13, 2048, %s578, [#allocation10], 256, 256, 16
        $region56: #{tpu_custom_call.1} parent=11 // pred_fallthru
          _
        // Predicated region
        $region57: #{tpu_custom_call.1} parent=11 // pred_check
          %p584 = pneg %p364
        $region58: #{tpu_custom_call.1} parent=11 // pred_check_branch
          %586 = sbr.rel (%p584) target = $region60
        $region59: #{tpu_custom_call.1} parent=11 // pred_region
          %s588 = ssub.s32 73728, 73728
          %589 = vsyncadd [#allocation13], %s588
          %s590 = sshll.u32 [#allocation17], 4
          %s591 = int_to_ptr.vmem [resolvable:$true] %s590
          %596 = dma.hbm_to_vmem [thread:$0]  %s14, 73728, %s591, [#allocation13], 256, 256, 16
        $region60: #{tpu_custom_call.1} parent=11 // pred_fallthru
          _
        // Predicated region
        $region61: #{tpu_custom_call.1} parent=11 // pred_check
          %p597 = pneg %p411
        $region62: #{tpu_custom_call.1} parent=11 // pred_check_branch
          %599 = sbr.rel (%p597) target = $region64
        $region63: #{tpu_custom_call.1} parent=11 // pred_region
          %s601 = ssub.s32 256, 256
          %602 = vsyncadd [#allocation19], %s601
          %s604 = sshll.u32 [#allocation20], 4
          %s605 = int_to_ptr.vmem [resolvable:$true] %s604
          %607 = dma.hbm_to_vmem [thread:$0]  %s16, 256, %s605, [#allocation19]
        $region64: #{tpu_custom_call.1} parent=11 // pred_fallthru
          _
        // Predicated region
        $region65: #{tpu_custom_call.1} parent=11 // pred_check
          %p608 = pneg %p432
        $region66: #{tpu_custom_call.1} parent=11 // pred_check_branch
          %610 = sbr.rel (%p608) target = $region68
        $region67: #{tpu_custom_call.1} parent=11 // pred_region
          _
        $region68: #{tpu_custom_call.1} parent=11 // pred_fallthru
          _
      $region12: #{tpu_custom_call.1} parent=5 // pred_fallthru
        _
      %p611 = scmp.lt.s32.totalorder %s34, 2
      // Predicated region
      $region69: #{tpu_custom_call.1} parent=5 // pred_check
        %p612 = pneg %p611
      $region70: #{tpu_custom_call.1} parent=5 // pred_check_branch
        %614 = sbr.rel (%p612) target = $region72
      $region71: #{tpu_custom_call.1} parent=5 // pred_region
        // Predicated region
        $region73: #{tpu_custom_call.1} parent=71 // pred_check
          %p615 = pneg %p54
        $region74: #{tpu_custom_call.1} parent=71 // pred_check_branch
          %617 = sbr.rel (%p615) target = $region76
        $region75: #{tpu_custom_call.1} parent=71 // pred_region
          %p618 = scmp.lt.s32.totalorder %s34, 1
          %s619 = scalar_select %p618, %s34, 1
          %s620 = smul.addr %s619, 4
          %s621 = smul.addr %s620, 8
          %s622 = scalar_lea.vmem %s0, %s621
        $region76: #{tpu_custom_call.1} parent=71 // pred_fallthru
          _
        // Predicated region
        $region77: #{tpu_custom_call.1} parent=71 // pred_check
          %p623 = pneg %p122
        $region78: #{tpu_custom_call.1} parent=71 // pred_check_branch
          %625 = sbr.rel (%p623) target = $region80
        $region79: #{tpu_custom_call.1} parent=71 // pred_region
          %s626 = sand.u32 %s34, 1
          %s627 = scalar_lea.sflag [#allocation3], %s626
          %s628 = sand.u32 %s112, 1
          %s629 = smul.addr %s628, 16
          %s630 = scalar_lea.vmem [#allocation7], %s629
          %s632 = ssub.s32 256, 256
          %633 = vsyncadd %s627, %s632
          %s634 = smul.addr %s34, 2
          %s635 = smul.addr %s634, 128
          %s636 = scalar_lea.hbm %s3, %s635
          %s637 = sshll.u32 %s630, 4
          %s638 = int_to_ptr.vmem [resolvable:$true] %s637
          %643 = dma.hbm_to_vmem [thread:$0]  %s636, 256, %s638, %s627, 128, 128, 8
        $region80: #{tpu_custom_call.1} parent=71 // pred_fallthru
          _
        // Predicated region
        $region81: #{tpu_custom_call.1} parent=71 // pred_check
          %p644 = pneg %p274
        $region82: #{tpu_custom_call.1} parent=71 // pred_check_branch
          %646 = sbr.rel (%p644) target = $region84
        $region83: #{tpu_custom_call.1} parent=71 // pred_region
          %s647 = sand.u32 %s34, 1
          %s648 = scalar_lea.sflag [#allocation3], %s647
          %s649 = sand.u32 %s264, 1
          %s650 = smul.addr %s649, 8
          %s651 = scalar_lea.vmem [#allocation14], %s650
          %s653 = ssub.s32 128, 128
          %654 = vsyncadd %s648, %s653
          %s655 = smul.addr %s34, 128
          %s656 = scalar_lea.hbm %s10, %s655
          %s658 = sshll.u32 %s651, 4
          %s659 = int_to_ptr.vmem [resolvable:$true] %s658
          %661 = dma.hbm_to_vmem [thread:$0]  %s656, 128, %s659, %s648
        $region84: #{tpu_custom_call.1} parent=71 // pred_fallthru
          _
        // Predicated region
        $region85: #{tpu_custom_call.1} parent=71 // pred_check
          %p662 = pneg %p384
        $region86: #{tpu_custom_call.1} parent=71 // pred_check_branch
          %664 = sbr.rel (%p662) target = $region88
        $region87: #{tpu_custom_call.1} parent=71 // pred_region
          %s665 = sand.u32 %s34, 1
          %s666 = scalar_lea.sflag [#allocation19], %s665
          %s667 = sand.u32 %s374, 1
          %s668 = smul.addr %s667, 16
          %s669 = scalar_lea.vmem [#allocation18], %s668
          %s671 = ssub.s32 256, 256
          %672 = vsyncadd %s666, %s671
          %s673 = smul.addr %s34, 2
          %s674 = smul.addr %s673, 128
          %s675 = scalar_lea.hbm %s15, %s674
          %s677 = sshll.u32 %s669, 4
          %s678 = int_to_ptr.vmem [resolvable:$true] %s677
          %680 = dma.hbm_to_vmem [thread:$0]  %s675, 256, %s678, %s666
        $region88: #{tpu_custom_call.1} parent=71 // pred_fallthru
          _
      $region72: #{tpu_custom_call.1} parent=5 // pred_fallthru
        _
      %p681 = scmp.le.s32.totalorder 1, %s34
      %p682 = scmp.lt.s32.totalorder %s34, 3
      %p683 = pnand %p681, %p682
      %p684 = pneg %p683
      // Predicated region
      $region89: #{tpu_custom_call.1} parent=5 // pred_check
        _
      $region90: #{tpu_custom_call.1} parent=5 // pred_check_branch
        %686 = sbr.rel (%p683) target = $region92
      $region91: #{tpu_custom_call.1} parent=5 // pred_region
        %s687 = ssub.s32 %s34, 1
        // Predicated region
        $region93: #{tpu_custom_call.1} parent=91 // pred_check
          %p688 = pneg %p81
        $region94: #{tpu_custom_call.1} parent=91 // pred_check_branch
          %690 = sbr.rel (%p688) target = $region96
        $region95: #{tpu_custom_call.1} parent=91 // pred_region
          %691 = dma.done [#allocation3], 64
        $region96: #{tpu_custom_call.1} parent=91 // pred_fallthru
          _
        // Predicated region
        $region97: #{tpu_custom_call.1} parent=91 // pred_check
          %p692 = pneg %p102
        $region98: #{tpu_custom_call.1} parent=91 // pred_check_branch
          %694 = sbr.rel (%p692) target = $region100
        $region99: #{tpu_custom_call.1} parent=91 // pred_region
          %695 = dma.done [#allocation6], 2304
        $region100: #{tpu_custom_call.1} parent=91 // pred_fallthru
          _
        %s696 = sand.u32 %s39, 1
        %s697 = scalar_lea.sflag [#allocation3], %s696
        %s698 = sand.u32 %s115, 1
        %s699 = smul.addr %s698, 16
        %s700 = scalar_lea.vmem [#allocation7], %s699
        // Predicated region
        $region101: #{tpu_custom_call.1} parent=91 // pred_check
          %p701 = pneg %p128
        $region102: #{tpu_custom_call.1} parent=91 // pred_check_branch
          %703 = sbr.rel (%p701) target = $region104
        $region103: #{tpu_custom_call.1} parent=91 // pred_region
          %704 = dma.done %s697, 256
        $region104: #{tpu_custom_call.1} parent=91 // pred_fallthru
          _
        // Predicated region
        $region105: #{tpu_custom_call.1} parent=91 // pred_check
          %p705 = pneg %p149
        $region106: #{tpu_custom_call.1} parent=91 // pred_check_branch
          %707 = sbr.rel (%p705) target = $region108
        $region107: #{tpu_custom_call.1} parent=91 // pred_region
          %708 = dma.done [#allocation6], 1536
        $region108: #{tpu_custom_call.1} parent=91 // pred_fallthru
          _
        // Predicated region
        $region109: #{tpu_custom_call.1} parent=91 // pred_check
          %p709 = pneg %p191
        $region110: #{tpu_custom_call.1} parent=91 // pred_check_branch
          %711 = sbr.rel (%p709) target = $region112
        $region111: #{tpu_custom_call.1} parent=91 // pred_region
          %712 = dma.done [#allocation10], 768
        $region112: #{tpu_custom_call.1} parent=91 // pred_fallthru
          _
        // Predicated region
        $region113: #{tpu_custom_call.1} parent=91 // pred_check
          %p713 = pneg %p233
        $region114: #{tpu_custom_call.1} parent=91 // pred_check_branch
          %715 = sbr.rel (%p713) target = $region116
        $region115: #{tpu_custom_call.1} parent=91 // pred_region
          %716 = dma.done [#allocation10], 256
        $region116: #{tpu_custom_call.1} parent=91 // pred_fallthru
          _
        // Predicated region
        $region117: #{tpu_custom_call.1} parent=91 // pred_check
          %p717 = pneg %p254
        $region118: #{tpu_custom_call.1} parent=91 // pred_check_branch
          %719 = sbr.rel (%p717) target = $region120
        $region119: #{tpu_custom_call.1} parent=91 // pred_region
          %720 = dma.done [#allocation13], 9216
        $region120: #{tpu_custom_call.1} parent=91 // pred_fallthru
          _
        %s721 = sand.u32 %s39, 1
        %s722 = scalar_lea.sflag [#allocation3], %s721
        %s723 = sand.u32 %s267, 1
        %s724 = smul.addr %s723, 8
        %s725 = scalar_lea.vmem [#allocation14], %s724
        // Predicated region
        $region121: #{tpu_custom_call.1} parent=91 // pred_check
          %p726 = pneg %p280
        $region122: #{tpu_custom_call.1} parent=91 // pred_check_branch
          %728 = sbr.rel (%p726) target = $region124
        $region123: #{tpu_custom_call.1} parent=91 // pred_region
          %729 = dma.done %s722, 128
        $region124: #{tpu_custom_call.1} parent=91 // pred_fallthru
          _
        // Predicated region
        $region125: #{tpu_custom_call.1} parent=91 // pred_check
          %p730 = pneg %p301
        $region126: #{tpu_custom_call.1} parent=91 // pred_check_branch
          %732 = sbr.rel (%p730) target = $region128
        $region127: #{tpu_custom_call.1} parent=91 // pred_region
          %733 = dma.done [#allocation6], 768
        $region128: #{tpu_custom_call.1} parent=91 // pred_fallthru
          _
        // Predicated region
        $region129: #{tpu_custom_call.1} parent=91 // pred_check
          %p734 = pneg %p343
        $region130: #{tpu_custom_call.1} parent=91 // pred_check_branch
          %736 = sbr.rel (%p734) target = $region132
        $region131: #{tpu_custom_call.1} parent=91 // pred_region
          %737 = dma.done [#allocation10], 2048
        $region132: #{tpu_custom_call.1} parent=91 // pred_fallthru
          _
        // Predicated region
        $region133: #{tpu_custom_call.1} parent=91 // pred_check
          %p738 = pneg %p364
        $region134: #{tpu_custom_call.1} parent=91 // pred_check_branch
          %740 = sbr.rel (%p738) target = $region136
        $region135: #{tpu_custom_call.1} parent=91 // pred_region
          %741 = dma.done [#allocation13], 73728
        $region136: #{tpu_custom_call.1} parent=91 // pred_fallthru
          _
        %s742 = sand.u32 %s39, 1
        %s743 = scalar_lea.sflag [#allocation19], %s742
        %s744 = sand.u32 %s377, 1
        %s745 = smul.addr %s744, 16
        %s746 = scalar_lea.vmem [#allocation18], %s745
        // Predicated region
        $region137: #{tpu_custom_call.1} parent=91 // pred_check
          %p747 = pneg %p390
        $region138: #{tpu_custom_call.1} parent=91 // pred_check_branch
          %749 = sbr.rel (%p747) target = $region140
        $region139: #{tpu_custom_call.1} parent=91 // pred_region
          %750 = dma.done %s743, 256
        $region140: #{tpu_custom_call.1} parent=91 // pred_fallthru
          _
        // Predicated region
        $region141: #{tpu_custom_call.1} parent=91 // pred_check
          %p751 = pneg %p411
        $region142: #{tpu_custom_call.1} parent=91 // pred_check_branch
          %753 = sbr.rel (%p751) target = $region144
        $region143: #{tpu_custom_call.1} parent=91 // pred_region
          %754 = dma.done [#allocation19], 256
        $region144: #{tpu_custom_call.1} parent=91 // pred_fallthru
          _
        %p755 = scmp.lt.s32.totalorder %s39, 1
        %s756 = scalar_select %p755, %s39, 1
        %s757 = smul.addr %s756, 4
        %s758 = smul.addr %s757, 8
        %s759 = scalar_lea.vmem %s0, %s758
        %p760 = pneg %p60
        %p761 = pneg %p57
        %p762 = pneg %p81
        %p763 = pneg %p78
        %p764 = pneg %p102
        %p765 = pneg %p99
        %s766 = sand.u32 %s39, 1
        %s767 = scalar_lea.sflag [#allocation3], %s766
        %s768 = sand.u32 %s115, 1
        %s769 = smul.addr %s768, 16
        %s770 = scalar_lea.vmem [#allocation7], %s769
        %p771 = pneg %p128
        %p772 = pneg %p125
        %p773 = pneg %p149
        %p774 = pneg %p146
        %p775 = pneg %p170
        %p776 = pneg %p167
        %p777 = pneg %p191
        %p778 = pneg %p188
        %p779 = pneg %p212
        %p780 = pneg %p209
        %p781 = pneg %p233
        %p782 = pneg %p230
        %p783 = pneg %p254
        %p784 = pneg %p251
        %s785 = sand.u32 %s39, 1
        %s786 = scalar_lea.sflag [#allocation3], %s785
        %s787 = sand.u32 %s267, 1
        %s788 = smul.addr %s787, 8
        %s789 = scalar_lea.vmem [#allocation14], %s788
        %p790 = pneg %p280
        %p791 = pneg %p277
        %p792 = pneg %p301
        %p793 = pneg %p298
        %p794 = pneg %p322
        %p795 = pneg %p319
        %p796 = pneg %p343
        %p797 = pneg %p340
        %p798 = pneg %p364
        %p799 = pneg %p361
        %s800 = sand.u32 %s39, 1
        %s801 = scalar_lea.sflag [#allocation19], %s800
        %s802 = sand.u32 %s377, 1
        %s803 = smul.addr %s802, 16
        %s804 = scalar_lea.vmem [#allocation18], %s803
        %p805 = pneg %p390
        %p806 = pneg %p387
        %p807 = pneg %p411
        %p808 = pneg %p408
        %p809 = pneg %p432
        %p810 = pneg %p429
        %p811 = pneg %p458
        %p812 = pneg %p455
        %s813 = sand.u32 %s445, 1
        %s814 = scalar_lea.sflag [#allocation4], %s813
        %s815 = sand.u32 %s445, 1
        %s816 = smul.addr %s815, 16
        %s817 = scalar_lea.vmem [#allocation21], %s816
        %p818 = scmp.lt.s32.totalorder %s39, 1
        %s819 = scalar_select %p818, %s39, 1
        %s820 = smul.addr %s819, 4
        %s821 = smul.addr %s820, 8
        %s822 = scalar_lea.vmem %s0, %s821
        %v823 = vld [vmem:[%s822] sm:$0xff]
        %v824 = vld [vmem:[%s822 + $0x8] sm:$0xff]
        %v825 = vld [vmem:[%s822 + $0x10] sm:$0xff]
        %v826 = vld [vmem:[%s822 + $0x18] sm:$0xff]
        %v827 = vld [vmem:[#allocation2] sm:$0xf]
        %vm828 = vcmask 31744
        %v830 = vsel %vm828, %v823, 0
        %v833 = vsel %vm828, %v824, 0
        %v836 = vsel %vm828, %v825, 0
        %v839 = vsel %vm828, %v826, 0
        %vm841 = vcmask 1043456
        %v843 = vsel %vm841, %v827, 0
        %845 = vmatprep.subr.mxu0 0.0
        %846 = vmatpush1.msra.mxu0 %v843
        %847 = vmatprep.subr.mxu0 0.0
        %848 = vmatpush1.msra.mxu0 0.0
        %849 = vmatprep.subr.mxu0 0.0
        %850 = vmatpush1.msra.mxu0 0.0
        %851 = vmatprep.subr.mxu0 0.0
        %852 = vmatpush1.msra.mxu0 0.0
        %853 = vmatprep.subr.mxu0 0.0
        %854 = vmatpush1.msra.mxu0 0.0
        %855 = vmatprep.subr.mxu0 0.0
        %856 = vmatpush1.msra.mxu0 0.0
        %857 = vmatprep.subr.mxu0 0.0
        %858 = vmatpush1.msra.mxu0 0.0
        %859 = vmatprep.subr.mxu0 0.0
        %860 = vmatpush1.msra.mxu0 0.0
        %861 = vmatprep.subr.mxu0 0.0
        %862 = vmatpush1.msra.mxu0 0.0
        %863 = vmatprep.subr.mxu0 0.0
        %864 = vmatpush1.msra.mxu0 0.0
        %865 = vmatprep.subr.mxu0 0.0
        %866 = vmatpush1.msra.mxu0 0.0
        %867 = vmatprep.subr.mxu0 0.0
        %868 = vmatpush1.msra.mxu0 0.0
        %869 = vmatprep.subr.mxu0 0.0
        %870 = vmatpush1.msra.mxu0 0.0
        %871 = vmatprep.subr.mxu0 0.0
        %872 = vmatpush1.msra.mxu0 0.0
        %873 = vmatprep.subr.mxu0 0.0
        %874 = vmatpush1.msra.mxu0 0.0
        %875 = vmatprep.subr.mxu0 0.0
        %876 = vmatpush1.msra.mxu0 0.0
        %877 = vmatprep.subr.mxu0 0.0
        %878 = vmatpush1.msra.mxu0 0.0
        %879 = vmatprep.subr.mxu0 0.0
        %880 = vmatpush1.msra.mxu0 0.0
        %881 = vmatprep.subr.mxu0 0.0
        %882 = vmatpush1.msra.mxu0 0.0
        %883 = vmatprep.subr.mxu0 0.0
        %884 = vmatpush1.msra.mxu0 0.0
        %885 = vmatprep.subr.mxu0 0.0
        %886 = vmatpush1.msra.mxu0 0.0
        %887 = vmatprep.subr.mxu0 0.0
        %888 = vmatpush1.msra.mxu0 0.0
        %889 = vmatprep.subr.mxu0 0.0
        %890 = vmatpush1.msra.mxu0 0.0
        %891 = vmatprep.subr.mxu0 0.0
        %892 = vmatpush1.msra.mxu0 0.0
        %893 = vmatprep.subr.mxu0 0.0
        %894 = vmatpush1.msra.mxu0 0.0
        %895 = vmatprep.subr.mxu0 0.0
        %896 = vmatpush1.msra.mxu0 0.0
        %897 = vmatprep.subr.mxu0 0.0
        %898 = vmatpush1.msra.mxu0 0.0
        %899 = vmatprep.subr.mxu0 0.0
        %900 = vmatpush1.msra.mxu0 0.0
        %901 = vmatprep.subr.mxu0 0.0
        %902 = vmatpush1.msra.mxu0 0.0
        %903 = vmatprep.subr.mxu0 0.0
        %904 = vmatpush1.msra.mxu0 0.0
        %905 = vmatprep.subr.mxu0 0.0
        %906 = vmatpush1.msra.mxu0 0.0
        %907 = vmatprep.subr.mxu0 0.0
        %908 = vmatpush1.msra.mxu0 0.0
        %909 = vmatprep.mubr.f32.mxu0 0.0
        %910 = vmatmul.mubr.f32.gmra.mrb[0].mxu0 %v830
        %v911 = vpop.f32.mrb[0].mxu0
        %v912 = vadd.f32 0.0, %v911
        %v913 = vpop.f32.mrb[0].mxu0
        %914 = vmatprep.mubr.f32.mxu0 0.0
        %915 = vmatmul.mubr.f32.gmra.mrb[0].mxu0 %v833
        %v916 = vpop.f32.mrb[0].mxu0
        %v917 = vadd.f32 0.0, %v916
        %v918 = vpop.f32.mrb[0].mxu0
        %919 = vmatprep.mubr.f32.mxu0 0.0
        %920 = vmatmul.mubr.f32.gmra.mrb[0].mxu0 %v836
        %v921 = vpop.f32.mrb[0].mxu0
        %v922 = vadd.f32 0.0, %v921
        %v923 = vpop.f32.mrb[0].mxu0
        %924 = vmatprep.mubr.f32.mxu0 0.0
        %925 = vmatmul.mubr.f32.gmra.mrb[0].mxu0 %v839
        %v926 = vpop.f32.mrb[0].mxu0
        %v927 = vadd.f32 0.0, %v926
        %v928 = vpop.f32.mrb[0].mxu0
        %929 = vdwg.mxu0
        %v930 = vld [vmem:[%s700] sm:$0xff]
        %v931 = vld [vmem:[%s700 + $0x8] sm:$0xff]
        %v932 = vld [vmem:[#allocation5] sm:$0xff]
        %v933 = vld [vmem:[#allocation5 + $0x8] sm:$0xff]
        %vm934 = vcmask 130048
        %v936 = vsel %vm934, %v912, 0
        %v939 = vsel %vm934, %v917, 0
        %v942 = vsel %vm934, %v922, 0
        %v945 = vsel %vm934, %v927, 0
        %v948 = vsel %vm934, %v930, 0
        %v951 = vsel %vm934, %v931, 0
        %953 = vmatprep.subr.mxu0 0.0
        %954 = vmatpush1.msra.mxu0 %v932
        %955 = vmatprep.subr.mxu0 0.0
        %956 = vmatpush1.msra.mxu0 %v933
        %957 = vmatprep.subr.mxu0 0.0
        %958 = vmatpush1.msra.mxu0 0.0
        %959 = vmatprep.subr.mxu0 0.0
        %960 = vmatpush1.msra.mxu0 0.0
        %961 = vmatprep.subr.mxu0 0.0
        %962 = vmatpush1.msra.mxu0 0.0
        %963 = vmatprep.subr.mxu0 0.0
        %964 = vmatpush1.msra.mxu0 0.0
        %965 = vmatprep.subr.mxu0 0.0
        %966 = vmatpush1.msra.mxu0 0.0
        %967 = vmatprep.subr.mxu0 0.0
        %968 = vmatpush1.msra.mxu0 0.0
        %969 = vmatprep.subr.mxu0 0.0
        %970 = vmatpush1.msra.mxu0 0.0
        %971 = vmatprep.subr.mxu0 0.0
        %972 = vmatpush1.msra.mxu0 0.0
        %973 = vmatprep.subr.mxu0 0.0
        %974 = vmatpush1.msra.mxu0 0.0
        %975 = vmatprep.subr.mxu0 0.0
        %976 = vmatpush1.msra.mxu0 0.0
        %977 = vmatprep.subr.mxu0 0.0
        %978 = vmatpush1.msra.mxu0 0.0
        %979 = vmatprep.subr.mxu0 0.0
        %980 = vmatpush1.msra.mxu0 0.0
        %981 = vmatprep.subr.mxu0 0.0
        %982 = vmatpush1.msra.mxu0 0.0
        %983 = vmatprep.subr.mxu0 0.0
        %984 = vmatpush1.msra.mxu0 0.0
        %985 = vmatprep.subr.mxu0 0.0
        %986 = vmatpush1.msra.mxu0 0.0
        %987 = vmatprep.subr.mxu0 0.0
        %988 = vmatpush1.msra.mxu0 0.0
        %989 = vmatprep.subr.mxu0 0.0
        %990 = vmatpush1.msra.mxu0 0.0
        %991 = vmatprep.subr.mxu0 0.0
        %992 = vmatpush1.msra.mxu0 0.0
        %993 = vmatprep.subr.mxu0 0.0
        %994 = vmatpush1.msra.mxu0 0.0
        %995 = vmatprep.subr.mxu0 0.0
        %996 = vmatpush1.msra.mxu0 0.0
        %997 = vmatprep.subr.mxu0 0.0
        %998 = vmatpush1.msra.mxu0 0.0
        %999 = vmatprep.subr.mxu0 0.0
        %1000 = vmatpush1.msra.mxu0 0.0
        %1001 = vmatprep.subr.mxu0 0.0
        %1002 = vmatpush1.msra.mxu0 0.0
        %1003 = vmatprep.subr.mxu0 0.0
        %1004 = vmatpush1.msra.mxu0 0.0
        %1005 = vmatprep.subr.mxu0 0.0
        %1006 = vmatpush1.msra.mxu0 0.0
        %1007 = vmatprep.subr.mxu0 0.0
        %1008 = vmatpush1.msra.mxu0 0.0
        %1009 = vmatprep.subr.mxu0 0.0
        %1010 = vmatpush1.msra.mxu0 0.0
        %1011 = vmatprep.subr.mxu0 0.0
        %1012 = vmatpush1.msra.mxu0 0.0
        %1013 = vmatprep.subr.mxu0 0.0
        %1014 = vmatpush1.msra.mxu0 0.0
        %1015 = vmatprep.subr.mxu0 0.0
        %1016 = vmatpush1.msra.mxu0 0.0
        %1017 = vmatprep.mubr.f32.mxu0 0.0
        %1018 = vmatmul.mubr.f32.gmra.mrb[0].mxu0 %v936
        %v1019 = vpop.f32.mrb[0].mxu0
        %v1020 = vadd.f32 0.0, %v1019
        %v1021 = vpop.f32.mrb[0].mxu0
        %1022 = vmatprep.mubr.f32.mxu0 0.0
        %1023 = vmatmul.mubr.f32.gmra.mrb[0].mxu0 %v939
        %v1024 = vpop.f32.mrb[0].mxu0
        %v1025 = vadd.f32 0.0, %v1024
        %v1026 = vpop.f32.mrb[0].mxu0
        %1027 = vmatprep.mubr.f32.mxu0 0.0
        %1028 = vmatmul.mubr.f32.gmra.mrb[0].mxu0 %v942
        %v1029 = vpop.f32.mrb[0].mxu0
        %v1030 = vadd.f32 0.0, %v1029
        %v1031 = vpop.f32.mrb[0].mxu0
        %1032 = vmatprep.mubr.f32.mxu0 0.0
        %1033 = vmatmul.mubr.f32.gmra.mrb[0].mxu0 %v945
        %v1034 = vpop.f32.mrb[0].mxu0
        %v1035 = vadd.f32 0.0, %v1034
        %v1036 = vpop.f32.mrb[0].mxu0
        %1037 = vmatprep.mubr.f32.mxu0 0.0
        %1038 = vmatmul.mubr.f32.gmra.mrb[0].mxu0 %v948
        %v1039 = vpop.f32.mrb[0].mxu0
        %v1040 = vadd.f32 0.0, %v1039
        %v1041 = vpop.f32.mrb[0].mxu0
        %1042 = vmatprep.mubr.f32.mxu0 0.0
        %1043 = vmatmul.mubr.f32.gmra.mrb[0].mxu0 %v951
        %v1044 = vpop.f32.mrb[0].mxu0
        %v1045 = vadd.f32 0.0, %v1044
        %v1046 = vpop.f32.mrb[0].mxu0
        %1047 = vdwg.mxu0
        %s1048 = scalar_lea.vmem [#allocation5], 16
        %v1049 = vld [vmem:[%s1048] sm:$0xff]
        %v1050 = vld [vmem:[%s1048 + $0x8] sm:$0xff]
        %1051 = vmatprep.subr.mxu0 0.0
        %1052 = vmatpush1.msra.mxu0 %v1049
        %1053 = vmatprep.subr.mxu0 0.0
        %1054 = vmatpush1.msra.mxu0 %v1050
        %1055 = vmatprep.subr.mxu0 0.0
        %1056 = vmatpush1.msra.mxu0 0.0
        %1057 = vmatprep.subr.mxu0 0.0
        %1058 = vmatpush1.msra.mxu0 0.0
        %1059 = vmatprep.subr.mxu0 0.0
        %1060 = vmatpush1.msra.mxu0 0.0
        %1061 = vmatprep.subr.mxu0 0.0
        %1062 = vmatpush1.msra.mxu0 0.0
        %1063 = vmatprep.subr.mxu0 0.0
        %1064 = vmatpush1.msra.mxu0 0.0
        %1065 = vmatprep.subr.mxu0 0.0
        %1066 = vmatpush1.msra.mxu0 0.0
        %1067 = vmatprep.subr.mxu0 0.0
        %1068 = vmatpush1.msra.mxu0 0.0
        %1069 = vmatprep.subr.mxu0 0.0
        %1070 = vmatpush1.msra.mxu0 0.0
        %1071 = vmatprep.subr.mxu0 0.0
        %1072 = vmatpush1.msra.mxu0 0.0
        %1073 = vmatprep.subr.mxu0 0.0
        %1074 = vmatpush1.msra.mxu0 0.0
        %1075 = vmatprep.subr.mxu0 0.0
        %1076 = vmatpush1.msra.mxu0 0.0
        %1077 = vmatprep.subr.mxu0 0.0
        %1078 = vmatpush1.msra.mxu0 0.0
        %1079 = vmatprep.subr.mxu0 0.0
        %1080 = vmatpush1.msra.mxu0 0.0
        %1081 = vmatprep.subr.mxu0 0.0
        %1082 = vmatpush1.msra.mxu0 0.0
        %1083 = vmatprep.subr.mxu0 0.0
        %1084 = vmatpush1.msra.mxu0 0.0
        %1085 = vmatprep.subr.mxu0 0.0
        %1086 = vmatpush1.msra.mxu0 0.0
        %1087 = vmatprep.subr.mxu0 0.0
        %1088 = vmatpush1.msra.mxu0 0.0
        %1089 = vmatprep.subr.mxu0 0.0
        %1090 = vmatpush1.msra.mxu0 0.0
        %1091 = vmatprep.subr.mxu0 0.0
        %1092 = vmatpush1.msra.mxu0 0.0
        %1093 = vmatprep.subr.mxu0 0.0
        %1094 = vmatpush1.msra.mxu0 0.0
        %1095 = vmatprep.subr.mxu0 0.0
        %1096 = vmatpush1.msra.mxu0 0.0
        %1097 = vmatprep.subr.mxu0 0.0
        %1098 = vmatpush1.msra.mxu0 0.0
        %1099 = vmatprep.subr.mxu0 0.0
        %1100 = vmatpush1.msra.mxu0 0.0
        %1101 = vmatprep.subr.mxu0 0.0
        %1102 = vmatpush1.msra.mxu0 0.0
        %1103 = vmatprep.subr.mxu0 0.0
        %1104 = vmatpush1.msra.mxu0 0.0
        %1105 = vmatprep.subr.mxu0 0.0
        %1106 = vmatpush1.msra.mxu0 0.0
        %1107 = vmatprep.subr.mxu0 0.0
        %1108 = vmatpush1.msra.mxu0 0.0
        %1109 = vmatprep.subr.mxu0 0.0
        %1110 = vmatpush1.msra.mxu0 0.0
        %1111 = vmatprep.subr.mxu0 0.0
        %1112 = vmatpush1.msra.mxu0 0.0
        %1113 = vmatprep.subr.mxu0 0.0
        %1114 = vmatpush1.msra.mxu0 0.0
        %1115 = vmatprep.mubr.f32.mxu0 0.0
        %1116 = vmatmul.mubr.f32.gmra.mrb[0].mxu0 %v936
        %v1117 = vpop.f32.mrb[0].mxu0
        %v1118 = vadd.f32 0.0, %v1117
        %v1119 = vpop.f32.mrb[0].mxu0
        %1120 = vmatprep.mubr.f32.mxu0 0.0
        %1121 = vmatmul.mubr.f32.gmra.mrb[0].mxu0 %v939
        %v1122 = vpop.f32.mrb[0].mxu0
        %v1123 = vadd.f32 0.0, %v1122
        %v1124 = vpop.f32.mrb[0].mxu0
        %1125 = vmatprep.mubr.f32.mxu0 0.0
        %1126 = vmatmul.mubr.f32.gmra.mrb[0].mxu0 %v942
        %v1127 = vpop.f32.mrb[0].mxu0
        %v1128 = vadd.f32 0.0, %v1127
        %v1129 = vpop.f32.mrb[0].mxu0
        %1130 = vmatprep.mubr.f32.mxu0 0.0
        %1131 = vmatmul.mubr.f32.gmra.mrb[0].mxu0 %v945
        %v1132 = vpop.f32.mrb[0].mxu0
        %v1133 = vadd.f32 0.0, %v1132
        %v1134 = vpop.f32.mrb[0].mxu0
        %1135 = vmatprep.mubr.f32.mxu0 0.0
        %1136 = vmatmul.mubr.f32.gmra.mrb[0].mxu0 %v948
        %v1137 = vpop.f32.mrb[0].mxu0
        %v1138 = vadd.f32 0.0, %v1137
        %v1139 = vpop.f32.mrb[0].mxu0
        %1140 = vmatprep.mubr.f32.mxu0 0.0
        %1141 = vmatmul.mubr.f32.gmra.mrb[0].mxu0 %v951
        %v1142 = vpop.f32.mrb[0].mxu0
        %v1143 = vadd.f32 0.0, %v1142
        %v1144 = vpop.f32.mrb[0].mxu0
        %1145 = vdwg.mxu0
        %s1146 = scalar_lea.vmem [#allocation5], 32
        %v1147 = vld [vmem:[%s1146] sm:$0xff]
        %v1148 = vld [vmem:[%s1146 + $0x8] sm:$0xff]
        %1149 = vmatprep.subr.mxu0 0.0
        %1150 = vmatpush1.msra.mxu0 %v1147
        %1151 = vmatprep.subr.mxu0 0.0
        %1152 = vmatpush1.msra.mxu0 %v1148
        %1153 = vmatprep.subr.mxu0 0.0
        %1154 = vmatpush1.msra.mxu0 0.0
        %1155 = vmatprep.subr.mxu0 0.0
        %1156 = vmatpush1.msra.mxu0 0.0
        %1157 = vmatprep.subr.mxu0 0.0
        %1158 = vmatpush1.msra.mxu0 0.0
        %1159 = vmatprep.subr.mxu0 0.0
        %1160 = vmatpush1.msra.mxu0 0.0
        %1161 = vmatprep.subr.mxu0 0.0
        %1162 = vmatpush1.msra.mxu0 0.0
        %1163 = vmatprep.subr.mxu0 0.0
        %1164 = vmatpush1.msra.mxu0 0.0
        %1165 = vmatprep.subr.mxu0 0.0
        %1166 = vmatpush1.msra.mxu0 0.0
        %1167 = vmatprep.subr.mxu0 0.0
        %1168 = vmatpush1.msra.mxu0 0.0
        %1169 = vmatprep.subr.mxu0 0.0
        %1170 = vmatpush1.msra.mxu0 0.0
        %1171 = vmatprep.subr.mxu0 0.0
        %1172 = vmatpush1.msra.mxu0 0.0
        %1173 = vmatprep.subr.mxu0 0.0
        %1174 = vmatpush1.msra.mxu0 0.0
        %1175 = vmatprep.subr.mxu0 0.0
        %1176 = vmatpush1.msra.mxu0 0.0
        %1177 = vmatprep.subr.mxu0 0.0
        %1178 = vmatpush1.msra.mxu0 0.0
        %1179 = vmatprep.subr.mxu0 0.0
        %1180 = vmatpush1.msra.mxu0 0.0
        %1181 = vmatprep.subr.mxu0 0.0
        %1182 = vmatpush1.msra.mxu0 0.0
        %1183 = vmatprep.subr.mxu0 0.0
        %1184 = vmatpush1.msra.mxu0 0.0
        %1185 = vmatprep.subr.mxu0 0.0
        %1186 = vmatpush1.msra.mxu0 0.0
        %1187 = vmatprep.subr.mxu0 0.0
        %1188 = vmatpush1.msra.mxu0 0.0
        %1189 = vmatprep.subr.mxu0 0.0
        %1190 = vmatpush1.msra.mxu0 0.0
        %1191 = vmatprep.subr.mxu0 0.0
        %1192 = vmatpush1.msra.mxu0 0.0
        %1193 = vmatprep.subr.mxu0 0.0
        %1194 = vmatpush1.msra.mxu0 0.0
        %1195 = vmatprep.subr.mxu0 0.0
        %1196 = vmatpush1.msra.mxu0 0.0
        %1197 = vmatprep.subr.mxu0 0.0
        %1198 = vmatpush1.msra.mxu0 0.0
        %1199 = vmatprep.subr.mxu0 0.0
        %1200 = vmatpush1.msra.mxu0 0.0
        %1201 = vmatprep.subr.mxu0 0.0
        %1202 = vmatpush1.msra.mxu0 0.0
        %1203 = vmatprep.subr.mxu0 0.0
        %1204 = vmatpush1.msra.mxu0 0.0
        %1205 = vmatprep.subr.mxu0 0.0
        %1206 = vmatpush1.msra.mxu0 0.0
        %1207 = vmatprep.subr.mxu0 0.0
        %1208 = vmatpush1.msra.mxu0 0.0
        %1209 = vmatprep.subr.mxu0 0.0
        %1210 = vmatpush1.msra.mxu0 0.0
        %1211 = vmatprep.subr.mxu0 0.0
        %1212 = vmatpush1.msra.mxu0 0.0
        %1213 = vmatprep.mubr.f32.mxu0 0.0
        %1214 = vmatmul.mubr.f32.gmra.mrb[0].mxu0 %v936
        %v1215 = vpop.f32.mrb[0].mxu0
        %v1216 = vadd.f32 0.0, %v1215
        %v1217 = vpop.f32.mrb[0].mxu0
        %1218 = vmatprep.mubr.f32.mxu0 0.0
        %1219 = vmatmul.mubr.f32.gmra.mrb[0].mxu0 %v939
        %v1220 = vpop.f32.mrb[0].mxu0
        %v1221 = vadd.f32 0.0, %v1220
        %v1222 = vpop.f32.mrb[0].mxu0
        %1223 = vmatprep.mubr.f32.mxu0 0.0
        %1224 = vmatmul.mubr.f32.gmra.mrb[0].mxu0 %v942
        %v1225 = vpop.f32.mrb[0].mxu0
        %v1226 = vadd.f32 0.0, %v1225
        %v1227 = vpop.f32.mrb[0].mxu0
        %1228 = vmatprep.mubr.f32.mxu0 0.0
        %1229 = vmatmul.mubr.f32.gmra.mrb[0].mxu0 %v945
        %v1230 = vpop.f32.mrb[0].mxu0
        %v1231 = vadd.f32 0.0, %v1230
        %v1232 = vpop.f32.mrb[0].mxu0
        %1233 = vmatprep.mubr.f32.mxu0 0.0
        %1234 = vmatmul.mubr.f32.gmra.mrb[0].mxu0 %v948
        %v1235 = vpop.f32.mrb[0].mxu0
        %v1236 = vadd.f32 0.0, %v1235
        %v1237 = vpop.f32.mrb[0].mxu0
        %1238 = vmatprep.mubr.f32.mxu0 0.0
        %1239 = vmatmul.mubr.f32.gmra.mrb[0].mxu0 %v951
        %v1240 = vpop.f32.mrb[0].mxu0
        %v1241 = vadd.f32 0.0, %v1240
        %v1242 = vpop.f32.mrb[0].mxu0
        %1243 = vdwg.mxu0
        %s1244 = scalar_lea.vmem [#allocation5], 48
        %v1245 = vld [vmem:[%s1244] sm:$0xff]
        %v1246 = vld [vmem:[%s1244 + $0x8] sm:$0xff]
        %1247 = vmatprep.subr.mxu0 0.0
        %1248 = vmatpush1.msra.mxu0 %v1245
        %1249 = vmatprep.subr.mxu0 0.0
        %1250 = vmatpush1.msra.mxu0 %v1246
        %1251 = vmatprep.subr.mxu0 0.0
        %1252 = vmatpush1.msra.mxu0 0.0
        %1253 = vmatprep.subr.mxu0 0.0
        %1254 = vmatpush1.msra.mxu0 0.0
        %1255 = vmatprep.subr.mxu0 0.0
        %1256 = vmatpush1.msra.mxu0 0.0
        %1257 = vmatprep.subr.mxu0 0.0
        %1258 = vmatpush1.msra.mxu0 0.0
        %1259 = vmatprep.subr.mxu0 0.0
        %1260 = vmatpush1.msra.mxu0 0.0
        %1261 = vmatprep.subr.mxu0 0.0
        %1262 = vmatpush1.msra.mxu0 0.0
        %1263 = vmatprep.subr.mxu0 0.0
        %1264 = vmatpush1.msra.mxu0 0.0
        %1265 = vmatprep.subr.mxu0 0.0
        %1266 = vmatpush1.msra.mxu0 0.0
        %1267 = vmatprep.subr.mxu0 0.0
        %1268 = vmatpush1.msra.mxu0 0.0
        %1269 = vmatprep.subr.mxu0 0.0
        %1270 = vmatpush1.msra.mxu0 0.0
        %1271 = vmatprep.subr.mxu0 0.0
        %1272 = vmatpush1.msra.mxu0 0.0
        %1273 = vmatprep.subr.mxu0 0.0
        %1274 = vmatpush1.msra.mxu0 0.0
        %1275 = vmatprep.subr.mxu0 0.0
        %1276 = vmatpush1.msra.mxu0 0.0
        %1277 = vmatprep.subr.mxu0 0.0
        %1278 = vmatpush1.msra.mxu0 0.0
        %1279 = vmatprep.subr.mxu0 0.0
        %1280 = vmatpush1.msra.mxu0 0.0
        %1281 = vmatprep.subr.mxu0 0.0
        %1282 = vmatpush1.msra.mxu0 0.0
        %1283 = vmatprep.subr.mxu0 0.0
        %1284 = vmatpush1.msra.mxu0 0.0
        %1285 = vmatprep.subr.mxu0 0.0
        %1286 = vmatpush1.msra.mxu0 0.0
        %1287 = vmatprep.subr.mxu0 0.0
        %1288 = vmatpush1.msra.mxu0 0.0
        %1289 = vmatprep.subr.mxu0 0.0
        %1290 = vmatpush1.msra.mxu0 0.0
        %1291 = vmatprep.subr.mxu0 0.0
        %1292 = vmatpush1.msra.mxu0 0.0
        %1293 = vmatprep.subr.mxu0 0.0
        %1294 = vmatpush1.msra.mxu0 0.0
        %1295 = vmatprep.subr.mxu0 0.0
        %1296 = vmatpush1.msra.mxu0 0.0
        %1297 = vmatprep.subr.mxu0 0.0
        %1298 = vmatpush1.msra.mxu0 0.0
        %1299 = vmatprep.subr.mxu0 0.0
        %1300 = vmatpush1.msra.mxu0 0.0
        %1301 = vmatprep.subr.mxu0 0.0
        %1302 = vmatpush1.msra.mxu0 0.0
        %1303 = vmatprep.subr.mxu0 0.0
        %1304 = vmatpush1.msra.mxu0 0.0
        %1305 = vmatprep.subr.mxu0 0.0
        %1306 = vmatpush1.msra.mxu0 0.0
        %1307 = vmatprep.subr.mxu0 0.0
        %1308 = vmatpush1.msra.mxu0 0.0
        %1309 = vmatprep.subr.mxu0 0.0
        %1310 = vmatpush1.msra.mxu0 0.0
        %1311 = vmatprep.mubr.f32.mxu0 0.0
        %1312 = vmatmul.mubr.f32.gmra.mrb[0].mxu0 %v936
        %v1313 = vpop.f32.mrb[0].mxu0
        %v1314 = vadd.f32 0.0, %v1313
        %v1315 = vpop.f32.mrb[0].mxu0
        %1316 = vmatprep.mubr.f32.mxu0 0.0
        %1317 = vmatmul.mubr.f32.gmra.mrb[0].mxu0 %v939
        %v1318 = vpop.f32.mrb[0].mxu0
        %v1319 = vadd.f32 0.0, %v1318
        %v1320 = vpop.f32.mrb[0].mxu0
        %1321 = vmatprep.mubr.f32.mxu0 0.0
        %1322 = vmatmul.mubr.f32.gmra.mrb[0].mxu0 %v942
        %v1323 = vpop.f32.mrb[0].mxu0
        %v1324 = vadd.f32 0.0, %v1323
        %v1325 = vpop.f32.mrb[0].mxu0
        %1326 = vmatprep.mubr.f32.mxu0 0.0
        %1327 = vmatmul.mubr.f32.gmra.mrb[0].mxu0 %v945
        %v1328 = vpop.f32.mrb[0].mxu0
        %v1329 = vadd.f32 0.0, %v1328
        %v1330 = vpop.f32.mrb[0].mxu0
        %1331 = vmatprep.mubr.f32.mxu0 0.0
        %1332 = vmatmul.mubr.f32.gmra.mrb[0].mxu0 %v948
        %v1333 = vpop.f32.mrb[0].mxu0
        %v1334 = vadd.f32 0.0, %v1333
        %v1335 = vpop.f32.mrb[0].mxu0
        %1336 = vmatprep.mubr.f32.mxu0 0.0
        %1337 = vmatmul.mubr.f32.gmra.mrb[0].mxu0 %v951
        %v1338 = vpop.f32.mrb[0].mxu0
        %v1339 = vadd.f32 0.0, %v1338
        %v1340 = vpop.f32.mrb[0].mxu0
        %1341 = vdwg.mxu0
        %s1342 = scalar_lea.vmem [#allocation5], 64
        %v1343 = vld [vmem:[%s1342] sm:$0xff]
        %v1344 = vld [vmem:[%s1342 + $0x8] sm:$0xff]
        %1345 = vmatprep.subr.mxu0 0.0
        %1346 = vmatpush1.msra.mxu0 %v1343
        %1347 = vmatprep.subr.mxu0 0.0
        %1348 = vmatpush1.msra.mxu0 %v1344
        %1349 = vmatprep.subr.mxu0 0.0
        %1350 = vmatpush1.msra.mxu0 0.0
        %1351 = vmatprep.subr.mxu0 0.0
        %1352 = vmatpush1.msra.mxu0 0.0
        %1353 = vmatprep.subr.mxu0 0.0
        %1354 = vmatpush1.msra.mxu0 0.0
        %1355 = vmatprep.subr.mxu0 0.0
        %1356 = vmatpush1.msra.mxu0 0.0
        %1357 = vmatprep.subr.mxu0 0.0
        %1358 = vmatpush1.msra.mxu0 0.0
        %1359 = vmatprep.subr.mxu0 0.0
        %1360 = vmatpush1.msra.mxu0 0.0
        %1361 = vmatprep.subr.mxu0 0.0
        %1362 = vmatpush1.msra.mxu0 0.0
        %1363 = vmatprep.subr.mxu0 0.0
        %1364 = vmatpush1.msra.mxu0 0.0
        %1365 = vmatprep.subr.mxu0 0.0
        %1366 = vmatpush1.msra.mxu0 0.0
        %1367 = vmatprep.subr.mxu0 0.0
        %1368 = vmatpush1.msra.mxu0 0.0
        %1369 = vmatprep.subr.mxu0 0.0
        %1370 = vmatpush1.msra.mxu0 0.0
        %1371 = vmatprep.subr.mxu0 0.0
        %1372 = vmatpush1.msra.mxu0 0.0
        %1373 = vmatprep.subr.mxu0 0.0
        %1374 = vmatpush1.msra.mxu0 0.0
        %1375 = vmatprep.subr.mxu0 0.0
        %1376 = vmatpush1.msra.mxu0 0.0
        %1377 = vmatprep.subr.mxu0 0.0
        %1378 = vmatpush1.msra.mxu0 0.0
        %1379 = vmatprep.subr.mxu0 0.0
        %1380 = vmatpush1.msra.mxu0 0.0
        %1381 = vmatprep.subr.mxu0 0.0
        %1382 = vmatpush1.msra.mxu0 0.0
        %1383 = vmatprep.subr.mxu0 0.0
        %1384 = vmatpush1.msra.mxu0 0.0
        %1385 = vmatprep.subr.mxu0 0.0
        %1386 = vmatpush1.msra.mxu0 0.0
        %1387 = vmatprep.subr.mxu0 0.0
        %1388 = vmatpush1.msra.mxu0 0.0
        %1389 = vmatprep.subr.mxu0 0.0
        %1390 = vmatpush1.msra.mxu0 0.0
        %1391 = vmatprep.subr.mxu0 0.0
        %1392 = vmatpush1.msra.mxu0 0.0
        %1393 = vmatprep.subr.mxu0 0.0
        %1394 = vmatpush1.msra.mxu0 0.0
        %1395 = vmatprep.subr.mxu0 0.0
        %1396 = vmatpush1.msra.mxu0 0.0
        %1397 = vmatprep.subr.mxu0 0.0
        %1398 = vmatpush1.msra.mxu0 0.0
        %1399 = vmatprep.subr.mxu0 0.0
        %1400 = vmatpush1.msra.mxu0 0.0
        %1401 = vmatprep.subr.mxu0 0.0
        %1402 = vmatpush1.msra.mxu0 0.0
        %1403 = vmatprep.subr.mxu0 0.0
        %1404 = vmatpush1.msra.mxu0 0.0
        %1405 = vmatprep.subr.mxu0 0.0
        %1406 = vmatpush1.msra.mxu0 0.0
        %1407 = vmatprep.subr.mxu0 0.0
        %1408 = vmatpush1.msra.mxu0 0.0
        %1409 = vmatprep.mubr.f32.mxu0 0.0
        %1410 = vmatmul.mubr.f32.gmra.mrb[0].mxu0 %v936
        %v1411 = vpop.f32.mrb[0].mxu0
        %v1412 = vadd.f32 0.0, %v1411
        %v1413 = vpop.f32.mrb[0].mxu0
        %1414 = vmatprep.mubr.f32.mxu0 0.0
        %1415 = vmatmul.mubr.f32.gmra.mrb[0].mxu0 %v939
        %v1416 = vpop.f32.mrb[0].mxu0
        %v1417 = vadd.f32 0.0, %v1416
        %v1418 = vpop.f32.mrb[0].mxu0
        %1419 = vmatprep.mubr.f32.mxu0 0.0
        %1420 = vmatmul.mubr.f32.gmra.mrb[0].mxu0 %v942
        %v1421 = vpop.f32.mrb[0].mxu0
        %v1422 = vadd.f32 0.0, %v1421
        %v1423 = vpop.f32.mrb[0].mxu0
        %1424 = vmatprep.mubr.f32.mxu0 0.0
        %1425 = vmatmul.mubr.f32.gmra.mrb[0].mxu0 %v945
        %v1426 = vpop.f32.mrb[0].mxu0
        %v1427 = vadd.f32 0.0, %v1426
        %v1428 = vpop.f32.mrb[0].mxu0
        %1429 = vmatprep.mubr.f32.mxu0 0.0
        %1430 = vmatmul.mubr.f32.gmra.mrb[0].mxu0 %v948
        %v1431 = vpop.f32.mrb[0].mxu0
        %v1432 = vadd.f32 0.0, %v1431
        %v1433 = vpop.f32.mrb[0].mxu0
        %1434 = vmatprep.mubr.f32.mxu0 0.0
        %1435 = vmatmul.mubr.f32.gmra.mrb[0].mxu0 %v951
        %v1436 = vpop.f32.mrb[0].mxu0
        %v1437 = vadd.f32 0.0, %v1436
        %v1438 = vpop.f32.mrb[0].mxu0
        %1439 = vdwg.mxu0
        %s1440 = scalar_lea.vmem [#allocation5], 80
        %v1441 = vld [vmem:[%s1440] sm:$0xff]
        %v1442 = vld [vmem:[%s1440 + $0x8] sm:$0xff]
        %1443 = vmatprep.subr.mxu0 0.0
        %1444 = vmatpush1.msra.mxu0 %v1441
        %1445 = vmatprep.subr.mxu0 0.0
        %1446 = vmatpush1.msra.mxu0 %v1442
        %1447 = vmatprep.subr.mxu0 0.0
        %1448 = vmatpush1.msra.mxu0 0.0
        %1449 = vmatprep.subr.mxu0 0.0
        %1450 = vmatpush1.msra.mxu0 0.0
        %1451 = vmatprep.subr.mxu0 0.0
        %1452 = vmatpush1.msra.mxu0 0.0
        %1453 = vmatprep.subr.mxu0 0.0
        %1454 = vmatpush1.msra.mxu0 0.0
        %1455 = vmatprep.subr.mxu0 0.0
        %1456 = vmatpush1.msra.mxu0 0.0
        %1457 = vmatprep.subr.mxu0 0.0
        %1458 = vmatpush1.msra.mxu0 0.0
        %1459 = vmatprep.subr.mxu0 0.0
        %1460 = vmatpush1.msra.mxu0 0.0
        %1461 = vmatprep.subr.mxu0 0.0
        %1462 = vmatpush1.msra.mxu0 0.0
        %1463 = vmatprep.subr.mxu0 0.0
        %1464 = vmatpush1.msra.mxu0 0.0
        %1465 = vmatprep.subr.mxu0 0.0
        %1466 = vmatpush1.msra.mxu0 0.0
        %1467 = vmatprep.subr.mxu0 0.0
        %1468 = vmatpush1.msra.mxu0 0.0
        %1469 = vmatprep.subr.mxu0 0.0
        %1470 = vmatpush1.msra.mxu0 0.0
        %1471 = vmatprep.subr.mxu0 0.0
        %1472 = vmatpush1.msra.mxu0 0.0
        %1473 = vmatprep.subr.mxu0 0.0
        %1474 = vmatpush1.msra.mxu0 0.0
        %1475 = vmatprep.subr.mxu0 0.0
        %1476 = vmatpush1.msra.mxu0 0.0
        %1477 = vmatprep.subr.mxu0 0.0
        %1478 = vmatpush1.msra.mxu0 0.0
        %1479 = vmatprep.subr.mxu0 0.0
        %1480 = vmatpush1.msra.mxu0 0.0
        %1481 = vmatprep.subr.mxu0 0.0
        %1482 = vmatpush1.msra.mxu0 0.0
        %1483 = vmatprep.subr.mxu0 0.0
        %1484 = vmatpush1.msra.mxu0 0.0
        %1485 = vmatprep.subr.mxu0 0.0
        %1486 = vmatpush1.msra.mxu0 0.0
        %1487 = vmatprep.subr.mxu0 0.0
        %1488 = vmatpush1.msra.mxu0 0.0
        %1489 = vmatprep.subr.mxu0 0.0
        %1490 = vmatpush1.msra.mxu0 0.0
        %1491 = vmatprep.subr.mxu0 0.0
        %1492 = vmatpush1.msra.mxu0 0.0
        %1493 = vmatprep.subr.mxu0 0.0
        %1494 = vmatpush1.msra.mxu0 0.0
        %1495 = vmatprep.subr.mxu0 0.0
        %1496 = vmatpush1.msra.mxu0 0.0
        %1497 = vmatprep.subr.mxu0 0.0
        %1498 = vmatpush1.msra.mxu0 0.0
        %1499 = vmatprep.subr.mxu0 0.0
        %1500 = vmatpush1.msra.mxu0 0.0
        %1501 = vmatprep.subr.mxu0 0.0
        %1502 = vmatpush1.msra.mxu0 0.0
        %1503 = vmatprep.subr.mxu0 0.0
        %1504 = vmatpush1.msra.mxu0 0.0
        %1505 = vmatprep.subr.mxu0 0.0
        %1506 = vmatpush1.msra.mxu0 0.0
        %1507 = vmatprep.mubr.f32.mxu0 0.0
        %1508 = vmatmul.mubr.f32.gmra.mrb[0].mxu0 %v936
        %v1509 = vpop.f32.mrb[0].mxu0
        %v1510 = vadd.f32 0.0, %v1509
        %v1511 = vpop.f32.mrb[0].mxu0
        %1512 = vmatprep.mubr.f32.mxu0 0.0
        %1513 = vmatmul.mubr.f32.gmra.mrb[0].mxu0 %v939
        %v1514 = vpop.f32.mrb[0].mxu0
        %v1515 = vadd.f32 0.0, %v1514
        %v1516 = vpop.f32.mrb[0].mxu0
        %1517 = vmatprep.mubr.f32.mxu0 0.0
        %1518 = vmatmul.mubr.f32.gmra.mrb[0].mxu0 %v942
        %v1519 = vpop.f32.mrb[0].mxu0
        %v1520 = vadd.f32 0.0, %v1519
        %v1521 = vpop.f32.mrb[0].mxu0
        %1522 = vmatprep.mubr.f32.mxu0 0.0
        %1523 = vmatmul.mubr.f32.gmra.mrb[0].mxu0 %v945
        %v1524 = vpop.f32.mrb[0].mxu0
        %v1525 = vadd.f32 0.0, %v1524
        %v1526 = vpop.f32.mrb[0].mxu0
        %1527 = vmatprep.mubr.f32.mxu0 0.0
        %1528 = vmatmul.mubr.f32.gmra.mrb[0].mxu0 %v948
        %v1529 = vpop.f32.mrb[0].mxu0
        %v1530 = vadd.f32 0.0, %v1529
        %v1531 = vpop.f32.mrb[0].mxu0
        %1532 = vmatprep.mubr.f32.mxu0 0.0
        %1533 = vmatmul.mubr.f32.gmra.mrb[0].mxu0 %v951
        %v1534 = vpop.f32.mrb[0].mxu0
        %v1535 = vadd.f32 0.0, %v1534
        %v1536 = vpop.f32.mrb[0].mxu0
        %1537 = vdwg.mxu0
        %s1538 = scalar_lea.vmem [#allocation5], 96
        %v1539 = vld [vmem:[%s1538] sm:$0xff]
        %v1540 = vld [vmem:[%s1538 + $0x8] sm:$0xff]
        %1541 = vmatprep.subr.mxu0 0.0
        %1542 = vmatpush1.msra.mxu0 %v1539
        %1543 = vmatprep.subr.mxu0 0.0
        %1544 = vmatpush1.msra.mxu0 %v1540
        %1545 = vmatprep.subr.mxu0 0.0
        %1546 = vmatpush1.msra.mxu0 0.0
        %1547 = vmatprep.subr.mxu0 0.0
        %1548 = vmatpush1.msra.mxu0 0.0
        %1549 = vmatprep.subr.mxu0 0.0
        %1550 = vmatpush1.msra.mxu0 0.0
        %1551 = vmatprep.subr.mxu0 0.0
        %1552 = vmatpush1.msra.mxu0 0.0
        %1553 = vmatprep.subr.mxu0 0.0
        %1554 = vmatpush1.msra.mxu0 0.0
        %1555 = vmatprep.subr.mxu0 0.0
        %1556 = vmatpush1.msra.mxu0 0.0
        %1557 = vmatprep.subr.mxu0 0.0
        %1558 = vmatpush1.msra.mxu0 0.0
        %1559 = vmatprep.subr.mxu0 0.0
        %1560 = vmatpush1.msra.mxu0 0.0
        %1561 = vmatprep.subr.mxu0 0.0
        %1562 = vmatpush1.msra.mxu0 0.0
        %1563 = vmatprep.subr.mxu0 0.0
        %1564 = vmatpush1.msra.mxu0 0.0
        %1565 = vmatprep.subr.mxu0 0.0
        %1566 = vmatpush1.msra.mxu0 0.0
        %1567 = vmatprep.subr.mxu0 0.0
        %1568 = vmatpush1.msra.mxu0 0.0
        %1569 = vmatprep.subr.mxu0 0.0
        %1570 = vmatpush1.msra.mxu0 0.0
        %1571 = vmatprep.subr.mxu0 0.0
        %1572 = vmatpush1.msra.mxu0 0.0
        %1573 = vmatprep.subr.mxu0 0.0
        %1574 = vmatpush1.msra.mxu0 0.0
        %1575 = vmatprep.subr.mxu0 0.0
        %1576 = vmatpush1.msra.mxu0 0.0
        %1577 = vmatprep.subr.mxu0 0.0
        %1578 = vmatpush1.msra.mxu0 0.0
        %1579 = vmatprep.subr.mxu0 0.0
        %1580 = vmatpush1.msra.mxu0 0.0
        %1581 = vmatprep.subr.mxu0 0.0
        %1582 = vmatpush1.msra.mxu0 0.0
        %1583 = vmatprep.subr.mxu0 0.0
        %1584 = vmatpush1.msra.mxu0 0.0
        %1585 = vmatprep.subr.mxu0 0.0
        %1586 = vmatpush1.msra.mxu0 0.0
        %1587 = vmatprep.subr.mxu0 0.0
        %1588 = vmatpush1.msra.mxu0 0.0
        %1589 = vmatprep.subr.mxu0 0.0
        %1590 = vmatpush1.msra.mxu0 0.0
        %1591 = vmatprep.subr.mxu0 0.0
        %1592 = vmatpush1.msra.mxu0 0.0
        %1593 = vmatprep.subr.mxu0 0.0
        %1594 = vmatpush1.msra.mxu0 0.0
        %1595 = vmatprep.subr.mxu0 0.0
        %1596 = vmatpush1.msra.mxu0 0.0
        %1597 = vmatprep.subr.mxu0 0.0
        %1598 = vmatpush1.msra.mxu0 0.0
        %1599 = vmatprep.subr.mxu0 0.0
        %1600 = vmatpush1.msra.mxu0 0.0
        %1601 = vmatprep.subr.mxu0 0.0
        %1602 = vmatpush1.msra.mxu0 0.0
        %1603 = vmatprep.subr.mxu0 0.0
        %1604 = vmatpush1.msra.mxu0 0.0
        %1605 = vmatprep.mubr.f32.mxu0 0.0
        %1606 = vmatmul.mubr.f32.gmra.mrb[0].mxu0 %v936
        %v1607 = vpop.f32.mrb[0].mxu0
        %v1608 = vadd.f32 0.0, %v1607
        %v1609 = vpop.f32.mrb[0].mxu0
        %1610 = vmatprep.mubr.f32.mxu0 0.0
        %1611 = vmatmul.mubr.f32.gmra.mrb[0].mxu0 %v939
        %v1612 = vpop.f32.mrb[0].mxu0
        %v1613 = vadd.f32 0.0, %v1612
        %v1614 = vpop.f32.mrb[0].mxu0
        %1615 = vmatprep.mubr.f32.mxu0 0.0
        %1616 = vmatmul.mubr.f32.gmra.mrb[0].mxu0 %v942
        %v1617 = vpop.f32.mrb[0].mxu0
        %v1618 = vadd.f32 0.0, %v1617
        %v1619 = vpop.f32.mrb[0].mxu0
        %1620 = vmatprep.mubr.f32.mxu0 0.0
        %1621 = vmatmul.mubr.f32.gmra.mrb[0].mxu0 %v945
        %v1622 = vpop.f32.mrb[0].mxu0
        %v1623 = vadd.f32 0.0, %v1622
        %v1624 = vpop.f32.mrb[0].mxu0
        %1625 = vmatprep.mubr.f32.mxu0 0.0
        %1626 = vmatmul.mubr.f32.gmra.mrb[0].mxu0 %v948
        %v1627 = vpop.f32.mrb[0].mxu0
        %v1628 = vadd.f32 0.0, %v1627
        %v1629 = vpop.f32.mrb[0].mxu0
        %1630 = vmatprep.mubr.f32.mxu0 0.0
        %1631 = vmatmul.mubr.f32.gmra.mrb[0].mxu0 %v951
        %v1632 = vpop.f32.mrb[0].mxu0
        %v1633 = vadd.f32 0.0, %v1632
        %v1634 = vpop.f32.mrb[0].mxu0
        %1635 = vdwg.mxu0
        %s1636 = scalar_lea.vmem [#allocation5], 112
        %v1637 = vld [vmem:[%s1636] sm:$0xff]
        %v1638 = vld [vmem:[%s1636 + $0x8] sm:$0xff]
        %1639 = vmatprep.subr.mxu0 0.0
        %1640 = vmatpush1.msra.mxu0 %v1637
        %1641 = vmatprep.subr.mxu0 0.0
        %1642 = vmatpush1.msra.mxu0 %v1638
        %1643 = vmatprep.subr.mxu0 0.0
        %1644 = vmatpush1.msra.mxu0 0.0
        %1645 = vmatprep.subr.mxu0 0.0
        %1646 = vmatpush1.msra.mxu0 0.0
        %1647 = vmatprep.subr.mxu0 0.0
        %1648 = vmatpush1.msra.mxu0 0.0
        %1649 = vmatprep.subr.mxu0 0.0
        %1650 = vmatpush1.msra.mxu0 0.0
        %1651 = vmatprep.subr.mxu0 0.0
        %1652 = vmatpush1.msra.mxu0 0.0
        %1653 = vmatprep.subr.mxu0 0.0
        %1654 = vmatpush1.msra.mxu0 0.0
        %1655 = vmatprep.subr.mxu0 0.0
        %1656 = vmatpush1.msra.mxu0 0.0
        %1657 = vmatprep.subr.mxu0 0.0
        %1658 = vmatpush1.msra.mxu0 0.0
        %1659 = vmatprep.subr.mxu0 0.0
        %1660 = vmatpush1.msra.mxu0 0.0
        %1661 = vmatprep.subr.mxu0 0.0
        %1662 = vmatpush1.msra.mxu0 0.0
        %1663 = vmatprep.subr.mxu0 0.0
        %1664 = vmatpush1.msra.mxu0 0.0
        %1665 = vmatprep.subr.mxu0 0.0
        %1666 = vmatpush1.msra.mxu0 0.0
        %1667 = vmatprep.subr.mxu0 0.0
        %1668 = vmatpush1.msra.mxu0 0.0
        %1669 = vmatprep.subr.mxu0 0.0
        %1670 = vmatpush1.msra.mxu0 0.0
        %1671 = vmatprep.subr.mxu0 0.0
        %1672 = vmatpush1.msra.mxu0 0.0
        %1673 = vmatprep.subr.mxu0 0.0
        %1674 = vmatpush1.msra.mxu0 0.0
        %1675 = vmatprep.subr.mxu0 0.0
        %1676 = vmatpush1.msra.mxu0 0.0
        %1677 = vmatprep.subr.mxu0 0.0
        %1678 = vmatpush1.msra.mxu0 0.0
        %1679 = vmatprep.subr.mxu0 0.0
        %1680 = vmatpush1.msra.mxu0 0.0
        %1681 = vmatprep.subr.mxu0 0.0
        %1682 = vmatpush1.msra.mxu0 0.0
        %1683 = vmatprep.subr.mxu0 0.0
        %1684 = vmatpush1.msra.mxu0 0.0
        %1685 = vmatprep.subr.mxu0 0.0
        %1686 = vmatpush1.msra.mxu0 0.0
        %1687 = vmatprep.subr.mxu0 0.0
        %1688 = vmatpush1.msra.mxu0 0.0
        %1689 = vmatprep.subr.mxu0 0.0
        %1690 = vmatpush1.msra.mxu0 0.0
        %1691 = vmatprep.subr.mxu0 0.0
        %1692 = vmatpush1.msra.mxu0 0.0
        %1693 = vmatprep.subr.mxu0 0.0
        %1694 = vmatpush1.msra.mxu0 0.0
        %1695 = vmatprep.subr.mxu0 0.0
        %1696 = vmatpush1.msra.mxu0 0.0
        %1697 = vmatprep.subr.mxu0 0.0
        %1698 = vmatpush1.msra.mxu0 0.0
        %1699 = vmatprep.subr.mxu0 0.0
        %1700 = vmatpush1.msra.mxu0 0.0
        %1701 = vmatprep.subr.mxu0 0.0
        %1702 = vmatpush1.msra.mxu0 0.0
        %1703 = vmatprep.mubr.f32.mxu0 0.0
        %1704 = vmatmul.mubr.f32.gmra.mrb[0].mxu0 %v936
        %v1705 = vpop.f32.mrb[0].mxu0
        %v1706 = vadd.f32 0.0, %v1705
        %v1707 = vpop.f32.mrb[0].mxu0
        %1708 = vmatprep.mubr.f32.mxu0 0.0
        %1709 = vmatmul.mubr.f32.gmra.mrb[0].mxu0 %v939
        %v1710 = vpop.f32.mrb[0].mxu0
        %v1711 = vadd.f32 0.0, %v1710
        %v1712 = vpop.f32.mrb[0].mxu0
        %1713 = vmatprep.mubr.f32.mxu0 0.0
        %1714 = vmatmul.mubr.f32.gmra.mrb[0].mxu0 %v942
        %v1715 = vpop.f32.mrb[0].mxu0
        %v1716 = vadd.f32 0.0, %v1715
        %v1717 = vpop.f32.mrb[0].mxu0
        %1718 = vmatprep.mubr.f32.mxu0 0.0
        %1719 = vmatmul.mubr.f32.gmra.mrb[0].mxu0 %v945
        %v1720 = vpop.f32.mrb[0].mxu0
        %v1721 = vadd.f32 0.0, %v1720
        %v1722 = vpop.f32.mrb[0].mxu0
        %1723 = vmatprep.mubr.f32.mxu0 0.0
        %1724 = vmatmul.mubr.f32.gmra.mrb[0].mxu0 %v948
        %v1725 = vpop.f32.mrb[0].mxu0
        %v1726 = vadd.f32 0.0, %v1725
        %v1727 = vpop.f32.mrb[0].mxu0
        %1728 = vmatprep.mubr.f32.mxu0 0.0
        %1729 = vmatmul.mubr.f32.gmra.mrb[0].mxu0 %v951
        %v1730 = vpop.f32.mrb[0].mxu0
        %v1731 = vadd.f32 0.0, %v1730
        %v1732 = vpop.f32.mrb[0].mxu0
        %1733 = vdwg.mxu0
        %s1734 = scalar_lea.vmem [#allocation5], 128
        %v1735 = vld [vmem:[%s1734] sm:$0xff]
        %v1736 = vld [vmem:[%s1734 + $0x8] sm:$0xff]
        %1737 = vmatprep.subr.mxu0 0.0
        %1738 = vmatpush1.msra.mxu0 %v1735
        %1739 = vmatprep.subr.mxu0 0.0
        %1740 = vmatpush1.msra.mxu0 %v1736
        %1741 = vmatprep.subr.mxu0 0.0
        %1742 = vmatpush1.msra.mxu0 0.0
        %1743 = vmatprep.subr.mxu0 0.0
        %1744 = vmatpush1.msra.mxu0 0.0
        %1745 = vmatprep.subr.mxu0 0.0
        %1746 = vmatpush1.msra.mxu0 0.0
        %1747 = vmatprep.subr.mxu0 0.0
        %1748 = vmatpush1.msra.mxu0 0.0
        %1749 = vmatprep.subr.mxu0 0.0
        %1750 = vmatpush1.msra.mxu0 0.0
        %1751 = vmatprep.subr.mxu0 0.0
        %1752 = vmatpush1.msra.mxu0 0.0
        %1753 = vmatprep.subr.mxu0 0.0
        %1754 = vmatpush1.msra.mxu0 0.0
        %1755 = vmatprep.subr.mxu0 0.0
        %1756 = vmatpush1.msra.mxu0 0.0
        %1757 = vmatprep.subr.mxu0 0.0
        %1758 = vmatpush1.msra.mxu0 0.0
        %1759 = vmatprep.subr.mxu0 0.0
        %1760 = vmatpush1.msra.mxu0 0.0
        %1761 = vmatprep.subr.mxu0 0.0
        %1762 = vmatpush1.msra.mxu0 0.0
        %1763 = vmatprep.subr.mxu0 0.0
        %1764 = vmatpush1.msra.mxu0 0.0
        %1765 = vmatprep.subr.mxu0 0.0
        %1766 = vmatpush1.msra.mxu0 0.0
        %1767 = vmatprep.subr.mxu0 0.0
        %1768 = vmatpush1.msra.mxu0 0.0
        %1769 = vmatprep.subr.mxu0 0.0
        %1770 = vmatpush1.msra.mxu0 0.0
        %1771 = vmatprep.subr.mxu0 0.0
        %1772 = vmatpush1.msra.mxu0 0.0
        %1773 = vmatprep.subr.mxu0 0.0
        %1774 = vmatpush1.msra.mxu0 0.0
        %1775 = vmatprep.subr.mxu0 0.0
        %1776 = vmatpush1.msra.mxu0 0.0
        %1777 = vmatprep.subr.mxu0 0.0
        %1778 = vmatpush1.msra.mxu0 0.0
        %1779 = vmatprep.subr.mxu0 0.0
        %1780 = vmatpush1.msra.mxu0 0.0
        %1781 = vmatprep.subr.mxu0 0.0
        %1782 = vmatpush1.msra.mxu0 0.0
        %1783 = vmatprep.subr.mxu0 0.0
        %1784 = vmatpush1.msra.mxu0 0.0
        %1785 = vmatprep.subr.mxu0 0.0
        %1786 = vmatpush1.msra.mxu0 0.0
        %1787 = vmatprep.subr.mxu0 0.0
        %1788 = vmatpush1.msra.mxu0 0.0
        %1789 = vmatprep.subr.mxu0 0.0
        %1790 = vmatpush1.msra.mxu0 0.0
        %1791 = vmatprep.subr.mxu0 0.0
        %1792 = vmatpush1.msra.mxu0 0.0
        %1793 = vmatprep.subr.mxu0 0.0
        %1794 = vmatpush1.msra.mxu0 0.0
        %1795 = vmatprep.subr.mxu0 0.0
        %1796 = vmatpush1.msra.mxu0 0.0
        %1797 = vmatprep.subr.mxu0 0.0
        %1798 = vmatpush1.msra.mxu0 0.0
        %1799 = vmatprep.subr.mxu0 0.0
        %1800 = vmatpush1.msra.mxu0 0.0
        %1801 = vmatprep.mubr.f32.mxu0 0.0
        %1802 = vmatmul.mubr.f32.gmra.mrb[0].mxu0 %v936
        %v1803 = vpop.f32.mrb[0].mxu0
        %v1804 = vadd.f32 0.0, %v1803
        %v1805 = vpop.f32.mrb[0].mxu0
        %1806 = vmatprep.mubr.f32.mxu0 0.0
        %1807 = vmatmul.mubr.f32.gmra.mrb[0].mxu0 %v939
        %v1808 = vpop.f32.mrb[0].mxu0
        %v1809 = vadd.f32 0.0, %v1808
        %v1810 = vpop.f32.mrb[0].mxu0
        %1811 = vmatprep.mubr.f32.mxu0 0.0
        %1812 = vmatmul.mubr.f32.gmra.mrb[0].mxu0 %v942
        %v1813 = vpop.f32.mrb[0].mxu0
        %v1814 = vadd.f32 0.0, %v1813
        %v1815 = vpop.f32.mrb[0].mxu0
        %1816 = vmatprep.mubr.f32.mxu0 0.0
        %1817 = vmatmul.mubr.f32.gmra.mrb[0].mxu0 %v945
        %v1818 = vpop.f32.mrb[0].mxu0
        %v1819 = vadd.f32 0.0, %v1818
        %v1820 = vpop.f32.mrb[0].mxu0
        %1821 = vmatprep.mubr.f32.mxu0 0.0
        %1822 = vmatmul.mubr.f32.gmra.mrb[0].mxu0 %v948
        %v1823 = vpop.f32.mrb[0].mxu0
        %v1824 = vadd.f32 0.0, %v1823
        %v1825 = vpop.f32.mrb[0].mxu0
        %1826 = vmatprep.mubr.f32.mxu0 0.0
        %1827 = vmatmul.mubr.f32.gmra.mrb[0].mxu0 %v951
        %v1828 = vpop.f32.mrb[0].mxu0
        %v1829 = vadd.f32 0.0, %v1828
        %v1830 = vpop.f32.mrb[0].mxu0
        %1831 = vdwg.mxu0
        %v1832 = vld [vmem:[#allocation8] sm:$0xff]
        %v1833 = vld [vmem:[#allocation8 + $0x8] sm:$0xff]
        %v1834 = vld [vmem:[#allocation8 + $0x10] sm:$0xff]
        %v1835 = vld [vmem:[#allocation8 + $0x18] sm:$0xff]
        %v1836 = vld [vmem:[#allocation8 + $0x20] sm:$0xff]
        %v1837 = vld [vmem:[#allocation8 + $0x28] sm:$0xff]
        %v1838 = vld [vmem:[#allocation8 + $0x30] sm:$0xff]
        %v1839 = vld [vmem:[#allocation8 + $0x38] sm:$0xff]
        %v1840 = vld [vmem:[#allocation8 + $0x40] sm:$0xff]
        %v1841 = vld [vmem:[#allocation8 + $0x48] sm:$0xff]
        %v1842 = vld [vmem:[#allocation8 + $0x50] sm:$0xff]
        %v1843 = vld [vmem:[#allocation8 + $0x58] sm:$0xff]
        %v1844 = vld [vmem:[%s5] sm:$0xff]
        %v1845 = vld [vmem:[%s5 + $0x8] sm:$0xff]
        %v1846 = vld [vmem:[%s5 + $0x10] sm:$0xff]
        %1848 = vset.pattern.permute.xlu0 0
        %1849 = vperm.xlu0 %1848, %v1844
        %v1850 = vpop.permute.xlu0 %1849
        %1853 = vset.pattern.permute.xlu0 0
        %1854 = vperm.xlu0 %1853, %v1845
        %v1855 = vpop.permute.xlu0 %1854
        %1858 = vset.pattern.permute.xlu0 0
        %1859 = vperm.xlu0 %1858, %v1846
        %v1860 = vpop.permute.xlu0 %1859
        %vm1862 = vcmask 392192
        %v1864 = vsel %vm1862, %v1835, 0
        %v1867 = vsel %vm1862, %v1839, 0
        %v1870 = vsel %vm1862, %v1843, 0
        %1872 = vmatprep.subr.mxu0 0.0
        %1873 = vmatpush1.msra.mxu0 %v1020
        %1874 = vmatprep.subr.mxu0 0.0
        %1875 = vmatpush1.msra.mxu0 %v1025
        %1876 = vmatprep.subr.mxu0 0.0
        %1877 = vmatpush1.msra.mxu0 %v1030
        %1878 = vmatprep.subr.mxu0 0.0
        %1879 = vmatpush1.msra.mxu0 %v1035
        %1880 = vmatprep.subr.mxu0 0.0
        %1881 = vmatpush1.msra.mxu0 %v1040
        %1882 = vmatprep.subr.mxu0 0.0
        %1883 = vmatpush1.msra.mxu0 %v1045
        %1884 = vmatprep.subr.mxu0 0.0
        %1885 = vmatpush1.msra.mxu0 %v1118
        %1886 = vmatprep.subr.mxu0 0.0
        %1887 = vmatpush1.msra.mxu0 %v1123
        %1888 = vmatprep.subr.mxu0 0.0
        %1889 = vmatpush1.msra.mxu0 %v1128
        %1890 = vmatprep.subr.mxu0 0.0
        %1891 = vmatpush1.msra.mxu0 %v1133
        %1892 = vmatprep.subr.mxu0 0.0
        %1893 = vmatpush1.msra.mxu0 %v1138
        %1894 = vmatprep.subr.mxu0 0.0
        %1895 = vmatpush1.msra.mxu0 %v1143
        %1896 = vmatprep.subr.mxu0 0.0
        %1897 = vmatpush1.msra.mxu0 %v1216
        %1898 = vmatprep.subr.mxu0 0.0
        %1899 = vmatpush1.msra.mxu0 %v1221
        %1900 = vmatprep.subr.mxu0 0.0
        %1901 = vmatpush1.msra.mxu0 %v1226
        %1902 = vmatprep.subr.mxu0 0.0
        %1903 = vmatpush1.msra.mxu0 %v1231
        %1904 = vmatprep.subr.mxu0 0.0
        %1905 = vmatpush1.msra.mxu0 %v1236
        %1906 = vmatprep.subr.mxu0 0.0
        %1907 = vmatpush1.msra.mxu0 %v1241
        %1908 = vmatprep.subr.mxu0 0.0
        %1909 = vmatpush1.msra.mxu0 %v1314
        %1910 = vmatprep.subr.mxu0 0.0
        %1911 = vmatpush1.msra.mxu0 %v1319
        %1912 = vmatprep.subr.mxu0 0.0
        %1913 = vmatpush1.msra.mxu0 %v1324
        %1914 = vmatprep.subr.mxu0 0.0
        %1915 = vmatpush1.msra.mxu0 %v1329
        %1916 = vmatprep.subr.mxu0 0.0
        %1917 = vmatpush1.msra.mxu0 %v1334
        %1918 = vmatprep.subr.mxu0 0.0
        %1919 = vmatpush1.msra.mxu0 %v1339
        %1920 = vmatprep.subr.mxu0 0.0
        %1921 = vmatpush1.msra.mxu0 %v1412
        %1922 = vmatprep.subr.mxu0 0.0
        %1923 = vmatpush1.msra.mxu0 %v1417
        %1924 = vmatprep.subr.mxu0 0.0
        %1925 = vmatpush1.msra.mxu0 %v1422
        %1926 = vmatprep.subr.mxu0 0.0
        %1927 = vmatpush1.msra.mxu0 %v1427
        %1928 = vmatprep.subr.mxu0 0.0
        %1929 = vmatpush1.msra.mxu0 %v1432
        %1930 = vmatprep.subr.mxu0 0.0
        %1931 = vmatpush1.msra.mxu0 %v1437
        %1932 = vmatprep.subr.mxu0 0.0
        %1933 = vmatpush1.msra.mxu0 %v1510
        %1934 = vmatprep.subr.mxu0 0.0
        %1935 = vmatpush1.msra.mxu0 %v1515
        %1936 = vmatprep.mubr.f32.mxu0 %v1833
        %1937 = vmatmul.mubr.f32.gmra.mrb[0].mxu0 %v1832
        %v1938 = vpop.f32.mrb[0].mxu0
        %v1939 = vadd.f32 %v1850, %v1938
        %v1940 = vpop.f32.mrb[0].mxu0
        %1941 = vmatprep.mubr.f32.mxu0 %v1837
        %1942 = vmatmul.mubr.f32.gmra.mrb[0].mxu0 %v1836
        %v1943 = vpop.f32.mrb[0].mxu0
        %v1944 = vadd.f32 %v1855, %v1943
        %v1945 = vpop.f32.mrb[0].mxu0
        %1946 = vmatprep.mubr.f32.mxu0 %v1841
        %1947 = vmatmul.mubr.f32.gmra.mrb[0].mxu0 %v1840
        %v1948 = vpop.f32.mrb[0].mxu0
        %v1949 = vadd.f32 %v1860, %v1948
        %v1950 = vpop.f32.mrb[0].mxu0
        %1951 = vdwg.mxu0
        %1952 = vmatprep.subr.mxu0 0.0
        %1953 = vmatpush1.msra.mxu0 %v1520
        %1954 = vmatprep.subr.mxu0 0.0
        %1955 = vmatpush1.msra.mxu0 %v1525
        %1956 = vmatprep.subr.mxu0 0.0
        %1957 = vmatpush1.msra.mxu0 %v1530
        %1958 = vmatprep.subr.mxu0 0.0
        %1959 = vmatpush1.msra.mxu0 %v1535
        %1960 = vmatprep.subr.mxu0 0.0
        %1961 = vmatpush1.msra.mxu0 %v1608
        %1962 = vmatprep.subr.mxu0 0.0
        %1963 = vmatpush1.msra.mxu0 %v1613
        %1964 = vmatprep.subr.mxu0 0.0
        %1965 = vmatpush1.msra.mxu0 %v1618
        %1966 = vmatprep.subr.mxu0 0.0
        %1967 = vmatpush1.msra.mxu0 %v1623
        %1968 = vmatprep.subr.mxu0 0.0
        %1969 = vmatpush1.msra.mxu0 %v1628
        %1970 = vmatprep.subr.mxu0 0.0
        %1971 = vmatpush1.msra.mxu0 %v1633
        %1972 = vmatprep.subr.mxu0 0.0
        %1973 = vmatpush1.msra.mxu0 %v1706
        %1974 = vmatprep.subr.mxu0 0.0
        %1975 = vmatpush1.msra.mxu0 %v1711
        %1976 = vmatprep.subr.mxu0 0.0
        %1977 = vmatpush1.msra.mxu0 %v1716
        %1978 = vmatprep.subr.mxu0 0.0
        %1979 = vmatpush1.msra.mxu0 %v1721
        %1980 = vmatprep.subr.mxu0 0.0
        %1981 = vmatpush1.msra.mxu0 %v1726
        %1982 = vmatprep.subr.mxu0 0.0
        %1983 = vmatpush1.msra.mxu0 %v1731
        %1984 = vmatprep.subr.mxu0 0.0
        %1985 = vmatpush1.msra.mxu0 %v1804
        %1986 = vmatprep.subr.mxu0 0.0
        %1987 = vmatpush1.msra.mxu0 %v1809
        %1988 = vmatprep.subr.mxu0 0.0
        %1989 = vmatpush1.msra.mxu0 %v1814
        %1990 = vmatprep.subr.mxu0 0.0
        %1991 = vmatpush1.msra.mxu0 %v1819
        %1992 = vmatprep.subr.mxu0 0.0
        %1993 = vmatpush1.msra.mxu0 %v1824
        %1994 = vmatprep.subr.mxu0 0.0
        %1995 = vmatpush1.msra.mxu0 %v1829
        %1996 = vmatprep.subr.mxu0 0.0
        %1997 = vmatpush1.msra.mxu0 0.0
        %1998 = vmatprep.subr.mxu0 0.0
        %1999 = vmatpush1.msra.mxu0 0.0
        %2000 = vmatprep.subr.mxu0 0.0
        %2001 = vmatpush1.msra.mxu0 0.0
        %2002 = vmatprep.subr.mxu0 0.0
        %2003 = vmatpush1.msra.mxu0 0.0
        %2004 = vmatprep.subr.mxu0 0.0
        %2005 = vmatpush1.msra.mxu0 0.0
        %2006 = vmatprep.subr.mxu0 0.0
        %2007 = vmatpush1.msra.mxu0 0.0
        %2008 = vmatprep.subr.mxu0 0.0
        %2009 = vmatpush1.msra.mxu0 0.0
        %2010 = vmatprep.subr.mxu0 0.0
        %2011 = vmatpush1.msra.mxu0 0.0
        %2012 = vmatprep.subr.mxu0 0.0
        %2013 = vmatpush1.msra.mxu0 0.0
        %2014 = vmatprep.subr.mxu0 0.0
        %2015 = vmatpush1.msra.mxu0 0.0
        %2016 = vmatprep.mubr.f32.mxu0 %v1864
        %2017 = vmatmul.mubr.f32.gmra.mrb[0].mxu0 %v1834
        %v2018 = vpop.f32.mrb[0].mxu0
        %v2019 = vadd.f32 %v1939, %v2018
        %v2020 = vpop.f32.mrb[0].mxu0
        %2021 = vmatprep.mubr.f32.mxu0 %v1867
        %2022 = vmatmul.mubr.f32.gmra.mrb[0].mxu0 %v1838
        %v2023 = vpop.f32.mrb[0].mxu0
        %v2024 = vadd.f32 %v1944, %v2023
        %v2025 = vpop.f32.mrb[0].mxu0
        %2026 = vmatprep.mubr.f32.mxu0 %v1870
        %2027 = vmatmul.mubr.f32.gmra.mrb[0].mxu0 %v1842
        %v2028 = vpop.f32.mrb[0].mxu0
        %v2029 = vadd.f32 %v1949, %v2028
        %v2030 = vpop.f32.mrb[0].mxu0
        %2031 = vdwg.mxu0
        %v2032 = vmax.f32 %v2019, 0.0
        %v2033 = vmax.f32 %v2024, 0.0
        %v2034 = vmax.f32 %v2029, 0.0
        %v2036 = vsel %vm934, %v2032, 0
        %v2039 = vsel %vm934, %v2033, 0
        %v2042 = vsel %vm934, %v2034, 0
        %2044 = vmatprep.subr.mxu0 0.0
        %2045 = vmatpush1.msra.mxu0 %v932
        %2046 = vmatprep.subr.mxu0 0.0
        %2047 = vmatpush1.msra.mxu0 %v933
        %2048 = vmatprep.subr.mxu0 0.0
        %2049 = vmatpush1.msra.mxu0 0.0
        %2050 = vmatprep.subr.mxu0 0.0
        %2051 = vmatpush1.msra.mxu0 0.0
        %2052 = vmatprep.subr.mxu0 0.0
        %2053 = vmatpush1.msra.mxu0 0.0
        %2054 = vmatprep.subr.mxu0 0.0
        %2055 = vmatpush1.msra.mxu0 0.0
        %2056 = vmatprep.subr.mxu0 0.0
        %2057 = vmatpush1.msra.mxu0 0.0
        %2058 = vmatprep.subr.mxu0 0.0
        %2059 = vmatpush1.msra.mxu0 0.0
        %2060 = vmatprep.subr.mxu0 0.0
        %2061 = vmatpush1.msra.mxu0 0.0
        %2062 = vmatprep.subr.mxu0 0.0
        %2063 = vmatpush1.msra.mxu0 0.0
        %2064 = vmatprep.subr.mxu0 0.0
        %2065 = vmatpush1.msra.mxu0 0.0
        %2066 = vmatprep.subr.mxu0 0.0
        %2067 = vmatpush1.msra.mxu0 0.0
        %2068 = vmatprep.subr.mxu0 0.0
        %2069 = vmatpush1.msra.mxu0 0.0
        %2070 = vmatprep.subr.mxu0 0.0
        %2071 = vmatpush1.msra.mxu0 0.0
        %2072 = vmatprep.subr.mxu0 0.0
        %2073 = vmatpush1.msra.mxu0 0.0
        %2074 = vmatprep.subr.mxu0 0.0
        %2075 = vmatpush1.msra.mxu0 0.0
        %2076 = vmatprep.subr.mxu0 0.0
        %2077 = vmatpush1.msra.mxu0 0.0
        %2078 = vmatprep.subr.mxu0 0.0
        %2079 = vmatpush1.msra.mxu0 0.0
        %2080 = vmatprep.subr.mxu0 0.0
        %2081 = vmatpush1.msra.mxu0 0.0
        %2082 = vmatprep.subr.mxu0 0.0
        %2083 = vmatpush1.msra.mxu0 0.0
        %2084 = vmatprep.subr.mxu0 0.0
        %2085 = vmatpush1.msra.mxu0 0.0
        %2086 = vmatprep.subr.mxu0 0.0
        %2087 = vmatpush1.msra.mxu0 0.0
        %2088 = vmatprep.subr.mxu0 0.0
        %2089 = vmatpush1.msra.mxu0 0.0
        %2090 = vmatprep.subr.mxu0 0.0
        %2091 = vmatpush1.msra.mxu0 0.0
        %2092 = vmatprep.subr.mxu0 0.0
        %2093 = vmatpush1.msra.mxu0 0.0
        %2094 = vmatprep.subr.mxu0 0.0
        %2095 = vmatpush1.msra.mxu0 0.0
        %2096 = vmatprep.subr.mxu0 0.0
        %2097 = vmatpush1.msra.mxu0 0.0
        %2098 = vmatprep.subr.mxu0 0.0
        %2099 = vmatpush1.msra.mxu0 0.0
        %2100 = vmatprep.subr.mxu0 0.0
        %2101 = vmatpush1.msra.mxu0 0.0
        %2102 = vmatprep.subr.mxu0 0.0
        %2103 = vmatpush1.msra.mxu0 0.0
        %2104 = vmatprep.subr.mxu0 0.0
        %2105 = vmatpush1.msra.mxu0 0.0
        %2106 = vmatprep.subr.mxu0 0.0
        %2107 = vmatpush1.msra.mxu0 0.0
        %2108 = vmatprep.mubr.f32.mxu0 0.0
        %2109 = vmatmul.mubr.f32.gmra.mrb[0].mxu0 %v2036
        %v2110 = vpop.f32.mrb[0].mxu0
        %v2111 = vadd.f32 0.0, %v2110
        %v2112 = vpop.f32.mrb[0].mxu0
        %2113 = vmatprep.mubr.f32.mxu0 0.0
        %2114 = vmatmul.mubr.f32.gmra.mrb[0].mxu0 %v2039
        %v2115 = vpop.f32.mrb[0].mxu0
        %v2116 = vadd.f32 0.0, %v2115
        %v2117 = vpop.f32.mrb[0].mxu0
        %2118 = vmatprep.mubr.f32.mxu0 0.0
        %2119 = vmatmul.mubr.f32.gmra.mrb[0].mxu0 %v2042
        %v2120 = vpop.f32.mrb[0].mxu0
        %v2121 = vadd.f32 0.0, %v2120
        %v2122 = vpop.f32.mrb[0].mxu0
        %2123 = vdwg.mxu0
        %2124 = vmatprep.subr.mxu0 0.0
        %2125 = vmatpush1.msra.mxu0 %v1049
        %2126 = vmatprep.subr.mxu0 0.0
        %2127 = vmatpush1.msra.mxu0 %v1050
        %2128 = vmatprep.subr.mxu0 0.0
        %2129 = vmatpush1.msra.mxu0 0.0
        %2130 = vmatprep.subr.mxu0 0.0
        %2131 = vmatpush1.msra.mxu0 0.0
        %2132 = vmatprep.subr.mxu0 0.0
        %2133 = vmatpush1.msra.mxu0 0.0
        %2134 = vmatprep.subr.mxu0 0.0
        %2135 = vmatpush1.msra.mxu0 0.0
        %2136 = vmatprep.subr.mxu0 0.0
        %2137 = vmatpush1.msra.mxu0 0.0
        %2138 = vmatprep.subr.mxu0 0.0
        %2139 = vmatpush1.msra.mxu0 0.0
        %2140 = vmatprep.subr.mxu0 0.0
        %2141 = vmatpush1.msra.mxu0 0.0
        %2142 = vmatprep.subr.mxu0 0.0
        %2143 = vmatpush1.msra.mxu0 0.0
        %2144 = vmatprep.subr.mxu0 0.0
        %2145 = vmatpush1.msra.mxu0 0.0
        %2146 = vmatprep.subr.mxu0 0.0
        %2147 = vmatpush1.msra.mxu0 0.0
        %2148 = vmatprep.subr.mxu0 0.0
        %2149 = vmatpush1.msra.mxu0 0.0
        %2150 = vmatprep.subr.mxu0 0.0
        %2151 = vmatpush1.msra.mxu0 0.0
        %2152 = vmatprep.subr.mxu0 0.0
        %2153 = vmatpush1.msra.mxu0 0.0
        %2154 = vmatprep.subr.mxu0 0.0
        %2155 = vmatpush1.msra.mxu0 0.0
        %2156 = vmatprep.subr.mxu0 0.0
        %2157 = vmatpush1.msra.mxu0 0.0
        %2158 = vmatprep.subr.mxu0 0.0
        %2159 = vmatpush1.msra.mxu0 0.0
        %2160 = vmatprep.subr.mxu0 0.0
        %2161 = vmatpush1.msra.mxu0 0.0
        %2162 = vmatprep.subr.mxu0 0.0
        %2163 = vmatpush1.msra.mxu0 0.0
        %2164 = vmatprep.subr.mxu0 0.0
        %2165 = vmatpush1.msra.mxu0 0.0
        %2166 = vmatprep.subr.mxu0 0.0
        %2167 = vmatpush1.msra.mxu0 0.0
        %2168 = vmatprep.subr.mxu0 0.0
        %2169 = vmatpush1.msra.mxu0 0.0
        %2170 = vmatprep.subr.mxu0 0.0
        %2171 = vmatpush1.msra.mxu0 0.0
        %2172 = vmatprep.subr.mxu0 0.0
        %2173 = vmatpush1.msra.mxu0 0.0
        %2174 = vmatprep.subr.mxu0 0.0
        %2175 = vmatpush1.msra.mxu0 0.0
        %2176 = vmatprep.subr.mxu0 0.0
        %2177 = vmatpush1.msra.mxu0 0.0
        %2178 = vmatprep.subr.mxu0 0.0
        %2179 = vmatpush1.msra.mxu0 0.0
        %2180 = vmatprep.subr.mxu0 0.0
        %2181 = vmatpush1.msra.mxu0 0.0
        %2182 = vmatprep.subr.mxu0 0.0
        %2183 = vmatpush1.msra.mxu0 0.0
        %2184 = vmatprep.subr.mxu0 0.0
        %2185 = vmatpush1.msra.mxu0 0.0
        %2186 = vmatprep.subr.mxu0 0.0
        %2187 = vmatpush1.msra.mxu0 0.0
        %2188 = vmatprep.mubr.f32.mxu0 0.0
        %2189 = vmatmul.mubr.f32.gmra.mrb[0].mxu0 %v2036
        %v2190 = vpop.f32.mrb[0].mxu0
        %v2191 = vadd.f32 0.0, %v2190
        %v2192 = vpop.f32.mrb[0].mxu0
        %2193 = vmatprep.mubr.f32.mxu0 0.0
        %2194 = vmatmul.mubr.f32.gmra.mrb[0].mxu0 %v2039
        %v2195 = vpop.f32.mrb[0].mxu0
        %v2196 = vadd.f32 0.0, %v2195
        %v2197 = vpop.f32.mrb[0].mxu0
        %2198 = vmatprep.mubr.f32.mxu0 0.0
        %2199 = vmatmul.mubr.f32.gmra.mrb[0].mxu0 %v2042
        %v2200 = vpop.f32.mrb[0].mxu0
        %v2201 = vadd.f32 0.0, %v2200
        %v2202 = vpop.f32.mrb[0].mxu0
        %2203 = vdwg.mxu0
        %2204 = vmatprep.subr.mxu0 0.0
        %2205 = vmatpush1.msra.mxu0 %v1147
        %2206 = vmatprep.subr.mxu0 0.0
        %2207 = vmatpush1.msra.mxu0 %v1148
        %2208 = vmatprep.subr.mxu0 0.0
        %2209 = vmatpush1.msra.mxu0 0.0
        %2210 = vmatprep.subr.mxu0 0.0
        %2211 = vmatpush1.msra.mxu0 0.0
        %2212 = vmatprep.subr.mxu0 0.0
        %2213 = vmatpush1.msra.mxu0 0.0
        %2214 = vmatprep.subr.mxu0 0.0
        %2215 = vmatpush1.msra.mxu0 0.0
        %2216 = vmatprep.subr.mxu0 0.0
        %2217 = vmatpush1.msra.mxu0 0.0
        %2218 = vmatprep.subr.mxu0 0.0
        %2219 = vmatpush1.msra.mxu0 0.0
        %2220 = vmatprep.subr.mxu0 0.0
        %2221 = vmatpush1.msra.mxu0 0.0
        %2222 = vmatprep.subr.mxu0 0.0
        %2223 = vmatpush1.msra.mxu0 0.0
        %2224 = vmatprep.subr.mxu0 0.0
        %2225 = vmatpush1.msra.mxu0 0.0
        %2226 = vmatprep.subr.mxu0 0.0
        %2227 = vmatpush1.msra.mxu0 0.0
        %2228 = vmatprep.subr.mxu0 0.0
        %2229 = vmatpush1.msra.mxu0 0.0
        %2230 = vmatprep.subr.mxu0 0.0
        %2231 = vmatpush1.msra.mxu0 0.0
        %2232 = vmatprep.subr.mxu0 0.0
        %2233 = vmatpush1.msra.mxu0 0.0
        %2234 = vmatprep.subr.mxu0 0.0
        %2235 = vmatpush1.msra.mxu0 0.0
        %2236 = vmatprep.subr.mxu0 0.0
        %2237 = vmatpush1.msra.mxu0 0.0
        %2238 = vmatprep.subr.mxu0 0.0
        %2239 = vmatpush1.msra.mxu0 0.0
        %2240 = vmatprep.subr.mxu0 0.0
        %2241 = vmatpush1.msra.mxu0 0.0
        %2242 = vmatprep.subr.mxu0 0.0
        %2243 = vmatpush1.msra.mxu0 0.0
        %2244 = vmatprep.subr.mxu0 0.0
        %2245 = vmatpush1.msra.mxu0 0.0
        %2246 = vmatprep.subr.mxu0 0.0
        %2247 = vmatpush1.msra.mxu0 0.0
        %2248 = vmatprep.subr.mxu0 0.0
        %2249 = vmatpush1.msra.mxu0 0.0
        %2250 = vmatprep.subr.mxu0 0.0
        %2251 = vmatpush1.msra.mxu0 0.0
        %2252 = vmatprep.subr.mxu0 0.0
        %2253 = vmatpush1.msra.mxu0 0.0
        %2254 = vmatprep.subr.mxu0 0.0
        %2255 = vmatpush1.msra.mxu0 0.0
        %2256 = vmatprep.subr.mxu0 0.0
        %2257 = vmatpush1.msra.mxu0 0.0
        %2258 = vmatprep.subr.mxu0 0.0
        %2259 = vmatpush1.msra.mxu0 0.0
        %2260 = vmatprep.subr.mxu0 0.0
        %2261 = vmatpush1.msra.mxu0 0.0
        %2262 = vmatprep.subr.mxu0 0.0
        %2263 = vmatpush1.msra.mxu0 0.0
        %2264 = vmatprep.subr.mxu0 0.0
        %2265 = vmatpush1.msra.mxu0 0.0
        %2266 = vmatprep.subr.mxu0 0.0
        %2267 = vmatpush1.msra.mxu0 0.0
        %2268 = vmatprep.mubr.f32.mxu0 0.0
        %2269 = vmatmul.mubr.f32.gmra.mrb[0].mxu0 %v2036
        %v2270 = vpop.f32.mrb[0].mxu0
        %v2271 = vadd.f32 0.0, %v2270
        %v2272 = vpop.f32.mrb[0].mxu0
        %2273 = vmatprep.mubr.f32.mxu0 0.0
        %2274 = vmatmul.mubr.f32.gmra.mrb[0].mxu0 %v2039
        %v2275 = vpop.f32.mrb[0].mxu0
        %v2276 = vadd.f32 0.0, %v2275
        %v2277 = vpop.f32.mrb[0].mxu0
        %2278 = vmatprep.mubr.f32.mxu0 0.0
        %2279 = vmatmul.mubr.f32.gmra.mrb[0].mxu0 %v2042
        %v2280 = vpop.f32.mrb[0].mxu0
        %v2281 = vadd.f32 0.0, %v2280
        %v2282 = vpop.f32.mrb[0].mxu0
        %2283 = vdwg.mxu0
        %2284 = vmatprep.subr.mxu0 0.0
        %2285 = vmatpush1.msra.mxu0 %v1245
        %2286 = vmatprep.subr.mxu0 0.0
        %2287 = vmatpush1.msra.mxu0 %v1246
        %2288 = vmatprep.subr.mxu0 0.0
        %2289 = vmatpush1.msra.mxu0 0.0
        %2290 = vmatprep.subr.mxu0 0.0
        %2291 = vmatpush1.msra.mxu0 0.0
        %2292 = vmatprep.subr.mxu0 0.0
        %2293 = vmatpush1.msra.mxu0 0.0
        %2294 = vmatprep.subr.mxu0 0.0
        %2295 = vmatpush1.msra.mxu0 0.0
        %2296 = vmatprep.subr.mxu0 0.0
        %2297 = vmatpush1.msra.mxu0 0.0
        %2298 = vmatprep.subr.mxu0 0.0
        %2299 = vmatpush1.msra.mxu0 0.0
        %2300 = vmatprep.subr.mxu0 0.0
        %2301 = vmatpush1.msra.mxu0 0.0
        %2302 = vmatprep.subr.mxu0 0.0
        %2303 = vmatpush1.msra.mxu0 0.0
        %2304 = vmatprep.subr.mxu0 0.0
        %2305 = vmatpush1.msra.mxu0 0.0
        %2306 = vmatprep.subr.mxu0 0.0
        %2307 = vmatpush1.msra.mxu0 0.0
        %2308 = vmatprep.subr.mxu0 0.0
        %2309 = vmatpush1.msra.mxu0 0.0
        %2310 = vmatprep.subr.mxu0 0.0
        %2311 = vmatpush1.msra.mxu0 0.0
        %2312 = vmatprep.subr.mxu0 0.0
        %2313 = vmatpush1.msra.mxu0 0.0
        %2314 = vmatprep.subr.mxu0 0.0
        %2315 = vmatpush1.msra.mxu0 0.0
        %2316 = vmatprep.subr.mxu0 0.0
        %2317 = vmatpush1.msra.mxu0 0.0
        %2318 = vmatprep.subr.mxu0 0.0
        %2319 = vmatpush1.msra.mxu0 0.0
        %2320 = vmatprep.subr.mxu0 0.0
        %2321 = vmatpush1.msra.mxu0 0.0
        %2322 = vmatprep.subr.mxu0 0.0
        %2323 = vmatpush1.msra.mxu0 0.0
        %2324 = vmatprep.subr.mxu0 0.0
        %2325 = vmatpush1.msra.mxu0 0.0
        %2326 = vmatprep.subr.mxu0 0.0
        %2327 = vmatpush1.msra.mxu0 0.0
        %2328 = vmatprep.subr.mxu0 0.0
        %2329 = vmatpush1.msra.mxu0 0.0
        %2330 = vmatprep.subr.mxu0 0.0
        %2331 = vmatpush1.msra.mxu0 0.0
        %2332 = vmatprep.subr.mxu0 0.0
        %2333 = vmatpush1.msra.mxu0 0.0
        %2334 = vmatprep.subr.mxu0 0.0
        %2335 = vmatpush1.msra.mxu0 0.0
        %2336 = vmatprep.subr.mxu0 0.0
        %2337 = vmatpush1.msra.mxu0 0.0
        %2338 = vmatprep.subr.mxu0 0.0
        %2339 = vmatpush1.msra.mxu0 0.0
        %2340 = vmatprep.subr.mxu0 0.0
        %2341 = vmatpush1.msra.mxu0 0.0
        %2342 = vmatprep.subr.mxu0 0.0
        %2343 = vmatpush1.msra.mxu0 0.0
        %2344 = vmatprep.subr.mxu0 0.0
        %2345 = vmatpush1.msra.mxu0 0.0
        %2346 = vmatprep.subr.mxu0 0.0
        %2347 = vmatpush1.msra.mxu0 0.0
        %2348 = vmatprep.mubr.f32.mxu0 0.0
        %2349 = vmatmul.mubr.f32.gmra.mrb[0].mxu0 %v2036
        %v2350 = vpop.f32.mrb[0].mxu0
        %v2351 = vadd.f32 0.0, %v2350
        %v2352 = vpop.f32.mrb[0].mxu0
        %2353 = vmatprep.mubr.f32.mxu0 0.0
        %2354 = vmatmul.mubr.f32.gmra.mrb[0].mxu0 %v2039
        %v2355 = vpop.f32.mrb[0].mxu0
        %v2356 = vadd.f32 0.0, %v2355
        %v2357 = vpop.f32.mrb[0].mxu0
        %2358 = vmatprep.mubr.f32.mxu0 0.0
        %2359 = vmatmul.mubr.f32.gmra.mrb[0].mxu0 %v2042
        %v2360 = vpop.f32.mrb[0].mxu0
        %v2361 = vadd.f32 0.0, %v2360
        %v2362 = vpop.f32.mrb[0].mxu0
        %2363 = vdwg.mxu0
        %2364 = vmatprep.subr.mxu0 0.0
        %2365 = vmatpush1.msra.mxu0 %v1343
        %2366 = vmatprep.subr.mxu0 0.0
        %2367 = vmatpush1.msra.mxu0 %v1344
        %2368 = vmatprep.subr.mxu0 0.0
        %2369 = vmatpush1.msra.mxu0 0.0
        %2370 = vmatprep.subr.mxu0 0.0
        %2371 = vmatpush1.msra.mxu0 0.0
        %2372 = vmatprep.subr.mxu0 0.0
        %2373 = vmatpush1.msra.mxu0 0.0
        %2374 = vmatprep.subr.mxu0 0.0
        %2375 = vmatpush1.msra.mxu0 0.0
        %2376 = vmatprep.subr.mxu0 0.0
        %2377 = vmatpush1.msra.mxu0 0.0
        %2378 = vmatprep.subr.mxu0 0.0
        %2379 = vmatpush1.msra.mxu0 0.0
        %2380 = vmatprep.subr.mxu0 0.0
        %2381 = vmatpush1.msra.mxu0 0.0
        %2382 = vmatprep.subr.mxu0 0.0
        %2383 = vmatpush1.msra.mxu0 0.0
        %2384 = vmatprep.subr.mxu0 0.0
        %2385 = vmatpush1.msra.mxu0 0.0
        %2386 = vmatprep.subr.mxu0 0.0
        %2387 = vmatpush1.msra.mxu0 0.0
        %2388 = vmatprep.subr.mxu0 0.0
        %2389 = vmatpush1.msra.mxu0 0.0
        %2390 = vmatprep.subr.mxu0 0.0
        %2391 = vmatpush1.msra.mxu0 0.0
        %2392 = vmatprep.subr.mxu0 0.0
        %2393 = vmatpush1.msra.mxu0 0.0
        %2394 = vmatprep.subr.mxu0 0.0
        %2395 = vmatpush1.msra.mxu0 0.0
        %2396 = vmatprep.subr.mxu0 0.0
        %2397 = vmatpush1.msra.mxu0 0.0
        %2398 = vmatprep.subr.mxu0 0.0
        %2399 = vmatpush1.msra.mxu0 0.0
        %2400 = vmatprep.subr.mxu0 0.0
        %2401 = vmatpush1.msra.mxu0 0.0
        %2402 = vmatprep.subr.mxu0 0.0
        %2403 = vmatpush1.msra.mxu0 0.0
        %2404 = vmatprep.subr.mxu0 0.0
        %2405 = vmatpush1.msra.mxu0 0.0
        %2406 = vmatprep.subr.mxu0 0.0
        %2407 = vmatpush1.msra.mxu0 0.0
        %2408 = vmatprep.subr.mxu0 0.0
        %2409 = vmatpush1.msra.mxu0 0.0
        %2410 = vmatprep.subr.mxu0 0.0
        %2411 = vmatpush1.msra.mxu0 0.0
        %2412 = vmatprep.subr.mxu0 0.0
        %2413 = vmatpush1.msra.mxu0 0.0
        %2414 = vmatprep.subr.mxu0 0.0
        %2415 = vmatpush1.msra.mxu0 0.0
        %2416 = vmatprep.subr.mxu0 0.0
        %2417 = vmatpush1.msra.mxu0 0.0
        %2418 = vmatprep.subr.mxu0 0.0
        %2419 = vmatpush1.msra.mxu0 0.0
        %2420 = vmatprep.subr.mxu0 0.0
        %2421 = vmatpush1.msra.mxu0 0.0
        %2422 = vmatprep.subr.mxu0 0.0
        %2423 = vmatpush1.msra.mxu0 0.0
        %2424 = vmatprep.subr.mxu0 0.0
        %2425 = vmatpush1.msra.mxu0 0.0
        %2426 = vmatprep.subr.mxu0 0.0
        %2427 = vmatpush1.msra.mxu0 0.0
        %2428 = vmatprep.mubr.f32.mxu0 0.0
        %2429 = vmatmul.mubr.f32.gmra.mrb[0].mxu0 %v2036
        %v2430 = vpop.f32.mrb[0].mxu0
        %v2431 = vadd.f32 0.0, %v2430
        %v2432 = vpop.f32.mrb[0].mxu0
        %2433 = vmatprep.mubr.f32.mxu0 0.0
        %2434 = vmatmul.mubr.f32.gmra.mrb[0].mxu0 %v2039
        %v2435 = vpop.f32.mrb[0].mxu0
        %v2436 = vadd.f32 0.0, %v2435
        %v2437 = vpop.f32.mrb[0].mxu0
        %2438 = vmatprep.mubr.f32.mxu0 0.0
        %2439 = vmatmul.mubr.f32.gmra.mrb[0].mxu0 %v2042
        %v2440 = vpop.f32.mrb[0].mxu0
        %v2441 = vadd.f32 0.0, %v2440
        %v2442 = vpop.f32.mrb[0].mxu0
        %2443 = vdwg.mxu0
        %2444 = vmatprep.subr.mxu0 0.0
        %2445 = vmatpush1.msra.mxu0 %v1441
        %2446 = vmatprep.subr.mxu0 0.0
        %2447 = vmatpush1.msra.mxu0 %v1442
        %2448 = vmatprep.subr.mxu0 0.0
        %2449 = vmatpush1.msra.mxu0 0.0
        %2450 = vmatprep.subr.mxu0 0.0
        %2451 = vmatpush1.msra.mxu0 0.0
        %2452 = vmatprep.subr.mxu0 0.0
        %2453 = vmatpush1.msra.mxu0 0.0
        %2454 = vmatprep.subr.mxu0 0.0
        %2455 = vmatpush1.msra.mxu0 0.0
        %2456 = vmatprep.subr.mxu0 0.0
        %2457 = vmatpush1.msra.mxu0 0.0
        %2458 = vmatprep.subr.mxu0 0.0
        %2459 = vmatpush1.msra.mxu0 0.0
        %2460 = vmatprep.subr.mxu0 0.0
        %2461 = vmatpush1.msra.mxu0 0.0
        %2462 = vmatprep.subr.mxu0 0.0
        %2463 = vmatpush1.msra.mxu0 0.0
        %2464 = vmatprep.subr.mxu0 0.0
        %2465 = vmatpush1.msra.mxu0 0.0
        %2466 = vmatprep.subr.mxu0 0.0
        %2467 = vmatpush1.msra.mxu0 0.0
        %2468 = vmatprep.subr.mxu0 0.0
        %2469 = vmatpush1.msra.mxu0 0.0
        %2470 = vmatprep.subr.mxu0 0.0
        %2471 = vmatpush1.msra.mxu0 0.0
        %2472 = vmatprep.subr.mxu0 0.0
        %2473 = vmatpush1.msra.mxu0 0.0
        %2474 = vmatprep.subr.mxu0 0.0
        %2475 = vmatpush1.msra.mxu0 0.0
        %2476 = vmatprep.subr.mxu0 0.0
        %2477 = vmatpush1.msra.mxu0 0.0
        %2478 = vmatprep.subr.mxu0 0.0
        %2479 = vmatpush1.msra.mxu0 0.0
        %2480 = vmatprep.subr.mxu0 0.0
        %2481 = vmatpush1.msra.mxu0 0.0
        %2482 = vmatprep.subr.mxu0 0.0
        %2483 = vmatpush1.msra.mxu0 0.0
        %2484 = vmatprep.subr.mxu0 0.0
        %2485 = vmatpush1.msra.mxu0 0.0
        %2486 = vmatprep.subr.mxu0 0.0
        %2487 = vmatpush1.msra.mxu0 0.0
        %2488 = vmatprep.subr.mxu0 0.0
        %2489 = vmatpush1.msra.mxu0 0.0
        %2490 = vmatprep.subr.mxu0 0.0
        %2491 = vmatpush1.msra.mxu0 0.0
        %2492 = vmatprep.subr.mxu0 0.0
        %2493 = vmatpush1.msra.mxu0 0.0
        %2494 = vmatprep.subr.mxu0 0.0
        %2495 = vmatpush1.msra.mxu0 0.0
        %2496 = vmatprep.subr.mxu0 0.0
        %2497 = vmatpush1.msra.mxu0 0.0
        %2498 = vmatprep.subr.mxu0 0.0
        %2499 = vmatpush1.msra.mxu0 0.0
        %2500 = vmatprep.subr.mxu0 0.0
        %2501 = vmatpush1.msra.mxu0 0.0
        %2502 = vmatprep.subr.mxu0 0.0
        %2503 = vmatpush1.msra.mxu0 0.0
        %2504 = vmatprep.subr.mxu0 0.0
        %2505 = vmatpush1.msra.mxu0 0.0
        %2506 = vmatprep.subr.mxu0 0.0
        %2507 = vmatpush1.msra.mxu0 0.0
        %2508 = vmatprep.mubr.f32.mxu0 0.0
        %2509 = vmatmul.mubr.f32.gmra.mrb[0].mxu0 %v2036
        %v2510 = vpop.f32.mrb[0].mxu0
        %v2511 = vadd.f32 0.0, %v2510
        %v2512 = vpop.f32.mrb[0].mxu0
        %2513 = vmatprep.mubr.f32.mxu0 0.0
        %2514 = vmatmul.mubr.f32.gmra.mrb[0].mxu0 %v2039
        %v2515 = vpop.f32.mrb[0].mxu0
        %v2516 = vadd.f32 0.0, %v2515
        %v2517 = vpop.f32.mrb[0].mxu0
        %2518 = vmatprep.mubr.f32.mxu0 0.0
        %2519 = vmatmul.mubr.f32.gmra.mrb[0].mxu0 %v2042
        %v2520 = vpop.f32.mrb[0].mxu0
        %v2521 = vadd.f32 0.0, %v2520
        %v2522 = vpop.f32.mrb[0].mxu0
        %2523 = vdwg.mxu0
        %2524 = vmatprep.subr.mxu0 0.0
        %2525 = vmatpush1.msra.mxu0 %v1539
        %2526 = vmatprep.subr.mxu0 0.0
        %2527 = vmatpush1.msra.mxu0 %v1540
        %2528 = vmatprep.subr.mxu0 0.0
        %2529 = vmatpush1.msra.mxu0 0.0
        %2530 = vmatprep.subr.mxu0 0.0
        %2531 = vmatpush1.msra.mxu0 0.0
        %2532 = vmatprep.subr.mxu0 0.0
        %2533 = vmatpush1.msra.mxu0 0.0
        %2534 = vmatprep.subr.mxu0 0.0
        %2535 = vmatpush1.msra.mxu0 0.0
        %2536 = vmatprep.subr.mxu0 0.0
        %2537 = vmatpush1.msra.mxu0 0.0
        %2538 = vmatprep.subr.mxu0 0.0
        %2539 = vmatpush1.msra.mxu0 0.0
        %2540 = vmatprep.subr.mxu0 0.0
        %2541 = vmatpush1.msra.mxu0 0.0
        %2542 = vmatprep.subr.mxu0 0.0
        %2543 = vmatpush1.msra.mxu0 0.0
        %2544 = vmatprep.subr.mxu0 0.0
        %2545 = vmatpush1.msra.mxu0 0.0
        %2546 = vmatprep.subr.mxu0 0.0
        %2547 = vmatpush1.msra.mxu0 0.0
        %2548 = vmatprep.subr.mxu0 0.0
        %2549 = vmatpush1.msra.mxu0 0.0
        %2550 = vmatprep.subr.mxu0 0.0
        %2551 = vmatpush1.msra.mxu0 0.0
        %2552 = vmatprep.subr.mxu0 0.0
        %2553 = vmatpush1.msra.mxu0 0.0
        %2554 = vmatprep.subr.mxu0 0.0
        %2555 = vmatpush1.msra.mxu0 0.0
        %2556 = vmatprep.subr.mxu0 0.0
        %2557 = vmatpush1.msra.mxu0 0.0
        %2558 = vmatprep.subr.mxu0 0.0
        %2559 = vmatpush1.msra.mxu0 0.0
        %2560 = vmatprep.subr.mxu0 0.0
        %2561 = vmatpush1.msra.mxu0 0.0
        %2562 = vmatprep.subr.mxu0 0.0
        %2563 = vmatpush1.msra.mxu0 0.0
        %2564 = vmatprep.subr.mxu0 0.0
        %2565 = vmatpush1.msra.mxu0 0.0
        %2566 = vmatprep.subr.mxu0 0.0
        %2567 = vmatpush1.msra.mxu0 0.0
        %2568 = vmatprep.subr.mxu0 0.0
        %2569 = vmatpush1.msra.mxu0 0.0
        %2570 = vmatprep.subr.mxu0 0.0
        %2571 = vmatpush1.msra.mxu0 0.0
        %2572 = vmatprep.subr.mxu0 0.0
        %2573 = vmatpush1.msra.mxu0 0.0
        %2574 = vmatprep.subr.mxu0 0.0
        %2575 = vmatpush1.msra.mxu0 0.0
        %2576 = vmatprep.subr.mxu0 0.0
        %2577 = vmatpush1.msra.mxu0 0.0
        %2578 = vmatprep.subr.mxu0 0.0
        %2579 = vmatpush1.msra.mxu0 0.0
        %2580 = vmatprep.subr.mxu0 0.0
        %2581 = vmatpush1.msra.mxu0 0.0
        %2582 = vmatprep.subr.mxu0 0.0
        %2583 = vmatpush1.msra.mxu0 0.0
        %2584 = vmatprep.subr.mxu0 0.0
        %2585 = vmatpush1.msra.mxu0 0.0
        %2586 = vmatprep.subr.mxu0 0.0
        %2587 = vmatpush1.msra.mxu0 0.0
        %2588 = vmatprep.mubr.f32.mxu0 0.0
        %2589 = vmatmul.mubr.f32.gmra.mrb[0].mxu0 %v2036
        %v2590 = vpop.f32.mrb[0].mxu0
        %v2591 = vadd.f32 0.0, %v2590
        %v2592 = vpop.f32.mrb[0].mxu0
        %2593 = vmatprep.mubr.f32.mxu0 0.0
        %2594 = vmatmul.mubr.f32.gmra.mrb[0].mxu0 %v2039
        %v2595 = vpop.f32.mrb[0].mxu0
        %v2596 = vadd.f32 0.0, %v2595
        %v2597 = vpop.f32.mrb[0].mxu0
        %2598 = vmatprep.mubr.f32.mxu0 0.0
        %2599 = vmatmul.mubr.f32.gmra.mrb[0].mxu0 %v2042
        %v2600 = vpop.f32.mrb[0].mxu0
        %v2601 = vadd.f32 0.0, %v2600
        %v2602 = vpop.f32.mrb[0].mxu0
        %2603 = vdwg.mxu0
        %2604 = vmatprep.subr.mxu0 0.0
        %2605 = vmatpush1.msra.mxu0 %v1637
        %2606 = vmatprep.subr.mxu0 0.0
        %2607 = vmatpush1.msra.mxu0 %v1638
        %2608 = vmatprep.subr.mxu0 0.0
        %2609 = vmatpush1.msra.mxu0 0.0
        %2610 = vmatprep.subr.mxu0 0.0
        %2611 = vmatpush1.msra.mxu0 0.0
        %2612 = vmatprep.subr.mxu0 0.0
        %2613 = vmatpush1.msra.mxu0 0.0
        %2614 = vmatprep.subr.mxu0 0.0
        %2615 = vmatpush1.msra.mxu0 0.0
        %2616 = vmatprep.subr.mxu0 0.0
        %2617 = vmatpush1.msra.mxu0 0.0
        %2618 = vmatprep.subr.mxu0 0.0
        %2619 = vmatpush1.msra.mxu0 0.0
        %2620 = vmatprep.subr.mxu0 0.0
        %2621 = vmatpush1.msra.mxu0 0.0
        %2622 = vmatprep.subr.mxu0 0.0
        %2623 = vmatpush1.msra.mxu0 0.0
        %2624 = vmatprep.subr.mxu0 0.0
        %2625 = vmatpush1.msra.mxu0 0.0
        %2626 = vmatprep.subr.mxu0 0.0
        %2627 = vmatpush1.msra.mxu0 0.0
        %2628 = vmatprep.subr.mxu0 0.0
        %2629 = vmatpush1.msra.mxu0 0.0
        %2630 = vmatprep.subr.mxu0 0.0
        %2631 = vmatpush1.msra.mxu0 0.0
        %2632 = vmatprep.subr.mxu0 0.0
        %2633 = vmatpush1.msra.mxu0 0.0
        %2634 = vmatprep.subr.mxu0 0.0
        %2635 = vmatpush1.msra.mxu0 0.0
        %2636 = vmatprep.subr.mxu0 0.0
        %2637 = vmatpush1.msra.mxu0 0.0
        %2638 = vmatprep.subr.mxu0 0.0
        %2639 = vmatpush1.msra.mxu0 0.0
        %2640 = vmatprep.subr.mxu0 0.0
        %2641 = vmatpush1.msra.mxu0 0.0
        %2642 = vmatprep.subr.mxu0 0.0
        %2643 = vmatpush1.msra.mxu0 0.0
        %2644 = vmatprep.subr.mxu0 0.0
        %2645 = vmatpush1.msra.mxu0 0.0
        %2646 = vmatprep.subr.mxu0 0.0
        %2647 = vmatpush1.msra.mxu0 0.0
        %2648 = vmatprep.subr.mxu0 0.0
        %2649 = vmatpush1.msra.mxu0 0.0
        %2650 = vmatprep.subr.mxu0 0.0
        %2651 = vmatpush1.msra.mxu0 0.0
        %2652 = vmatprep.subr.mxu0 0.0
        %2653 = vmatpush1.msra.mxu0 0.0
        %2654 = vmatprep.subr.mxu0 0.0
        %2655 = vmatpush1.msra.mxu0 0.0
        %2656 = vmatprep.subr.mxu0 0.0
        %2657 = vmatpush1.msra.mxu0 0.0
        %2658 = vmatprep.subr.mxu0 0.0
        %2659 = vmatpush1.msra.mxu0 0.0
        %2660 = vmatprep.subr.mxu0 0.0
        %2661 = vmatpush1.msra.mxu0 0.0
        %2662 = vmatprep.subr.mxu0 0.0
        %2663 = vmatpush1.msra.mxu0 0.0
        %2664 = vmatprep.subr.mxu0 0.0
        %2665 = vmatpush1.msra.mxu0 0.0
        %2666 = vmatprep.subr.mxu0 0.0
        %2667 = vmatpush1.msra.mxu0 0.0
        %2668 = vmatprep.mubr.f32.mxu0 0.0
        %2669 = vmatmul.mubr.f32.gmra.mrb[0].mxu0 %v2036
        %v2670 = vpop.f32.mrb[0].mxu0
        %v2671 = vadd.f32 0.0, %v2670
        %v2672 = vpop.f32.mrb[0].mxu0
        %2673 = vmatprep.mubr.f32.mxu0 0.0
        %2674 = vmatmul.mubr.f32.gmra.mrb[0].mxu0 %v2039
        %v2675 = vpop.f32.mrb[0].mxu0
        %v2676 = vadd.f32 0.0, %v2675
        %v2677 = vpop.f32.mrb[0].mxu0
        %2678 = vmatprep.mubr.f32.mxu0 0.0
        %2679 = vmatmul.mubr.f32.gmra.mrb[0].mxu0 %v2042
        %v2680 = vpop.f32.mrb[0].mxu0
        %v2681 = vadd.f32 0.0, %v2680
        %v2682 = vpop.f32.mrb[0].mxu0
        %2683 = vdwg.mxu0
        %2684 = vmatprep.subr.mxu0 0.0
        %2685 = vmatpush1.msra.mxu0 %v1735
        %2686 = vmatprep.subr.mxu0 0.0
        %2687 = vmatpush1.msra.mxu0 %v1736
        %2688 = vmatprep.subr.mxu0 0.0
        %2689 = vmatpush1.msra.mxu0 0.0
        %2690 = vmatprep.subr.mxu0 0.0
        %2691 = vmatpush1.msra.mxu0 0.0
        %2692 = vmatprep.subr.mxu0 0.0
        %2693 = vmatpush1.msra.mxu0 0.0
        %2694 = vmatprep.subr.mxu0 0.0
        %2695 = vmatpush1.msra.mxu0 0.0
        %2696 = vmatprep.subr.mxu0 0.0
        %2697 = vmatpush1.msra.mxu0 0.0
        %2698 = vmatprep.subr.mxu0 0.0
        %2699 = vmatpush1.msra.mxu0 0.0
        %2700 = vmatprep.subr.mxu0 0.0
        %2701 = vmatpush1.msra.mxu0 0.0
        %2702 = vmatprep.subr.mxu0 0.0
        %2703 = vmatpush1.msra.mxu0 0.0
        %2704 = vmatprep.subr.mxu0 0.0
        %2705 = vmatpush1.msra.mxu0 0.0
        %2706 = vmatprep.subr.mxu0 0.0
        %2707 = vmatpush1.msra.mxu0 0.0
        %2708 = vmatprep.subr.mxu0 0.0
        %2709 = vmatpush1.msra.mxu0 0.0
        %2710 = vmatprep.subr.mxu0 0.0
        %2711 = vmatpush1.msra.mxu0 0.0
        %2712 = vmatprep.subr.mxu0 0.0
        %2713 = vmatpush1.msra.mxu0 0.0
        %2714 = vmatprep.subr.mxu0 0.0
        %2715 = vmatpush1.msra.mxu0 0.0
        %2716 = vmatprep.subr.mxu0 0.0
        %2717 = vmatpush1.msra.mxu0 0.0
        %2718 = vmatprep.subr.mxu0 0.0
        %2719 = vmatpush1.msra.mxu0 0.0
        %2720 = vmatprep.subr.mxu0 0.0
        %2721 = vmatpush1.msra.mxu0 0.0
        %2722 = vmatprep.subr.mxu0 0.0
        %2723 = vmatpush1.msra.mxu0 0.0
        %2724 = vmatprep.subr.mxu0 0.0
        %2725 = vmatpush1.msra.mxu0 0.0
        %2726 = vmatprep.subr.mxu0 0.0
        %2727 = vmatpush1.msra.mxu0 0.0
        %2728 = vmatprep.subr.mxu0 0.0
        %2729 = vmatpush1.msra.mxu0 0.0
        %2730 = vmatprep.subr.mxu0 0.0
        %2731 = vmatpush1.msra.mxu0 0.0
        %2732 = vmatprep.subr.mxu0 0.0
        %2733 = vmatpush1.msra.mxu0 0.0
        %2734 = vmatprep.subr.mxu0 0.0
        %2735 = vmatpush1.msra.mxu0 0.0
        %2736 = vmatprep.subr.mxu0 0.0
        %2737 = vmatpush1.msra.mxu0 0.0
        %2738 = vmatprep.subr.mxu0 0.0
        %2739 = vmatpush1.msra.mxu0 0.0
        %2740 = vmatprep.subr.mxu0 0.0
        %2741 = vmatpush1.msra.mxu0 0.0
        %2742 = vmatprep.subr.mxu0 0.0
        %2743 = vmatpush1.msra.mxu0 0.0
        %2744 = vmatprep.subr.mxu0 0.0
        %2745 = vmatpush1.msra.mxu0 0.0
        %2746 = vmatprep.subr.mxu0 0.0
        %2747 = vmatpush1.msra.mxu0 0.0
        %2748 = vmatprep.mubr.f32.mxu0 0.0
        %2749 = vmatmul.mubr.f32.gmra.mrb[0].mxu0 %v2036
        %v2750 = vpop.f32.mrb[0].mxu0
        %v2751 = vadd.f32 0.0, %v2750
        %v2752 = vpop.f32.mrb[0].mxu0
        %2753 = vmatprep.mubr.f32.mxu0 0.0
        %2754 = vmatmul.mubr.f32.gmra.mrb[0].mxu0 %v2039
        %v2755 = vpop.f32.mrb[0].mxu0
        %v2756 = vadd.f32 0.0, %v2755
        %v2757 = vpop.f32.mrb[0].mxu0
        %2758 = vmatprep.mubr.f32.mxu0 0.0
        %2759 = vmatmul.mubr.f32.gmra.mrb[0].mxu0 %v2042
        %v2760 = vpop.f32.mrb[0].mxu0
        %v2761 = vadd.f32 0.0, %v2760
        %v2762 = vpop.f32.mrb[0].mxu0
        %2763 = vdwg.mxu0
        %v2764 = vld [vmem:[#allocation9] sm:$0xff]
        %v2765 = vld [vmem:[#allocation9 + $0x8] sm:$0xff]
        %v2766 = vld [vmem:[#allocation9 + $0x10] sm:$0xff]
        %v2767 = vld [vmem:[#allocation9 + $0x18] sm:$0xff]
        %v2768 = vld [vmem:[#allocation9 + $0x20] sm:$0xff]
        %v2769 = vld [vmem:[#allocation9 + $0x28] sm:$0xff]
        %v2770 = vld [vmem:[%s7] sm:$0xff]
        %v2771 = vld [vmem:[%s7 + $0x8] sm:$0xff]
        %v2772 = vld [vmem:[%s7 + $0x10] sm:$0xff]
        %2774 = vset.pattern.permute.xlu0 0
        %2775 = vperm.xlu0 %2774, %v2770
        %v2776 = vpop.permute.xlu0 %2775
        %2779 = vset.pattern.permute.xlu0 0
        %2780 = vperm.xlu0 %2779, %v2771
        %v2781 = vpop.permute.xlu0 %2780
        %2784 = vset.pattern.permute.xlu0 0
        %2785 = vperm.xlu0 %2784, %v2772
        %v2786 = vpop.permute.xlu0 %2785
        %vm2788 = vcmask 719872
        %v2790 = vsel %vm2788, %v2765, 0
        %v2793 = vsel %vm2788, %v2767, 0
        %v2796 = vsel %vm2788, %v2769, 0
        %2798 = vmatprep.subr.mxu0 0.0
        %2799 = vmatpush1.msra.mxu0 %v2111
        %2800 = vmatprep.subr.mxu0 0.0
        %2801 = vmatpush1.msra.mxu0 %v2116
        %2802 = vmatprep.subr.mxu0 0.0
        %2803 = vmatpush1.msra.mxu0 %v2121
        %2804 = vmatprep.subr.mxu0 0.0
        %2805 = vmatpush1.msra.mxu0 %v2191
        %2806 = vmatprep.subr.mxu0 0.0
        %2807 = vmatpush1.msra.mxu0 %v2196
        %2808 = vmatprep.subr.mxu0 0.0
        %2809 = vmatpush1.msra.mxu0 %v2201
        %2810 = vmatprep.subr.mxu0 0.0
        %2811 = vmatpush1.msra.mxu0 %v2271
        %2812 = vmatprep.subr.mxu0 0.0
        %2813 = vmatpush1.msra.mxu0 %v2276
        %2814 = vmatprep.subr.mxu0 0.0
        %2815 = vmatpush1.msra.mxu0 %v2281
        %2816 = vmatprep.subr.mxu0 0.0
        %2817 = vmatpush1.msra.mxu0 %v2351
        %2818 = vmatprep.subr.mxu0 0.0
        %2819 = vmatpush1.msra.mxu0 %v2356
        %2820 = vmatprep.subr.mxu0 0.0
        %2821 = vmatpush1.msra.mxu0 %v2361
        %2822 = vmatprep.subr.mxu0 0.0
        %2823 = vmatpush1.msra.mxu0 %v2431
        %2824 = vmatprep.subr.mxu0 0.0
        %2825 = vmatpush1.msra.mxu0 %v2436
        %2826 = vmatprep.subr.mxu0 0.0
        %2827 = vmatpush1.msra.mxu0 %v2441
        %2828 = vmatprep.subr.mxu0 0.0
        %2829 = vmatpush1.msra.mxu0 %v2511
        %2830 = vmatprep.subr.mxu0 0.0
        %2831 = vmatpush1.msra.mxu0 %v2516
        %2832 = vmatprep.subr.mxu0 0.0
        %2833 = vmatpush1.msra.mxu0 %v2521
        %2834 = vmatprep.subr.mxu0 0.0
        %2835 = vmatpush1.msra.mxu0 %v2591
        %2836 = vmatprep.subr.mxu0 0.0
        %2837 = vmatpush1.msra.mxu0 %v2596
        %2838 = vmatprep.subr.mxu0 0.0
        %2839 = vmatpush1.msra.mxu0 %v2601
        %2840 = vmatprep.subr.mxu0 0.0
        %2841 = vmatpush1.msra.mxu0 %v2671
        %2842 = vmatprep.subr.mxu0 0.0
        %2843 = vmatpush1.msra.mxu0 %v2676
        %2844 = vmatprep.subr.mxu0 0.0
        %2845 = vmatpush1.msra.mxu0 %v2681
        %2846 = vmatprep.subr.mxu0 0.0
        %2847 = vmatpush1.msra.mxu0 %v2751
        %2848 = vmatprep.subr.mxu0 0.0
        %2849 = vmatpush1.msra.mxu0 %v2756
        %2850 = vmatprep.subr.mxu0 0.0
        %2851 = vmatpush1.msra.mxu0 %v2761
        %2852 = vmatprep.subr.mxu0 0.0
        %2853 = vmatpush1.msra.mxu0 0.0
        %2854 = vmatprep.subr.mxu0 0.0
        %2855 = vmatpush1.msra.mxu0 0.0
        %2856 = vmatprep.subr.mxu0 0.0
        %2857 = vmatpush1.msra.mxu0 0.0
        %2858 = vmatprep.subr.mxu0 0.0
        %2859 = vmatpush1.msra.mxu0 0.0
        %2860 = vmatprep.subr.mxu0 0.0
        %2861 = vmatpush1.msra.mxu0 0.0
        %2862 = vmatprep.mubr.f32.mxu0 %v2790
        %2863 = vmatmul.mubr.f32.gmra.mrb[0].mxu0 %v2764
        %v2864 = vpop.f32.mrb[0].mxu0
        %v2865 = vadd.f32 %v2776, %v2864
        %v2866 = vpop.f32.mrb[0].mxu0
        %2867 = vmatprep.mubr.f32.mxu0 %v2793
        %2868 = vmatmul.mubr.f32.gmra.mrb[0].mxu0 %v2766
        %v2869 = vpop.f32.mrb[0].mxu0
        %v2870 = vadd.f32 %v2781, %v2869
        %v2871 = vpop.f32.mrb[0].mxu0
        %2872 = vmatprep.mubr.f32.mxu0 %v2796
        %2873 = vmatmul.mubr.f32.gmra.mrb[0].mxu0 %v2768
        %v2874 = vpop.f32.mrb[0].mxu0
        %v2875 = vadd.f32 %v2786, %v2874
        %v2876 = vpop.f32.mrb[0].mxu0
        %2877 = vdwg.mxu0
        %v2878 = vmax.f32 %v2865, 0.0
        %v2879 = vmax.f32 %v2870, 0.0
        %v2880 = vmax.f32 %v2875, 0.0
        %v2881 = vld [vmem:[#allocation11] sm:$0xff]
        %v2882 = vld [vmem:[#allocation11 + $0x8] sm:$0xff]
        %v2884 = vsel %vm934, %v2878, 0
        %v2887 = vsel %vm934, %v2879, 0
        %v2890 = vsel %vm934, %v2880, 0
        %2892 = vmatprep.subr.mxu0 0.0
        %2893 = vmatpush1.msra.mxu0 %v2881
        %2894 = vmatprep.subr.mxu0 0.0
        %2895 = vmatpush1.msra.mxu0 %v2882
        %2896 = vmatprep.subr.mxu0 0.0
        %2897 = vmatpush1.msra.mxu0 0.0
        %2898 = vmatprep.subr.mxu0 0.0
        %2899 = vmatpush1.msra.mxu0 0.0
        %2900 = vmatprep.subr.mxu0 0.0
        %2901 = vmatpush1.msra.mxu0 0.0
        %2902 = vmatprep.subr.mxu0 0.0
        %2903 = vmatpush1.msra.mxu0 0.0
        %2904 = vmatprep.subr.mxu0 0.0
        %2905 = vmatpush1.msra.mxu0 0.0
        %2906 = vmatprep.subr.mxu0 0.0
        %2907 = vmatpush1.msra.mxu0 0.0
        %2908 = vmatprep.subr.mxu0 0.0
        %2909 = vmatpush1.msra.mxu0 0.0
        %2910 = vmatprep.subr.mxu0 0.0
        %2911 = vmatpush1.msra.mxu0 0.0
        %2912 = vmatprep.subr.mxu0 0.0
        %2913 = vmatpush1.msra.mxu0 0.0
        %2914 = vmatprep.subr.mxu0 0.0
        %2915 = vmatpush1.msra.mxu0 0.0
        %2916 = vmatprep.subr.mxu0 0.0
        %2917 = vmatpush1.msra.mxu0 0.0
        %2918 = vmatprep.subr.mxu0 0.0
        %2919 = vmatpush1.msra.mxu0 0.0
        %2920 = vmatprep.subr.mxu0 0.0
        %2921 = vmatpush1.msra.mxu0 0.0
        %2922 = vmatprep.subr.mxu0 0.0
        %2923 = vmatpush1.msra.mxu0 0.0
        %2924 = vmatprep.subr.mxu0 0.0
        %2925 = vmatpush1.msra.mxu0 0.0
        %2926 = vmatprep.subr.mxu0 0.0
        %2927 = vmatpush1.msra.mxu0 0.0
        %2928 = vmatprep.subr.mxu0 0.0
        %2929 = vmatpush1.msra.mxu0 0.0
        %2930 = vmatprep.subr.mxu0 0.0
        %2931 = vmatpush1.msra.mxu0 0.0
        %2932 = vmatprep.subr.mxu0 0.0
        %2933 = vmatpush1.msra.mxu0 0.0
        %2934 = vmatprep.subr.mxu0 0.0
        %2935 = vmatpush1.msra.mxu0 0.0
        %2936 = vmatprep.subr.mxu0 0.0
        %2937 = vmatpush1.msra.mxu0 0.0
        %2938 = vmatprep.subr.mxu0 0.0
        %2939 = vmatpush1.msra.mxu0 0.0
        %2940 = vmatprep.subr.mxu0 0.0
        %2941 = vmatpush1.msra.mxu0 0.0
        %2942 = vmatprep.subr.mxu0 0.0
        %2943 = vmatpush1.msra.mxu0 0.0
        %2944 = vmatprep.subr.mxu0 0.0
        %2945 = vmatpush1.msra.mxu0 0.0
        %2946 = vmatprep.subr.mxu0 0.0
        %2947 = vmatpush1.msra.mxu0 0.0
        %2948 = vmatprep.subr.mxu0 0.0
        %2949 = vmatpush1.msra.mxu0 0.0
        %2950 = vmatprep.subr.mxu0 0.0
        %2951 = vmatpush1.msra.mxu0 0.0
        %2952 = vmatprep.subr.mxu0 0.0
        %2953 = vmatpush1.msra.mxu0 0.0
        %2954 = vmatprep.subr.mxu0 0.0
        %2955 = vmatpush1.msra.mxu0 0.0
        %2956 = vmatprep.mubr.f32.mxu0 0.0
        %2957 = vmatmul.mubr.f32.gmra.mrb[0].mxu0 %v2884
        %v2958 = vpop.f32.mrb[0].mxu0
        %v2959 = vadd.f32 0.0, %v2958
        %v2960 = vpop.f32.mrb[0].mxu0
        %2961 = vmatprep.mubr.f32.mxu0 0.0
        %2962 = vmatmul.mubr.f32.gmra.mrb[0].mxu0 %v2887
        %v2963 = vpop.f32.mrb[0].mxu0
        %v2964 = vadd.f32 0.0, %v2963
        %v2965 = vpop.f32.mrb[0].mxu0
        %2966 = vmatprep.mubr.f32.mxu0 0.0
        %2967 = vmatmul.mubr.f32.gmra.mrb[0].mxu0 %v2890
        %v2968 = vpop.f32.mrb[0].mxu0
        %v2969 = vadd.f32 0.0, %v2968
        %v2970 = vpop.f32.mrb[0].mxu0
        %2971 = vdwg.mxu0
        %v2972 = vld [vmem:[%s725] sm:$0xff]
        %v2973 = vld [vmem:[#allocation12] sm:$0xff]
        %v2974 = vld [vmem:[#allocation12 + $0x8] sm:$0xff]
        %v2975 = vld [vmem:[#allocation12 + $0x10] sm:$0xff]
        %v2976 = vld [vmem:[#allocation12 + $0x18] sm:$0xff]
        %v2977 = vld [vmem:[#allocation12 + $0x20] sm:$0xff]
        %v2978 = vld [vmem:[#allocation12 + $0x28] sm:$0xff]
        %v2979 = vld [vmem:[#allocation12 + $0x30] sm:$0xff]
        %v2980 = vld [vmem:[#allocation12 + $0x38] sm:$0xff]
        %vm2981 = vcmask 523264
        %v2983 = vsel %vm2981, %v2959, 0
        %v2986 = vsel %vm2981, %v2964, 0
        %v2989 = vsel %vm2981, %v2969, 0
        %v2992 = vsel %vm2981, %v2972, 0
        %2994 = vmatprep.subr.mxu0 0.0
        %2995 = vmatpush1.msra.mxu0 %v2973
        %2996 = vmatprep.subr.mxu0 0.0
        %2997 = vmatpush1.msra.mxu0 %v2974
        %2998 = vmatprep.subr.mxu0 0.0
        %2999 = vmatpush1.msra.mxu0 %v2975
        %3000 = vmatprep.subr.mxu0 0.0
        %3001 = vmatpush1.msra.mxu0 %v2976
        %3002 = vmatprep.subr.mxu0 0.0
        %3003 = vmatpush1.msra.mxu0 %v2977
        %3004 = vmatprep.subr.mxu0 0.0
        %3005 = vmatpush1.msra.mxu0 %v2978
        %3006 = vmatprep.subr.mxu0 0.0
        %3007 = vmatpush1.msra.mxu0 %v2979
        %3008 = vmatprep.subr.mxu0 0.0
        %3009 = vmatpush1.msra.mxu0 %v2980
        %3010 = vmatprep.subr.mxu0 0.0
        %3011 = vmatpush1.msra.mxu0 0.0
        %3012 = vmatprep.subr.mxu0 0.0
        %3013 = vmatpush1.msra.mxu0 0.0
        %3014 = vmatprep.subr.mxu0 0.0
        %3015 = vmatpush1.msra.mxu0 0.0
        %3016 = vmatprep.subr.mxu0 0.0
        %3017 = vmatpush1.msra.mxu0 0.0
        %3018 = vmatprep.subr.mxu0 0.0
        %3019 = vmatpush1.msra.mxu0 0.0
        %3020 = vmatprep.subr.mxu0 0.0
        %3021 = vmatpush1.msra.mxu0 0.0
        %3022 = vmatprep.subr.mxu0 0.0
        %3023 = vmatpush1.msra.mxu0 0.0
        %3024 = vmatprep.subr.mxu0 0.0
        %3025 = vmatpush1.msra.mxu0 0.0
        %3026 = vmatprep.subr.mxu0 0.0
        %3027 = vmatpush1.msra.mxu0 0.0
        %3028 = vmatprep.subr.mxu0 0.0
        %3029 = vmatpush1.msra.mxu0 0.0
        %3030 = vmatprep.subr.mxu0 0.0
        %3031 = vmatpush1.msra.mxu0 0.0
        %3032 = vmatprep.subr.mxu0 0.0
        %3033 = vmatpush1.msra.mxu0 0.0
        %3034 = vmatprep.subr.mxu0 0.0
        %3035 = vmatpush1.msra.mxu0 0.0
        %3036 = vmatprep.subr.mxu0 0.0
        %3037 = vmatpush1.msra.mxu0 0.0
        %3038 = vmatprep.subr.mxu0 0.0
        %3039 = vmatpush1.msra.mxu0 0.0
        %3040 = vmatprep.subr.mxu0 0.0
        %3041 = vmatpush1.msra.mxu0 0.0
        %3042 = vmatprep.subr.mxu0 0.0
        %3043 = vmatpush1.msra.mxu0 0.0
        %3044 = vmatprep.subr.mxu0 0.0
        %3045 = vmatpush1.msra.mxu0 0.0
        %3046 = vmatprep.subr.mxu0 0.0
        %3047 = vmatpush1.msra.mxu0 0.0
        %3048 = vmatprep.subr.mxu0 0.0
        %3049 = vmatpush1.msra.mxu0 0.0
        %3050 = vmatprep.subr.mxu0 0.0
        %3051 = vmatpush1.msra.mxu0 0.0
        %3052 = vmatprep.subr.mxu0 0.0
        %3053 = vmatpush1.msra.mxu0 0.0
        %3054 = vmatprep.subr.mxu0 0.0
        %3055 = vmatpush1.msra.mxu0 0.0
        %3056 = vmatprep.subr.mxu0 0.0
        %3057 = vmatpush1.msra.mxu0 0.0
        %3058 = vmatprep.mubr.f32.mxu0 0.0
        %3059 = vmatmul.mubr.f32.gmra.mrb[0].mxu0 %v2983
        %v3060 = vpop.f32.mrb[0].mxu0
        %v3061 = vadd.f32 0.0, %v3060
        %v3062 = vpop.f32.mrb[0].mxu0
        %3063 = vmatprep.mubr.f32.mxu0 0.0
        %3064 = vmatmul.mubr.f32.gmra.mrb[0].mxu0 %v2986
        %v3065 = vpop.f32.mrb[0].mxu0
        %v3066 = vadd.f32 0.0, %v3065
        %v3067 = vpop.f32.mrb[0].mxu0
        %3068 = vmatprep.mubr.f32.mxu0 0.0
        %3069 = vmatmul.mubr.f32.gmra.mrb[0].mxu0 %v2989
        %v3070 = vpop.f32.mrb[0].mxu0
        %v3071 = vadd.f32 0.0, %v3070
        %v3072 = vpop.f32.mrb[0].mxu0
        %3073 = vmatprep.mubr.f32.mxu0 0.0
        %3074 = vmatmul.mubr.f32.gmra.mrb[0].mxu0 %v2992
        %v3075 = vpop.f32.mrb[0].mxu0
        %v3076 = vadd.f32 0.0, %v3075
        %v3077 = vpop.f32.mrb[0].mxu0
        %3078 = vdwg.mxu0
        %s3079 = scalar_lea.vmem [#allocation12], 64
        %v3080 = vld [vmem:[%s3079] sm:$0xff]
        %v3081 = vld [vmem:[%s3079 + $0x8] sm:$0xff]
        %v3082 = vld [vmem:[%s3079 + $0x10] sm:$0xff]
        %v3083 = vld [vmem:[%s3079 + $0x18] sm:$0xff]
        %v3084 = vld [vmem:[%s3079 + $0x20] sm:$0xff]
        %v3085 = vld [vmem:[%s3079 + $0x28] sm:$0xff]
        %v3086 = vld [vmem:[%s3079 + $0x30] sm:$0xff]
        %v3087 = vld [vmem:[%s3079 + $0x38] sm:$0xff]
        %3088 = vmatprep.subr.mxu0 0.0
        %3089 = vmatpush1.msra.mxu0 %v3080
        %3090 = vmatprep.subr.mxu0 0.0
        %3091 = vmatpush1.msra.mxu0 %v3081
        %3092 = vmatprep.subr.mxu0 0.0
        %3093 = vmatpush1.msra.mxu0 %v3082
        %3094 = vmatprep.subr.mxu0 0.0
        %3095 = vmatpush1.msra.mxu0 %v3083
        %3096 = vmatprep.subr.mxu0 0.0
        %3097 = vmatpush1.msra.mxu0 %v3084
        %3098 = vmatprep.subr.mxu0 0.0
        %3099 = vmatpush1.msra.mxu0 %v3085
        %3100 = vmatprep.subr.mxu0 0.0
        %3101 = vmatpush1.msra.mxu0 %v3086
        %3102 = vmatprep.subr.mxu0 0.0
        %3103 = vmatpush1.msra.mxu0 %v3087
        %3104 = vmatprep.subr.mxu0 0.0
        %3105 = vmatpush1.msra.mxu0 0.0
        %3106 = vmatprep.subr.mxu0 0.0
        %3107 = vmatpush1.msra.mxu0 0.0
        %3108 = vmatprep.subr.mxu0 0.0
        %3109 = vmatpush1.msra.mxu0 0.0
        %3110 = vmatprep.subr.mxu0 0.0
        %3111 = vmatpush1.msra.mxu0 0.0
        %3112 = vmatprep.subr.mxu0 0.0
        %3113 = vmatpush1.msra.mxu0 0.0
        %3114 = vmatprep.subr.mxu0 0.0
        %3115 = vmatpush1.msra.mxu0 0.0
        %3116 = vmatprep.subr.mxu0 0.0
        %3117 = vmatpush1.msra.mxu0 0.0
        %3118 = vmatprep.subr.mxu0 0.0
        %3119 = vmatpush1.msra.mxu0 0.0
        %3120 = vmatprep.subr.mxu0 0.0
        %3121 = vmatpush1.msra.mxu0 0.0
        %3122 = vmatprep.subr.mxu0 0.0
        %3123 = vmatpush1.msra.mxu0 0.0
        %3124 = vmatprep.subr.mxu0 0.0
        %3125 = vmatpush1.msra.mxu0 0.0
        %3126 = vmatprep.subr.mxu0 0.0
        %3127 = vmatpush1.msra.mxu0 0.0
        %3128 = vmatprep.subr.mxu0 0.0
        %3129 = vmatpush1.msra.mxu0 0.0
        %3130 = vmatprep.subr.mxu0 0.0
        %3131 = vmatpush1.msra.mxu0 0.0
        %3132 = vmatprep.subr.mxu0 0.0
        %3133 = vmatpush1.msra.mxu0 0.0
        %3134 = vmatprep.subr.mxu0 0.0
        %3135 = vmatpush1.msra.mxu0 0.0
        %3136 = vmatprep.subr.mxu0 0.0
        %3137 = vmatpush1.msra.mxu0 0.0
        %3138 = vmatprep.subr.mxu0 0.0
        %3139 = vmatpush1.msra.mxu0 0.0
        %3140 = vmatprep.subr.mxu0 0.0
        %3141 = vmatpush1.msra.mxu0 0.0
        %3142 = vmatprep.subr.mxu0 0.0
        %3143 = vmatpush1.msra.mxu0 0.0
        %3144 = vmatprep.subr.mxu0 0.0
        %3145 = vmatpush1.msra.mxu0 0.0
        %3146 = vmatprep.subr.mxu0 0.0
        %3147 = vmatpush1.msra.mxu0 0.0
        %3148 = vmatprep.subr.mxu0 0.0
        %3149 = vmatpush1.msra.mxu0 0.0
        %3150 = vmatprep.subr.mxu0 0.0
        %3151 = vmatpush1.msra.mxu0 0.0
        %3152 = vmatprep.mubr.f32.mxu0 0.0
        %3153 = vmatmul.mubr.f32.gmra.mrb[0].mxu0 %v2983
        %v3154 = vpop.f32.mrb[0].mxu0
        %v3155 = vadd.f32 0.0, %v3154
        %v3156 = vpop.f32.mrb[0].mxu0
        %3157 = vmatprep.mubr.f32.mxu0 0.0
        %3158 = vmatmul.mubr.f32.gmra.mrb[0].mxu0 %v2986
        %v3159 = vpop.f32.mrb[0].mxu0
        %v3160 = vadd.f32 0.0, %v3159
        %v3161 = vpop.f32.mrb[0].mxu0
        %3162 = vmatprep.mubr.f32.mxu0 0.0
        %3163 = vmatmul.mubr.f32.gmra.mrb[0].mxu0 %v2989
        %v3164 = vpop.f32.mrb[0].mxu0
        %v3165 = vadd.f32 0.0, %v3164
        %v3166 = vpop.f32.mrb[0].mxu0
        %3167 = vmatprep.mubr.f32.mxu0 0.0
        %3168 = vmatmul.mubr.f32.gmra.mrb[0].mxu0 %v2992
        %v3169 = vpop.f32.mrb[0].mxu0
        %v3170 = vadd.f32 0.0, %v3169
        %v3171 = vpop.f32.mrb[0].mxu0
        %3172 = vdwg.mxu0
        %s3173 = scalar_lea.vmem [#allocation12], 128
        %v3174 = vld [vmem:[%s3173] sm:$0xff]
        %v3175 = vld [vmem:[%s3173 + $0x8] sm:$0xff]
        %v3176 = vld [vmem:[%s3173 + $0x10] sm:$0xff]
        %v3177 = vld [vmem:[%s3173 + $0x18] sm:$0xff]
        %v3178 = vld [vmem:[%s3173 + $0x20] sm:$0xff]
        %v3179 = vld [vmem:[%s3173 + $0x28] sm:$0xff]
        %v3180 = vld [vmem:[%s3173 + $0x30] sm:$0xff]
        %v3181 = vld [vmem:[%s3173 + $0x38] sm:$0xff]
        %3182 = vmatprep.subr.mxu0 0.0
        %3183 = vmatpush1.msra.mxu0 %v3174
        %3184 = vmatprep.subr.mxu0 0.0
        %3185 = vmatpush1.msra.mxu0 %v3175
        %3186 = vmatprep.subr.mxu0 0.0
        %3187 = vmatpush1.msra.mxu0 %v3176
        %3188 = vmatprep.subr.mxu0 0.0
        %3189 = vmatpush1.msra.mxu0 %v3177
        %3190 = vmatprep.subr.mxu0 0.0
        %3191 = vmatpush1.msra.mxu0 %v3178
        %3192 = vmatprep.subr.mxu0 0.0
        %3193 = vmatpush1.msra.mxu0 %v3179
        %3194 = vmatprep.subr.mxu0 0.0
        %3195 = vmatpush1.msra.mxu0 %v3180
        %3196 = vmatprep.subr.mxu0 0.0
        %3197 = vmatpush1.msra.mxu0 %v3181
        %3198 = vmatprep.subr.mxu0 0.0
        %3199 = vmatpush1.msra.mxu0 0.0
        %3200 = vmatprep.subr.mxu0 0.0
        %3201 = vmatpush1.msra.mxu0 0.0
        %3202 = vmatprep.subr.mxu0 0.0
        %3203 = vmatpush1.msra.mxu0 0.0
        %3204 = vmatprep.subr.mxu0 0.0
        %3205 = vmatpush1.msra.mxu0 0.0
        %3206 = vmatprep.subr.mxu0 0.0
        %3207 = vmatpush1.msra.mxu0 0.0
        %3208 = vmatprep.subr.mxu0 0.0
        %3209 = vmatpush1.msra.mxu0 0.0
        %3210 = vmatprep.subr.mxu0 0.0
        %3211 = vmatpush1.msra.mxu0 0.0
        %3212 = vmatprep.subr.mxu0 0.0
        %3213 = vmatpush1.msra.mxu0 0.0
        %3214 = vmatprep.subr.mxu0 0.0
        %3215 = vmatpush1.msra.mxu0 0.0
        %3216 = vmatprep.subr.mxu0 0.0
        %3217 = vmatpush1.msra.mxu0 0.0
        %3218 = vmatprep.subr.mxu0 0.0
        %3219 = vmatpush1.msra.mxu0 0.0
        %3220 = vmatprep.subr.mxu0 0.0
        %3221 = vmatpush1.msra.mxu0 0.0
        %3222 = vmatprep.subr.mxu0 0.0
        %3223 = vmatpush1.msra.mxu0 0.0
        %3224 = vmatprep.subr.mxu0 0.0
        %3225 = vmatpush1.msra.mxu0 0.0
        %3226 = vmatprep.subr.mxu0 0.0
        %3227 = vmatpush1.msra.mxu0 0.0
        %3228 = vmatprep.subr.mxu0 0.0
        %3229 = vmatpush1.msra.mxu0 0.0
        %3230 = vmatprep.subr.mxu0 0.0
        %3231 = vmatpush1.msra.mxu0 0.0
        %3232 = vmatprep.subr.mxu0 0.0
        %3233 = vmatpush1.msra.mxu0 0.0
        %3234 = vmatprep.subr.mxu0 0.0
        %3235 = vmatpush1.msra.mxu0 0.0
        %3236 = vmatprep.subr.mxu0 0.0
        %3237 = vmatpush1.msra.mxu0 0.0
        %3238 = vmatprep.subr.mxu0 0.0
        %3239 = vmatpush1.msra.mxu0 0.0
        %3240 = vmatprep.subr.mxu0 0.0
        %3241 = vmatpush1.msra.mxu0 0.0
        %3242 = vmatprep.subr.mxu0 0.0
        %3243 = vmatpush1.msra.mxu0 0.0
        %3244 = vmatprep.subr.mxu0 0.0
        %3245 = vmatpush1.msra.mxu0 0.0
        %3246 = vmatprep.mubr.f32.mxu0 0.0
        %3247 = vmatmul.mubr.f32.gmra.mrb[0].mxu0 %v2983
        %v3248 = vpop.f32.mrb[0].mxu0
        %v3249 = vadd.f32 0.0, %v3248
        %v3250 = vpop.f32.mrb[0].mxu0
        %3251 = vmatprep.mubr.f32.mxu0 0.0
        %3252 = vmatmul.mubr.f32.gmra.mrb[0].mxu0 %v2986
        %v3253 = vpop.f32.mrb[0].mxu0
        %v3254 = vadd.f32 0.0, %v3253
        %v3255 = vpop.f32.mrb[0].mxu0
        %3256 = vmatprep.mubr.f32.mxu0 0.0
        %3257 = vmatmul.mubr.f32.gmra.mrb[0].mxu0 %v2989
        %v3258 = vpop.f32.mrb[0].mxu0
        %v3259 = vadd.f32 0.0, %v3258
        %v3260 = vpop.f32.mrb[0].mxu0
        %3261 = vmatprep.mubr.f32.mxu0 0.0
        %3262 = vmatmul.mubr.f32.gmra.mrb[0].mxu0 %v2992
        %v3263 = vpop.f32.mrb[0].mxu0
        %v3264 = vadd.f32 0.0, %v3263
        %v3265 = vpop.f32.mrb[0].mxu0
        %3266 = vdwg.mxu0
        %s3267 = scalar_lea.vmem [#allocation12], 192
        %v3268 = vld [vmem:[%s3267] sm:$0xff]
        %v3269 = vld [vmem:[%s3267 + $0x8] sm:$0xff]
        %v3270 = vld [vmem:[%s3267 + $0x10] sm:$0xff]
        %v3271 = vld [vmem:[%s3267 + $0x18] sm:$0xff]
        %v3272 = vld [vmem:[%s3267 + $0x20] sm:$0xff]
        %v3273 = vld [vmem:[%s3267 + $0x28] sm:$0xff]
        %v3274 = vld [vmem:[%s3267 + $0x30] sm:$0xff]
        %v3275 = vld [vmem:[%s3267 + $0x38] sm:$0xff]
        %3276 = vmatprep.subr.mxu0 0.0
        %3277 = vmatpush1.msra.mxu0 %v3268
        %3278 = vmatprep.subr.mxu0 0.0
        %3279 = vmatpush1.msra.mxu0 %v3269
        %3280 = vmatprep.subr.mxu0 0.0
        %3281 = vmatpush1.msra.mxu0 %v3270
        %3282 = vmatprep.subr.mxu0 0.0
        %3283 = vmatpush1.msra.mxu0 %v3271
        %3284 = vmatprep.subr.mxu0 0.0
        %3285 = vmatpush1.msra.mxu0 %v3272
        %3286 = vmatprep.subr.mxu0 0.0
        %3287 = vmatpush1.msra.mxu0 %v3273
        %3288 = vmatprep.subr.mxu0 0.0
        %3289 = vmatpush1.msra.mxu0 %v3274
        %3290 = vmatprep.subr.mxu0 0.0
        %3291 = vmatpush1.msra.mxu0 %v3275
        %3292 = vmatprep.subr.mxu0 0.0
        %3293 = vmatpush1.msra.mxu0 0.0
        %3294 = vmatprep.subr.mxu0 0.0
        %3295 = vmatpush1.msra.mxu0 0.0
        %3296 = vmatprep.subr.mxu0 0.0
        %3297 = vmatpush1.msra.mxu0 0.0
        %3298 = vmatprep.subr.mxu0 0.0
        %3299 = vmatpush1.msra.mxu0 0.0
        %3300 = vmatprep.subr.mxu0 0.0
        %3301 = vmatpush1.msra.mxu0 0.0
        %3302 = vmatprep.subr.mxu0 0.0
        %3303 = vmatpush1.msra.mxu0 0.0
        %3304 = vmatprep.subr.mxu0 0.0
        %3305 = vmatpush1.msra.mxu0 0.0
        %3306 = vmatprep.subr.mxu0 0.0
        %3307 = vmatpush1.msra.mxu0 0.0
        %3308 = vmatprep.subr.mxu0 0.0
        %3309 = vmatpush1.msra.mxu0 0.0
        %3310 = vmatprep.subr.mxu0 0.0
        %3311 = vmatpush1.msra.mxu0 0.0
        %3312 = vmatprep.subr.mxu0 0.0
        %3313 = vmatpush1.msra.mxu0 0.0
        %3314 = vmatprep.subr.mxu0 0.0
        %3315 = vmatpush1.msra.mxu0 0.0
        %3316 = vmatprep.subr.mxu0 0.0
        %3317 = vmatpush1.msra.mxu0 0.0
        %3318 = vmatprep.subr.mxu0 0.0
        %3319 = vmatpush1.msra.mxu0 0.0
        %3320 = vmatprep.subr.mxu0 0.0
        %3321 = vmatpush1.msra.mxu0 0.0
        %3322 = vmatprep.subr.mxu0 0.0
        %3323 = vmatpush1.msra.mxu0 0.0
        %3324 = vmatprep.subr.mxu0 0.0
        %3325 = vmatpush1.msra.mxu0 0.0
        %3326 = vmatprep.subr.mxu0 0.0
        %3327 = vmatpush1.msra.mxu0 0.0
        %3328 = vmatprep.subr.mxu0 0.0
        %3329 = vmatpush1.msra.mxu0 0.0
        %3330 = vmatprep.subr.mxu0 0.0
        %3331 = vmatpush1.msra.mxu0 0.0
        %3332 = vmatprep.subr.mxu0 0.0
        %3333 = vmatpush1.msra.mxu0 0.0
        %3334 = vmatprep.subr.mxu0 0.0
        %3335 = vmatpush1.msra.mxu0 0.0
        %3336 = vmatprep.subr.mxu0 0.0
        %3337 = vmatpush1.msra.mxu0 0.0
        %3338 = vmatprep.subr.mxu0 0.0
        %3339 = vmatpush1.msra.mxu0 0.0
        %3340 = vmatprep.mubr.f32.mxu0 0.0
        %3341 = vmatmul.mubr.f32.gmra.mrb[0].mxu0 %v2983
        %v3342 = vpop.f32.mrb[0].mxu0
        %v3343 = vadd.f32 0.0, %v3342
        %v3344 = vpop.f32.mrb[0].mxu0
        %3345 = vmatprep.mubr.f32.mxu0 0.0
        %3346 = vmatmul.mubr.f32.gmra.mrb[0].mxu0 %v2986
        %v3347 = vpop.f32.mrb[0].mxu0
        %v3348 = vadd.f32 0.0, %v3347
        %v3349 = vpop.f32.mrb[0].mxu0
        %3350 = vmatprep.mubr.f32.mxu0 0.0
        %3351 = vmatmul.mubr.f32.gmra.mrb[0].mxu0 %v2989
        %v3352 = vpop.f32.mrb[0].mxu0
        %v3353 = vadd.f32 0.0, %v3352
        %v3354 = vpop.f32.mrb[0].mxu0
        %3355 = vmatprep.mubr.f32.mxu0 0.0
        %3356 = vmatmul.mubr.f32.gmra.mrb[0].mxu0 %v2992
        %v3357 = vpop.f32.mrb[0].mxu0
        %v3358 = vadd.f32 0.0, %v3357
        %v3359 = vpop.f32.mrb[0].mxu0
        %3360 = vdwg.mxu0
        %s3361 = scalar_lea.vmem [#allocation12], 256
        %v3362 = vld [vmem:[%s3361] sm:$0xff]
        %v3363 = vld [vmem:[%s3361 + $0x8] sm:$0xff]
        %v3364 = vld [vmem:[%s3361 + $0x10] sm:$0xff]
        %v3365 = vld [vmem:[%s3361 + $0x18] sm:$0xff]
        %v3366 = vld [vmem:[%s3361 + $0x20] sm:$0xff]
        %v3367 = vld [vmem:[%s3361 + $0x28] sm:$0xff]
        %v3368 = vld [vmem:[%s3361 + $0x30] sm:$0xff]
        %v3369 = vld [vmem:[%s3361 + $0x38] sm:$0xff]
        %3370 = vmatprep.subr.mxu0 0.0
        %3371 = vmatpush1.msra.mxu0 %v3362
        %3372 = vmatprep.subr.mxu0 0.0
        %3373 = vmatpush1.msra.mxu0 %v3363
        %3374 = vmatprep.subr.mxu0 0.0
        %3375 = vmatpush1.msra.mxu0 %v3364
        %3376 = vmatprep.subr.mxu0 0.0
        %3377 = vmatpush1.msra.mxu0 %v3365
        %3378 = vmatprep.subr.mxu0 0.0
        %3379 = vmatpush1.msra.mxu0 %v3366
        %3380 = vmatprep.subr.mxu0 0.0
        %3381 = vmatpush1.msra.mxu0 %v3367
        %3382 = vmatprep.subr.mxu0 0.0
        %3383 = vmatpush1.msra.mxu0 %v3368
        %3384 = vmatprep.subr.mxu0 0.0
        %3385 = vmatpush1.msra.mxu0 %v3369
        %3386 = vmatprep.subr.mxu0 0.0
        %3387 = vmatpush1.msra.mxu0 0.0
        %3388 = vmatprep.subr.mxu0 0.0
        %3389 = vmatpush1.msra.mxu0 0.0
        %3390 = vmatprep.subr.mxu0 0.0
        %3391 = vmatpush1.msra.mxu0 0.0
        %3392 = vmatprep.subr.mxu0 0.0
        %3393 = vmatpush1.msra.mxu0 0.0
        %3394 = vmatprep.subr.mxu0 0.0
        %3395 = vmatpush1.msra.mxu0 0.0
        %3396 = vmatprep.subr.mxu0 0.0
        %3397 = vmatpush1.msra.mxu0 0.0
        %3398 = vmatprep.subr.mxu0 0.0
        %3399 = vmatpush1.msra.mxu0 0.0
        %3400 = vmatprep.subr.mxu0 0.0
        %3401 = vmatpush1.msra.mxu0 0.0
        %3402 = vmatprep.subr.mxu0 0.0
        %3403 = vmatpush1.msra.mxu0 0.0
        %3404 = vmatprep.subr.mxu0 0.0
        %3405 = vmatpush1.msra.mxu0 0.0
        %3406 = vmatprep.subr.mxu0 0.0
        %3407 = vmatpush1.msra.mxu0 0.0
        %3408 = vmatprep.subr.mxu0 0.0
        %3409 = vmatpush1.msra.mxu0 0.0
        %3410 = vmatprep.subr.mxu0 0.0
        %3411 = vmatpush1.msra.mxu0 0.0
        %3412 = vmatprep.subr.mxu0 0.0
        %3413 = vmatpush1.msra.mxu0 0.0
        %3414 = vmatprep.subr.mxu0 0.0
        %3415 = vmatpush1.msra.mxu0 0.0
        %3416 = vmatprep.subr.mxu0 0.0
        %3417 = vmatpush1.msra.mxu0 0.0
        %3418 = vmatprep.subr.mxu0 0.0
        %3419 = vmatpush1.msra.mxu0 0.0
        %3420 = vmatprep.subr.mxu0 0.0
        %3421 = vmatpush1.msra.mxu0 0.0
        %3422 = vmatprep.subr.mxu0 0.0
        %3423 = vmatpush1.msra.mxu0 0.0
        %3424 = vmatprep.subr.mxu0 0.0
        %3425 = vmatpush1.msra.mxu0 0.0
        %3426 = vmatprep.subr.mxu0 0.0
        %3427 = vmatpush1.msra.mxu0 0.0
        %3428 = vmatprep.subr.mxu0 0.0
        %3429 = vmatpush1.msra.mxu0 0.0
        %3430 = vmatprep.subr.mxu0 0.0
        %3431 = vmatpush1.msra.mxu0 0.0
        %3432 = vmatprep.subr.mxu0 0.0
        %3433 = vmatpush1.msra.mxu0 0.0
        %3434 = vmatprep.mubr.f32.mxu0 0.0
        %3435 = vmatmul.mubr.f32.gmra.mrb[0].mxu0 %v2983
        %v3436 = vpop.f32.mrb[0].mxu0
        %v3437 = vadd.f32 0.0, %v3436
        %v3438 = vpop.f32.mrb[0].mxu0
        %3439 = vmatprep.mubr.f32.mxu0 0.0
        %3440 = vmatmul.mubr.f32.gmra.mrb[0].mxu0 %v2986
        %v3441 = vpop.f32.mrb[0].mxu0
        %v3442 = vadd.f32 0.0, %v3441
        %v3443 = vpop.f32.mrb[0].mxu0
        %3444 = vmatprep.mubr.f32.mxu0 0.0
        %3445 = vmatmul.mubr.f32.gmra.mrb[0].mxu0 %v2989
        %v3446 = vpop.f32.mrb[0].mxu0
        %v3447 = vadd.f32 0.0, %v3446
        %v3448 = vpop.f32.mrb[0].mxu0
        %3449 = vmatprep.mubr.f32.mxu0 0.0
        %3450 = vmatmul.mubr.f32.gmra.mrb[0].mxu0 %v2992
        %v3451 = vpop.f32.mrb[0].mxu0
        %v3452 = vadd.f32 0.0, %v3451
        %v3453 = vpop.f32.mrb[0].mxu0
        %3454 = vdwg.mxu0
        %s3455 = scalar_lea.vmem [#allocation12], 320
        %v3456 = vld [vmem:[%s3455] sm:$0xff]
        %v3457 = vld [vmem:[%s3455 + $0x8] sm:$0xff]
        %v3458 = vld [vmem:[%s3455 + $0x10] sm:$0xff]
        %v3459 = vld [vmem:[%s3455 + $0x18] sm:$0xff]
        %v3460 = vld [vmem:[%s3455 + $0x20] sm:$0xff]
        %v3461 = vld [vmem:[%s3455 + $0x28] sm:$0xff]
        %v3462 = vld [vmem:[%s3455 + $0x30] sm:$0xff]
        %v3463 = vld [vmem:[%s3455 + $0x38] sm:$0xff]
        %3464 = vmatprep.subr.mxu0 0.0
        %3465 = vmatpush1.msra.mxu0 %v3456
        %3466 = vmatprep.subr.mxu0 0.0
        %3467 = vmatpush1.msra.mxu0 %v3457
        %3468 = vmatprep.subr.mxu0 0.0
        %3469 = vmatpush1.msra.mxu0 %v3458
        %3470 = vmatprep.subr.mxu0 0.0
        %3471 = vmatpush1.msra.mxu0 %v3459
        %3472 = vmatprep.subr.mxu0 0.0
        %3473 = vmatpush1.msra.mxu0 %v3460
        %3474 = vmatprep.subr.mxu0 0.0
        %3475 = vmatpush1.msra.mxu0 %v3461
        %3476 = vmatprep.subr.mxu0 0.0
        %3477 = vmatpush1.msra.mxu0 %v3462
        %3478 = vmatprep.subr.mxu0 0.0
        %3479 = vmatpush1.msra.mxu0 %v3463
        %3480 = vmatprep.subr.mxu0 0.0
        %3481 = vmatpush1.msra.mxu0 0.0
        %3482 = vmatprep.subr.mxu0 0.0
        %3483 = vmatpush1.msra.mxu0 0.0
        %3484 = vmatprep.subr.mxu0 0.0
        %3485 = vmatpush1.msra.mxu0 0.0
        %3486 = vmatprep.subr.mxu0 0.0
        %3487 = vmatpush1.msra.mxu0 0.0
        %3488 = vmatprep.subr.mxu0 0.0
        %3489 = vmatpush1.msra.mxu0 0.0
        %3490 = vmatprep.subr.mxu0 0.0
        %3491 = vmatpush1.msra.mxu0 0.0
        %3492 = vmatprep.subr.mxu0 0.0
        %3493 = vmatpush1.msra.mxu0 0.0
        %3494 = vmatprep.subr.mxu0 0.0
        %3495 = vmatpush1.msra.mxu0 0.0
        %3496 = vmatprep.subr.mxu0 0.0
        %3497 = vmatpush1.msra.mxu0 0.0
        %3498 = vmatprep.subr.mxu0 0.0
        %3499 = vmatpush1.msra.mxu0 0.0
        %3500 = vmatprep.subr.mxu0 0.0
        %3501 = vmatpush1.msra.mxu0 0.0
        %3502 = vmatprep.subr.mxu0 0.0
        %3503 = vmatpush1.msra.mxu0 0.0
        %3504 = vmatprep.subr.mxu0 0.0
        %3505 = vmatpush1.msra.mxu0 0.0
        %3506 = vmatprep.subr.mxu0 0.0
        %3507 = vmatpush1.msra.mxu0 0.0
        %3508 = vmatprep.subr.mxu0 0.0
        %3509 = vmatpush1.msra.mxu0 0.0
        %3510 = vmatprep.subr.mxu0 0.0
        %3511 = vmatpush1.msra.mxu0 0.0
        %3512 = vmatprep.subr.mxu0 0.0
        %3513 = vmatpush1.msra.mxu0 0.0
        %3514 = vmatprep.subr.mxu0 0.0
        %3515 = vmatpush1.msra.mxu0 0.0
        %3516 = vmatprep.subr.mxu0 0.0
        %3517 = vmatpush1.msra.mxu0 0.0
        %3518 = vmatprep.subr.mxu0 0.0
        %3519 = vmatpush1.msra.mxu0 0.0
        %3520 = vmatprep.subr.mxu0 0.0
        %3521 = vmatpush1.msra.mxu0 0.0
        %3522 = vmatprep.subr.mxu0 0.0
        %3523 = vmatpush1.msra.mxu0 0.0
        %3524 = vmatprep.subr.mxu0 0.0
        %3525 = vmatpush1.msra.mxu0 0.0
        %3526 = vmatprep.subr.mxu0 0.0
        %3527 = vmatpush1.msra.mxu0 0.0
        %3528 = vmatprep.mubr.f32.mxu0 0.0
        %3529 = vmatmul.mubr.f32.gmra.mrb[0].mxu0 %v2983
        %v3530 = vpop.f32.mrb[0].mxu0
        %v3531 = vadd.f32 0.0, %v3530
        %v3532 = vpop.f32.mrb[0].mxu0
        %3533 = vmatprep.mubr.f32.mxu0 0.0
        %3534 = vmatmul.mubr.f32.gmra.mrb[0].mxu0 %v2986
        %v3535 = vpop.f32.mrb[0].mxu0
        %v3536 = vadd.f32 0.0, %v3535
        %v3537 = vpop.f32.mrb[0].mxu0
        %3538 = vmatprep.mubr.f32.mxu0 0.0
        %3539 = vmatmul.mubr.f32.gmra.mrb[0].mxu0 %v2989
        %v3540 = vpop.f32.mrb[0].mxu0
        %v3541 = vadd.f32 0.0, %v3540
        %v3542 = vpop.f32.mrb[0].mxu0
        %3543 = vmatprep.mubr.f32.mxu0 0.0
        %3544 = vmatmul.mubr.f32.gmra.mrb[0].mxu0 %v2992
        %v3545 = vpop.f32.mrb[0].mxu0
        %v3546 = vadd.f32 0.0, %v3545
        %v3547 = vpop.f32.mrb[0].mxu0
        %3548 = vdwg.mxu0
        %s3549 = scalar_lea.vmem [#allocation12], 384
        %v3550 = vld [vmem:[%s3549] sm:$0xff]
        %v3551 = vld [vmem:[%s3549 + $0x8] sm:$0xff]
        %v3552 = vld [vmem:[%s3549 + $0x10] sm:$0xff]
        %v3553 = vld [vmem:[%s3549 + $0x18] sm:$0xff]
        %v3554 = vld [vmem:[%s3549 + $0x20] sm:$0xff]
        %v3555 = vld [vmem:[%s3549 + $0x28] sm:$0xff]
        %v3556 = vld [vmem:[%s3549 + $0x30] sm:$0xff]
        %v3557 = vld [vmem:[%s3549 + $0x38] sm:$0xff]
        %3558 = vmatprep.subr.mxu0 0.0
        %3559 = vmatpush1.msra.mxu0 %v3550
        %3560 = vmatprep.subr.mxu0 0.0
        %3561 = vmatpush1.msra.mxu0 %v3551
        %3562 = vmatprep.subr.mxu0 0.0
        %3563 = vmatpush1.msra.mxu0 %v3552
        %3564 = vmatprep.subr.mxu0 0.0
        %3565 = vmatpush1.msra.mxu0 %v3553
        %3566 = vmatprep.subr.mxu0 0.0
        %3567 = vmatpush1.msra.mxu0 %v3554
        %3568 = vmatprep.subr.mxu0 0.0
        %3569 = vmatpush1.msra.mxu0 %v3555
        %3570 = vmatprep.subr.mxu0 0.0
        %3571 = vmatpush1.msra.mxu0 %v3556
        %3572 = vmatprep.subr.mxu0 0.0
        %3573 = vmatpush1.msra.mxu0 %v3557
        %3574 = vmatprep.subr.mxu0 0.0
        %3575 = vmatpush1.msra.mxu0 0.0
        %3576 = vmatprep.subr.mxu0 0.0
        %3577 = vmatpush1.msra.mxu0 0.0
        %3578 = vmatprep.subr.mxu0 0.0
        %3579 = vmatpush1.msra.mxu0 0.0
        %3580 = vmatprep.subr.mxu0 0.0
        %3581 = vmatpush1.msra.mxu0 0.0
        %3582 = vmatprep.subr.mxu0 0.0
        %3583 = vmatpush1.msra.mxu0 0.0
        %3584 = vmatprep.subr.mxu0 0.0
        %3585 = vmatpush1.msra.mxu0 0.0
        %3586 = vmatprep.subr.mxu0 0.0
        %3587 = vmatpush1.msra.mxu0 0.0
        %3588 = vmatprep.subr.mxu0 0.0
        %3589 = vmatpush1.msra.mxu0 0.0
        %3590 = vmatprep.subr.mxu0 0.0
        %3591 = vmatpush1.msra.mxu0 0.0
        %3592 = vmatprep.subr.mxu0 0.0
        %3593 = vmatpush1.msra.mxu0 0.0
        %3594 = vmatprep.subr.mxu0 0.0
        %3595 = vmatpush1.msra.mxu0 0.0
        %3596 = vmatprep.subr.mxu0 0.0
        %3597 = vmatpush1.msra.mxu0 0.0
        %3598 = vmatprep.subr.mxu0 0.0
        %3599 = vmatpush1.msra.mxu0 0.0
        %3600 = vmatprep.subr.mxu0 0.0
        %3601 = vmatpush1.msra.mxu0 0.0
        %3602 = vmatprep.subr.mxu0 0.0
        %3603 = vmatpush1.msra.mxu0 0.0
        %3604 = vmatprep.subr.mxu0 0.0
        %3605 = vmatpush1.msra.mxu0 0.0
        %3606 = vmatprep.subr.mxu0 0.0
        %3607 = vmatpush1.msra.mxu0 0.0
        %3608 = vmatprep.subr.mxu0 0.0
        %3609 = vmatpush1.msra.mxu0 0.0
        %3610 = vmatprep.subr.mxu0 0.0
        %3611 = vmatpush1.msra.mxu0 0.0
        %3612 = vmatprep.subr.mxu0 0.0
        %3613 = vmatpush1.msra.mxu0 0.0
        %3614 = vmatprep.subr.mxu0 0.0
        %3615 = vmatpush1.msra.mxu0 0.0
        %3616 = vmatprep.subr.mxu0 0.0
        %3617 = vmatpush1.msra.mxu0 0.0
        %3618 = vmatprep.subr.mxu0 0.0
        %3619 = vmatpush1.msra.mxu0 0.0
        %3620 = vmatprep.subr.mxu0 0.0
        %3621 = vmatpush1.msra.mxu0 0.0
        %3622 = vmatprep.mubr.f32.mxu0 0.0
        %3623 = vmatmul.mubr.f32.gmra.mrb[0].mxu0 %v2983
        %v3624 = vpop.f32.mrb[0].mxu0
        %v3625 = vadd.f32 0.0, %v3624
        %v3626 = vpop.f32.mrb[0].mxu0
        %3627 = vmatprep.mubr.f32.mxu0 0.0
        %3628 = vmatmul.mubr.f32.gmra.mrb[0].mxu0 %v2986
        %v3629 = vpop.f32.mrb[0].mxu0
        %v3630 = vadd.f32 0.0, %v3629
        %v3631 = vpop.f32.mrb[0].mxu0
        %3632 = vmatprep.mubr.f32.mxu0 0.0
        %3633 = vmatmul.mubr.f32.gmra.mrb[0].mxu0 %v2989
        %v3634 = vpop.f32.mrb[0].mxu0
        %v3635 = vadd.f32 0.0, %v3634
        %v3636 = vpop.f32.mrb[0].mxu0
        %3637 = vmatprep.mubr.f32.mxu0 0.0
        %3638 = vmatmul.mubr.f32.gmra.mrb[0].mxu0 %v2992
        %v3639 = vpop.f32.mrb[0].mxu0
        %v3640 = vadd.f32 0.0, %v3639
        %v3641 = vpop.f32.mrb[0].mxu0
        %3642 = vdwg.mxu0
        %s3643 = scalar_lea.vmem [#allocation12], 448
        %v3644 = vld [vmem:[%s3643] sm:$0xff]
        %v3645 = vld [vmem:[%s3643 + $0x8] sm:$0xff]
        %v3646 = vld [vmem:[%s3643 + $0x10] sm:$0xff]
        %v3647 = vld [vmem:[%s3643 + $0x18] sm:$0xff]
        %v3648 = vld [vmem:[%s3643 + $0x20] sm:$0xff]
        %v3649 = vld [vmem:[%s3643 + $0x28] sm:$0xff]
        %v3650 = vld [vmem:[%s3643 + $0x30] sm:$0xff]
        %v3651 = vld [vmem:[%s3643 + $0x38] sm:$0xff]
        %3652 = vmatprep.subr.mxu0 0.0
        %3653 = vmatpush1.msra.mxu0 %v3644
        %3654 = vmatprep.subr.mxu0 0.0
        %3655 = vmatpush1.msra.mxu0 %v3645
        %3656 = vmatprep.subr.mxu0 0.0
        %3657 = vmatpush1.msra.mxu0 %v3646
        %3658 = vmatprep.subr.mxu0 0.0
        %3659 = vmatpush1.msra.mxu0 %v3647
        %3660 = vmatprep.subr.mxu0 0.0
        %3661 = vmatpush1.msra.mxu0 %v3648
        %3662 = vmatprep.subr.mxu0 0.0
        %3663 = vmatpush1.msra.mxu0 %v3649
        %3664 = vmatprep.subr.mxu0 0.0
        %3665 = vmatpush1.msra.mxu0 %v3650
        %3666 = vmatprep.subr.mxu0 0.0
        %3667 = vmatpush1.msra.mxu0 %v3651
        %3668 = vmatprep.subr.mxu0 0.0
        %3669 = vmatpush1.msra.mxu0 0.0
        %3670 = vmatprep.subr.mxu0 0.0
        %3671 = vmatpush1.msra.mxu0 0.0
        %3672 = vmatprep.subr.mxu0 0.0
        %3673 = vmatpush1.msra.mxu0 0.0
        %3674 = vmatprep.subr.mxu0 0.0
        %3675 = vmatpush1.msra.mxu0 0.0
        %3676 = vmatprep.subr.mxu0 0.0
        %3677 = vmatpush1.msra.mxu0 0.0
        %3678 = vmatprep.subr.mxu0 0.0
        %3679 = vmatpush1.msra.mxu0 0.0
        %3680 = vmatprep.subr.mxu0 0.0
        %3681 = vmatpush1.msra.mxu0 0.0
        %3682 = vmatprep.subr.mxu0 0.0
        %3683 = vmatpush1.msra.mxu0 0.0
        %3684 = vmatprep.subr.mxu0 0.0
        %3685 = vmatpush1.msra.mxu0 0.0
        %3686 = vmatprep.subr.mxu0 0.0
        %3687 = vmatpush1.msra.mxu0 0.0
        %3688 = vmatprep.subr.mxu0 0.0
        %3689 = vmatpush1.msra.mxu0 0.0
        %3690 = vmatprep.subr.mxu0 0.0
        %3691 = vmatpush1.msra.mxu0 0.0
        %3692 = vmatprep.subr.mxu0 0.0
        %3693 = vmatpush1.msra.mxu0 0.0
        %3694 = vmatprep.subr.mxu0 0.0
        %3695 = vmatpush1.msra.mxu0 0.0
        %3696 = vmatprep.subr.mxu0 0.0
        %3697 = vmatpush1.msra.mxu0 0.0
        %3698 = vmatprep.subr.mxu0 0.0
        %3699 = vmatpush1.msra.mxu0 0.0
        %3700 = vmatprep.subr.mxu0 0.0
        %3701 = vmatpush1.msra.mxu0 0.0
        %3702 = vmatprep.subr.mxu0 0.0
        %3703 = vmatpush1.msra.mxu0 0.0
        %3704 = vmatprep.subr.mxu0 0.0
        %3705 = vmatpush1.msra.mxu0 0.0
        %3706 = vmatprep.subr.mxu0 0.0
        %3707 = vmatpush1.msra.mxu0 0.0
        %3708 = vmatprep.subr.mxu0 0.0
        %3709 = vmatpush1.msra.mxu0 0.0
        %3710 = vmatprep.subr.mxu0 0.0
        %3711 = vmatpush1.msra.mxu0 0.0
        %3712 = vmatprep.subr.mxu0 0.0
        %3713 = vmatpush1.msra.mxu0 0.0
        %3714 = vmatprep.subr.mxu0 0.0
        %3715 = vmatpush1.msra.mxu0 0.0
        %3716 = vmatprep.mubr.f32.mxu0 0.0
        %3717 = vmatmul.mubr.f32.gmra.mrb[0].mxu0 %v2983
        %v3718 = vpop.f32.mrb[0].mxu0
        %v3719 = vadd.f32 0.0, %v3718
        %v3720 = vpop.f32.mrb[0].mxu0
        %3721 = vmatprep.mubr.f32.mxu0 0.0
        %3722 = vmatmul.mubr.f32.gmra.mrb[0].mxu0 %v2986
        %v3723 = vpop.f32.mrb[0].mxu0
        %v3724 = vadd.f32 0.0, %v3723
        %v3725 = vpop.f32.mrb[0].mxu0
        %3726 = vmatprep.mubr.f32.mxu0 0.0
        %3727 = vmatmul.mubr.f32.gmra.mrb[0].mxu0 %v2989
        %v3728 = vpop.f32.mrb[0].mxu0
        %v3729 = vadd.f32 0.0, %v3728
        %v3730 = vpop.f32.mrb[0].mxu0
        %3731 = vmatprep.mubr.f32.mxu0 0.0
        %3732 = vmatmul.mubr.f32.gmra.mrb[0].mxu0 %v2992
        %v3733 = vpop.f32.mrb[0].mxu0
        %v3734 = vadd.f32 0.0, %v3733
        %v3735 = vpop.f32.mrb[0].mxu0
        %3736 = vdwg.mxu0
        %s3737 = scalar_lea.vmem [#allocation12], 512
        %v3738 = vld [vmem:[%s3737] sm:$0xff]
        %v3739 = vld [vmem:[%s3737 + $0x8] sm:$0xff]
        %v3740 = vld [vmem:[%s3737 + $0x10] sm:$0xff]
        %v3741 = vld [vmem:[%s3737 + $0x18] sm:$0xff]
        %v3742 = vld [vmem:[%s3737 + $0x20] sm:$0xff]
        %v3743 = vld [vmem:[%s3737 + $0x28] sm:$0xff]
        %v3744 = vld [vmem:[%s3737 + $0x30] sm:$0xff]
        %v3745 = vld [vmem:[%s3737 + $0x38] sm:$0xff]
        %3746 = vmatprep.subr.mxu0 0.0
        %3747 = vmatpush1.msra.mxu0 %v3738
        %3748 = vmatprep.subr.mxu0 0.0
        %3749 = vmatpush1.msra.mxu0 %v3739
        %3750 = vmatprep.subr.mxu0 0.0
        %3751 = vmatpush1.msra.mxu0 %v3740
        %3752 = vmatprep.subr.mxu0 0.0
        %3753 = vmatpush1.msra.mxu0 %v3741
        %3754 = vmatprep.subr.mxu0 0.0
        %3755 = vmatpush1.msra.mxu0 %v3742
        %3756 = vmatprep.subr.mxu0 0.0
        %3757 = vmatpush1.msra.mxu0 %v3743
        %3758 = vmatprep.subr.mxu0 0.0
        %3759 = vmatpush1.msra.mxu0 %v3744
        %3760 = vmatprep.subr.mxu0 0.0
        %3761 = vmatpush1.msra.mxu0 %v3745
        %3762 = vmatprep.subr.mxu0 0.0
        %3763 = vmatpush1.msra.mxu0 0.0
        %3764 = vmatprep.subr.mxu0 0.0
        %3765 = vmatpush1.msra.mxu0 0.0
        %3766 = vmatprep.subr.mxu0 0.0
        %3767 = vmatpush1.msra.mxu0 0.0
        %3768 = vmatprep.subr.mxu0 0.0
        %3769 = vmatpush1.msra.mxu0 0.0
        %3770 = vmatprep.subr.mxu0 0.0
        %3771 = vmatpush1.msra.mxu0 0.0
        %3772 = vmatprep.subr.mxu0 0.0
        %3773 = vmatpush1.msra.mxu0 0.0
        %3774 = vmatprep.subr.mxu0 0.0
        %3775 = vmatpush1.msra.mxu0 0.0
        %3776 = vmatprep.subr.mxu0 0.0
        %3777 = vmatpush1.msra.mxu0 0.0
        %3778 = vmatprep.subr.mxu0 0.0
        %3779 = vmatpush1.msra.mxu0 0.0
        %3780 = vmatprep.subr.mxu0 0.0
        %3781 = vmatpush1.msra.mxu0 0.0
        %3782 = vmatprep.subr.mxu0 0.0
        %3783 = vmatpush1.msra.mxu0 0.0
        %3784 = vmatprep.subr.mxu0 0.0
        %3785 = vmatpush1.msra.mxu0 0.0
        %3786 = vmatprep.subr.mxu0 0.0
        %3787 = vmatpush1.msra.mxu0 0.0
        %3788 = vmatprep.subr.mxu0 0.0
        %3789 = vmatpush1.msra.mxu0 0.0
        %3790 = vmatprep.subr.mxu0 0.0
        %3791 = vmatpush1.msra.mxu0 0.0
        %3792 = vmatprep.subr.mxu0 0.0
        %3793 = vmatpush1.msra.mxu0 0.0
        %3794 = vmatprep.subr.mxu0 0.0
        %3795 = vmatpush1.msra.mxu0 0.0
        %3796 = vmatprep.subr.mxu0 0.0
        %3797 = vmatpush1.msra.mxu0 0.0
        %3798 = vmatprep.subr.mxu0 0.0
        %3799 = vmatpush1.msra.mxu0 0.0
        %3800 = vmatprep.subr.mxu0 0.0
        %3801 = vmatpush1.msra.mxu0 0.0
        %3802 = vmatprep.subr.mxu0 0.0
        %3803 = vmatpush1.msra.mxu0 0.0
        %3804 = vmatprep.subr.mxu0 0.0
        %3805 = vmatpush1.msra.mxu0 0.0
        %3806 = vmatprep.subr.mxu0 0.0
        %3807 = vmatpush1.msra.mxu0 0.0
        %3808 = vmatprep.subr.mxu0 0.0
        %3809 = vmatpush1.msra.mxu0 0.0
        %3810 = vmatprep.mubr.f32.mxu0 0.0
        %3811 = vmatmul.mubr.f32.gmra.mrb[0].mxu0 %v2983
        %v3812 = vpop.f32.mrb[0].mxu0
        %v3813 = vadd.f32 0.0, %v3812
        %v3814 = vpop.f32.mrb[0].mxu0
        %3815 = vmatprep.mubr.f32.mxu0 0.0
        %3816 = vmatmul.mubr.f32.gmra.mrb[0].mxu0 %v2986
        %v3817 = vpop.f32.mrb[0].mxu0
        %v3818 = vadd.f32 0.0, %v3817
        %v3819 = vpop.f32.mrb[0].mxu0
        %3820 = vmatprep.mubr.f32.mxu0 0.0
        %3821 = vmatmul.mubr.f32.gmra.mrb[0].mxu0 %v2989
        %v3822 = vpop.f32.mrb[0].mxu0
        %v3823 = vadd.f32 0.0, %v3822
        %v3824 = vpop.f32.mrb[0].mxu0
        %3825 = vmatprep.mubr.f32.mxu0 0.0
        %3826 = vmatmul.mubr.f32.gmra.mrb[0].mxu0 %v2992
        %v3827 = vpop.f32.mrb[0].mxu0
        %v3828 = vadd.f32 0.0, %v3827
        %v3829 = vpop.f32.mrb[0].mxu0
        %3830 = vdwg.mxu0
        %v3831 = vld [vmem:[#allocation15] sm:$0xff]
        %v3832 = vld [vmem:[#allocation15 + $0x8] sm:$0xff]
        %v3833 = vld [vmem:[#allocation15 + $0x10] sm:$0xff]
        %v3834 = vld [vmem:[#allocation15 + $0x18] sm:$0xff]
        %v3835 = vld [vmem:[#allocation15 + $0x20] sm:$0xff]
        %v3836 = vld [vmem:[#allocation15 + $0x28] sm:$0xff]
        %v3837 = vld [vmem:[%s12] sm:$0xff]
        %v3838 = vld [vmem:[%s12 + $0x8] sm:$0xff]
        %3840 = vset.pattern.permute.xlu0 0
        %3841 = vperm.xlu0 %3840, %v3837
        %v3842 = vpop.permute.xlu0 %3841
        %3845 = vset.pattern.permute.xlu0 0
        %3846 = vperm.xlu0 %3845, %v3838
        %v3847 = vpop.permute.xlu0 %3846
        %vm3849 = vcmask 261120
        %v3851 = vsel %vm3849, %v3833, 0
        %v3854 = vsel %vm3849, %v3836, 0
        %3856 = vmatprep.subr.mxu0 0.0
        %3857 = vmatpush1.msra.mxu0 %v3061
        %3858 = vmatprep.subr.mxu0 0.0
        %3859 = vmatpush1.msra.mxu0 %v3066
        %3860 = vmatprep.subr.mxu0 0.0
        %3861 = vmatpush1.msra.mxu0 %v3071
        %3862 = vmatprep.subr.mxu0 0.0
        %3863 = vmatpush1.msra.mxu0 %v3076
        %3864 = vmatprep.subr.mxu0 0.0
        %3865 = vmatpush1.msra.mxu0 %v3155
        %3866 = vmatprep.subr.mxu0 0.0
        %3867 = vmatpush1.msra.mxu0 %v3160
        %3868 = vmatprep.subr.mxu0 0.0
        %3869 = vmatpush1.msra.mxu0 %v3165
        %3870 = vmatprep.subr.mxu0 0.0
        %3871 = vmatpush1.msra.mxu0 %v3170
        %3872 = vmatprep.subr.mxu0 0.0
        %3873 = vmatpush1.msra.mxu0 %v3249
        %3874 = vmatprep.subr.mxu0 0.0
        %3875 = vmatpush1.msra.mxu0 %v3254
        %3876 = vmatprep.subr.mxu0 0.0
        %3877 = vmatpush1.msra.mxu0 %v3259
        %3878 = vmatprep.subr.mxu0 0.0
        %3879 = vmatpush1.msra.mxu0 %v3264
        %3880 = vmatprep.subr.mxu0 0.0
        %3881 = vmatpush1.msra.mxu0 %v3343
        %3882 = vmatprep.subr.mxu0 0.0
        %3883 = vmatpush1.msra.mxu0 %v3348
        %3884 = vmatprep.subr.mxu0 0.0
        %3885 = vmatpush1.msra.mxu0 %v3353
        %3886 = vmatprep.subr.mxu0 0.0
        %3887 = vmatpush1.msra.mxu0 %v3358
        %3888 = vmatprep.subr.mxu0 0.0
        %3889 = vmatpush1.msra.mxu0 %v3437
        %3890 = vmatprep.subr.mxu0 0.0
        %3891 = vmatpush1.msra.mxu0 %v3442
        %3892 = vmatprep.subr.mxu0 0.0
        %3893 = vmatpush1.msra.mxu0 %v3447
        %3894 = vmatprep.subr.mxu0 0.0
        %3895 = vmatpush1.msra.mxu0 %v3452
        %3896 = vmatprep.subr.mxu0 0.0
        %3897 = vmatpush1.msra.mxu0 %v3531
        %3898 = vmatprep.subr.mxu0 0.0
        %3899 = vmatpush1.msra.mxu0 %v3536
        %3900 = vmatprep.subr.mxu0 0.0
        %3901 = vmatpush1.msra.mxu0 %v3541
        %3902 = vmatprep.subr.mxu0 0.0
        %3903 = vmatpush1.msra.mxu0 %v3546
        %3904 = vmatprep.subr.mxu0 0.0
        %3905 = vmatpush1.msra.mxu0 %v3625
        %3906 = vmatprep.subr.mxu0 0.0
        %3907 = vmatpush1.msra.mxu0 %v3630
        %3908 = vmatprep.subr.mxu0 0.0
        %3909 = vmatpush1.msra.mxu0 %v3635
        %3910 = vmatprep.subr.mxu0 0.0
        %3911 = vmatpush1.msra.mxu0 %v3640
        %3912 = vmatprep.subr.mxu0 0.0
        %3913 = vmatpush1.msra.mxu0 %v3719
        %3914 = vmatprep.subr.mxu0 0.0
        %3915 = vmatpush1.msra.mxu0 %v3724
        %3916 = vmatprep.subr.mxu0 0.0
        %3917 = vmatpush1.msra.mxu0 %v3729
        %3918 = vmatprep.subr.mxu0 0.0
        %3919 = vmatpush1.msra.mxu0 %v3734
        %3920 = vmatprep.mubr.f32.mxu0 %v3832
        %3921 = vmatmul.mubr.f32.gmra.mrb[0].mxu0 %v3831
        %v3922 = vpop.f32.mrb[0].mxu0
        %v3923 = vadd.f32 %v3842, %v3922
        %v3924 = vpop.f32.mrb[0].mxu0
        %3925 = vmatprep.mubr.f32.mxu0 %v3835
        %3926 = vmatmul.mubr.f32.gmra.mrb[0].mxu0 %v3834
        %v3927 = vpop.f32.mrb[0].mxu0
        %v3928 = vadd.f32 %v3847, %v3927
        %v3929 = vpop.f32.mrb[0].mxu0
        %3930 = vdwg.mxu0
        %3931 = vmatprep.subr.mxu0 0.0
        %3932 = vmatpush1.msra.mxu0 %v3813
        %3933 = vmatprep.subr.mxu0 0.0
        %3934 = vmatpush1.msra.mxu0 %v3818
        %3935 = vmatprep.subr.mxu0 0.0
        %3936 = vmatpush1.msra.mxu0 %v3823
        %3937 = vmatprep.subr.mxu0 0.0
        %3938 = vmatpush1.msra.mxu0 %v3828
        %3939 = vmatprep.subr.mxu0 0.0
        %3940 = vmatpush1.msra.mxu0 0.0
        %3941 = vmatprep.subr.mxu0 0.0
        %3942 = vmatpush1.msra.mxu0 0.0
        %3943 = vmatprep.subr.mxu0 0.0
        %3944 = vmatpush1.msra.mxu0 0.0
        %3945 = vmatprep.subr.mxu0 0.0
        %3946 = vmatpush1.msra.mxu0 0.0
        %3947 = vmatprep.subr.mxu0 0.0
        %3948 = vmatpush1.msra.mxu0 0.0
        %3949 = vmatprep.subr.mxu0 0.0
        %3950 = vmatpush1.msra.mxu0 0.0
        %3951 = vmatprep.subr.mxu0 0.0
        %3952 = vmatpush1.msra.mxu0 0.0
        %3953 = vmatprep.subr.mxu0 0.0
        %3954 = vmatpush1.msra.mxu0 0.0
        %3955 = vmatprep.subr.mxu0 0.0
        %3956 = vmatpush1.msra.mxu0 0.0
        %3957 = vmatprep.subr.mxu0 0.0
        %3958 = vmatpush1.msra.mxu0 0.0
        %3959 = vmatprep.subr.mxu0 0.0
        %3960 = vmatpush1.msra.mxu0 0.0
        %3961 = vmatprep.subr.mxu0 0.0
        %3962 = vmatpush1.msra.mxu0 0.0
        %3963 = vmatprep.subr.mxu0 0.0
        %3964 = vmatpush1.msra.mxu0 0.0
        %3965 = vmatprep.subr.mxu0 0.0
        %3966 = vmatpush1.msra.mxu0 0.0
        %3967 = vmatprep.subr.mxu0 0.0
        %3968 = vmatpush1.msra.mxu0 0.0
        %3969 = vmatprep.subr.mxu0 0.0
        %3970 = vmatpush1.msra.mxu0 0.0
        %3971 = vmatprep.subr.mxu0 0.0
        %3972 = vmatpush1.msra.mxu0 0.0
        %3973 = vmatprep.subr.mxu0 0.0
        %3974 = vmatpush1.msra.mxu0 0.0
        %3975 = vmatprep.subr.mxu0 0.0
        %3976 = vmatpush1.msra.mxu0 0.0
        %3977 = vmatprep.subr.mxu0 0.0
        %3978 = vmatpush1.msra.mxu0 0.0
        %3979 = vmatprep.subr.mxu0 0.0
        %3980 = vmatpush1.msra.mxu0 0.0
        %3981 = vmatprep.subr.mxu0 0.0
        %3982 = vmatpush1.msra.mxu0 0.0
        %3983 = vmatprep.subr.mxu0 0.0
        %3984 = vmatpush1.msra.mxu0 0.0
        %3985 = vmatprep.subr.mxu0 0.0
        %3986 = vmatpush1.msra.mxu0 0.0
        %3987 = vmatprep.subr.mxu0 0.0
        %3988 = vmatpush1.msra.mxu0 0.0
        %3989 = vmatprep.subr.mxu0 0.0
        %3990 = vmatpush1.msra.mxu0 0.0
        %3991 = vmatprep.subr.mxu0 0.0
        %3992 = vmatpush1.msra.mxu0 0.0
        %3993 = vmatprep.subr.mxu0 0.0
        %3994 = vmatpush1.msra.mxu0 0.0
        %3995 = vmatprep.mubr.f32.mxu0 0.0
        %3996 = vmatmul.mubr.f32.gmra.mrb[0].mxu0 %v3851
        %v3997 = vpop.f32.mrb[0].mxu0
        %v3998 = vadd.f32 %v3923, %v3997
        %v3999 = vpop.f32.mrb[0].mxu0
        %4000 = vmatprep.mubr.f32.mxu0 0.0
        %4001 = vmatmul.mubr.f32.gmra.mrb[0].mxu0 %v3854
        %v4002 = vpop.f32.mrb[0].mxu0
        %v4003 = vadd.f32 %v3928, %v4002
        %v4004 = vpop.f32.mrb[0].mxu0
        %4005 = vdwg.mxu0
        %v4006 = vmax.f32 %v3998, 0.0
        %v4007 = vmax.f32 %v4003, 0.0
        %v4008 = vld [vmem:[#allocation16] sm:$0xff]
        %v4009 = vld [vmem:[#allocation16 + $0x8] sm:$0xff]
        %v4010 = vld [vmem:[#allocation16 + $0x10] sm:$0xff]
        %v4011 = vld [vmem:[#allocation16 + $0x18] sm:$0xff]
        %v4012 = vld [vmem:[#allocation16 + $0x20] sm:$0xff]
        %v4013 = vld [vmem:[#allocation16 + $0x28] sm:$0xff]
        %v4014 = vld [vmem:[#allocation16 + $0x30] sm:$0xff]
        %v4015 = vld [vmem:[#allocation16 + $0x38] sm:$0xff]
        %v4016 = vld [vmem:[#allocation16 + $0x40] sm:$0xff]
        %v4017 = vld [vmem:[#allocation16 + $0x48] sm:$0xff]
        %v4018 = vld [vmem:[#allocation16 + $0x50] sm:$0xff]
        %v4019 = vld [vmem:[#allocation16 + $0x58] sm:$0xff]
        %v4020 = vld [vmem:[#allocation16 + $0x60] sm:$0xff]
        %v4021 = vld [vmem:[#allocation16 + $0x68] sm:$0xff]
        %v4022 = vld [vmem:[#allocation16 + $0x70] sm:$0xff]
        %v4023 = vld [vmem:[#allocation16 + $0x78] sm:$0xff]
        %v4025 = vsel %vm2981, %v4006, 0
        %v4028 = vsel %vm2981, %v4007, 0
        %4030 = vmatprep.subr.mxu0 %v4009
        %4031 = vmatpush1.msra.mxu0 %v4008
        %4032 = vmatprep.subr.mxu0 %v4011
        %4033 = vmatpush1.msra.mxu0 %v4010
        %4034 = vmatprep.subr.mxu0 %v4013
        %4035 = vmatpush1.msra.mxu0 %v4012
        %4036 = vmatprep.subr.mxu0 %v4015
        %4037 = vmatpush1.msra.mxu0 %v4014
        %4038 = vmatprep.subr.mxu0 %v4017
        %4039 = vmatpush1.msra.mxu0 %v4016
        %4040 = vmatprep.subr.mxu0 %v4019
        %4041 = vmatpush1.msra.mxu0 %v4018
        %4042 = vmatprep.subr.mxu0 %v4021
        %4043 = vmatpush1.msra.mxu0 %v4020
        %4044 = vmatprep.subr.mxu0 %v4023
        %4045 = vmatpush1.msra.mxu0 %v4022
        %4046 = vmatprep.subr.mxu0 0.0
        %4047 = vmatpush1.msra.mxu0 0.0
        %4048 = vmatprep.subr.mxu0 0.0
        %4049 = vmatpush1.msra.mxu0 0.0
        %4050 = vmatprep.subr.mxu0 0.0
        %4051 = vmatpush1.msra.mxu0 0.0
        %4052 = vmatprep.subr.mxu0 0.0
        %4053 = vmatpush1.msra.mxu0 0.0
        %4054 = vmatprep.subr.mxu0 0.0
        %4055 = vmatpush1.msra.mxu0 0.0
        %4056 = vmatprep.subr.mxu0 0.0
        %4057 = vmatpush1.msra.mxu0 0.0
        %4058 = vmatprep.subr.mxu0 0.0
        %4059 = vmatpush1.msra.mxu0 0.0
        %4060 = vmatprep.subr.mxu0 0.0
        %4061 = vmatpush1.msra.mxu0 0.0
        %4062 = vmatprep.subr.mxu0 0.0
        %4063 = vmatpush1.msra.mxu0 0.0
        %4064 = vmatprep.subr.mxu0 0.0
        %4065 = vmatpush1.msra.mxu0 0.0
        %4066 = vmatprep.subr.mxu0 0.0
        %4067 = vmatpush1.msra.mxu0 0.0
        %4068 = vmatprep.subr.mxu0 0.0
        %4069 = vmatpush1.msra.mxu0 0.0
        %4070 = vmatprep.subr.mxu0 0.0
        %4071 = vmatpush1.msra.mxu0 0.0
        %4072 = vmatprep.subr.mxu0 0.0
        %4073 = vmatpush1.msra.mxu0 0.0
        %4074 = vmatprep.subr.mxu0 0.0
        %4075 = vmatpush1.msra.mxu0 0.0
        %4076 = vmatprep.subr.mxu0 0.0
        %4077 = vmatpush1.msra.mxu0 0.0
        %4078 = vmatprep.subr.mxu0 0.0
        %4079 = vmatpush1.msra.mxu0 0.0
        %4080 = vmatprep.subr.mxu0 0.0
        %4081 = vmatpush1.msra.mxu0 0.0
        %4082 = vmatprep.subr.mxu0 0.0
        %4083 = vmatpush1.msra.mxu0 0.0
        %4084 = vmatprep.subr.mxu0 0.0
        %4085 = vmatpush1.msra.mxu0 0.0
        %4086 = vmatprep.subr.mxu0 0.0
        %4087 = vmatpush1.msra.mxu0 0.0
        %4088 = vmatprep.subr.mxu0 0.0
        %4089 = vmatpush1.msra.mxu0 0.0
        %4090 = vmatprep.subr.mxu0 0.0
        %4091 = vmatpush1.msra.mxu0 0.0
        %4092 = vmatprep.subr.mxu0 0.0
        %4093 = vmatpush1.msra.mxu0 0.0
        %4094 = vmatprep.mubr.f32.mxu0 0.0
        %4095 = vmatmul.mubr.f32.gmra.mrb[0].mxu0 %v4025
        %v4096 = vpop.f32.mrb[0].mxu0
        %v4097 = vadd.f32 0.0, %v4096
        %v4098 = vpop.f32.mrb[0].mxu0
        %v4099 = vadd.f32 0.0, %v4098
        %4100 = vmatprep.mubr.f32.mxu0 0.0
        %4101 = vmatmul.mubr.f32.gmra.mrb[0].mxu0 %v4028
        %v4102 = vpop.f32.mrb[0].mxu0
        %v4103 = vadd.f32 0.0, %v4102
        %v4104 = vpop.f32.mrb[0].mxu0
        %v4105 = vadd.f32 0.0, %v4104
        %4106 = vdwg.mxu0
        %v4107 = vld [vmem:[%s746] sm:$0xff]
        %v4108 = vld [vmem:[%s746 + $0x8] sm:$0xff]
        %v4109 = vld [vmem:[#allocation17] sm:$0xff]
        %v4110 = vld [vmem:[#allocation17 + $0x8] sm:$0xff]
        %v4111 = vld [vmem:[#allocation17 + $0x10] sm:$0xff]
        %v4112 = vld [vmem:[#allocation17 + $0x18] sm:$0xff]
        %v4113 = vld [vmem:[#allocation17 + $0x20] sm:$0xff]
        %v4114 = vld [vmem:[#allocation17 + $0x28] sm:$0xff]
        %v4115 = vld [vmem:[#allocation17 + $0x30] sm:$0xff]
        %v4116 = vld [vmem:[#allocation17 + $0x38] sm:$0xff]
        %v4117 = vld [vmem:[#allocation17 + $0x40] sm:$0xff]
        %v4118 = vld [vmem:[#allocation17 + $0x48] sm:$0xff]
        %v4119 = vld [vmem:[#allocation17 + $0x50] sm:$0xff]
        %v4120 = vld [vmem:[#allocation17 + $0x58] sm:$0xff]
        %v4121 = vld [vmem:[#allocation17 + $0x60] sm:$0xff]
        %v4122 = vld [vmem:[#allocation17 + $0x68] sm:$0xff]
        %v4123 = vld [vmem:[#allocation17 + $0x70] sm:$0xff]
        %v4124 = vld [vmem:[#allocation17 + $0x78] sm:$0xff]
        %v4125 = vld [vmem:[#allocation17 + $0x80] sm:$0xff]
        %v4126 = vld [vmem:[#allocation17 + $0x88] sm:$0xff]
        %v4127 = vld [vmem:[#allocation17 + $0x90] sm:$0xff]
        %v4128 = vld [vmem:[#allocation17 + $0x98] sm:$0xff]
        %v4129 = vld [vmem:[#allocation17 + $0xa0] sm:$0xff]
        %v4130 = vld [vmem:[#allocation17 + $0xa8] sm:$0xff]
        %v4131 = vld [vmem:[#allocation17 + $0xb0] sm:$0xff]
        %v4132 = vld [vmem:[#allocation17 + $0xb8] sm:$0xff]
        %v4133 = vld [vmem:[#allocation17 + $0xc0] sm:$0xff]
        %v4134 = vld [vmem:[#allocation17 + $0xc8] sm:$0xff]
        %v4135 = vld [vmem:[#allocation17 + $0xd0] sm:$0xff]
        %v4136 = vld [vmem:[#allocation17 + $0xd8] sm:$0xff]
        %v4137 = vld [vmem:[#allocation17 + $0xe0] sm:$0xff]
        %v4138 = vld [vmem:[#allocation17 + $0xe8] sm:$0xff]
        %v4139 = vld [vmem:[#allocation17 + $0xf0] sm:$0xff]
        %v4140 = vld [vmem:[#allocation17 + $0xf8] sm:$0xff]
        %v4141 = vld [vmem:[#allocation17 + $0x100] sm:$0xff]
        %v4142 = vld [vmem:[#allocation17 + $0x108] sm:$0xff]
        %v4143 = vld [vmem:[#allocation17 + $0x110] sm:$0xff]
        %v4144 = vld [vmem:[#allocation17 + $0x118] sm:$0xff]
        %v4145 = vld [vmem:[#allocation17 + $0x120] sm:$0xff]
        %v4146 = vld [vmem:[#allocation17 + $0x128] sm:$0xff]
        %v4147 = vld [vmem:[#allocation17 + $0x130] sm:$0xff]
        %v4148 = vld [vmem:[#allocation17 + $0x138] sm:$0xff]
        %v4149 = vld [vmem:[#allocation17 + $0x140] sm:$0xff]
        %v4150 = vld [vmem:[#allocation17 + $0x148] sm:$0xff]
        %v4151 = vld [vmem:[#allocation17 + $0x150] sm:$0xff]
        %v4152 = vld [vmem:[#allocation17 + $0x158] sm:$0xff]
        %v4153 = vld [vmem:[#allocation17 + $0x160] sm:$0xff]
        %v4154 = vld [vmem:[#allocation17 + $0x168] sm:$0xff]
        %v4155 = vld [vmem:[#allocation17 + $0x170] sm:$0xff]
        %v4156 = vld [vmem:[#allocation17 + $0x178] sm:$0xff]
        %v4157 = vld [vmem:[#allocation17 + $0x180] sm:$0xff]
        %v4158 = vld [vmem:[#allocation17 + $0x188] sm:$0xff]
        %v4159 = vld [vmem:[#allocation17 + $0x190] sm:$0xff]
        %v4160 = vld [vmem:[#allocation17 + $0x198] sm:$0xff]
        %v4161 = vld [vmem:[#allocation17 + $0x1a0] sm:$0xff]
        %v4162 = vld [vmem:[#allocation17 + $0x1a8] sm:$0xff]
        %v4163 = vld [vmem:[#allocation17 + $0x1b0] sm:$0xff]
        %v4164 = vld [vmem:[#allocation17 + $0x1b8] sm:$0xff]
        %v4165 = vld [vmem:[#allocation17 + $0x1c0] sm:$0xff]
        %v4166 = vld [vmem:[#allocation17 + $0x1c8] sm:$0xff]
        %v4167 = vld [vmem:[#allocation17 + $0x1d0] sm:$0xff]
        %v4168 = vld [vmem:[#allocation17 + $0x1d8] sm:$0xff]
        %v4169 = vld [vmem:[#allocation17 + $0x1e0] sm:$0xff]
        %v4170 = vld [vmem:[#allocation17 + $0x1e8] sm:$0xff]
        %v4171 = vld [vmem:[#allocation17 + $0x1f0] sm:$0xff]
        %v4172 = vld [vmem:[#allocation17 + $0x1f8] sm:$0xff]
        %4173 = vmatprep.subr.mxu0 %v4110
        %4174 = vmatpush1.msra.mxu0 %v4109
        %4175 = vmatprep.subr.mxu0 %v4112
        %4176 = vmatpush1.msra.mxu0 %v4111
        %4177 = vmatprep.subr.mxu0 %v4114
        %4178 = vmatpush1.msra.mxu0 %v4113
        %4179 = vmatprep.subr.mxu0 %v4116
        %4180 = vmatpush1.msra.mxu0 %v4115
        %4181 = vmatprep.subr.mxu0 %v4118
        %4182 = vmatpush1.msra.mxu0 %v4117
        %4183 = vmatprep.subr.mxu0 %v4120
        %4184 = vmatpush1.msra.mxu0 %v4119
        %4185 = vmatprep.subr.mxu0 %v4122
        %4186 = vmatpush1.msra.mxu0 %v4121
        %4187 = vmatprep.subr.mxu0 %v4124
        %4188 = vmatpush1.msra.mxu0 %v4123
        %4189 = vmatprep.subr.mxu0 %v4126
        %4190 = vmatpush1.msra.mxu0 %v4125
        %4191 = vmatprep.subr.mxu0 %v4128
        %4192 = vmatpush1.msra.mxu0 %v4127
        %4193 = vmatprep.subr.mxu0 %v4130
        %4194 = vmatpush1.msra.mxu0 %v4129
        %4195 = vmatprep.subr.mxu0 %v4132
        %4196 = vmatpush1.msra.mxu0 %v4131
        %4197 = vmatprep.subr.mxu0 %v4134
        %4198 = vmatpush1.msra.mxu0 %v4133
        %4199 = vmatprep.subr.mxu0 %v4136
        %4200 = vmatpush1.msra.mxu0 %v4135
        %4201 = vmatprep.subr.mxu0 %v4138
        %4202 = vmatpush1.msra.mxu0 %v4137
        %4203 = vmatprep.subr.mxu0 %v4140
        %4204 = vmatpush1.msra.mxu0 %v4139
        %4205 = vmatprep.subr.mxu0 %v4142
        %4206 = vmatpush1.msra.mxu0 %v4141
        %4207 = vmatprep.subr.mxu0 %v4144
        %4208 = vmatpush1.msra.mxu0 %v4143
        %4209 = vmatprep.subr.mxu0 %v4146
        %4210 = vmatpush1.msra.mxu0 %v4145
        %4211 = vmatprep.subr.mxu0 %v4148
        %4212 = vmatpush1.msra.mxu0 %v4147
        %4213 = vmatprep.subr.mxu0 %v4150
        %4214 = vmatpush1.msra.mxu0 %v4149
        %4215 = vmatprep.subr.mxu0 %v4152
        %4216 = vmatpush1.msra.mxu0 %v4151
        %4217 = vmatprep.subr.mxu0 %v4154
        %4218 = vmatpush1.msra.mxu0 %v4153
        %4219 = vmatprep.subr.mxu0 %v4156
        %4220 = vmatpush1.msra.mxu0 %v4155
        %4221 = vmatprep.subr.mxu0 %v4158
        %4222 = vmatpush1.msra.mxu0 %v4157
        %4223 = vmatprep.subr.mxu0 %v4160
        %4224 = vmatpush1.msra.mxu0 %v4159
        %4225 = vmatprep.subr.mxu0 %v4162
        %4226 = vmatpush1.msra.mxu0 %v4161
        %4227 = vmatprep.subr.mxu0 %v4164
        %4228 = vmatpush1.msra.mxu0 %v4163
        %4229 = vmatprep.subr.mxu0 %v4166
        %4230 = vmatpush1.msra.mxu0 %v4165
        %4231 = vmatprep.subr.mxu0 %v4168
        %4232 = vmatpush1.msra.mxu0 %v4167
        %4233 = vmatprep.subr.mxu0 %v4170
        %4234 = vmatpush1.msra.mxu0 %v4169
        %4235 = vmatprep.subr.mxu0 %v4172
        %4236 = vmatpush1.msra.mxu0 %v4171
        %4237 = vmatprep.mubr.f32.mxu0 %v4099
        %4238 = vmatmul.mubr.f32.gmra.mrb[0].mxu0 %v4097
        %v4239 = vpop.f32.mrb[0].mxu0
        %v4240 = vadd.f32 0.0, %v4239
        %v4241 = vpop.f32.mrb[0].mxu0
        %v4242 = vadd.f32 0.0, %v4241
        %4243 = vmatprep.mubr.f32.mxu0 %v4105
        %4244 = vmatmul.mubr.f32.gmra.mrb[0].mxu0 %v4103
        %v4245 = vpop.f32.mrb[0].mxu0
        %v4246 = vadd.f32 0.0, %v4245
        %v4247 = vpop.f32.mrb[0].mxu0
        %v4248 = vadd.f32 0.0, %v4247
        %4249 = vmatprep.mubr.f32.mxu0 %v4108
        %4250 = vmatmul.mubr.f32.gmra.mrb[0].mxu0 %v4107
        %v4251 = vpop.f32.mrb[0].mxu0
        %v4252 = vadd.f32 0.0, %v4251
        %v4253 = vpop.f32.mrb[0].mxu0
        %v4254 = vadd.f32 0.0, %v4253
        %4255 = vdwg.mxu0
        %s4256 = scalar_lea.vmem [#allocation17], 512
        %v4257 = vld [vmem:[%s4256] sm:$0xff]
        %v4258 = vld [vmem:[%s4256 + $0x8] sm:$0xff]
        %v4259 = vld [vmem:[%s4256 + $0x10] sm:$0xff]
        %v4260 = vld [vmem:[%s4256 + $0x18] sm:$0xff]
        %v4261 = vld [vmem:[%s4256 + $0x20] sm:$0xff]
        %v4262 = vld [vmem:[%s4256 + $0x28] sm:$0xff]
        %v4263 = vld [vmem:[%s4256 + $0x30] sm:$0xff]
        %v4264 = vld [vmem:[%s4256 + $0x38] sm:$0xff]
        %v4265 = vld [vmem:[%s4256 + $0x40] sm:$0xff]
        %v4266 = vld [vmem:[%s4256 + $0x48] sm:$0xff]
        %v4267 = vld [vmem:[%s4256 + $0x50] sm:$0xff]
        %v4268 = vld [vmem:[%s4256 + $0x58] sm:$0xff]
        %v4269 = vld [vmem:[%s4256 + $0x60] sm:$0xff]
        %v4270 = vld [vmem:[%s4256 + $0x68] sm:$0xff]
        %v4271 = vld [vmem:[%s4256 + $0x70] sm:$0xff]
        %v4272 = vld [vmem:[%s4256 + $0x78] sm:$0xff]
        %v4273 = vld [vmem:[%s4256 + $0x80] sm:$0xff]
        %v4274 = vld [vmem:[%s4256 + $0x88] sm:$0xff]
        %v4275 = vld [vmem:[%s4256 + $0x90] sm:$0xff]
        %v4276 = vld [vmem:[%s4256 + $0x98] sm:$0xff]
        %v4277 = vld [vmem:[%s4256 + $0xa0] sm:$0xff]
        %v4278 = vld [vmem:[%s4256 + $0xa8] sm:$0xff]
        %v4279 = vld [vmem:[%s4256 + $0xb0] sm:$0xff]
        %v4280 = vld [vmem:[%s4256 + $0xb8] sm:$0xff]
        %v4281 = vld [vmem:[%s4256 + $0xc0] sm:$0xff]
        %v4282 = vld [vmem:[%s4256 + $0xc8] sm:$0xff]
        %v4283 = vld [vmem:[%s4256 + $0xd0] sm:$0xff]
        %v4284 = vld [vmem:[%s4256 + $0xd8] sm:$0xff]
        %v4285 = vld [vmem:[%s4256 + $0xe0] sm:$0xff]
        %v4286 = vld [vmem:[%s4256 + $0xe8] sm:$0xff]
        %v4287 = vld [vmem:[%s4256 + $0xf0] sm:$0xff]
        %v4288 = vld [vmem:[%s4256 + $0xf8] sm:$0xff]
        %v4289 = vld [vmem:[%s4256 + $0x100] sm:$0xff]
        %v4290 = vld [vmem:[%s4256 + $0x108] sm:$0xff]
        %v4291 = vld [vmem:[%s4256 + $0x110] sm:$0xff]
        %v4292 = vld [vmem:[%s4256 + $0x118] sm:$0xff]
        %v4293 = vld [vmem:[%s4256 + $0x120] sm:$0xff]
        %v4294 = vld [vmem:[%s4256 + $0x128] sm:$0xff]
        %v4295 = vld [vmem:[%s4256 + $0x130] sm:$0xff]
        %v4296 = vld [vmem:[%s4256 + $0x138] sm:$0xff]
        %v4297 = vld [vmem:[%s4256 + $0x140] sm:$0xff]
        %v4298 = vld [vmem:[%s4256 + $0x148] sm:$0xff]
        %v4299 = vld [vmem:[%s4256 + $0x150] sm:$0xff]
        %v4300 = vld [vmem:[%s4256 + $0x158] sm:$0xff]
        %v4301 = vld [vmem:[%s4256 + $0x160] sm:$0xff]
        %v4302 = vld [vmem:[%s4256 + $0x168] sm:$0xff]
        %v4303 = vld [vmem:[%s4256 + $0x170] sm:$0xff]
        %v4304 = vld [vmem:[%s4256 + $0x178] sm:$0xff]
        %v4305 = vld [vmem:[%s4256 + $0x180] sm:$0xff]
        %v4306 = vld [vmem:[%s4256 + $0x188] sm:$0xff]
        %v4307 = vld [vmem:[%s4256 + $0x190] sm:$0xff]
        %v4308 = vld [vmem:[%s4256 + $0x198] sm:$0xff]
        %v4309 = vld [vmem:[%s4256 + $0x1a0] sm:$0xff]
        %v4310 = vld [vmem:[%s4256 + $0x1a8] sm:$0xff]
        %v4311 = vld [vmem:[%s4256 + $0x1b0] sm:$0xff]
        %v4312 = vld [vmem:[%s4256 + $0x1b8] sm:$0xff]
        %v4313 = vld [vmem:[%s4256 + $0x1c0] sm:$0xff]
        %v4314 = vld [vmem:[%s4256 + $0x1c8] sm:$0xff]
        %v4315 = vld [vmem:[%s4256 + $0x1d0] sm:$0xff]
        %v4316 = vld [vmem:[%s4256 + $0x1d8] sm:$0xff]
        %v4317 = vld [vmem:[%s4256 + $0x1e0] sm:$0xff]
        %v4318 = vld [vmem:[%s4256 + $0x1e8] sm:$0xff]
        %v4319 = vld [vmem:[%s4256 + $0x1f0] sm:$0xff]
        %v4320 = vld [vmem:[%s4256 + $0x1f8] sm:$0xff]
        %4321 = vmatprep.subr.mxu0 %v4258
        %4322 = vmatpush1.msra.mxu0 %v4257
        %4323 = vmatprep.subr.mxu0 %v4260
        %4324 = vmatpush1.msra.mxu0 %v4259
        %4325 = vmatprep.subr.mxu0 %v4262
        %4326 = vmatpush1.msra.mxu0 %v4261
        %4327 = vmatprep.subr.mxu0 %v4264
        %4328 = vmatpush1.msra.mxu0 %v4263
        %4329 = vmatprep.subr.mxu0 %v4266
        %4330 = vmatpush1.msra.mxu0 %v4265
        %4331 = vmatprep.subr.mxu0 %v4268
        %4332 = vmatpush1.msra.mxu0 %v4267
        %4333 = vmatprep.subr.mxu0 %v4270
        %4334 = vmatpush1.msra.mxu0 %v4269
        %4335 = vmatprep.subr.mxu0 %v4272
        %4336 = vmatpush1.msra.mxu0 %v4271
        %4337 = vmatprep.subr.mxu0 %v4274
        %4338 = vmatpush1.msra.mxu0 %v4273
        %4339 = vmatprep.subr.mxu0 %v4276
        %4340 = vmatpush1.msra.mxu0 %v4275
        %4341 = vmatprep.subr.mxu0 %v4278
        %4342 = vmatpush1.msra.mxu0 %v4277
        %4343 = vmatprep.subr.mxu0 %v4280
        %4344 = vmatpush1.msra.mxu0 %v4279
        %4345 = vmatprep.subr.mxu0 %v4282
        %4346 = vmatpush1.msra.mxu0 %v4281
        %4347 = vmatprep.subr.mxu0 %v4284
        %4348 = vmatpush1.msra.mxu0 %v4283
        %4349 = vmatprep.subr.mxu0 %v4286
        %4350 = vmatpush1.msra.mxu0 %v4285
        %4351 = vmatprep.subr.mxu0 %v4288
        %4352 = vmatpush1.msra.mxu0 %v4287
        %4353 = vmatprep.subr.mxu0 %v4290
        %4354 = vmatpush1.msra.mxu0 %v4289
        %4355 = vmatprep.subr.mxu0 %v4292
        %4356 = vmatpush1.msra.mxu0 %v4291
        %4357 = vmatprep.subr.mxu0 %v4294
        %4358 = vmatpush1.msra.mxu0 %v4293
        %4359 = vmatprep.subr.mxu0 %v4296
        %4360 = vmatpush1.msra.mxu0 %v4295
        %4361 = vmatprep.subr.mxu0 %v4298
        %4362 = vmatpush1.msra.mxu0 %v4297
        %4363 = vmatprep.subr.mxu0 %v4300
        %4364 = vmatpush1.msra.mxu0 %v4299
        %4365 = vmatprep.subr.mxu0 %v4302
        %4366 = vmatpush1.msra.mxu0 %v4301
        %4367 = vmatprep.subr.mxu0 %v4304
        %4368 = vmatpush1.msra.mxu0 %v4303
        %4369 = vmatprep.subr.mxu0 %v4306
        %4370 = vmatpush1.msra.mxu0 %v4305
        %4371 = vmatprep.subr.mxu0 %v4308
        %4372 = vmatpush1.msra.mxu0 %v4307
        %4373 = vmatprep.subr.mxu0 %v4310
        %4374 = vmatpush1.msra.mxu0 %v4309
        %4375 = vmatprep.subr.mxu0 %v4312
        %4376 = vmatpush1.msra.mxu0 %v4311
        %4377 = vmatprep.subr.mxu0 %v4314
        %4378 = vmatpush1.msra.mxu0 %v4313
        %4379 = vmatprep.subr.mxu0 %v4316
        %4380 = vmatpush1.msra.mxu0 %v4315
        %4381 = vmatprep.subr.mxu0 %v4318
        %4382 = vmatpush1.msra.mxu0 %v4317
        %4383 = vmatprep.subr.mxu0 %v4320
        %4384 = vmatpush1.msra.mxu0 %v4319
        %4385 = vmatprep.mubr.f32.mxu0 %v4099
        %4386 = vmatmul.mubr.f32.gmra.mrb[0].mxu0 %v4097
        %v4387 = vpop.f32.mrb[0].mxu0
        %v4388 = vadd.f32 0.0, %v4387
        %v4389 = vpop.f32.mrb[0].mxu0
        %v4390 = vadd.f32 0.0, %v4389
        %4391 = vmatprep.mubr.f32.mxu0 %v4105
        %4392 = vmatmul.mubr.f32.gmra.mrb[0].mxu0 %v4103
        %v4393 = vpop.f32.mrb[0].mxu0
        %v4394 = vadd.f32 0.0, %v4393
        %v4395 = vpop.f32.mrb[0].mxu0
        %v4396 = vadd.f32 0.0, %v4395
        %4397 = vmatprep.mubr.f32.mxu0 %v4108
        %4398 = vmatmul.mubr.f32.gmra.mrb[0].mxu0 %v4107
        %v4399 = vpop.f32.mrb[0].mxu0
        %v4400 = vadd.f32 0.0, %v4399
        %v4401 = vpop.f32.mrb[0].mxu0
        %v4402 = vadd.f32 0.0, %v4401
        %4403 = vdwg.mxu0
        %s4404 = scalar_lea.vmem [#allocation17], 1024
        %v4405 = vld [vmem:[%s4404] sm:$0xff]
        %v4406 = vld [vmem:[%s4404 + $0x8] sm:$0xff]
        %v4407 = vld [vmem:[%s4404 + $0x10] sm:$0xff]
        %v4408 = vld [vmem:[%s4404 + $0x18] sm:$0xff]
        %v4409 = vld [vmem:[%s4404 + $0x20] sm:$0xff]
        %v4410 = vld [vmem:[%s4404 + $0x28] sm:$0xff]
        %v4411 = vld [vmem:[%s4404 + $0x30] sm:$0xff]
        %v4412 = vld [vmem:[%s4404 + $0x38] sm:$0xff]
        %v4413 = vld [vmem:[%s4404 + $0x40] sm:$0xff]
        %v4414 = vld [vmem:[%s4404 + $0x48] sm:$0xff]
        %v4415 = vld [vmem:[%s4404 + $0x50] sm:$0xff]
        %v4416 = vld [vmem:[%s4404 + $0x58] sm:$0xff]
        %v4417 = vld [vmem:[%s4404 + $0x60] sm:$0xff]
        %v4418 = vld [vmem:[%s4404 + $0x68] sm:$0xff]
        %v4419 = vld [vmem:[%s4404 + $0x70] sm:$0xff]
        %v4420 = vld [vmem:[%s4404 + $0x78] sm:$0xff]
        %v4421 = vld [vmem:[%s4404 + $0x80] sm:$0xff]
        %v4422 = vld [vmem:[%s4404 + $0x88] sm:$0xff]
        %v4423 = vld [vmem:[%s4404 + $0x90] sm:$0xff]
        %v4424 = vld [vmem:[%s4404 + $0x98] sm:$0xff]
        %v4425 = vld [vmem:[%s4404 + $0xa0] sm:$0xff]
        %v4426 = vld [vmem:[%s4404 + $0xa8] sm:$0xff]
        %v4427 = vld [vmem:[%s4404 + $0xb0] sm:$0xff]
        %v4428 = vld [vmem:[%s4404 + $0xb8] sm:$0xff]
        %v4429 = vld [vmem:[%s4404 + $0xc0] sm:$0xff]
        %v4430 = vld [vmem:[%s4404 + $0xc8] sm:$0xff]
        %v4431 = vld [vmem:[%s4404 + $0xd0] sm:$0xff]
        %v4432 = vld [vmem:[%s4404 + $0xd8] sm:$0xff]
        %v4433 = vld [vmem:[%s4404 + $0xe0] sm:$0xff]
        %v4434 = vld [vmem:[%s4404 + $0xe8] sm:$0xff]
        %v4435 = vld [vmem:[%s4404 + $0xf0] sm:$0xff]
        %v4436 = vld [vmem:[%s4404 + $0xf8] sm:$0xff]
        %v4437 = vld [vmem:[%s4404 + $0x100] sm:$0xff]
        %v4438 = vld [vmem:[%s4404 + $0x108] sm:$0xff]
        %v4439 = vld [vmem:[%s4404 + $0x110] sm:$0xff]
        %v4440 = vld [vmem:[%s4404 + $0x118] sm:$0xff]
        %v4441 = vld [vmem:[%s4404 + $0x120] sm:$0xff]
        %v4442 = vld [vmem:[%s4404 + $0x128] sm:$0xff]
        %v4443 = vld [vmem:[%s4404 + $0x130] sm:$0xff]
        %v4444 = vld [vmem:[%s4404 + $0x138] sm:$0xff]
        %v4445 = vld [vmem:[%s4404 + $0x140] sm:$0xff]
        %v4446 = vld [vmem:[%s4404 + $0x148] sm:$0xff]
        %v4447 = vld [vmem:[%s4404 + $0x150] sm:$0xff]
        %v4448 = vld [vmem:[%s4404 + $0x158] sm:$0xff]
        %v4449 = vld [vmem:[%s4404 + $0x160] sm:$0xff]
        %v4450 = vld [vmem:[%s4404 + $0x168] sm:$0xff]
        %v4451 = vld [vmem:[%s4404 + $0x170] sm:$0xff]
        %v4452 = vld [vmem:[%s4404 + $0x178] sm:$0xff]
        %v4453 = vld [vmem:[%s4404 + $0x180] sm:$0xff]
        %v4454 = vld [vmem:[%s4404 + $0x188] sm:$0xff]
        %v4455 = vld [vmem:[%s4404 + $0x190] sm:$0xff]
        %v4456 = vld [vmem:[%s4404 + $0x198] sm:$0xff]
        %v4457 = vld [vmem:[%s4404 + $0x1a0] sm:$0xff]
        %v4458 = vld [vmem:[%s4404 + $0x1a8] sm:$0xff]
        %v4459 = vld [vmem:[%s4404 + $0x1b0] sm:$0xff]
        %v4460 = vld [vmem:[%s4404 + $0x1b8] sm:$0xff]
        %v4461 = vld [vmem:[%s4404 + $0x1c0] sm:$0xff]
        %v4462 = vld [vmem:[%s4404 + $0x1c8] sm:$0xff]
        %v4463 = vld [vmem:[%s4404 + $0x1d0] sm:$0xff]
        %v4464 = vld [vmem:[%s4404 + $0x1d8] sm:$0xff]
        %v4465 = vld [vmem:[%s4404 + $0x1e0] sm:$0xff]
        %v4466 = vld [vmem:[%s4404 + $0x1e8] sm:$0xff]
        %v4467 = vld [vmem:[%s4404 + $0x1f0] sm:$0xff]
        %v4468 = vld [vmem:[%s4404 + $0x1f8] sm:$0xff]
        %4469 = vmatprep.subr.mxu0 %v4406
        %4470 = vmatpush1.msra.mxu0 %v4405
        %4471 = vmatprep.subr.mxu0 %v4408
        %4472 = vmatpush1.msra.mxu0 %v4407
        %4473 = vmatprep.subr.mxu0 %v4410
        %4474 = vmatpush1.msra.mxu0 %v4409
        %4475 = vmatprep.subr.mxu0 %v4412
        %4476 = vmatpush1.msra.mxu0 %v4411
        %4477 = vmatprep.subr.mxu0 %v4414
        %4478 = vmatpush1.msra.mxu0 %v4413
        %4479 = vmatprep.subr.mxu0 %v4416
        %4480 = vmatpush1.msra.mxu0 %v4415
        %4481 = vmatprep.subr.mxu0 %v4418
        %4482 = vmatpush1.msra.mxu0 %v4417
        %4483 = vmatprep.subr.mxu0 %v4420
        %4484 = vmatpush1.msra.mxu0 %v4419
        %4485 = vmatprep.subr.mxu0 %v4422
        %4486 = vmatpush1.msra.mxu0 %v4421
        %4487 = vmatprep.subr.mxu0 %v4424
        %4488 = vmatpush1.msra.mxu0 %v4423
        %4489 = vmatprep.subr.mxu0 %v4426
        %4490 = vmatpush1.msra.mxu0 %v4425
        %4491 = vmatprep.subr.mxu0 %v4428
        %4492 = vmatpush1.msra.mxu0 %v4427
        %4493 = vmatprep.subr.mxu0 %v4430
        %4494 = vmatpush1.msra.mxu0 %v4429
        %4495 = vmatprep.subr.mxu0 %v4432
        %4496 = vmatpush1.msra.mxu0 %v4431
        %4497 = vmatprep.subr.mxu0 %v4434
        %4498 = vmatpush1.msra.mxu0 %v4433
        %4499 = vmatprep.subr.mxu0 %v4436
        %4500 = vmatpush1.msra.mxu0 %v4435
        %4501 = vmatprep.subr.mxu0 %v4438
        %4502 = vmatpush1.msra.mxu0 %v4437
        %4503 = vmatprep.subr.mxu0 %v4440
        %4504 = vmatpush1.msra.mxu0 %v4439
        %4505 = vmatprep.subr.mxu0 %v4442
        %4506 = vmatpush1.msra.mxu0 %v4441
        %4507 = vmatprep.subr.mxu0 %v4444
        %4508 = vmatpush1.msra.mxu0 %v4443
        %4509 = vmatprep.subr.mxu0 %v4446
        %4510 = vmatpush1.msra.mxu0 %v4445
        %4511 = vmatprep.subr.mxu0 %v4448
        %4512 = vmatpush1.msra.mxu0 %v4447
        %4513 = vmatprep.subr.mxu0 %v4450
        %4514 = vmatpush1.msra.mxu0 %v4449
        %4515 = vmatprep.subr.mxu0 %v4452
        %4516 = vmatpush1.msra.mxu0 %v4451
        %4517 = vmatprep.subr.mxu0 %v4454
        %4518 = vmatpush1.msra.mxu0 %v4453
        %4519 = vmatprep.subr.mxu0 %v4456
        %4520 = vmatpush1.msra.mxu0 %v4455
        %4521 = vmatprep.subr.mxu0 %v4458
        %4522 = vmatpush1.msra.mxu0 %v4457
        %4523 = vmatprep.subr.mxu0 %v4460
        %4524 = vmatpush1.msra.mxu0 %v4459
        %4525 = vmatprep.subr.mxu0 %v4462
        %4526 = vmatpush1.msra.mxu0 %v4461
        %4527 = vmatprep.subr.mxu0 %v4464
        %4528 = vmatpush1.msra.mxu0 %v4463
        %4529 = vmatprep.subr.mxu0 %v4466
        %4530 = vmatpush1.msra.mxu0 %v4465
        %4531 = vmatprep.subr.mxu0 %v4468
        %4532 = vmatpush1.msra.mxu0 %v4467
        %4533 = vmatprep.mubr.f32.mxu0 %v4099
        %4534 = vmatmul.mubr.f32.gmra.mrb[0].mxu0 %v4097
        %v4535 = vpop.f32.mrb[0].mxu0
        %v4536 = vadd.f32 0.0, %v4535
        %v4537 = vpop.f32.mrb[0].mxu0
        %v4538 = vadd.f32 0.0, %v4537
        %4539 = vmatprep.mubr.f32.mxu0 %v4105
        %4540 = vmatmul.mubr.f32.gmra.mrb[0].mxu0 %v4103
        %v4541 = vpop.f32.mrb[0].mxu0
        %v4542 = vadd.f32 0.0, %v4541
        %v4543 = vpop.f32.mrb[0].mxu0
        %v4544 = vadd.f32 0.0, %v4543
        %4545 = vmatprep.mubr.f32.mxu0 %v4108
        %4546 = vmatmul.mubr.f32.gmra.mrb[0].mxu0 %v4107
        %v4547 = vpop.f32.mrb[0].mxu0
        %v4548 = vadd.f32 0.0, %v4547
        %v4549 = vpop.f32.mrb[0].mxu0
        %v4550 = vadd.f32 0.0, %v4549
        %4551 = vdwg.mxu0
        %s4552 = scalar_lea.vmem [#allocation17], 1536
        %v4553 = vld [vmem:[%s4552] sm:$0xff]
        %v4554 = vld [vmem:[%s4552 + $0x8] sm:$0xff]
        %v4555 = vld [vmem:[%s4552 + $0x10] sm:$0xff]
        %v4556 = vld [vmem:[%s4552 + $0x18] sm:$0xff]
        %v4557 = vld [vmem:[%s4552 + $0x20] sm:$0xff]
        %v4558 = vld [vmem:[%s4552 + $0x28] sm:$0xff]
        %v4559 = vld [vmem:[%s4552 + $0x30] sm:$0xff]
        %v4560 = vld [vmem:[%s4552 + $0x38] sm:$0xff]
        %v4561 = vld [vmem:[%s4552 + $0x40] sm:$0xff]
        %v4562 = vld [vmem:[%s4552 + $0x48] sm:$0xff]
        %v4563 = vld [vmem:[%s4552 + $0x50] sm:$0xff]
        %v4564 = vld [vmem:[%s4552 + $0x58] sm:$0xff]
        %v4565 = vld [vmem:[%s4552 + $0x60] sm:$0xff]
        %v4566 = vld [vmem:[%s4552 + $0x68] sm:$0xff]
        %v4567 = vld [vmem:[%s4552 + $0x70] sm:$0xff]
        %v4568 = vld [vmem:[%s4552 + $0x78] sm:$0xff]
        %v4569 = vld [vmem:[%s4552 + $0x80] sm:$0xff]
        %v4570 = vld [vmem:[%s4552 + $0x88] sm:$0xff]
        %v4571 = vld [vmem:[%s4552 + $0x90] sm:$0xff]
        %v4572 = vld [vmem:[%s4552 + $0x98] sm:$0xff]
        %v4573 = vld [vmem:[%s4552 + $0xa0] sm:$0xff]
        %v4574 = vld [vmem:[%s4552 + $0xa8] sm:$0xff]
        %v4575 = vld [vmem:[%s4552 + $0xb0] sm:$0xff]
        %v4576 = vld [vmem:[%s4552 + $0xb8] sm:$0xff]
        %v4577 = vld [vmem:[%s4552 + $0xc0] sm:$0xff]
        %v4578 = vld [vmem:[%s4552 + $0xc8] sm:$0xff]
        %v4579 = vld [vmem:[%s4552 + $0xd0] sm:$0xff]
        %v4580 = vld [vmem:[%s4552 + $0xd8] sm:$0xff]
        %v4581 = vld [vmem:[%s4552 + $0xe0] sm:$0xff]
        %v4582 = vld [vmem:[%s4552 + $0xe8] sm:$0xff]
        %v4583 = vld [vmem:[%s4552 + $0xf0] sm:$0xff]
        %v4584 = vld [vmem:[%s4552 + $0xf8] sm:$0xff]
        %v4585 = vld [vmem:[%s4552 + $0x100] sm:$0xff]
        %v4586 = vld [vmem:[%s4552 + $0x108] sm:$0xff]
        %v4587 = vld [vmem:[%s4552 + $0x110] sm:$0xff]
        %v4588 = vld [vmem:[%s4552 + $0x118] sm:$0xff]
        %v4589 = vld [vmem:[%s4552 + $0x120] sm:$0xff]
        %v4590 = vld [vmem:[%s4552 + $0x128] sm:$0xff]
        %v4591 = vld [vmem:[%s4552 + $0x130] sm:$0xff]
        %v4592 = vld [vmem:[%s4552 + $0x138] sm:$0xff]
        %v4593 = vld [vmem:[%s4552 + $0x140] sm:$0xff]
        %v4594 = vld [vmem:[%s4552 + $0x148] sm:$0xff]
        %v4595 = vld [vmem:[%s4552 + $0x150] sm:$0xff]
        %v4596 = vld [vmem:[%s4552 + $0x158] sm:$0xff]
        %v4597 = vld [vmem:[%s4552 + $0x160] sm:$0xff]
        %v4598 = vld [vmem:[%s4552 + $0x168] sm:$0xff]
        %v4599 = vld [vmem:[%s4552 + $0x170] sm:$0xff]
        %v4600 = vld [vmem:[%s4552 + $0x178] sm:$0xff]
        %v4601 = vld [vmem:[%s4552 + $0x180] sm:$0xff]
        %v4602 = vld [vmem:[%s4552 + $0x188] sm:$0xff]
        %v4603 = vld [vmem:[%s4552 + $0x190] sm:$0xff]
        %v4604 = vld [vmem:[%s4552 + $0x198] sm:$0xff]
        %v4605 = vld [vmem:[%s4552 + $0x1a0] sm:$0xff]
        %v4606 = vld [vmem:[%s4552 + $0x1a8] sm:$0xff]
        %v4607 = vld [vmem:[%s4552 + $0x1b0] sm:$0xff]
        %v4608 = vld [vmem:[%s4552 + $0x1b8] sm:$0xff]
        %v4609 = vld [vmem:[%s4552 + $0x1c0] sm:$0xff]
        %v4610 = vld [vmem:[%s4552 + $0x1c8] sm:$0xff]
        %v4611 = vld [vmem:[%s4552 + $0x1d0] sm:$0xff]
        %v4612 = vld [vmem:[%s4552 + $0x1d8] sm:$0xff]
        %v4613 = vld [vmem:[%s4552 + $0x1e0] sm:$0xff]
        %v4614 = vld [vmem:[%s4552 + $0x1e8] sm:$0xff]
        %v4615 = vld [vmem:[%s4552 + $0x1f0] sm:$0xff]
        %v4616 = vld [vmem:[%s4552 + $0x1f8] sm:$0xff]
        %4617 = vmatprep.subr.mxu0 %v4554
        %4618 = vmatpush1.msra.mxu0 %v4553
        %4619 = vmatprep.subr.mxu0 %v4556
        %4620 = vmatpush1.msra.mxu0 %v4555
        %4621 = vmatprep.subr.mxu0 %v4558
        %4622 = vmatpush1.msra.mxu0 %v4557
        %4623 = vmatprep.subr.mxu0 %v4560
        %4624 = vmatpush1.msra.mxu0 %v4559
        %4625 = vmatprep.subr.mxu0 %v4562
        %4626 = vmatpush1.msra.mxu0 %v4561
        %4627 = vmatprep.subr.mxu0 %v4564
        %4628 = vmatpush1.msra.mxu0 %v4563
        %4629 = vmatprep.subr.mxu0 %v4566
        %4630 = vmatpush1.msra.mxu0 %v4565
        %4631 = vmatprep.subr.mxu0 %v4568
        %4632 = vmatpush1.msra.mxu0 %v4567
        %4633 = vmatprep.subr.mxu0 %v4570
        %4634 = vmatpush1.msra.mxu0 %v4569
        %4635 = vmatprep.subr.mxu0 %v4572
        %4636 = vmatpush1.msra.mxu0 %v4571
        %4637 = vmatprep.subr.mxu0 %v4574
        %4638 = vmatpush1.msra.mxu0 %v4573
        %4639 = vmatprep.subr.mxu0 %v4576
        %4640 = vmatpush1.msra.mxu0 %v4575
        %4641 = vmatprep.subr.mxu0 %v4578
        %4642 = vmatpush1.msra.mxu0 %v4577
        %4643 = vmatprep.subr.mxu0 %v4580
        %4644 = vmatpush1.msra.mxu0 %v4579
        %4645 = vmatprep.subr.mxu0 %v4582
        %4646 = vmatpush1.msra.mxu0 %v4581
        %4647 = vmatprep.subr.mxu0 %v4584
        %4648 = vmatpush1.msra.mxu0 %v4583
        %4649 = vmatprep.subr.mxu0 %v4586
        %4650 = vmatpush1.msra.mxu0 %v4585
        %4651 = vmatprep.subr.mxu0 %v4588
        %4652 = vmatpush1.msra.mxu0 %v4587
        %4653 = vmatprep.subr.mxu0 %v4590
        %4654 = vmatpush1.msra.mxu0 %v4589
        %4655 = vmatprep.subr.mxu0 %v4592
        %4656 = vmatpush1.msra.mxu0 %v4591
        %4657 = vmatprep.subr.mxu0 %v4594
        %4658 = vmatpush1.msra.mxu0 %v4593
        %4659 = vmatprep.subr.mxu0 %v4596
        %4660 = vmatpush1.msra.mxu0 %v4595
        %4661 = vmatprep.subr.mxu0 %v4598
        %4662 = vmatpush1.msra.mxu0 %v4597
        %4663 = vmatprep.subr.mxu0 %v4600
        %4664 = vmatpush1.msra.mxu0 %v4599
        %4665 = vmatprep.subr.mxu0 %v4602
        %4666 = vmatpush1.msra.mxu0 %v4601
        %4667 = vmatprep.subr.mxu0 %v4604
        %4668 = vmatpush1.msra.mxu0 %v4603
        %4669 = vmatprep.subr.mxu0 %v4606
        %4670 = vmatpush1.msra.mxu0 %v4605
        %4671 = vmatprep.subr.mxu0 %v4608
        %4672 = vmatpush1.msra.mxu0 %v4607
        %4673 = vmatprep.subr.mxu0 %v4610
        %4674 = vmatpush1.msra.mxu0 %v4609
        %4675 = vmatprep.subr.mxu0 %v4612
        %4676 = vmatpush1.msra.mxu0 %v4611
        %4677 = vmatprep.subr.mxu0 %v4614
        %4678 = vmatpush1.msra.mxu0 %v4613
        %4679 = vmatprep.subr.mxu0 %v4616
        %4680 = vmatpush1.msra.mxu0 %v4615
        %4681 = vmatprep.mubr.f32.mxu0 %v4099
        %4682 = vmatmul.mubr.f32.gmra.mrb[0].mxu0 %v4097
        %v4683 = vpop.f32.mrb[0].mxu0
        %v4684 = vadd.f32 0.0, %v4683
        %v4685 = vpop.f32.mrb[0].mxu0
        %v4686 = vadd.f32 0.0, %v4685
        %4687 = vmatprep.mubr.f32.mxu0 %v4105
        %4688 = vmatmul.mubr.f32.gmra.mrb[0].mxu0 %v4103
        %v4689 = vpop.f32.mrb[0].mxu0
        %v4690 = vadd.f32 0.0, %v4689
        %v4691 = vpop.f32.mrb[0].mxu0
        %v4692 = vadd.f32 0.0, %v4691
        %4693 = vmatprep.mubr.f32.mxu0 %v4108
        %4694 = vmatmul.mubr.f32.gmra.mrb[0].mxu0 %v4107
        %v4695 = vpop.f32.mrb[0].mxu0
        %v4696 = vadd.f32 0.0, %v4695
        %v4697 = vpop.f32.mrb[0].mxu0
        %v4698 = vadd.f32 0.0, %v4697
        %4699 = vdwg.mxu0
        %s4700 = scalar_lea.vmem [#allocation17], 2048
        %v4701 = vld [vmem:[%s4700] sm:$0xff]
        %v4702 = vld [vmem:[%s4700 + $0x8] sm:$0xff]
        %v4703 = vld [vmem:[%s4700 + $0x10] sm:$0xff]
        %v4704 = vld [vmem:[%s4700 + $0x18] sm:$0xff]
        %v4705 = vld [vmem:[%s4700 + $0x20] sm:$0xff]
        %v4706 = vld [vmem:[%s4700 + $0x28] sm:$0xff]
        %v4707 = vld [vmem:[%s4700 + $0x30] sm:$0xff]
        %v4708 = vld [vmem:[%s4700 + $0x38] sm:$0xff]
        %v4709 = vld [vmem:[%s4700 + $0x40] sm:$0xff]
        %v4710 = vld [vmem:[%s4700 + $0x48] sm:$0xff]
        %v4711 = vld [vmem:[%s4700 + $0x50] sm:$0xff]
        %v4712 = vld [vmem:[%s4700 + $0x58] sm:$0xff]
        %v4713 = vld [vmem:[%s4700 + $0x60] sm:$0xff]
        %v4714 = vld [vmem:[%s4700 + $0x68] sm:$0xff]
        %v4715 = vld [vmem:[%s4700 + $0x70] sm:$0xff]
        %v4716 = vld [vmem:[%s4700 + $0x78] sm:$0xff]
        %v4717 = vld [vmem:[%s4700 + $0x80] sm:$0xff]
        %v4718 = vld [vmem:[%s4700 + $0x88] sm:$0xff]
        %v4719 = vld [vmem:[%s4700 + $0x90] sm:$0xff]
        %v4720 = vld [vmem:[%s4700 + $0x98] sm:$0xff]
        %v4721 = vld [vmem:[%s4700 + $0xa0] sm:$0xff]
        %v4722 = vld [vmem:[%s4700 + $0xa8] sm:$0xff]
        %v4723 = vld [vmem:[%s4700 + $0xb0] sm:$0xff]
        %v4724 = vld [vmem:[%s4700 + $0xb8] sm:$0xff]
        %v4725 = vld [vmem:[%s4700 + $0xc0] sm:$0xff]
        %v4726 = vld [vmem:[%s4700 + $0xc8] sm:$0xff]
        %v4727 = vld [vmem:[%s4700 + $0xd0] sm:$0xff]
        %v4728 = vld [vmem:[%s4700 + $0xd8] sm:$0xff]
        %v4729 = vld [vmem:[%s4700 + $0xe0] sm:$0xff]
        %v4730 = vld [vmem:[%s4700 + $0xe8] sm:$0xff]
        %v4731 = vld [vmem:[%s4700 + $0xf0] sm:$0xff]
        %v4732 = vld [vmem:[%s4700 + $0xf8] sm:$0xff]
        %v4733 = vld [vmem:[%s4700 + $0x100] sm:$0xff]
        %v4734 = vld [vmem:[%s4700 + $0x108] sm:$0xff]
        %v4735 = vld [vmem:[%s4700 + $0x110] sm:$0xff]
        %v4736 = vld [vmem:[%s4700 + $0x118] sm:$0xff]
        %v4737 = vld [vmem:[%s4700 + $0x120] sm:$0xff]
        %v4738 = vld [vmem:[%s4700 + $0x128] sm:$0xff]
        %v4739 = vld [vmem:[%s4700 + $0x130] sm:$0xff]
        %v4740 = vld [vmem:[%s4700 + $0x138] sm:$0xff]
        %v4741 = vld [vmem:[%s4700 + $0x140] sm:$0xff]
        %v4742 = vld [vmem:[%s4700 + $0x148] sm:$0xff]
        %v4743 = vld [vmem:[%s4700 + $0x150] sm:$0xff]
        %v4744 = vld [vmem:[%s4700 + $0x158] sm:$0xff]
        %v4745 = vld [vmem:[%s4700 + $0x160] sm:$0xff]
        %v4746 = vld [vmem:[%s4700 + $0x168] sm:$0xff]
        %v4747 = vld [vmem:[%s4700 + $0x170] sm:$0xff]
        %v4748 = vld [vmem:[%s4700 + $0x178] sm:$0xff]
        %v4749 = vld [vmem:[%s4700 + $0x180] sm:$0xff]
        %v4750 = vld [vmem:[%s4700 + $0x188] sm:$0xff]
        %v4751 = vld [vmem:[%s4700 + $0x190] sm:$0xff]
        %v4752 = vld [vmem:[%s4700 + $0x198] sm:$0xff]
        %v4753 = vld [vmem:[%s4700 + $0x1a0] sm:$0xff]
        %v4754 = vld [vmem:[%s4700 + $0x1a8] sm:$0xff]
        %v4755 = vld [vmem:[%s4700 + $0x1b0] sm:$0xff]
        %v4756 = vld [vmem:[%s4700 + $0x1b8] sm:$0xff]
        %v4757 = vld [vmem:[%s4700 + $0x1c0] sm:$0xff]
        %v4758 = vld [vmem:[%s4700 + $0x1c8] sm:$0xff]
        %v4759 = vld [vmem:[%s4700 + $0x1d0] sm:$0xff]
        %v4760 = vld [vmem:[%s4700 + $0x1d8] sm:$0xff]
        %v4761 = vld [vmem:[%s4700 + $0x1e0] sm:$0xff]
        %v4762 = vld [vmem:[%s4700 + $0x1e8] sm:$0xff]
        %v4763 = vld [vmem:[%s4700 + $0x1f0] sm:$0xff]
        %v4764 = vld [vmem:[%s4700 + $0x1f8] sm:$0xff]
        %4765 = vmatprep.subr.mxu0 %v4702
        %4766 = vmatpush1.msra.mxu0 %v4701
        %4767 = vmatprep.subr.mxu0 %v4704
        %4768 = vmatpush1.msra.mxu0 %v4703
        %4769 = vmatprep.subr.mxu0 %v4706
        %4770 = vmatpush1.msra.mxu0 %v4705
        %4771 = vmatprep.subr.mxu0 %v4708
        %4772 = vmatpush1.msra.mxu0 %v4707
        %4773 = vmatprep.subr.mxu0 %v4710
        %4774 = vmatpush1.msra.mxu0 %v4709
        %4775 = vmatprep.subr.mxu0 %v4712
        %4776 = vmatpush1.msra.mxu0 %v4711
        %4777 = vmatprep.subr.mxu0 %v4714
        %4778 = vmatpush1.msra.mxu0 %v4713
        %4779 = vmatprep.subr.mxu0 %v4716
        %4780 = vmatpush1.msra.mxu0 %v4715
        %4781 = vmatprep.subr.mxu0 %v4718
        %4782 = vmatpush1.msra.mxu0 %v4717
        %4783 = vmatprep.subr.mxu0 %v4720
        %4784 = vmatpush1.msra.mxu0 %v4719
        %4785 = vmatprep.subr.mxu0 %v4722
        %4786 = vmatpush1.msra.mxu0 %v4721
        %4787 = vmatprep.subr.mxu0 %v4724
        %4788 = vmatpush1.msra.mxu0 %v4723
        %4789 = vmatprep.subr.mxu0 %v4726
        %4790 = vmatpush1.msra.mxu0 %v4725
        %4791 = vmatprep.subr.mxu0 %v4728
        %4792 = vmatpush1.msra.mxu0 %v4727
        %4793 = vmatprep.subr.mxu0 %v4730
        %4794 = vmatpush1.msra.mxu0 %v4729
        %4795 = vmatprep.subr.mxu0 %v4732
        %4796 = vmatpush1.msra.mxu0 %v4731
        %4797 = vmatprep.subr.mxu0 %v4734
        %4798 = vmatpush1.msra.mxu0 %v4733
        %4799 = vmatprep.subr.mxu0 %v4736
        %4800 = vmatpush1.msra.mxu0 %v4735
        %4801 = vmatprep.subr.mxu0 %v4738
        %4802 = vmatpush1.msra.mxu0 %v4737
        %4803 = vmatprep.subr.mxu0 %v4740
        %4804 = vmatpush1.msra.mxu0 %v4739
        %4805 = vmatprep.subr.mxu0 %v4742
        %4806 = vmatpush1.msra.mxu0 %v4741
        %4807 = vmatprep.subr.mxu0 %v4744
        %4808 = vmatpush1.msra.mxu0 %v4743
        %4809 = vmatprep.subr.mxu0 %v4746
        %4810 = vmatpush1.msra.mxu0 %v4745
        %4811 = vmatprep.subr.mxu0 %v4748
        %4812 = vmatpush1.msra.mxu0 %v4747
        %4813 = vmatprep.subr.mxu0 %v4750
        %4814 = vmatpush1.msra.mxu0 %v4749
        %4815 = vmatprep.subr.mxu0 %v4752
        %4816 = vmatpush1.msra.mxu0 %v4751
        %4817 = vmatprep.subr.mxu0 %v4754
        %4818 = vmatpush1.msra.mxu0 %v4753
        %4819 = vmatprep.subr.mxu0 %v4756
        %4820 = vmatpush1.msra.mxu0 %v4755
        %4821 = vmatprep.subr.mxu0 %v4758
        %4822 = vmatpush1.msra.mxu0 %v4757
        %4823 = vmatprep.subr.mxu0 %v4760
        %4824 = vmatpush1.msra.mxu0 %v4759
        %4825 = vmatprep.subr.mxu0 %v4762
        %4826 = vmatpush1.msra.mxu0 %v4761
        %4827 = vmatprep.subr.mxu0 %v4764
        %4828 = vmatpush1.msra.mxu0 %v4763
        %4829 = vmatprep.mubr.f32.mxu0 %v4099
        %4830 = vmatmul.mubr.f32.gmra.mrb[0].mxu0 %v4097
        %v4831 = vpop.f32.mrb[0].mxu0
        %v4832 = vadd.f32 0.0, %v4831
        %v4833 = vpop.f32.mrb[0].mxu0
        %v4834 = vadd.f32 0.0, %v4833
        %4835 = vmatprep.mubr.f32.mxu0 %v4105
        %4836 = vmatmul.mubr.f32.gmra.mrb[0].mxu0 %v4103
        %v4837 = vpop.f32.mrb[0].mxu0
        %v4838 = vadd.f32 0.0, %v4837
        %v4839 = vpop.f32.mrb[0].mxu0
        %v4840 = vadd.f32 0.0, %v4839
        %4841 = vmatprep.mubr.f32.mxu0 %v4108
        %4842 = vmatmul.mubr.f32.gmra.mrb[0].mxu0 %v4107
        %v4843 = vpop.f32.mrb[0].mxu0
        %v4844 = vadd.f32 0.0, %v4843
        %v4845 = vpop.f32.mrb[0].mxu0
        %v4846 = vadd.f32 0.0, %v4845
        %4847 = vdwg.mxu0
        %s4848 = scalar_lea.vmem [#allocation17], 2560
        %v4849 = vld [vmem:[%s4848] sm:$0xff]
        %v4850 = vld [vmem:[%s4848 + $0x8] sm:$0xff]
        %v4851 = vld [vmem:[%s4848 + $0x10] sm:$0xff]
        %v4852 = vld [vmem:[%s4848 + $0x18] sm:$0xff]
        %v4853 = vld [vmem:[%s4848 + $0x20] sm:$0xff]
        %v4854 = vld [vmem:[%s4848 + $0x28] sm:$0xff]
        %v4855 = vld [vmem:[%s4848 + $0x30] sm:$0xff]
        %v4856 = vld [vmem:[%s4848 + $0x38] sm:$0xff]
        %v4857 = vld [vmem:[%s4848 + $0x40] sm:$0xff]
        %v4858 = vld [vmem:[%s4848 + $0x48] sm:$0xff]
        %v4859 = vld [vmem:[%s4848 + $0x50] sm:$0xff]
        %v4860 = vld [vmem:[%s4848 + $0x58] sm:$0xff]
        %v4861 = vld [vmem:[%s4848 + $0x60] sm:$0xff]
        %v4862 = vld [vmem:[%s4848 + $0x68] sm:$0xff]
        %v4863 = vld [vmem:[%s4848 + $0x70] sm:$0xff]
        %v4864 = vld [vmem:[%s4848 + $0x78] sm:$0xff]
        %v4865 = vld [vmem:[%s4848 + $0x80] sm:$0xff]
        %v4866 = vld [vmem:[%s4848 + $0x88] sm:$0xff]
        %v4867 = vld [vmem:[%s4848 + $0x90] sm:$0xff]
        %v4868 = vld [vmem:[%s4848 + $0x98] sm:$0xff]
        %v4869 = vld [vmem:[%s4848 + $0xa0] sm:$0xff]
        %v4870 = vld [vmem:[%s4848 + $0xa8] sm:$0xff]
        %v4871 = vld [vmem:[%s4848 + $0xb0] sm:$0xff]
        %v4872 = vld [vmem:[%s4848 + $0xb8] sm:$0xff]
        %v4873 = vld [vmem:[%s4848 + $0xc0] sm:$0xff]
        %v4874 = vld [vmem:[%s4848 + $0xc8] sm:$0xff]
        %v4875 = vld [vmem:[%s4848 + $0xd0] sm:$0xff]
        %v4876 = vld [vmem:[%s4848 + $0xd8] sm:$0xff]
        %v4877 = vld [vmem:[%s4848 + $0xe0] sm:$0xff]
        %v4878 = vld [vmem:[%s4848 + $0xe8] sm:$0xff]
        %v4879 = vld [vmem:[%s4848 + $0xf0] sm:$0xff]
        %v4880 = vld [vmem:[%s4848 + $0xf8] sm:$0xff]
        %v4881 = vld [vmem:[%s4848 + $0x100] sm:$0xff]
        %v4882 = vld [vmem:[%s4848 + $0x108] sm:$0xff]
        %v4883 = vld [vmem:[%s4848 + $0x110] sm:$0xff]
        %v4884 = vld [vmem:[%s4848 + $0x118] sm:$0xff]
        %v4885 = vld [vmem:[%s4848 + $0x120] sm:$0xff]
        %v4886 = vld [vmem:[%s4848 + $0x128] sm:$0xff]
        %v4887 = vld [vmem:[%s4848 + $0x130] sm:$0xff]
        %v4888 = vld [vmem:[%s4848 + $0x138] sm:$0xff]
        %v4889 = vld [vmem:[%s4848 + $0x140] sm:$0xff]
        %v4890 = vld [vmem:[%s4848 + $0x148] sm:$0xff]
        %v4891 = vld [vmem:[%s4848 + $0x150] sm:$0xff]
        %v4892 = vld [vmem:[%s4848 + $0x158] sm:$0xff]
        %v4893 = vld [vmem:[%s4848 + $0x160] sm:$0xff]
        %v4894 = vld [vmem:[%s4848 + $0x168] sm:$0xff]
        %v4895 = vld [vmem:[%s4848 + $0x170] sm:$0xff]
        %v4896 = vld [vmem:[%s4848 + $0x178] sm:$0xff]
        %v4897 = vld [vmem:[%s4848 + $0x180] sm:$0xff]
        %v4898 = vld [vmem:[%s4848 + $0x188] sm:$0xff]
        %v4899 = vld [vmem:[%s4848 + $0x190] sm:$0xff]
        %v4900 = vld [vmem:[%s4848 + $0x198] sm:$0xff]
        %v4901 = vld [vmem:[%s4848 + $0x1a0] sm:$0xff]
        %v4902 = vld [vmem:[%s4848 + $0x1a8] sm:$0xff]
        %v4903 = vld [vmem:[%s4848 + $0x1b0] sm:$0xff]
        %v4904 = vld [vmem:[%s4848 + $0x1b8] sm:$0xff]
        %v4905 = vld [vmem:[%s4848 + $0x1c0] sm:$0xff]
        %v4906 = vld [vmem:[%s4848 + $0x1c8] sm:$0xff]
        %v4907 = vld [vmem:[%s4848 + $0x1d0] sm:$0xff]
        %v4908 = vld [vmem:[%s4848 + $0x1d8] sm:$0xff]
        %v4909 = vld [vmem:[%s4848 + $0x1e0] sm:$0xff]
        %v4910 = vld [vmem:[%s4848 + $0x1e8] sm:$0xff]
        %v4911 = vld [vmem:[%s4848 + $0x1f0] sm:$0xff]
        %v4912 = vld [vmem:[%s4848 + $0x1f8] sm:$0xff]
        %4913 = vmatprep.subr.mxu0 %v4850
        %4914 = vmatpush1.msra.mxu0 %v4849
        %4915 = vmatprep.subr.mxu0 %v4852
        %4916 = vmatpush1.msra.mxu0 %v4851
        %4917 = vmatprep.subr.mxu0 %v4854
        %4918 = vmatpush1.msra.mxu0 %v4853
        %4919 = vmatprep.subr.mxu0 %v4856
        %4920 = vmatpush1.msra.mxu0 %v4855
        %4921 = vmatprep.subr.mxu0 %v4858
        %4922 = vmatpush1.msra.mxu0 %v4857
        %4923 = vmatprep.subr.mxu0 %v4860
        %4924 = vmatpush1.msra.mxu0 %v4859
        %4925 = vmatprep.subr.mxu0 %v4862
        %4926 = vmatpush1.msra.mxu0 %v4861
        %4927 = vmatprep.subr.mxu0 %v4864
        %4928 = vmatpush1.msra.mxu0 %v4863
        %4929 = vmatprep.subr.mxu0 %v4866
        %4930 = vmatpush1.msra.mxu0 %v4865
        %4931 = vmatprep.subr.mxu0 %v4868
        %4932 = vmatpush1.msra.mxu0 %v4867
        %4933 = vmatprep.subr.mxu0 %v4870
        %4934 = vmatpush1.msra.mxu0 %v4869
        %4935 = vmatprep.subr.mxu0 %v4872
        %4936 = vmatpush1.msra.mxu0 %v4871
        %4937 = vmatprep.subr.mxu0 %v4874
        %4938 = vmatpush1.msra.mxu0 %v4873
        %4939 = vmatprep.subr.mxu0 %v4876
        %4940 = vmatpush1.msra.mxu0 %v4875
        %4941 = vmatprep.subr.mxu0 %v4878
        %4942 = vmatpush1.msra.mxu0 %v4877
        %4943 = vmatprep.subr.mxu0 %v4880
        %4944 = vmatpush1.msra.mxu0 %v4879
        %4945 = vmatprep.subr.mxu0 %v4882
        %4946 = vmatpush1.msra.mxu0 %v4881
        %4947 = vmatprep.subr.mxu0 %v4884
        %4948 = vmatpush1.msra.mxu0 %v4883
        %4949 = vmatprep.subr.mxu0 %v4886
        %4950 = vmatpush1.msra.mxu0 %v4885
        %4951 = vmatprep.subr.mxu0 %v4888
        %4952 = vmatpush1.msra.mxu0 %v4887
        %4953 = vmatprep.subr.mxu0 %v4890
        %4954 = vmatpush1.msra.mxu0 %v4889
        %4955 = vmatprep.subr.mxu0 %v4892
        %4956 = vmatpush1.msra.mxu0 %v4891
        %4957 = vmatprep.subr.mxu0 %v4894
        %4958 = vmatpush1.msra.mxu0 %v4893
        %4959 = vmatprep.subr.mxu0 %v4896
        %4960 = vmatpush1.msra.mxu0 %v4895
        %4961 = vmatprep.subr.mxu0 %v4898
        %4962 = vmatpush1.msra.mxu0 %v4897
        %4963 = vmatprep.subr.mxu0 %v4900
        %4964 = vmatpush1.msra.mxu0 %v4899
        %4965 = vmatprep.subr.mxu0 %v4902
        %4966 = vmatpush1.msra.mxu0 %v4901
        %4967 = vmatprep.subr.mxu0 %v4904
        %4968 = vmatpush1.msra.mxu0 %v4903
        %4969 = vmatprep.subr.mxu0 %v4906
        %4970 = vmatpush1.msra.mxu0 %v4905
        %4971 = vmatprep.subr.mxu0 %v4908
        %4972 = vmatpush1.msra.mxu0 %v4907
        %4973 = vmatprep.subr.mxu0 %v4910
        %4974 = vmatpush1.msra.mxu0 %v4909
        %4975 = vmatprep.subr.mxu0 %v4912
        %4976 = vmatpush1.msra.mxu0 %v4911
        %4977 = vmatprep.mubr.f32.mxu0 %v4099
        %4978 = vmatmul.mubr.f32.gmra.mrb[0].mxu0 %v4097
        %v4979 = vpop.f32.mrb[0].mxu0
        %v4980 = vadd.f32 0.0, %v4979
        %v4981 = vpop.f32.mrb[0].mxu0
        %v4982 = vadd.f32 0.0, %v4981
        %4983 = vmatprep.mubr.f32.mxu0 %v4105
        %4984 = vmatmul.mubr.f32.gmra.mrb[0].mxu0 %v4103
        %v4985 = vpop.f32.mrb[0].mxu0
        %v4986 = vadd.f32 0.0, %v4985
        %v4987 = vpop.f32.mrb[0].mxu0
        %v4988 = vadd.f32 0.0, %v4987
        %4989 = vmatprep.mubr.f32.mxu0 %v4108
        %4990 = vmatmul.mubr.f32.gmra.mrb[0].mxu0 %v4107
        %v4991 = vpop.f32.mrb[0].mxu0
        %v4992 = vadd.f32 0.0, %v4991
        %v4993 = vpop.f32.mrb[0].mxu0
        %v4994 = vadd.f32 0.0, %v4993
        %4995 = vdwg.mxu0
        %s4996 = scalar_lea.vmem [#allocation17], 3072
        %v4997 = vld [vmem:[%s4996] sm:$0xff]
        %v4998 = vld [vmem:[%s4996 + $0x8] sm:$0xff]
        %v4999 = vld [vmem:[%s4996 + $0x10] sm:$0xff]
        %v5000 = vld [vmem:[%s4996 + $0x18] sm:$0xff]
        %v5001 = vld [vmem:[%s4996 + $0x20] sm:$0xff]
        %v5002 = vld [vmem:[%s4996 + $0x28] sm:$0xff]
        %v5003 = vld [vmem:[%s4996 + $0x30] sm:$0xff]
        %v5004 = vld [vmem:[%s4996 + $0x38] sm:$0xff]
        %v5005 = vld [vmem:[%s4996 + $0x40] sm:$0xff]
        %v5006 = vld [vmem:[%s4996 + $0x48] sm:$0xff]
        %v5007 = vld [vmem:[%s4996 + $0x50] sm:$0xff]
        %v5008 = vld [vmem:[%s4996 + $0x58] sm:$0xff]
        %v5009 = vld [vmem:[%s4996 + $0x60] sm:$0xff]
        %v5010 = vld [vmem:[%s4996 + $0x68] sm:$0xff]
        %v5011 = vld [vmem:[%s4996 + $0x70] sm:$0xff]
        %v5012 = vld [vmem:[%s4996 + $0x78] sm:$0xff]
        %v5013 = vld [vmem:[%s4996 + $0x80] sm:$0xff]
        %v5014 = vld [vmem:[%s4996 + $0x88] sm:$0xff]
        %v5015 = vld [vmem:[%s4996 + $0x90] sm:$0xff]
        %v5016 = vld [vmem:[%s4996 + $0x98] sm:$0xff]
        %v5017 = vld [vmem:[%s4996 + $0xa0] sm:$0xff]
        %v5018 = vld [vmem:[%s4996 + $0xa8] sm:$0xff]
        %v5019 = vld [vmem:[%s4996 + $0xb0] sm:$0xff]
        %v5020 = vld [vmem:[%s4996 + $0xb8] sm:$0xff]
        %v5021 = vld [vmem:[%s4996 + $0xc0] sm:$0xff]
        %v5022 = vld [vmem:[%s4996 + $0xc8] sm:$0xff]
        %v5023 = vld [vmem:[%s4996 + $0xd0] sm:$0xff]
        %v5024 = vld [vmem:[%s4996 + $0xd8] sm:$0xff]
        %v5025 = vld [vmem:[%s4996 + $0xe0] sm:$0xff]
        %v5026 = vld [vmem:[%s4996 + $0xe8] sm:$0xff]
        %v5027 = vld [vmem:[%s4996 + $0xf0] sm:$0xff]
        %v5028 = vld [vmem:[%s4996 + $0xf8] sm:$0xff]
        %v5029 = vld [vmem:[%s4996 + $0x100] sm:$0xff]
        %v5030 = vld [vmem:[%s4996 + $0x108] sm:$0xff]
        %v5031 = vld [vmem:[%s4996 + $0x110] sm:$0xff]
        %v5032 = vld [vmem:[%s4996 + $0x118] sm:$0xff]
        %v5033 = vld [vmem:[%s4996 + $0x120] sm:$0xff]
        %v5034 = vld [vmem:[%s4996 + $0x128] sm:$0xff]
        %v5035 = vld [vmem:[%s4996 + $0x130] sm:$0xff]
        %v5036 = vld [vmem:[%s4996 + $0x138] sm:$0xff]
        %v5037 = vld [vmem:[%s4996 + $0x140] sm:$0xff]
        %v5038 = vld [vmem:[%s4996 + $0x148] sm:$0xff]
        %v5039 = vld [vmem:[%s4996 + $0x150] sm:$0xff]
        %v5040 = vld [vmem:[%s4996 + $0x158] sm:$0xff]
        %v5041 = vld [vmem:[%s4996 + $0x160] sm:$0xff]
        %v5042 = vld [vmem:[%s4996 + $0x168] sm:$0xff]
        %v5043 = vld [vmem:[%s4996 + $0x170] sm:$0xff]
        %v5044 = vld [vmem:[%s4996 + $0x178] sm:$0xff]
        %v5045 = vld [vmem:[%s4996 + $0x180] sm:$0xff]
        %v5046 = vld [vmem:[%s4996 + $0x188] sm:$0xff]
        %v5047 = vld [vmem:[%s4996 + $0x190] sm:$0xff]
        %v5048 = vld [vmem:[%s4996 + $0x198] sm:$0xff]
        %v5049 = vld [vmem:[%s4996 + $0x1a0] sm:$0xff]
        %v5050 = vld [vmem:[%s4996 + $0x1a8] sm:$0xff]
        %v5051 = vld [vmem:[%s4996 + $0x1b0] sm:$0xff]
        %v5052 = vld [vmem:[%s4996 + $0x1b8] sm:$0xff]
        %v5053 = vld [vmem:[%s4996 + $0x1c0] sm:$0xff]
        %v5054 = vld [vmem:[%s4996 + $0x1c8] sm:$0xff]
        %v5055 = vld [vmem:[%s4996 + $0x1d0] sm:$0xff]
        %v5056 = vld [vmem:[%s4996 + $0x1d8] sm:$0xff]
        %v5057 = vld [vmem:[%s4996 + $0x1e0] sm:$0xff]
        %v5058 = vld [vmem:[%s4996 + $0x1e8] sm:$0xff]
        %v5059 = vld [vmem:[%s4996 + $0x1f0] sm:$0xff]
        %v5060 = vld [vmem:[%s4996 + $0x1f8] sm:$0xff]
        %5061 = vmatprep.subr.mxu0 %v4998
        %5062 = vmatpush1.msra.mxu0 %v4997
        %5063 = vmatprep.subr.mxu0 %v5000
        %5064 = vmatpush1.msra.mxu0 %v4999
        %5065 = vmatprep.subr.mxu0 %v5002
        %5066 = vmatpush1.msra.mxu0 %v5001
        %5067 = vmatprep.subr.mxu0 %v5004
        %5068 = vmatpush1.msra.mxu0 %v5003
        %5069 = vmatprep.subr.mxu0 %v5006
        %5070 = vmatpush1.msra.mxu0 %v5005
        %5071 = vmatprep.subr.mxu0 %v5008
        %5072 = vmatpush1.msra.mxu0 %v5007
        %5073 = vmatprep.subr.mxu0 %v5010
        %5074 = vmatpush1.msra.mxu0 %v5009
        %5075 = vmatprep.subr.mxu0 %v5012
        %5076 = vmatpush1.msra.mxu0 %v5011
        %5077 = vmatprep.subr.mxu0 %v5014
        %5078 = vmatpush1.msra.mxu0 %v5013
        %5079 = vmatprep.subr.mxu0 %v5016
        %5080 = vmatpush1.msra.mxu0 %v5015
        %5081 = vmatprep.subr.mxu0 %v5018
        %5082 = vmatpush1.msra.mxu0 %v5017
        %5083 = vmatprep.subr.mxu0 %v5020
        %5084 = vmatpush1.msra.mxu0 %v5019
        %5085 = vmatprep.subr.mxu0 %v5022
        %5086 = vmatpush1.msra.mxu0 %v5021
        %5087 = vmatprep.subr.mxu0 %v5024
        %5088 = vmatpush1.msra.mxu0 %v5023
        %5089 = vmatprep.subr.mxu0 %v5026
        %5090 = vmatpush1.msra.mxu0 %v5025
        %5091 = vmatprep.subr.mxu0 %v5028
        %5092 = vmatpush1.msra.mxu0 %v5027
        %5093 = vmatprep.subr.mxu0 %v5030
        %5094 = vmatpush1.msra.mxu0 %v5029
        %5095 = vmatprep.subr.mxu0 %v5032
        %5096 = vmatpush1.msra.mxu0 %v5031
        %5097 = vmatprep.subr.mxu0 %v5034
        %5098 = vmatpush1.msra.mxu0 %v5033
        %5099 = vmatprep.subr.mxu0 %v5036
        %5100 = vmatpush1.msra.mxu0 %v5035
        %5101 = vmatprep.subr.mxu0 %v5038
        %5102 = vmatpush1.msra.mxu0 %v5037
        %5103 = vmatprep.subr.mxu0 %v5040
        %5104 = vmatpush1.msra.mxu0 %v5039
        %5105 = vmatprep.subr.mxu0 %v5042
        %5106 = vmatpush1.msra.mxu0 %v5041
        %5107 = vmatprep.subr.mxu0 %v5044
        %5108 = vmatpush1.msra.mxu0 %v5043
        %5109 = vmatprep.subr.mxu0 %v5046
        %5110 = vmatpush1.msra.mxu0 %v5045
        %5111 = vmatprep.subr.mxu0 %v5048
        %5112 = vmatpush1.msra.mxu0 %v5047
        %5113 = vmatprep.subr.mxu0 %v5050
        %5114 = vmatpush1.msra.mxu0 %v5049
        %5115 = vmatprep.subr.mxu0 %v5052
        %5116 = vmatpush1.msra.mxu0 %v5051
        %5117 = vmatprep.subr.mxu0 %v5054
        %5118 = vmatpush1.msra.mxu0 %v5053
        %5119 = vmatprep.subr.mxu0 %v5056
        %5120 = vmatpush1.msra.mxu0 %v5055
        %5121 = vmatprep.subr.mxu0 %v5058
        %5122 = vmatpush1.msra.mxu0 %v5057
        %5123 = vmatprep.subr.mxu0 %v5060
        %5124 = vmatpush1.msra.mxu0 %v5059
        %5125 = vmatprep.mubr.f32.mxu0 %v4099
        %5126 = vmatmul.mubr.f32.gmra.mrb[0].mxu0 %v4097
        %v5127 = vpop.f32.mrb[0].mxu0
        %v5128 = vadd.f32 0.0, %v5127
        %v5129 = vpop.f32.mrb[0].mxu0
        %v5130 = vadd.f32 0.0, %v5129
        %5131 = vmatprep.mubr.f32.mxu0 %v4105
        %5132 = vmatmul.mubr.f32.gmra.mrb[0].mxu0 %v4103
        %v5133 = vpop.f32.mrb[0].mxu0
        %v5134 = vadd.f32 0.0, %v5133
        %v5135 = vpop.f32.mrb[0].mxu0
        %v5136 = vadd.f32 0.0, %v5135
        %5137 = vmatprep.mubr.f32.mxu0 %v4108
        %5138 = vmatmul.mubr.f32.gmra.mrb[0].mxu0 %v4107
        %v5139 = vpop.f32.mrb[0].mxu0
        %v5140 = vadd.f32 0.0, %v5139
        %v5141 = vpop.f32.mrb[0].mxu0
        %v5142 = vadd.f32 0.0, %v5141
        %5143 = vdwg.mxu0
        %s5144 = scalar_lea.vmem [#allocation17], 3584
        %v5145 = vld [vmem:[%s5144] sm:$0xff]
        %v5146 = vld [vmem:[%s5144 + $0x8] sm:$0xff]
        %v5147 = vld [vmem:[%s5144 + $0x10] sm:$0xff]
        %v5148 = vld [vmem:[%s5144 + $0x18] sm:$0xff]
        %v5149 = vld [vmem:[%s5144 + $0x20] sm:$0xff]
        %v5150 = vld [vmem:[%s5144 + $0x28] sm:$0xff]
        %v5151 = vld [vmem:[%s5144 + $0x30] sm:$0xff]
        %v5152 = vld [vmem:[%s5144 + $0x38] sm:$0xff]
        %v5153 = vld [vmem:[%s5144 + $0x40] sm:$0xff]
        %v5154 = vld [vmem:[%s5144 + $0x48] sm:$0xff]
        %v5155 = vld [vmem:[%s5144 + $0x50] sm:$0xff]
        %v5156 = vld [vmem:[%s5144 + $0x58] sm:$0xff]
        %v5157 = vld [vmem:[%s5144 + $0x60] sm:$0xff]
        %v5158 = vld [vmem:[%s5144 + $0x68] sm:$0xff]
        %v5159 = vld [vmem:[%s5144 + $0x70] sm:$0xff]
        %v5160 = vld [vmem:[%s5144 + $0x78] sm:$0xff]
        %v5161 = vld [vmem:[%s5144 + $0x80] sm:$0xff]
        %v5162 = vld [vmem:[%s5144 + $0x88] sm:$0xff]
        %v5163 = vld [vmem:[%s5144 + $0x90] sm:$0xff]
        %v5164 = vld [vmem:[%s5144 + $0x98] sm:$0xff]
        %v5165 = vld [vmem:[%s5144 + $0xa0] sm:$0xff]
        %v5166 = vld [vmem:[%s5144 + $0xa8] sm:$0xff]
        %v5167 = vld [vmem:[%s5144 + $0xb0] sm:$0xff]
        %v5168 = vld [vmem:[%s5144 + $0xb8] sm:$0xff]
        %v5169 = vld [vmem:[%s5144 + $0xc0] sm:$0xff]
        %v5170 = vld [vmem:[%s5144 + $0xc8] sm:$0xff]
        %v5171 = vld [vmem:[%s5144 + $0xd0] sm:$0xff]
        %v5172 = vld [vmem:[%s5144 + $0xd8] sm:$0xff]
        %v5173 = vld [vmem:[%s5144 + $0xe0] sm:$0xff]
        %v5174 = vld [vmem:[%s5144 + $0xe8] sm:$0xff]
        %v5175 = vld [vmem:[%s5144 + $0xf0] sm:$0xff]
        %v5176 = vld [vmem:[%s5144 + $0xf8] sm:$0xff]
        %v5177 = vld [vmem:[%s5144 + $0x100] sm:$0xff]
        %v5178 = vld [vmem:[%s5144 + $0x108] sm:$0xff]
        %v5179 = vld [vmem:[%s5144 + $0x110] sm:$0xff]
        %v5180 = vld [vmem:[%s5144 + $0x118] sm:$0xff]
        %v5181 = vld [vmem:[%s5144 + $0x120] sm:$0xff]
        %v5182 = vld [vmem:[%s5144 + $0x128] sm:$0xff]
        %v5183 = vld [vmem:[%s5144 + $0x130] sm:$0xff]
        %v5184 = vld [vmem:[%s5144 + $0x138] sm:$0xff]
        %v5185 = vld [vmem:[%s5144 + $0x140] sm:$0xff]
        %v5186 = vld [vmem:[%s5144 + $0x148] sm:$0xff]
        %v5187 = vld [vmem:[%s5144 + $0x150] sm:$0xff]
        %v5188 = vld [vmem:[%s5144 + $0x158] sm:$0xff]
        %v5189 = vld [vmem:[%s5144 + $0x160] sm:$0xff]
        %v5190 = vld [vmem:[%s5144 + $0x168] sm:$0xff]
        %v5191 = vld [vmem:[%s5144 + $0x170] sm:$0xff]
        %v5192 = vld [vmem:[%s5144 + $0x178] sm:$0xff]
        %v5193 = vld [vmem:[%s5144 + $0x180] sm:$0xff]
        %v5194 = vld [vmem:[%s5144 + $0x188] sm:$0xff]
        %v5195 = vld [vmem:[%s5144 + $0x190] sm:$0xff]
        %v5196 = vld [vmem:[%s5144 + $0x198] sm:$0xff]
        %v5197 = vld [vmem:[%s5144 + $0x1a0] sm:$0xff]
        %v5198 = vld [vmem:[%s5144 + $0x1a8] sm:$0xff]
        %v5199 = vld [vmem:[%s5144 + $0x1b0] sm:$0xff]
        %v5200 = vld [vmem:[%s5144 + $0x1b8] sm:$0xff]
        %v5201 = vld [vmem:[%s5144 + $0x1c0] sm:$0xff]
        %v5202 = vld [vmem:[%s5144 + $0x1c8] sm:$0xff]
        %v5203 = vld [vmem:[%s5144 + $0x1d0] sm:$0xff]
        %v5204 = vld [vmem:[%s5144 + $0x1d8] sm:$0xff]
        %v5205 = vld [vmem:[%s5144 + $0x1e0] sm:$0xff]
        %v5206 = vld [vmem:[%s5144 + $0x1e8] sm:$0xff]
        %v5207 = vld [vmem:[%s5144 + $0x1f0] sm:$0xff]
        %v5208 = vld [vmem:[%s5144 + $0x1f8] sm:$0xff]
        %5209 = vmatprep.subr.mxu0 %v5146
        %5210 = vmatpush1.msra.mxu0 %v5145
        %5211 = vmatprep.subr.mxu0 %v5148
        %5212 = vmatpush1.msra.mxu0 %v5147
        %5213 = vmatprep.subr.mxu0 %v5150
        %5214 = vmatpush1.msra.mxu0 %v5149
        %5215 = vmatprep.subr.mxu0 %v5152
        %5216 = vmatpush1.msra.mxu0 %v5151
        %5217 = vmatprep.subr.mxu0 %v5154
        %5218 = vmatpush1.msra.mxu0 %v5153
        %5219 = vmatprep.subr.mxu0 %v5156
        %5220 = vmatpush1.msra.mxu0 %v5155
        %5221 = vmatprep.subr.mxu0 %v5158
        %5222 = vmatpush1.msra.mxu0 %v5157
        %5223 = vmatprep.subr.mxu0 %v5160
        %5224 = vmatpush1.msra.mxu0 %v5159
        %5225 = vmatprep.subr.mxu0 %v5162
        %5226 = vmatpush1.msra.mxu0 %v5161
        %5227 = vmatprep.subr.mxu0 %v5164
        %5228 = vmatpush1.msra.mxu0 %v5163
        %5229 = vmatprep.subr.mxu0 %v5166
        %5230 = vmatpush1.msra.mxu0 %v5165
        %5231 = vmatprep.subr.mxu0 %v5168
        %5232 = vmatpush1.msra.mxu0 %v5167
        %5233 = vmatprep.subr.mxu0 %v5170
        %5234 = vmatpush1.msra.mxu0 %v5169
        %5235 = vmatprep.subr.mxu0 %v5172
        %5236 = vmatpush1.msra.mxu0 %v5171
        %5237 = vmatprep.subr.mxu0 %v5174
        %5238 = vmatpush1.msra.mxu0 %v5173
        %5239 = vmatprep.subr.mxu0 %v5176
        %5240 = vmatpush1.msra.mxu0 %v5175
        %5241 = vmatprep.subr.mxu0 %v5178
        %5242 = vmatpush1.msra.mxu0 %v5177
        %5243 = vmatprep.subr.mxu0 %v5180
        %5244 = vmatpush1.msra.mxu0 %v5179
        %5245 = vmatprep.subr.mxu0 %v5182
        %5246 = vmatpush1.msra.mxu0 %v5181
        %5247 = vmatprep.subr.mxu0 %v5184
        %5248 = vmatpush1.msra.mxu0 %v5183
        %5249 = vmatprep.subr.mxu0 %v5186
        %5250 = vmatpush1.msra.mxu0 %v5185
        %5251 = vmatprep.subr.mxu0 %v5188
        %5252 = vmatpush1.msra.mxu0 %v5187
        %5253 = vmatprep.subr.mxu0 %v5190
        %5254 = vmatpush1.msra.mxu0 %v5189
        %5255 = vmatprep.subr.mxu0 %v5192
        %5256 = vmatpush1.msra.mxu0 %v5191
        %5257 = vmatprep.subr.mxu0 %v5194
        %5258 = vmatpush1.msra.mxu0 %v5193
        %5259 = vmatprep.subr.mxu0 %v5196
        %5260 = vmatpush1.msra.mxu0 %v5195
        %5261 = vmatprep.subr.mxu0 %v5198
        %5262 = vmatpush1.msra.mxu0 %v5197
        %5263 = vmatprep.subr.mxu0 %v5200
        %5264 = vmatpush1.msra.mxu0 %v5199
        %5265 = vmatprep.subr.mxu0 %v5202
        %5266 = vmatpush1.msra.mxu0 %v5201
        %5267 = vmatprep.subr.mxu0 %v5204
        %5268 = vmatpush1.msra.mxu0 %v5203
        %5269 = vmatprep.subr.mxu0 %v5206
        %5270 = vmatpush1.msra.mxu0 %v5205
        %5271 = vmatprep.subr.mxu0 %v5208
        %5272 = vmatpush1.msra.mxu0 %v5207
        %5273 = vmatprep.mubr.f32.mxu0 %v4099
        %5274 = vmatmul.mubr.f32.gmra.mrb[0].mxu0 %v4097
        %v5275 = vpop.f32.mrb[0].mxu0
        %v5276 = vadd.f32 0.0, %v5275
        %v5277 = vpop.f32.mrb[0].mxu0
        %v5278 = vadd.f32 0.0, %v5277
        %5279 = vmatprep.mubr.f32.mxu0 %v4105
        %5280 = vmatmul.mubr.f32.gmra.mrb[0].mxu0 %v4103
        %v5281 = vpop.f32.mrb[0].mxu0
        %v5282 = vadd.f32 0.0, %v5281
        %v5283 = vpop.f32.mrb[0].mxu0
        %v5284 = vadd.f32 0.0, %v5283
        %5285 = vmatprep.mubr.f32.mxu0 %v4108
        %5286 = vmatmul.mubr.f32.gmra.mrb[0].mxu0 %v4107
        %v5287 = vpop.f32.mrb[0].mxu0
        %v5288 = vadd.f32 0.0, %v5287
        %v5289 = vpop.f32.mrb[0].mxu0
        %v5290 = vadd.f32 0.0, %v5289
        %5291 = vdwg.mxu0
        %s5292 = scalar_lea.vmem [#allocation17], 4096
        %v5293 = vld [vmem:[%s5292] sm:$0xff]
        %v5294 = vld [vmem:[%s5292 + $0x8] sm:$0xff]
        %v5295 = vld [vmem:[%s5292 + $0x10] sm:$0xff]
        %v5296 = vld [vmem:[%s5292 + $0x18] sm:$0xff]
        %v5297 = vld [vmem:[%s5292 + $0x20] sm:$0xff]
        %v5298 = vld [vmem:[%s5292 + $0x28] sm:$0xff]
        %v5299 = vld [vmem:[%s5292 + $0x30] sm:$0xff]
        %v5300 = vld [vmem:[%s5292 + $0x38] sm:$0xff]
        %v5301 = vld [vmem:[%s5292 + $0x40] sm:$0xff]
        %v5302 = vld [vmem:[%s5292 + $0x48] sm:$0xff]
        %v5303 = vld [vmem:[%s5292 + $0x50] sm:$0xff]
        %v5304 = vld [vmem:[%s5292 + $0x58] sm:$0xff]
        %v5305 = vld [vmem:[%s5292 + $0x60] sm:$0xff]
        %v5306 = vld [vmem:[%s5292 + $0x68] sm:$0xff]
        %v5307 = vld [vmem:[%s5292 + $0x70] sm:$0xff]
        %v5308 = vld [vmem:[%s5292 + $0x78] sm:$0xff]
        %v5309 = vld [vmem:[%s5292 + $0x80] sm:$0xff]
        %v5310 = vld [vmem:[%s5292 + $0x88] sm:$0xff]
        %v5311 = vld [vmem:[%s5292 + $0x90] sm:$0xff]
        %v5312 = vld [vmem:[%s5292 + $0x98] sm:$0xff]
        %v5313 = vld [vmem:[%s5292 + $0xa0] sm:$0xff]
        %v5314 = vld [vmem:[%s5292 + $0xa8] sm:$0xff]
        %v5315 = vld [vmem:[%s5292 + $0xb0] sm:$0xff]
        %v5316 = vld [vmem:[%s5292 + $0xb8] sm:$0xff]
        %v5317 = vld [vmem:[%s5292 + $0xc0] sm:$0xff]
        %v5318 = vld [vmem:[%s5292 + $0xc8] sm:$0xff]
        %v5319 = vld [vmem:[%s5292 + $0xd0] sm:$0xff]
        %v5320 = vld [vmem:[%s5292 + $0xd8] sm:$0xff]
        %v5321 = vld [vmem:[%s5292 + $0xe0] sm:$0xff]
        %v5322 = vld [vmem:[%s5292 + $0xe8] sm:$0xff]
        %v5323 = vld [vmem:[%s5292 + $0xf0] sm:$0xff]
        %v5324 = vld [vmem:[%s5292 + $0xf8] sm:$0xff]
        %v5325 = vld [vmem:[%s5292 + $0x100] sm:$0xff]
        %v5326 = vld [vmem:[%s5292 + $0x108] sm:$0xff]
        %v5327 = vld [vmem:[%s5292 + $0x110] sm:$0xff]
        %v5328 = vld [vmem:[%s5292 + $0x118] sm:$0xff]
        %v5329 = vld [vmem:[%s5292 + $0x120] sm:$0xff]
        %v5330 = vld [vmem:[%s5292 + $0x128] sm:$0xff]
        %v5331 = vld [vmem:[%s5292 + $0x130] sm:$0xff]
        %v5332 = vld [vmem:[%s5292 + $0x138] sm:$0xff]
        %v5333 = vld [vmem:[%s5292 + $0x140] sm:$0xff]
        %v5334 = vld [vmem:[%s5292 + $0x148] sm:$0xff]
        %v5335 = vld [vmem:[%s5292 + $0x150] sm:$0xff]
        %v5336 = vld [vmem:[%s5292 + $0x158] sm:$0xff]
        %v5337 = vld [vmem:[%s5292 + $0x160] sm:$0xff]
        %v5338 = vld [vmem:[%s5292 + $0x168] sm:$0xff]
        %v5339 = vld [vmem:[%s5292 + $0x170] sm:$0xff]
        %v5340 = vld [vmem:[%s5292 + $0x178] sm:$0xff]
        %v5341 = vld [vmem:[%s5292 + $0x180] sm:$0xff]
        %v5342 = vld [vmem:[%s5292 + $0x188] sm:$0xff]
        %v5343 = vld [vmem:[%s5292 + $0x190] sm:$0xff]
        %v5344 = vld [vmem:[%s5292 + $0x198] sm:$0xff]
        %v5345 = vld [vmem:[%s5292 + $0x1a0] sm:$0xff]
        %v5346 = vld [vmem:[%s5292 + $0x1a8] sm:$0xff]
        %v5347 = vld [vmem:[%s5292 + $0x1b0] sm:$0xff]
        %v5348 = vld [vmem:[%s5292 + $0x1b8] sm:$0xff]
        %v5349 = vld [vmem:[%s5292 + $0x1c0] sm:$0xff]
        %v5350 = vld [vmem:[%s5292 + $0x1c8] sm:$0xff]
        %v5351 = vld [vmem:[%s5292 + $0x1d0] sm:$0xff]
        %v5352 = vld [vmem:[%s5292 + $0x1d8] sm:$0xff]
        %v5353 = vld [vmem:[%s5292 + $0x1e0] sm:$0xff]
        %v5354 = vld [vmem:[%s5292 + $0x1e8] sm:$0xff]
        %v5355 = vld [vmem:[%s5292 + $0x1f0] sm:$0xff]
        %v5356 = vld [vmem:[%s5292 + $0x1f8] sm:$0xff]
        %5357 = vmatprep.subr.mxu0 %v5294
        %5358 = vmatpush1.msra.mxu0 %v5293
        %5359 = vmatprep.subr.mxu0 %v5296
        %5360 = vmatpush1.msra.mxu0 %v5295
        %5361 = vmatprep.subr.mxu0 %v5298
        %5362 = vmatpush1.msra.mxu0 %v5297
        %5363 = vmatprep.subr.mxu0 %v5300
        %5364 = vmatpush1.msra.mxu0 %v5299
        %5365 = vmatprep.subr.mxu0 %v5302
        %5366 = vmatpush1.msra.mxu0 %v5301
        %5367 = vmatprep.subr.mxu0 %v5304
        %5368 = vmatpush1.msra.mxu0 %v5303
        %5369 = vmatprep.subr.mxu0 %v5306
        %5370 = vmatpush1.msra.mxu0 %v5305
        %5371 = vmatprep.subr.mxu0 %v5308
        %5372 = vmatpush1.msra.mxu0 %v5307
        %5373 = vmatprep.subr.mxu0 %v5310
        %5374 = vmatpush1.msra.mxu0 %v5309
        %5375 = vmatprep.subr.mxu0 %v5312
        %5376 = vmatpush1.msra.mxu0 %v5311
        %5377 = vmatprep.subr.mxu0 %v5314
        %5378 = vmatpush1.msra.mxu0 %v5313
        %5379 = vmatprep.subr.mxu0 %v5316
        %5380 = vmatpush1.msra.mxu0 %v5315
        %5381 = vmatprep.subr.mxu0 %v5318
        %5382 = vmatpush1.msra.mxu0 %v5317
        %5383 = vmatprep.subr.mxu0 %v5320
        %5384 = vmatpush1.msra.mxu0 %v5319
        %5385 = vmatprep.subr.mxu0 %v5322
        %5386 = vmatpush1.msra.mxu0 %v5321
        %5387 = vmatprep.subr.mxu0 %v5324
        %5388 = vmatpush1.msra.mxu0 %v5323
        %5389 = vmatprep.subr.mxu0 %v5326
        %5390 = vmatpush1.msra.mxu0 %v5325
        %5391 = vmatprep.subr.mxu0 %v5328
        %5392 = vmatpush1.msra.mxu0 %v5327
        %5393 = vmatprep.subr.mxu0 %v5330
        %5394 = vmatpush1.msra.mxu0 %v5329
        %5395 = vmatprep.subr.mxu0 %v5332
        %5396 = vmatpush1.msra.mxu0 %v5331
        %5397 = vmatprep.subr.mxu0 %v5334
        %5398 = vmatpush1.msra.mxu0 %v5333
        %5399 = vmatprep.subr.mxu0 %v5336
        %5400 = vmatpush1.msra.mxu0 %v5335
        %5401 = vmatprep.subr.mxu0 %v5338
        %5402 = vmatpush1.msra.mxu0 %v5337
        %5403 = vmatprep.subr.mxu0 %v5340
        %5404 = vmatpush1.msra.mxu0 %v5339
        %5405 = vmatprep.subr.mxu0 %v5342
        %5406 = vmatpush1.msra.mxu0 %v5341
        %5407 = vmatprep.subr.mxu0 %v5344
        %5408 = vmatpush1.msra.mxu0 %v5343
        %5409 = vmatprep.subr.mxu0 %v5346
        %5410 = vmatpush1.msra.mxu0 %v5345
        %5411 = vmatprep.subr.mxu0 %v5348
        %5412 = vmatpush1.msra.mxu0 %v5347
        %5413 = vmatprep.subr.mxu0 %v5350
        %5414 = vmatpush1.msra.mxu0 %v5349
        %5415 = vmatprep.subr.mxu0 %v5352
        %5416 = vmatpush1.msra.mxu0 %v5351
        %5417 = vmatprep.subr.mxu0 %v5354
        %5418 = vmatpush1.msra.mxu0 %v5353
        %5419 = vmatprep.subr.mxu0 %v5356
        %5420 = vmatpush1.msra.mxu0 %v5355
        %5421 = vmatprep.mubr.f32.mxu0 %v4099
        %5422 = vmatmul.mubr.f32.gmra.mrb[0].mxu0 %v4097
        %v5423 = vpop.f32.mrb[0].mxu0
        %v5424 = vadd.f32 0.0, %v5423
        %v5425 = vpop.f32.mrb[0].mxu0
        %v5426 = vadd.f32 0.0, %v5425
        %5427 = vmatprep.mubr.f32.mxu0 %v4105
        %5428 = vmatmul.mubr.f32.gmra.mrb[0].mxu0 %v4103
        %v5429 = vpop.f32.mrb[0].mxu0
        %v5430 = vadd.f32 0.0, %v5429
        %v5431 = vpop.f32.mrb[0].mxu0
        %v5432 = vadd.f32 0.0, %v5431
        %5433 = vmatprep.mubr.f32.mxu0 %v4108
        %5434 = vmatmul.mubr.f32.gmra.mrb[0].mxu0 %v4107
        %v5435 = vpop.f32.mrb[0].mxu0
        %v5436 = vadd.f32 0.0, %v5435
        %v5437 = vpop.f32.mrb[0].mxu0
        %v5438 = vadd.f32 0.0, %v5437
        %5439 = vdwg.mxu0
        %v5440 = vld [vmem:[#allocation20] sm:$0xff]
        %v5441 = vld [vmem:[#allocation20 + $0x8] sm:$0xff]
        %v5442 = vld [vmem:[%s17] sm:$0xff]
        %5444 = vset.pattern.permute.xlu0 0
        %5445 = vperm.xlu0 %5444, %v5442
        %v5446 = vpop.permute.xlu0 %5445
        %v5449 = vsel %vm2788, %v5441, 0
        %5451 = vmatprep.subr.mxu0 %v4242
        %5452 = vmatpush1.msra.mxu0 %v4240
        %5453 = vmatprep.subr.mxu0 %v4248
        %5454 = vmatpush1.msra.mxu0 %v4246
        %5455 = vmatprep.subr.mxu0 %v4254
        %5456 = vmatpush1.msra.mxu0 %v4252
        %5457 = vmatprep.subr.mxu0 %v4390
        %5458 = vmatpush1.msra.mxu0 %v4388
        %5459 = vmatprep.subr.mxu0 %v4396
        %5460 = vmatpush1.msra.mxu0 %v4394
        %5461 = vmatprep.subr.mxu0 %v4402
        %5462 = vmatpush1.msra.mxu0 %v4400
        %5463 = vmatprep.subr.mxu0 %v4538
        %5464 = vmatpush1.msra.mxu0 %v4536
        %5465 = vmatprep.subr.mxu0 %v4544
        %5466 = vmatpush1.msra.mxu0 %v4542
        %5467 = vmatprep.subr.mxu0 %v4550
        %5468 = vmatpush1.msra.mxu0 %v4548
        %5469 = vmatprep.subr.mxu0 %v4686
        %5470 = vmatpush1.msra.mxu0 %v4684
        %5471 = vmatprep.subr.mxu0 %v4692
        %5472 = vmatpush1.msra.mxu0 %v4690
        %5473 = vmatprep.subr.mxu0 %v4698
        %5474 = vmatpush1.msra.mxu0 %v4696
        %5475 = vmatprep.subr.mxu0 %v4834
        %5476 = vmatpush1.msra.mxu0 %v4832
        %5477 = vmatprep.subr.mxu0 %v4840
        %5478 = vmatpush1.msra.mxu0 %v4838
        %5479 = vmatprep.subr.mxu0 %v4846
        %5480 = vmatpush1.msra.mxu0 %v4844
        %5481 = vmatprep.subr.mxu0 %v4982
        %5482 = vmatpush1.msra.mxu0 %v4980
        %5483 = vmatprep.subr.mxu0 %v4988
        %5484 = vmatpush1.msra.mxu0 %v4986
        %5485 = vmatprep.subr.mxu0 %v4994
        %5486 = vmatpush1.msra.mxu0 %v4992
        %5487 = vmatprep.subr.mxu0 %v5130
        %5488 = vmatpush1.msra.mxu0 %v5128
        %5489 = vmatprep.subr.mxu0 %v5136
        %5490 = vmatpush1.msra.mxu0 %v5134
        %5491 = vmatprep.subr.mxu0 %v5142
        %5492 = vmatpush1.msra.mxu0 %v5140
        %5493 = vmatprep.subr.mxu0 %v5278
        %5494 = vmatpush1.msra.mxu0 %v5276
        %5495 = vmatprep.subr.mxu0 %v5284
        %5496 = vmatpush1.msra.mxu0 %v5282
        %5497 = vmatprep.subr.mxu0 %v5290
        %5498 = vmatpush1.msra.mxu0 %v5288
        %5499 = vmatprep.subr.mxu0 %v5426
        %5500 = vmatpush1.msra.mxu0 %v5424
        %5501 = vmatprep.subr.mxu0 %v5432
        %5502 = vmatpush1.msra.mxu0 %v5430
        %5503 = vmatprep.subr.mxu0 %v5438
        %5504 = vmatpush1.msra.mxu0 %v5436
        %5505 = vmatprep.subr.mxu0 0.0
        %5506 = vmatpush1.msra.mxu0 0.0
        %5507 = vmatprep.subr.mxu0 0.0
        %5508 = vmatpush1.msra.mxu0 0.0
        %5509 = vmatprep.subr.mxu0 0.0
        %5510 = vmatpush1.msra.mxu0 0.0
        %5511 = vmatprep.subr.mxu0 0.0
        %5512 = vmatpush1.msra.mxu0 0.0
        %5513 = vmatprep.subr.mxu0 0.0
        %5514 = vmatpush1.msra.mxu0 0.0
        %5515 = vmatprep.mubr.f32.mxu0 %v5449
        %5516 = vmatmul.mubr.f32.gmra.mrb[0].mxu0 %v5440
        %v5517 = vpop.f32.mrb[0].mxu0
        %v5518 = vadd.f32 %v5446, %v5517
        %v5519 = vpop.f32.mrb[0].mxu0
        %v5520 = vadd.f32 %v5446, %v5519
        %5521 = vdwg.mxu0
        %v5522 = vmax.f32 %v5518, 0.0
        %v5523 = vmax.f32 %v5520, 0.0
        %5524 = vst [vmem:[%s817] sm:$0xff] %v5522
        %5525 = vst [vmem:[%s817 + $0x8] sm:$0xff] %v5523
        %s5526 = sand.u32 %s445, 1
        %s5527 = scalar_lea.sflag [#allocation4], %s5526
        %s5528 = sand.u32 %s445, 1
        %s5529 = smul.addr %s5528, 16
        %s5530 = scalar_lea.vmem [#allocation21], %s5529
        // Predicated region
        $region145: #{tpu_custom_call.1} parent=91 // pred_check
          %p5531 = pneg %p455
        $region146: #{tpu_custom_call.1} parent=91 // pred_check_branch
          %5533 = sbr.rel (%p5531) target = $region148
        $region147: #{tpu_custom_call.1} parent=91 // pred_region
          %s5535 = ssub.s32 256, 256
          %5536 = vsyncadd %s5527, %s5535
          %s5537 = smul.addr %s39, 2
          %s5538 = smul.addr %s5537, 128
          %s5539 = scalar_lea.hbm %s18, %s5538
          %s5541 = sshll.u32 %s5530, 4
          %s5542 = int_to_ptr.vmem [resolvable:$true] %s5541
          %5544 = dma.vmem_to_hbm [thread:$0]  %s5542, 256, %s5539, %s5527
        $region148: #{tpu_custom_call.1} parent=91 // pred_fallthru
          _
      $region92: #{tpu_custom_call.1} parent=5 // pred_fallthru
        _
      %p5545 = scmp.le.s32.totalorder 2, %s34
      // Predicated region
      $region149: #{tpu_custom_call.1} parent=5 // pred_check
        %p5546 = pneg %p5545
      $region150: #{tpu_custom_call.1} parent=5 // pred_check_branch
        %5548 = sbr.rel (%p5546) target = $region152
      $region151: #{tpu_custom_call.1} parent=5 // pred_region
        %s5549 = ssub.s32 %s34, 2
        // Predicated region
        $region153: #{tpu_custom_call.1} parent=151 // pred_check
          %p5550 = pneg %p461
        $region154: #{tpu_custom_call.1} parent=151 // pred_check_branch
          %5552 = sbr.rel (%p5550) target = $region156
        $region155: #{tpu_custom_call.1} parent=151 // pred_region
          %s5553 = sand.u32 %s446, 1
          %s5554 = scalar_lea.sflag [#allocation4], %s5553
          %s5555 = sand.u32 %s446, 1
          %s5556 = smul.addr %s5555, 16
          %s5557 = scalar_lea.vmem [#allocation21], %s5556
          %5558 = dma.done %s5554, 256
        $region156: #{tpu_custom_call.1} parent=151 // pred_fallthru
          _
      $region152: #{tpu_custom_call.1} parent=5 // pred_fallthru
        _
    $region6: #{tpu_custom_call.1} parent=1 // loop_footer
      %s38 = sadd.s32 1, %s34
    $region7: #{tpu_custom_call.1} parent=1 // loop_footer_branch
      %33 = sbr.rel target = $region3
    $region8: #{tpu_custom_call.1} parent=1 // loop_exit
      _
    %5559 = vsyncpa [#allocation3], 1
    %s5560 = scalar_lea.sflag [#allocation3], 1
    %5561 = vsyncpa %s5560, 1
    %5562 = vsyncpa [#allocation6], 1
    %5563 = vsyncpa [#allocation10], 1
    %5564 = vsyncpa [#allocation13], 1
    %5565 = vsyncpa [#allocation19], 1
    %s5566 = scalar_lea.sflag [#allocation19], 1
    %5567 = vsyncpa %s5566, 1
    %5568 = vsyncpa [#allocation4], 1
    %s5569 = scalar_lea.sflag [#allocation4], 1
    %5570 = vsyncpa %s5569, 1

</llo_original>
